<compile_context>
chip_gen: v7x
topology: tpu7x:2x2x1
jax: 0.10.0
libtpu: 0.0.40
codegen_flags: <defaults>
</compile_context>

<pallas_src>
import functools

import jax
import jax.numpy as jnp
from jax.experimental import pallas as pl
from jax.experimental.pallas import tpu as pltpu

_VMEM_LIMIT = 32 * 1024 * 1024  # safe on v5e/v6e and within v7x's 64 MiB physical


# ----------------------------------------------------------------------------
# Kernel 1: fused  conv3x3(valid) + bias + ReLU + 2x2 window-max   (per frame)
#
# The frame is given row-major flattened: x_ref is (H*W, C).  Conv output at
# flat position p = oh*W + ow is sum_{di,dj} x[p + di*W + dj] @ w[di,dj], so
# each tap is a contiguous shifted slice of Ly = (OH-1)*W + OW rows.  Columns
# with ow >= OW are garbage and are never selected by the pooling subsample.
# ----------------------------------------------------------------------------
def _conv_relu_pool_kernel(x_ref, w_ref, b_ref, o_ref, y_scr, *, W, C, OC, OH, OW):
    ly = (OH - 1) * W + OW          # conv positions needed (flat, incl. garbage cols)
    lm = ly - W - 1                 # 2x2 window-max anchors emitted

    acc = None
    for k in range(9):              # static 9-tap accumulation on the MXU
        di, dj = divmod(k, 3)
        tap = x_ref[pl.ds(di * W + dj, ly), :].astype(jnp.bfloat16)   # (Ly, C)
        contrib = jnp.dot(tap, w_ref[k], preferred_element_type=jnp.float32)
        acc = contrib if acc is None else acc + contrib               # (Ly, OC) f32

    # bias + ReLU in f32 (ReLU commutes with the max below: per-channel bias).
    y_scr[...] = jnp.maximum(acc + b_ref[...], 0.0)

    # 2x2 overlapping window max at every anchor; the wrapper subsamples the
    # even anchors (= MaxPool2d(2), floor mode).
    m = jnp.maximum(
        jnp.maximum(y_scr[pl.ds(0, lm), :], y_scr[pl.ds(1, lm), :]),
        jnp.maximum(y_scr[pl.ds(W, lm), :], y_scr[pl.ds(W + 1, lm), :]),
    )
    o_ref[...] = m.astype(o_ref.dtype)


def conv_relu_pool(x_nhwc, w, b):
    """x: (N, H, W, C) f32; w: (3, 3, C, OC); b: (OC,). Returns (N, OH//2, OW//2, OC)."""
    n, h, wid, c = x_nhwc.shape
    oc = w.shape[-1]
    oh, ow = h - 2, wid - 2
    ph, pw = oh // 2, ow // 2
    ly = (oh - 1) * wid + ow
    lm = ly - wid - 1

    x_flat = x_nhwc.reshape(n, h * wid, c).astype(jnp.float32)
    w9 = w.reshape(9, c, oc).astype(jnp.bfloat16)       # MXU operands in bf16
    bias = b.reshape(1, oc).astype(jnp.float32)

    m = pl.pallas_call(
        functools.partial(_conv_relu_pool_kernel, W=wid, C=c, OC=oc, OH=oh, OW=ow),
        out_shape=jax.ShapeDtypeStruct((n, lm, oc), jnp.float32),
        grid_spec=pltpu.PrefetchScalarGridSpec(
            num_scalar_prefetch=0,
            grid=(n,),                                   # one frame per grid step
            in_specs=[
                pl.BlockSpec((None, h * wid, c), lambda i: (i, 0, 0)),
                pl.BlockSpec((9, c, oc), lambda i: (0, 0, 0)),   # resident weights
                pl.BlockSpec((1, oc), lambda i: (0, 0)),          # resident bias
            ],
            out_specs=pl.BlockSpec((None, lm, oc), lambda i: (i, 0, 0)),
            scratch_shapes=[pltpu.VMEM((ly, oc), jnp.float32)],
        ),
        compiler_params=pltpu.CompilerParams(
            dimension_semantics=("parallel",),           # shards across v7x's 2 TCs
            vmem_limit_bytes=_VMEM_LIMIT,
        ),
    )(x_flat, w9, bias)

    # Stride-2 subsample of the window max == MaxPool2d(kernel=2, stride=2), floor.
    m_full = jnp.pad(m, ((0, 0), (0, h * wid - lm), (0, 0)))
    m_full = m_full.reshape(n, h, wid, oc)
    return m_full[:, 0:2 * ph:2, 0:2 * pw:2, :]          # (N, ph, pw, OC)


# ----------------------------------------------------------------------------
# Kernel 2: LSTM input projection, hoisted out of the recurrence.
#   gates_x = feat @ W_ih[:F]  +  years * W_ih[F]  +  (b_ih + b_hh)
# Keeps the contraction K = 128 (the "+1 year" feature is a rank-1 term).
# ----------------------------------------------------------------------------
def _lstm_input_proj_kernel(feat_ref, wf_ref, yr_ref, wyr_ref, b_ref, o_ref):
    acc = jnp.dot(feat_ref[...].astype(jnp.bfloat16), wf_ref[...],
                  preferred_element_type=jnp.float32)            # (T*B, 4H)
    o_ref[...] = acc + yr_ref[...] * wyr_ref[...] + b_ref[...]


def lstm_input_proj(feat, w_ih, years_col, bias):
    """feat: (T*B, F) f32; w_ih: (F+1, 4H); years_col: (T*B, 1); bias: (4H,)."""
    tb, f = feat.shape
    g = w_ih.shape[1]
    wf = w_ih[:f].astype(jnp.bfloat16)
    wyr = w_ih[f:].reshape(1, g).astype(jnp.float32)
    return pl.pallas_call(
        _lstm_input_proj_kernel,
        out_shape=jax.ShapeDtypeStruct((tb, g), jnp.float32),
    )(feat.astype(jnp.float32), wf, years_col.astype(jnp.float32),
      wyr, bias.reshape(1, g).astype(jnp.float32))


# ----------------------------------------------------------------------------
# Kernel 3: LSTM recurrence (grid=(T,)) with h/c in VMEM scratch, fused with the
# fc1(ReLU)+fc2 head on the final time step.  Gate order i, f, g, o (PyTorch).
# ----------------------------------------------------------------------------
def _lstm_fc_kernel(gx_ref, whh_ref, w1_ref, b1_ref, w2_ref, b2_ref, o_ref,
                    h_scr, c_scr):
    t = pl.program_id(0)
    hid = h_scr.shape[1]

    @pl.when(t == 0)
    def _():
        h_scr[...] = jnp.zeros_like(h_scr)
        c_scr[...] = jnp.zeros_like(c_scr)

    gates = gx_ref[...] + jnp.dot(h_scr[...].astype(jnp.bfloat16), whh_ref[...],
                                  preferred_element_type=jnp.float32)  # (B, 4H)

    i_g = jax.nn.sigmoid(gates[:, 0 * hid:1 * hid])
    f_g = jax.nn.sigmoid(gates[:, 1 * hid:2 * hid])
    g_g = jnp.tanh(gates[:, 2 * hid:3 * hid])
    o_g = jax.nn.sigmoid(gates[:, 3 * hid:4 * hid])

    c_new = f_g * c_scr[...] + i_g * g_g
    h_new = o_g * jnp.tanh(c_new)
    c_scr[...] = c_new
    h_scr[...] = h_new

    @pl.when(t == pl.num_programs(0) - 1)
    def _():
        # fc1 + ReLU
        z = jnp.maximum(
            jnp.dot(h_new.astype(jnp.bfloat16), w1_ref[...],
                    preferred_element_type=jnp.float32) + b1_ref[...], 0.0)
        # fc2 (output dim 1) as an f32 multiply + lane reduction.
        o_ref[...] = jnp.sum(z * w2_ref[...], axis=-1, keepdims=True) + b2_ref[...]


def lstm_fc_head(gates_x_tbg, w_hh, fc1w, fc1b, fc2w, fc2b):
    """gates_x_tbg: (T, B, 4H) f32. Returns the final prediction (B, 1)."""
    t_len, b, g = gates_x_tbg.shape
    hid = w_hh.shape[0]
    f1 = fc1w.shape[1]
    grid_spec = pltpu.PrefetchScalarGridSpec(
        num_scalar_prefetch=0,
        grid=(t_len,),
        in_specs=[
            pl.BlockSpec((None, b, g), lambda t: (t, 0, 0)),   # precomputed gates_x[t]
            pl.BlockSpec((hid, g), lambda t: (0, 0)),          # W_hh (resident)
            pl.BlockSpec((hid, f1), lambda t: (0, 0)),         # fc1 weight
            pl.BlockSpec((1, f1), lambda t: (0, 0)),           # fc1 bias
            pl.BlockSpec((1, f1), lambda t: (0, 0)),           # fc2 weight (as row)
            pl.BlockSpec((1, 1), lambda t: (0, 0)),            # fc2 bias
        ],
        out_specs=pl.BlockSpec((b, 1), lambda t: (0, 0)),
        scratch_shapes=[pltpu.VMEM((b, hid), jnp.float32),     # h state
                        pltpu.VMEM((b, hid), jnp.float32)],    # c state
    )
    return pl.pallas_call(
        _lstm_fc_kernel,
        out_shape=jax.ShapeDtypeStruct((b, 1), jnp.float32),
        grid_spec=grid_spec,
        compiler_params=pltpu.CompilerParams(
            dimension_semantics=("arbitrary",),                # time axis is serial
            vmem_limit_bytes=_VMEM_LIMIT,
        ),
    )(gates_x_tbg.astype(jnp.float32),
      w_hh.astype(jnp.bfloat16),
      fc1w.astype(jnp.bfloat16),
      fc1b.reshape(1, f1).astype(jnp.float32),
      fc2w.reshape(1, f1).astype(jnp.float32),
      fc2b.reshape(1, 1).astype(jnp.float32))


# ----------------------------------------------------------------------------
# Parameters (deterministic synthetic init; shapes mirror the nn.Module).
# ----------------------------------------------------------------------------
def init_params(key, channels, cnn_feat, hidden=128):
    ks = jax.random.split(key, 12)
    s = 0.05

    def rnd(k, shape):
        return (s * jax.random.normal(k, shape)).astype(jnp.float32)

    lstm_in = cnn_feat + 1  # + "years" feature (last row of w_ih)
    return dict(
        c1w=rnd(ks[0], (3, 3, channels, 32)), c1b=rnd(ks[1], (32,)),
        c2w=rnd(ks[2], (3, 3, 32, 64)),       c2b=rnd(ks[3], (64,)),
        c3w=rnd(ks[4], (3, 3, 64, 128)),      c3b=rnd(ks[5], (128,)),
        w_ih=rnd(ks[6], (lstm_in, 4 * hidden)),
        w_hh=rnd(ks[7], (hidden, 4 * hidden)),
        lstm_b=rnd(ks[8], (4 * hidden,)),     # = b_ih + b_hh combined
        fc1w=rnd(ks[9], (hidden, 64)),        fc1b=rnd(ks[10], (64,)),
        fc2w=rnd(ks[11], (64, 1)),            fc2b=jnp.zeros((1,), jnp.float32),
    )


# ----------------------------------------------------------------------------
# Forward pass (matches CNNLSTMModel.forward).
# ----------------------------------------------------------------------------
@jax.jit
def cnn_lstm_forward(params, x, years):
    # x: (B, T, C, H, W); years: (B,)
    b, t, c, hh, ww = x.shape
    # NCHW frames -> (T*B, H, W, C), t-major so the LSTM needs no extra transpose.
    # TODO(synk): this one small transpose stays in XLA; folding it into the first
    # conv's read pattern would need an in-kernel channel transpose.
    frames = x.transpose(1, 0, 3, 4, 2).reshape(t * b, hh, ww, c).astype(jnp.float32)

    p1 = conv_relu_pool(frames, params["c1w"], params["c1b"])   # (T*B, 11, 11, 32)
    p2 = conv_relu_pool(p1, params["c2w"], params["c2b"])       # (T*B,  4,  4, 64)
    p3 = conv_relu_pool(p2, params["c3w"], params["c3b"])       # (T*B,  1,  1,128)

    feat = p3.reshape(t * b, -1)                                 # (T*B, 128), t-major
    yrs = jnp.broadcast_to(years[None, :, None], (t, b, 1)).reshape(t * b, 1)

    # Input projection hoisted out of the recurrence (year handled as rank-1 term).
    gates_x = lstm_input_proj(feat, params["w_ih"], yrs, params["lstm_b"])
    gates_x = gates_x.reshape(t, b, -1)                          # (T, B, 4H)

    # Recurrence + fc1(ReLU) + fc2 fused; returns (B, 1).
    return lstm_fc_head(gates_x, params["w_hh"], params["fc1w"], params["fc1b"],
                        params["fc2w"], params["fc2b"])


if __name__ == "__main__":
    # Spatial chain: 24 ->conv-> 22 ->pool-> 11 ->conv-> 9 ->pool-> 4 ->conv-> 2
    # ->pool-> 1, so _to_linear = 128 * 1 * 1 = 128, LSTM input = 129.
    B, T, C, H, W = 2, 4, 3, 24, 24
    HIDDEN = 128
    CNN_FEAT = 128

    key = jax.random.PRNGKey(0)
    kp, kx, ky = jax.random.split(key, 3)
    params = init_params(kp, C, CNN_FEAT, HIDDEN)

    x = jax.random.normal(kx, (B, T, C, H, W), dtype=jnp.float32)
    years = jax.random.normal(ky, (B,), dtype=jnp.float32)

    out = cnn_lstm_forward(params, x, years)
    out = jax.block_until_ready(out)
    assert out.shape == (B, 1) and out.dtype == jnp.float32
    print("KERNEL_OK")
</pallas_src>

<mosaic_0001>
module attributes {stable_mosaic.version = 11 : i64} {
  func.func @_conv_relu_pool_kernel(%arg0: i32, %arg1: memref<1x576x3xf32, #tpu.memory_space<vmem>>, %arg2: memref<9x3x32xbf16, #tpu.memory_space<vmem>>, %arg3: memref<1x32xf32, #tpu.memory_space<vmem>>, %arg4: memref<1x501x32xf32, #tpu.memory_space<vmem>>, %arg5: memref<526x32xf32, #tpu.memory_space<vmem>>) attributes {dimension_semantics = [#tpu.dimension_semantics<parallel>], iteration_bounds = array<i64: 8>, scalar_prefetch = 0 : i64, scratch_operands = 1 : i64, tpu.core_type = #tpu.core_type<tc>, window_params = [{transform_indices = @transform_0, window_bounds = array<i64: 1, 576, 3>}, {pipeline_mode = #tpu.pipeline_mode<synchronous>, transform_indices = @transform_1, window_bounds = array<i64: 9, 3, 32>}, {pipeline_mode = #tpu.pipeline_mode<synchronous>, transform_indices = @transform_2, window_bounds = array<i64: 1, 32>}, {transform_indices = @transform_3, window_bounds = array<i64: 1, 501, 32>}]} {
    %c0 = arith.constant 0 : index
    %c0_0 = arith.constant 0 : index
    %c0_1 = arith.constant 0 : index
    %0 = vector.load %arg1[%c0, %c0_0, %c0_1] : memref<1x576x3xf32, #tpu.memory_space<vmem>>, vector<1x526x3xf32>
    %1 = vector.shape_cast %0 : vector<1x526x3xf32> to vector<526x3xf32>
    %2 = arith.truncf %1 : vector<526x3xf32> to vector<526x3xbf16>
    %c0_2 = arith.constant 0 : index
    %c0_3 = arith.constant 0 : index
    %c0_4 = arith.constant 0 : index
    %3 = vector.load %arg2[%c0_2, %c0_3, %c0_4] : memref<9x3x32xbf16, #tpu.memory_space<vmem>>, vector<1x3x32xbf16>
    %4 = vector.shape_cast %3 : vector<1x3x32xbf16> to vector<3x32xbf16>
    %cst = arith.constant dense<0.000000e+00> : vector<526x32xf32>
    %5 = tpu.matmul %2, %4, %cst {dimension_numbers = #tpu.dot_dimension_numbers<[1], [0], [0], [1], [0, 0, 1, 1], [], []>} : vector<526x3xbf16>, vector<3x32xbf16>, vector<526x32xf32> -> vector<526x32xf32>
    %c0_5 = arith.constant 0 : index
    %c1 = arith.constant 1 : index
    %c0_6 = arith.constant 0 : index
    %6 = vector.load %arg1[%c0_5, %c1, %c0_6] : memref<1x576x3xf32, #tpu.memory_space<vmem>>, vector<1x526x3xf32>
    %7 = vector.shape_cast %6 : vector<1x526x3xf32> to vector<526x3xf32>
    %8 = arith.truncf %7 : vector<526x3xf32> to vector<526x3xbf16>
    %c1_7 = arith.constant 1 : index
    %c0_8 = arith.constant 0 : index
    %c0_9 = arith.constant 0 : index
    %9 = vector.load %arg2[%c1_7, %c0_8, %c0_9] : memref<9x3x32xbf16, #tpu.memory_space<vmem>>, vector<1x3x32xbf16>
    %10 = vector.shape_cast %9 : vector<1x3x32xbf16> to vector<3x32xbf16>
    %cst_10 = arith.constant dense<0.000000e+00> : vector<526x32xf32>
    %11 = tpu.matmul %8, %10, %cst_10 {dimension_numbers = #tpu.dot_dimension_numbers<[1], [0], [0], [1], [0, 0, 1, 1], [], []>} : vector<526x3xbf16>, vector<3x32xbf16>, vector<526x32xf32> -> vector<526x32xf32>
    %12 = arith.addf %5, %11 : vector<526x32xf32>
    %c0_11 = arith.constant 0 : index
    %c2 = arith.constant 2 : index
    %c0_12 = arith.constant 0 : index
    %13 = vector.load %arg1[%c0_11, %c2, %c0_12] : memref<1x576x3xf32, #tpu.memory_space<vmem>>, vector<1x526x3xf32>
    %14 = vector.shape_cast %13 : vector<1x526x3xf32> to vector<526x3xf32>
    %15 = arith.truncf %14 : vector<526x3xf32> to vector<526x3xbf16>
    %c2_13 = arith.constant 2 : index
    %c0_14 = arith.constant 0 : index
    %c0_15 = arith.constant 0 : index
    %16 = vector.load %arg2[%c2_13, %c0_14, %c0_15] : memref<9x3x32xbf16, #tpu.memory_space<vmem>>, vector<1x3x32xbf16>
    %17 = vector.shape_cast %16 : vector<1x3x32xbf16> to vector<3x32xbf16>
    %cst_16 = arith.constant dense<0.000000e+00> : vector<526x32xf32>
    %18 = tpu.matmul %15, %17, %cst_16 {dimension_numbers = #tpu.dot_dimension_numbers<[1], [0], [0], [1], [0, 0, 1, 1], [], []>} : vector<526x3xbf16>, vector<3x32xbf16>, vector<526x32xf32> -> vector<526x32xf32>
    %19 = arith.addf %12, %18 : vector<526x32xf32>
    %c0_17 = arith.constant 0 : index
    %c24 = arith.constant 24 : index
    %c0_18 = arith.constant 0 : index
    %20 = vector.load %arg1[%c0_17, %c24, %c0_18] : memref<1x576x3xf32, #tpu.memory_space<vmem>>, vector<1x526x3xf32>
    %21 = vector.shape_cast %20 : vector<1x526x3xf32> to vector<526x3xf32>
    %22 = arith.truncf %21 : vector<526x3xf32> to vector<526x3xbf16>
    %c3 = arith.constant 3 : index
    %c0_19 = arith.constant 0 : index
    %c0_20 = arith.constant 0 : index
    %23 = vector.load %arg2[%c3, %c0_19, %c0_20] : memref<9x3x32xbf16, #tpu.memory_space<vmem>>, vector<1x3x32xbf16>
    %24 = vector.shape_cast %23 : vector<1x3x32xbf16> to vector<3x32xbf16>
    %cst_21 = arith.constant dense<0.000000e+00> : vector<526x32xf32>
    %25 = tpu.matmul %22, %24, %cst_21 {dimension_numbers = #tpu.dot_dimension_numbers<[1], [0], [0], [1], [0, 0, 1, 1], [], []>} : vector<526x3xbf16>, vector<3x32xbf16>, vector<526x32xf32> -> vector<526x32xf32>
    %26 = arith.addf %19, %25 : vector<526x32xf32>
    %c0_22 = arith.constant 0 : index
    %c25 = arith.constant 25 : index
    %c0_23 = arith.constant 0 : index
    %27 = vector.load %arg1[%c0_22, %c25, %c0_23] : memref<1x576x3xf32, #tpu.memory_space<vmem>>, vector<1x526x3xf32>
    %28 = vector.shape_cast %27 : vector<1x526x3xf32> to vector<526x3xf32>
    %29 = arith.truncf %28 : vector<526x3xf32> to vector<526x3xbf16>
    %c4 = arith.constant 4 : index
    %c0_24 = arith.constant 0 : index
    %c0_25 = arith.constant 0 : index
    %30 = vector.load %arg2[%c4, %c0_24, %c0_25] : memref<9x3x32xbf16, #tpu.memory_space<vmem>>, vector<1x3x32xbf16>
    %31 = vector.shape_cast %30 : vector<1x3x32xbf16> to vector<3x32xbf16>
    %cst_26 = arith.constant dense<0.000000e+00> : vector<526x32xf32>
    %32 = tpu.matmul %29, %31, %cst_26 {dimension_numbers = #tpu.dot_dimension_numbers<[1], [0], [0], [1], [0, 0, 1, 1], [], []>} : vector<526x3xbf16>, vector<3x32xbf16>, vector<526x32xf32> -> vector<526x32xf32>
    %33 = arith.addf %26, %32 : vector<526x32xf32>
    %c0_27 = arith.constant 0 : index
    %c26 = arith.constant 26 : index
    %c0_28 = arith.constant 0 : index
    %34 = vector.load %arg1[%c0_27, %c26, %c0_28] : memref<1x576x3xf32, #tpu.memory_space<vmem>>, vector<1x526x3xf32>
    %35 = vector.shape_cast %34 : vector<1x526x3xf32> to vector<526x3xf32>
    %36 = arith.truncf %35 : vector<526x3xf32> to vector<526x3xbf16>
    %c5 = arith.constant 5 : index
    %c0_29 = arith.constant 0 : index
    %c0_30 = arith.constant 0 : index
    %37 = vector.load %arg2[%c5, %c0_29, %c0_30] : memref<9x3x32xbf16, #tpu.memory_space<vmem>>, vector<1x3x32xbf16>
    %38 = vector.shape_cast %37 : vector<1x3x32xbf16> to vector<3x32xbf16>
    %cst_31 = arith.constant dense<0.000000e+00> : vector<526x32xf32>
    %39 = tpu.matmul %36, %38, %cst_31 {dimension_numbers = #tpu.dot_dimension_numbers<[1], [0], [0], [1], [0, 0, 1, 1], [], []>} : vector<526x3xbf16>, vector<3x32xbf16>, vector<526x32xf32> -> vector<526x32xf32>
    %40 = arith.addf %33, %39 : vector<526x32xf32>
    %c0_32 = arith.constant 0 : index
    %c48 = arith.constant 48 : index
    %c0_33 = arith.constant 0 : index
    %41 = vector.load %arg1[%c0_32, %c48, %c0_33] : memref<1x576x3xf32, #tpu.memory_space<vmem>>, vector<1x526x3xf32>
    %42 = vector.shape_cast %41 : vector<1x526x3xf32> to vector<526x3xf32>
    %43 = arith.truncf %42 : vector<526x3xf32> to vector<526x3xbf16>
    %c6 = arith.constant 6 : index
    %c0_34 = arith.constant 0 : index
    %c0_35 = arith.constant 0 : index
    %44 = vector.load %arg2[%c6, %c0_34, %c0_35] : memref<9x3x32xbf16, #tpu.memory_space<vmem>>, vector<1x3x32xbf16>
    %45 = vector.shape_cast %44 : vector<1x3x32xbf16> to vector<3x32xbf16>
    %cst_36 = arith.constant dense<0.000000e+00> : vector<526x32xf32>
    %46 = tpu.matmul %43, %45, %cst_36 {dimension_numbers = #tpu.dot_dimension_numbers<[1], [0], [0], [1], [0, 0, 1, 1], [], []>} : vector<526x3xbf16>, vector<3x32xbf16>, vector<526x32xf32> -> vector<526x32xf32>
    %47 = arith.addf %40, %46 : vector<526x32xf32>
    %c0_37 = arith.constant 0 : index
    %c49 = arith.constant 49 : index
    %c0_38 = arith.constant 0 : index
    %48 = vector.load %arg1[%c0_37, %c49, %c0_38] : memref<1x576x3xf32, #tpu.memory_space<vmem>>, vector<1x526x3xf32>
    %49 = vector.shape_cast %48 : vector<1x526x3xf32> to vector<526x3xf32>
    %50 = arith.truncf %49 : vector<526x3xf32> to vector<526x3xbf16>
    %c7 = arith.constant 7 : index
    %c0_39 = arith.constant 0 : index
    %c0_40 = arith.constant 0 : index
    %51 = vector.load %arg2[%c7, %c0_39, %c0_40] : memref<9x3x32xbf16, #tpu.memory_space<vmem>>, vector<1x3x32xbf16>
    %52 = vector.shape_cast %51 : vector<1x3x32xbf16> to vector<3x32xbf16>
    %cst_41 = arith.constant dense<0.000000e+00> : vector<526x32xf32>
    %53 = tpu.matmul %50, %52, %cst_41 {dimension_numbers = #tpu.dot_dimension_numbers<[1], [0], [0], [1], [0, 0, 1, 1], [], []>} : vector<526x3xbf16>, vector<3x32xbf16>, vector<526x32xf32> -> vector<526x32xf32>
    %54 = arith.addf %47, %53 : vector<526x32xf32>
    %c0_42 = arith.constant 0 : index
    %c50 = arith.constant 50 : index
    %c0_43 = arith.constant 0 : index
    %55 = vector.load %arg1[%c0_42, %c50, %c0_43] : memref<1x576x3xf32, #tpu.memory_space<vmem>>, vector<1x526x3xf32>
    %56 = vector.shape_cast %55 : vector<1x526x3xf32> to vector<526x3xf32>
    %57 = arith.truncf %56 : vector<526x3xf32> to vector<526x3xbf16>
    %c8 = arith.constant 8 : index
    %c0_44 = arith.constant 0 : index
    %c0_45 = arith.constant 0 : index
    %58 = vector.load %arg2[%c8, %c0_44, %c0_45] : memref<9x3x32xbf16, #tpu.memory_space<vmem>>, vector<1x3x32xbf16>
    %59 = vector.shape_cast %58 : vector<1x3x32xbf16> to vector<3x32xbf16>
    %cst_46 = arith.constant dense<0.000000e+00> : vector<526x32xf32>
    %60 = tpu.matmul %57, %59, %cst_46 {dimension_numbers = #tpu.dot_dimension_numbers<[1], [0], [0], [1], [0, 0, 1, 1], [], []>} : vector<526x3xbf16>, vector<3x32xbf16>, vector<526x32xf32> -> vector<526x32xf32>
    %61 = arith.addf %54, %60 : vector<526x32xf32>
    %c0_47 = arith.constant 0 : index
    %c0_48 = arith.constant 0 : index
    %62 = vector.load %arg3[%c0_47, %c0_48] : memref<1x32xf32, #tpu.memory_space<vmem>>, vector<1x32xf32>
    %63 = vector.broadcast %62 : vector<1x32xf32> to vector<526x32xf32>
    %64 = arith.addf %61, %63 : vector<526x32xf32>
    %cst_49 = arith.constant 0.000000e+00 : f32
    %65 = vector.broadcast %cst_49 : f32 to vector<526x32xf32>
    %66 = arith.maximumf %64, %65 : vector<526x32xf32>
    %c0_50 = arith.constant 0 : index
    %c0_51 = arith.constant 0 : index
    %67 = vector.load %arg5[%c0_50, %c0_51] : memref<526x32xf32, #tpu.memory_space<vmem>>, vector<526x32xf32>
    tpu.vector_store %arg5[%c0_50, %c0_51], %66 {strides = array<i32>} : memref<526x32xf32, #tpu.memory_space<vmem>>, vector<526x32xf32>,
    %c0_52 = arith.constant 0 : index
    %c0_53 = arith.constant 0 : index
    %68 = vector.load %arg5[%c0_52, %c0_53] : memref<526x32xf32, #tpu.memory_space<vmem>>, vector<501x32xf32>
    %c1_54 = arith.constant 1 : index
    %c0_55 = arith.constant 0 : index
    %69 = vector.load %arg5[%c1_54, %c0_55] : memref<526x32xf32, #tpu.memory_space<vmem>>, vector<501x32xf32>
    %70 = arith.maximumf %68, %69 : vector<501x32xf32>
    %c24_56 = arith.constant 24 : index
    %c0_57 = arith.constant 0 : index
    %71 = vector.load %arg5[%c24_56, %c0_57] : memref<526x32xf32, #tpu.memory_space<vmem>>, vector<501x32xf32>
    %c25_58 = arith.constant 25 : index
    %c0_59 = arith.constant 0 : index
    %72 = vector.load %arg5[%c25_58, %c0_59] : memref<526x32xf32, #tpu.memory_space<vmem>>, vector<501x32xf32>
    %73 = arith.maximumf %71, %72 : vector<501x32xf32>
    %74 = arith.maximumf %70, %73 : vector<501x32xf32>
    %c0_60 = arith.constant 0 : index
    %c0_61 = arith.constant 0 : index
    %c0_62 = arith.constant 0 : index
    %75 = vector.load %arg4[%c0_60, %c0_61, %c0_62] : memref<1x501x32xf32, #tpu.memory_space<vmem>>, vector<1x501x32xf32>
    %76 = vector.shape_cast %75 : vector<1x501x32xf32> to vector<501x32xf32>
    %77 = vector.shape_cast %74 : vector<501x32xf32> to vector<1x501x32xf32>
    tpu.vector_store %arg4[%c0_60, %c0_61, %c0_62], %77 {strides = array<i32>} : memref<1x501x32xf32, #tpu.memory_space<vmem>>, vector<1x501x32xf32>,
    return
  }
  func.func @transform_0(%arg0: i32) -> (i32, i32, i32) {
    %c0_i32 = arith.constant 0 : i32
    %c0_i32_0 = arith.constant 0 : i32
    %c0_i32_1 = arith.constant 0 : i32
    return %arg0, %c0_i32, %c0_i32_0 : i32, i32, i32
  }
  func.func @transform_1(%arg0: i32) -> (i32, i32, i32) {
    %c0_i32 = arith.constant 0 : i32
    %c0_i32_0 = arith.constant 0 : i32
    %c0_i32_1 = arith.constant 0 : i32
    %c0_i32_2 = arith.constant 0 : i32
    return %c0_i32, %c0_i32_0, %c0_i32_1 : i32, i32, i32
  }
  func.func @transform_2(%arg0: i32) -> (i32, i32) {
    %c0_i32 = arith.constant 0 : i32
    %c0_i32_0 = arith.constant 0 : i32
    %c0_i32_1 = arith.constant 0 : i32
    return %c0_i32, %c0_i32_0 : i32, i32
  }
  func.func @transform_3(%arg0: i32) -> (i32, i32, i32) {
    %c0_i32 = arith.constant 0 : i32
    %c0_i32_0 = arith.constant 0 : i32
    %c0_i32_1 = arith.constant 0 : i32
    return %arg0, %c0_i32, %c0_i32_0 : i32, i32, i32
  }
}

module attributes {stable_mosaic.version = 11 : i64} {
  func.func @_conv_relu_pool_kernel(%arg0: i32, %arg1: memref<1x121x32xf32, #tpu.memory_space<vmem>>, %arg2: memref<9x32x64xbf16, #tpu.memory_space<vmem>>, %arg3: memref<1x64xf32, #tpu.memory_space<vmem>>, %arg4: memref<1x85x64xf32, #tpu.memory_space<vmem>>, %arg5: memref<97x64xf32, #tpu.memory_space<vmem>>) attributes {dimension_semantics = [#tpu.dimension_semantics<parallel>], iteration_bounds = array<i64: 8>, scalar_prefetch = 0 : i64, scratch_operands = 1 : i64, tpu.core_type = #tpu.core_type<tc>, window_params = [{transform_indices = @transform_0, window_bounds = array<i64: 1, 121, 32>}, {pipeline_mode = #tpu.pipeline_mode<synchronous>, transform_indices = @transform_1, window_bounds = array<i64: 9, 32, 64>}, {pipeline_mode = #tpu.pipeline_mode<synchronous>, transform_indices = @transform_2, window_bounds = array<i64: 1, 64>}, {transform_indices = @transform_3, window_bounds = array<i64: 1, 85, 64>}]} {
    %c0 = arith.constant 0 : index
    %c0_0 = arith.constant 0 : index
    %c0_1 = arith.constant 0 : index
    %0 = vector.load %arg1[%c0, %c0_0, %c0_1] : memref<1x121x32xf32, #tpu.memory_space<vmem>>, vector<1x97x32xf32>
    %1 = vector.shape_cast %0 : vector<1x97x32xf32> to vector<97x32xf32>
    %2 = arith.truncf %1 : vector<97x32xf32> to vector<97x32xbf16>
    %c0_2 = arith.constant 0 : index
    %c0_3 = arith.constant 0 : index
    %c0_4 = arith.constant 0 : index
    %3 = vector.load %arg2[%c0_2, %c0_3, %c0_4] : memref<9x32x64xbf16, #tpu.memory_space<vmem>>, vector<1x32x64xbf16>
    %4 = vector.shape_cast %3 : vector<1x32x64xbf16> to vector<32x64xbf16>
    %cst = arith.constant dense<0.000000e+00> : vector<97x64xf32>
    %5 = tpu.matmul %2, %4, %cst {dimension_numbers = #tpu.dot_dimension_numbers<[1], [0], [0], [1], [0, 0, 1, 1], [], []>} : vector<97x32xbf16>, vector<32x64xbf16>, vector<97x64xf32> -> vector<97x64xf32>
    %c0_5 = arith.constant 0 : index
    %c1 = arith.constant 1 : index
    %c0_6 = arith.constant 0 : index
    %6 = vector.load %arg1[%c0_5, %c1, %c0_6] : memref<1x121x32xf32, #tpu.memory_space<vmem>>, vector<1x97x32xf32>
    %7 = vector.shape_cast %6 : vector<1x97x32xf32> to vector<97x32xf32>
    %8 = arith.truncf %7 : vector<97x32xf32> to vector<97x32xbf16>
    %c1_7 = arith.constant 1 : index
    %c0_8 = arith.constant 0 : index
    %c0_9 = arith.constant 0 : index
    %9 = vector.load %arg2[%c1_7, %c0_8, %c0_9] : memref<9x32x64xbf16, #tpu.memory_space<vmem>>, vector<1x32x64xbf16>
    %10 = vector.shape_cast %9 : vector<1x32x64xbf16> to vector<32x64xbf16>
    %cst_10 = arith.constant dense<0.000000e+00> : vector<97x64xf32>
    %11 = tpu.matmul %8, %10, %cst_10 {dimension_numbers = #tpu.dot_dimension_numbers<[1], [0], [0], [1], [0, 0, 1, 1], [], []>} : vector<97x32xbf16>, vector<32x64xbf16>, vector<97x64xf32> -> vector<97x64xf32>
    %12 = arith.addf %5, %11 : vector<97x64xf32>
    %c0_11 = arith.constant 0 : index
    %c2 = arith.constant 2 : index
    %c0_12 = arith.constant 0 : index
    %13 = vector.load %arg1[%c0_11, %c2, %c0_12] : memref<1x121x32xf32, #tpu.memory_space<vmem>>, vector<1x97x32xf32>
    %14 = vector.shape_cast %13 : vector<1x97x32xf32> to vector<97x32xf32>
    %15 = arith.truncf %14 : vector<97x32xf32> to vector<97x32xbf16>
    %c2_13 = arith.constant 2 : index
    %c0_14 = arith.constant 0 : index
    %c0_15 = arith.constant 0 : index
    %16 = vector.load %arg2[%c2_13, %c0_14, %c0_15] : memref<9x32x64xbf16, #tpu.memory_space<vmem>>, vector<1x32x64xbf16>
    %17 = vector.shape_cast %16 : vector<1x32x64xbf16> to vector<32x64xbf16>
    %cst_16 = arith.constant dense<0.000000e+00> : vector<97x64xf32>
    %18 = tpu.matmul %15, %17, %cst_16 {dimension_numbers = #tpu.dot_dimension_numbers<[1], [0], [0], [1], [0, 0, 1, 1], [], []>} : vector<97x32xbf16>, vector<32x64xbf16>, vector<97x64xf32> -> vector<97x64xf32>
    %19 = arith.addf %12, %18 : vector<97x64xf32>
    %c0_17 = arith.constant 0 : index
    %c11 = arith.constant 11 : index
    %c0_18 = arith.constant 0 : index
    %20 = vector.load %arg1[%c0_17, %c11, %c0_18] : memref<1x121x32xf32, #tpu.memory_space<vmem>>, vector<1x97x32xf32>
    %21 = vector.shape_cast %20 : vector<1x97x32xf32> to vector<97x32xf32>
    %22 = arith.truncf %21 : vector<97x32xf32> to vector<97x32xbf16>
    %c3 = arith.constant 3 : index
    %c0_19 = arith.constant 0 : index
    %c0_20 = arith.constant 0 : index
    %23 = vector.load %arg2[%c3, %c0_19, %c0_20] : memref<9x32x64xbf16, #tpu.memory_space<vmem>>, vector<1x32x64xbf16>
    %24 = vector.shape_cast %23 : vector<1x32x64xbf16> to vector<32x64xbf16>
    %cst_21 = arith.constant dense<0.000000e+00> : vector<97x64xf32>
    %25 = tpu.matmul %22, %24, %cst_21 {dimension_numbers = #tpu.dot_dimension_numbers<[1], [0], [0], [1], [0, 0, 1, 1], [], []>} : vector<97x32xbf16>, vector<32x64xbf16>, vector<97x64xf32> -> vector<97x64xf32>
    %26 = arith.addf %19, %25 : vector<97x64xf32>
    %c0_22 = arith.constant 0 : index
    %c12 = arith.constant 12 : index
    %c0_23 = arith.constant 0 : index
    %27 = vector.load %arg1[%c0_22, %c12, %c0_23] : memref<1x121x32xf32, #tpu.memory_space<vmem>>, vector<1x97x32xf32>
    %28 = vector.shape_cast %27 : vector<1x97x32xf32> to vector<97x32xf32>
    %29 = arith.truncf %28 : vector<97x32xf32> to vector<97x32xbf16>
    %c4 = arith.constant 4 : index
    %c0_24 = arith.constant 0 : index
    %c0_25 = arith.constant 0 : index
    %30 = vector.load %arg2[%c4, %c0_24, %c0_25] : memref<9x32x64xbf16, #tpu.memory_space<vmem>>, vector<1x32x64xbf16>
    %31 = vector.shape_cast %30 : vector<1x32x64xbf16> to vector<32x64xbf16>
    %cst_26 = arith.constant dense<0.000000e+00> : vector<97x64xf32>
    %32 = tpu.matmul %29, %31, %cst_26 {dimension_numbers = #tpu.dot_dimension_numbers<[1], [0], [0], [1], [0, 0, 1, 1], [], []>} : vector<97x32xbf16>, vector<32x64xbf16>, vector<97x64xf32> -> vector<97x64xf32>
    %33 = arith.addf %26, %32 : vector<97x64xf32>
    %c0_27 = arith.constant 0 : index
    %c13 = arith.constant 13 : index
    %c0_28 = arith.constant 0 : index
    %34 = vector.load %arg1[%c0_27, %c13, %c0_28] : memref<1x121x32xf32, #tpu.memory_space<vmem>>, vector<1x97x32xf32>
    %35 = vector.shape_cast %34 : vector<1x97x32xf32> to vector<97x32xf32>
    %36 = arith.truncf %35 : vector<97x32xf32> to vector<97x32xbf16>
    %c5 = arith.constant 5 : index
    %c0_29 = arith.constant 0 : index
    %c0_30 = arith.constant 0 : index
    %37 = vector.load %arg2[%c5, %c0_29, %c0_30] : memref<9x32x64xbf16, #tpu.memory_space<vmem>>, vector<1x32x64xbf16>
    %38 = vector.shape_cast %37 : vector<1x32x64xbf16> to vector<32x64xbf16>
    %cst_31 = arith.constant dense<0.000000e+00> : vector<97x64xf32>
    %39 = tpu.matmul %36, %38, %cst_31 {dimension_numbers = #tpu.dot_dimension_numbers<[1], [0], [0], [1], [0, 0, 1, 1], [], []>} : vector<97x32xbf16>, vector<32x64xbf16>, vector<97x64xf32> -> vector<97x64xf32>
    %40 = arith.addf %33, %39 : vector<97x64xf32>
    %c0_32 = arith.constant 0 : index
    %c22 = arith.constant 22 : index
    %c0_33 = arith.constant 0 : index
    %41 = vector.load %arg1[%c0_32, %c22, %c0_33] : memref<1x121x32xf32, #tpu.memory_space<vmem>>, vector<1x97x32xf32>
    %42 = vector.shape_cast %41 : vector<1x97x32xf32> to vector<97x32xf32>
    %43 = arith.truncf %42 : vector<97x32xf32> to vector<97x32xbf16>
    %c6 = arith.constant 6 : index
    %c0_34 = arith.constant 0 : index
    %c0_35 = arith.constant 0 : index
    %44 = vector.load %arg2[%c6, %c0_34, %c0_35] : memref<9x32x64xbf16, #tpu.memory_space<vmem>>, vector<1x32x64xbf16>
    %45 = vector.shape_cast %44 : vector<1x32x64xbf16> to vector<32x64xbf16>
    %cst_36 = arith.constant dense<0.000000e+00> : vector<97x64xf32>
    %46 = tpu.matmul %43, %45, %cst_36 {dimension_numbers = #tpu.dot_dimension_numbers<[1], [0], [0], [1], [0, 0, 1, 1], [], []>} : vector<97x32xbf16>, vector<32x64xbf16>, vector<97x64xf32> -> vector<97x64xf32>
    %47 = arith.addf %40, %46 : vector<97x64xf32>
    %c0_37 = arith.constant 0 : index
    %c23 = arith.constant 23 : index
    %c0_38 = arith.constant 0 : index
    %48 = vector.load %arg1[%c0_37, %c23, %c0_38] : memref<1x121x32xf32, #tpu.memory_space<vmem>>, vector<1x97x32xf32>
    %49 = vector.shape_cast %48 : vector<1x97x32xf32> to vector<97x32xf32>
    %50 = arith.truncf %49 : vector<97x32xf32> to vector<97x32xbf16>
    %c7 = arith.constant 7 : index
    %c0_39 = arith.constant 0 : index
    %c0_40 = arith.constant 0 : index
    %51 = vector.load %arg2[%c7, %c0_39, %c0_40] : memref<9x32x64xbf16, #tpu.memory_space<vmem>>, vector<1x32x64xbf16>
    %52 = vector.shape_cast %51 : vector<1x32x64xbf16> to vector<32x64xbf16>
    %cst_41 = arith.constant dense<0.000000e+00> : vector<97x64xf32>
    %53 = tpu.matmul %50, %52, %cst_41 {dimension_numbers = #tpu.dot_dimension_numbers<[1], [0], [0], [1], [0, 0, 1, 1], [], []>} : vector<97x32xbf16>, vector<32x64xbf16>, vector<97x64xf32> -> vector<97x64xf32>
    %54 = arith.addf %47, %53 : vector<97x64xf32>
    %c0_42 = arith.constant 0 : index
    %c24 = arith.constant 24 : index
    %c0_43 = arith.constant 0 : index
    %55 = vector.load %arg1[%c0_42, %c24, %c0_43] : memref<1x121x32xf32, #tpu.memory_space<vmem>>, vector<1x97x32xf32>
    %56 = vector.shape_cast %55 : vector<1x97x32xf32> to vector<97x32xf32>
    %57 = arith.truncf %56 : vector<97x32xf32> to vector<97x32xbf16>
    %c8 = arith.constant 8 : index
    %c0_44 = arith.constant 0 : index
    %c0_45 = arith.constant 0 : index
    %58 = vector.load %arg2[%c8, %c0_44, %c0_45] : memref<9x32x64xbf16, #tpu.memory_space<vmem>>, vector<1x32x64xbf16>
    %59 = vector.shape_cast %58 : vector<1x32x64xbf16> to vector<32x64xbf16>
    %cst_46 = arith.constant dense<0.000000e+00> : vector<97x64xf32>
    %60 = tpu.matmul %57, %59, %cst_46 {dimension_numbers = #tpu.dot_dimension_numbers<[1], [0], [0], [1], [0, 0, 1, 1], [], []>} : vector<97x32xbf16>, vector<32x64xbf16>, vector<97x64xf32> -> vector<97x64xf32>
    %61 = arith.addf %54, %60 : vector<97x64xf32>
    %c0_47 = arith.constant 0 : index
    %c0_48 = arith.constant 0 : index
    %62 = vector.load %arg3[%c0_47, %c0_48] : memref<1x64xf32, #tpu.memory_space<vmem>>, vector<1x64xf32>
    %63 = vector.broadcast %62 : vector<1x64xf32> to vector<97x64xf32>
    %64 = arith.addf %61, %63 : vector<97x64xf32>
    %cst_49 = arith.constant 0.000000e+00 : f32
    %65 = vector.broadcast %cst_49 : f32 to vector<97x64xf32>
    %66 = arith.maximumf %64, %65 : vector<97x64xf32>
    %c0_50 = arith.constant 0 : index
    %c0_51 = arith.constant 0 : index
    %67 = vector.load %arg5[%c0_50, %c0_51] : memref<97x64xf32, #tpu.memory_space<vmem>>, vector<97x64xf32>
    tpu.vector_store %arg5[%c0_50, %c0_51], %66 {strides = array<i32>} : memref<97x64xf32, #tpu.memory_space<vmem>>, vector<97x64xf32>,
    %c0_52 = arith.constant 0 : index
    %c0_53 = arith.constant 0 : index
    %68 = vector.load %arg5[%c0_52, %c0_53] : memref<97x64xf32, #tpu.memory_space<vmem>>, vector<85x64xf32>
    %c1_54 = arith.constant 1 : index
    %c0_55 = arith.constant 0 : index
    %69 = vector.load %arg5[%c1_54, %c0_55] : memref<97x64xf32, #tpu.memory_space<vmem>>, vector<85x64xf32>
    %70 = arith.maximumf %68, %69 : vector<85x64xf32>
    %c11_56 = arith.constant 11 : index
    %c0_57 = arith.constant 0 : index
    %71 = vector.load %arg5[%c11_56, %c0_57] : memref<97x64xf32, #tpu.memory_space<vmem>>, vector<85x64xf32>
    %c12_58 = arith.constant 12 : index
    %c0_59 = arith.constant 0 : index
    %72 = vector.load %arg5[%c12_58, %c0_59] : memref<97x64xf32, #tpu.memory_space<vmem>>, vector<85x64xf32>
    %73 = arith.maximumf %71, %72 : vector<85x64xf32>
    %74 = arith.maximumf %70, %73 : vector<85x64xf32>
    %c0_60 = arith.constant 0 : index
    %c0_61 = arith.constant 0 : index
    %c0_62 = arith.constant 0 : index
    %75 = vector.load %arg4[%c0_60, %c0_61, %c0_62] : memref<1x85x64xf32, #tpu.memory_space<vmem>>, vector<1x85x64xf32>
    %76 = vector.shape_cast %75 : vector<1x85x64xf32> to vector<85x64xf32>
    %77 = vector.shape_cast %74 : vector<85x64xf32> to vector<1x85x64xf32>
    tpu.vector_store %arg4[%c0_60, %c0_61, %c0_62], %77 {strides = array<i32>} : memref<1x85x64xf32, #tpu.memory_space<vmem>>, vector<1x85x64xf32>,
    return
  }
  func.func @transform_0(%arg0: i32) -> (i32, i32, i32) {
    %c0_i32 = arith.constant 0 : i32
    %c0_i32_0 = arith.constant 0 : i32
    %c0_i32_1 = arith.constant 0 : i32
    return %arg0, %c0_i32, %c0_i32_0 : i32, i32, i32
  }
  func.func @transform_1(%arg0: i32) -> (i32, i32, i32) {
    %c0_i32 = arith.constant 0 : i32
    %c0_i32_0 = arith.constant 0 : i32
    %c0_i32_1 = arith.constant 0 : i32
    %c0_i32_2 = arith.constant 0 : i32
    return %c0_i32, %c0_i32_0, %c0_i32_1 : i32, i32, i32
  }
  func.func @transform_2(%arg0: i32) -> (i32, i32) {
    %c0_i32 = arith.constant 0 : i32
    %c0_i32_0 = arith.constant 0 : i32
    %c0_i32_1 = arith.constant 0 : i32
    return %c0_i32, %c0_i32_0 : i32, i32
  }
  func.func @transform_3(%arg0: i32) -> (i32, i32, i32) {
    %c0_i32 = arith.constant 0 : i32
    %c0_i32_0 = arith.constant 0 : i32
    %c0_i32_1 = arith.constant 0 : i32
    return %arg0, %c0_i32, %c0_i32_0 : i32, i32, i32
  }
}

module attributes {stable_mosaic.version = 11 : i64} {
  func.func @_lstm_input_proj_kernel(%arg0: memref<8x128xf32, #tpu.memory_space<vmem>>, %arg1: memref<128x512xbf16, #tpu.memory_space<vmem>>, %arg2: memref<8x1xf32, #tpu.memory_space<vmem>>, %arg3: memref<1x512xf32, #tpu.memory_space<vmem>>, %arg4: memref<1x512xf32, #tpu.memory_space<vmem>>, %arg5: memref<8x512xf32, #tpu.memory_space<vmem>>) attributes {dimension_semantics = [], scalar_prefetch = 0 : i64, scratch_operands = 0 : i64, tpu.core_type = #tpu.core_type<tc>} {
    %c0 = arith.constant 0 : index
    %c0_0 = arith.constant 0 : index
    %0 = vector.load %arg0[%c0, %c0_0] : memref<8x128xf32, #tpu.memory_space<vmem>>, vector<8x128xf32>
    %1 = arith.truncf %0 : vector<8x128xf32> to vector<8x128xbf16>
    %c0_1 = arith.constant 0 : index
    %c0_2 = arith.constant 0 : index
    %2 = vector.load %arg1[%c0_1, %c0_2] : memref<128x512xbf16, #tpu.memory_space<vmem>>, vector<128x512xbf16>
    %cst = arith.constant dense<0.000000e+00> : vector<8x512xf32>
    %3 = tpu.matmul %1, %2, %cst {dimension_numbers = #tpu.dot_dimension_numbers<[1], [0], [0], [1], [0, 0, 1, 1], [], []>} : vector<8x128xbf16>, vector<128x512xbf16>, vector<8x512xf32> -> vector<8x512xf32>
    %c0_3 = arith.constant 0 : index
    %c0_4 = arith.constant 0 : index
    %4 = vector.load %arg2[%c0_3, %c0_4] : memref<8x1xf32, #tpu.memory_space<vmem>>, vector<8x1xf32>
    %c0_5 = arith.constant 0 : index
    %c0_6 = arith.constant 0 : index
    %5 = vector.load %arg3[%c0_5, %c0_6] : memref<1x512xf32, #tpu.memory_space<vmem>>, vector<1x512xf32>
    %6 = vector.broadcast %4 : vector<8x1xf32> to vector<8x512xf32>
    %7 = vector.broadcast %5 : vector<1x512xf32> to vector<8x512xf32>
    %8 = arith.mulf %6, %7 : vector<8x512xf32>
    %9 = arith.addf %3, %8 : vector<8x512xf32>
    %c0_7 = arith.constant 0 : index
    %c0_8 = arith.constant 0 : index
    %10 = vector.load %arg4[%c0_7, %c0_8] : memref<1x512xf32, #tpu.memory_space<vmem>>, vector<1x512xf32>
    %11 = vector.broadcast %10 : vector<1x512xf32> to vector<8x512xf32>
    %12 = arith.addf %9, %11 : vector<8x512xf32>
    %c0_9 = arith.constant 0 : index
    %c0_10 = arith.constant 0 : index
    %13 = vector.load %arg5[%c0_9, %c0_10] : memref<8x512xf32, #tpu.memory_space<vmem>>, vector<8x512xf32>
    tpu.vector_store %arg5[%c0_9, %c0_10], %12 {strides = array<i32>} : memref<8x512xf32, #tpu.memory_space<vmem>>, vector<8x512xf32>,
    return
  }
}

module attributes {stable_mosaic.version = 11 : i64} {
  func.func @_conv_relu_pool_kernel(%arg0: i32, %arg1: memref<1x16x64xf32, #tpu.memory_space<vmem>>, %arg2: memref<9x64x128xbf16, #tpu.memory_space<vmem>>, %arg3: memref<1x128xf32, #tpu.memory_space<vmem>>, %arg4: memref<1x1x128xf32, #tpu.memory_space<vmem>>, %arg5: memref<6x128xf32, #tpu.memory_space<vmem>>) attributes {dimension_semantics = [#tpu.dimension_semantics<parallel>], iteration_bounds = array<i64: 8>, scalar_prefetch = 0 : i64, scratch_operands = 1 : i64, tpu.core_type = #tpu.core_type<tc>, window_params = [{transform_indices = @transform_0, window_bounds = array<i64: 1, 16, 64>}, {pipeline_mode = #tpu.pipeline_mode<synchronous>, transform_indices = @transform_1, window_bounds = array<i64: 9, 64, 128>}, {pipeline_mode = #tpu.pipeline_mode<synchronous>, transform_indices = @transform_2, window_bounds = array<i64: 1, 128>}, {transform_indices = @transform_3, window_bounds = array<i64: 1, 1, 128>}]} {
    %c0 = arith.constant 0 : index
    %c0_0 = arith.constant 0 : index
    %c0_1 = arith.constant 0 : index
    %0 = vector.load %arg1[%c0, %c0_0, %c0_1] : memref<1x16x64xf32, #tpu.memory_space<vmem>>, vector<1x6x64xf32>
    %1 = vector.shape_cast %0 : vector<1x6x64xf32> to vector<6x64xf32>
    %2 = arith.truncf %1 : vector<6x64xf32> to vector<6x64xbf16>
    %c0_2 = arith.constant 0 : index
    %c0_3 = arith.constant 0 : index
    %c0_4 = arith.constant 0 : index
    %3 = vector.load %arg2[%c0_2, %c0_3, %c0_4] : memref<9x64x128xbf16, #tpu.memory_space<vmem>>, vector<1x64x128xbf16>
    %4 = vector.shape_cast %3 : vector<1x64x128xbf16> to vector<64x128xbf16>
    %cst = arith.constant dense<0.000000e+00> : vector<6x128xf32>
    %5 = tpu.matmul %2, %4, %cst {dimension_numbers = #tpu.dot_dimension_numbers<[1], [0], [0], [1], [0, 0, 1, 1], [], []>} : vector<6x64xbf16>, vector<64x128xbf16>, vector<6x128xf32> -> vector<6x128xf32>
    %c0_5 = arith.constant 0 : index
    %c1 = arith.constant 1 : index
    %c0_6 = arith.constant 0 : index
    %6 = vector.load %arg1[%c0_5, %c1, %c0_6] : memref<1x16x64xf32, #tpu.memory_space<vmem>>, vector<1x6x64xf32>
    %7 = vector.shape_cast %6 : vector<1x6x64xf32> to vector<6x64xf32>
    %8 = arith.truncf %7 : vector<6x64xf32> to vector<6x64xbf16>
    %c1_7 = arith.constant 1 : index
    %c0_8 = arith.constant 0 : index
    %c0_9 = arith.constant 0 : index
    %9 = vector.load %arg2[%c1_7, %c0_8, %c0_9] : memref<9x64x128xbf16, #tpu.memory_space<vmem>>, vector<1x64x128xbf16>
    %10 = vector.shape_cast %9 : vector<1x64x128xbf16> to vector<64x128xbf16>
    %cst_10 = arith.constant dense<0.000000e+00> : vector<6x128xf32>
    %11 = tpu.matmul %8, %10, %cst_10 {dimension_numbers = #tpu.dot_dimension_numbers<[1], [0], [0], [1], [0, 0, 1, 1], [], []>} : vector<6x64xbf16>, vector<64x128xbf16>, vector<6x128xf32> -> vector<6x128xf32>
    %12 = arith.addf %5, %11 : vector<6x128xf32>
    %c0_11 = arith.constant 0 : index
    %c2 = arith.constant 2 : index
    %c0_12 = arith.constant 0 : index
    %13 = vector.load %arg1[%c0_11, %c2, %c0_12] : memref<1x16x64xf32, #tpu.memory_space<vmem>>, vector<1x6x64xf32>
    %14 = vector.shape_cast %13 : vector<1x6x64xf32> to vector<6x64xf32>
    %15 = arith.truncf %14 : vector<6x64xf32> to vector<6x64xbf16>
    %c2_13 = arith.constant 2 : index
    %c0_14 = arith.constant 0 : index
    %c0_15 = arith.constant 0 : index
    %16 = vector.load %arg2[%c2_13, %c0_14, %c0_15] : memref<9x64x128xbf16, #tpu.memory_space<vmem>>, vector<1x64x128xbf16>
    %17 = vector.shape_cast %16 : vector<1x64x128xbf16> to vector<64x128xbf16>
    %cst_16 = arith.constant dense<0.000000e+00> : vector<6x128xf32>
    %18 = tpu.matmul %15, %17, %cst_16 {dimension_numbers = #tpu.dot_dimension_numbers<[1], [0], [0], [1], [0, 0, 1, 1], [], []>} : vector<6x64xbf16>, vector<64x128xbf16>, vector<6x128xf32> -> vector<6x128xf32>
    %19 = arith.addf %12, %18 : vector<6x128xf32>
    %c0_17 = arith.constant 0 : index
    %c4 = arith.constant 4 : index
    %c0_18 = arith.constant 0 : index
    %20 = vector.load %arg1[%c0_17, %c4, %c0_18] : memref<1x16x64xf32, #tpu.memory_space<vmem>>, vector<1x6x64xf32>
    %21 = vector.shape_cast %20 : vector<1x6x64xf32> to vector<6x64xf32>
    %22 = arith.truncf %21 : vector<6x64xf32> to vector<6x64xbf16>
    %c3 = arith.constant 3 : index
    %c0_19 = arith.constant 0 : index
    %c0_20 = arith.constant 0 : index
    %23 = vector.load %arg2[%c3, %c0_19, %c0_20] : memref<9x64x128xbf16, #tpu.memory_space<vmem>>, vector<1x64x128xbf16>
    %24 = vector.shape_cast %23 : vector<1x64x128xbf16> to vector<64x128xbf16>
    %cst_21 = arith.constant dense<0.000000e+00> : vector<6x128xf32>
    %25 = tpu.matmul %22, %24, %cst_21 {dimension_numbers = #tpu.dot_dimension_numbers<[1], [0], [0], [1], [0, 0, 1, 1], [], []>} : vector<6x64xbf16>, vector<64x128xbf16>, vector<6x128xf32> -> vector<6x128xf32>
    %26 = arith.addf %19, %25 : vector<6x128xf32>
    %c0_22 = arith.constant 0 : index
    %c5 = arith.constant 5 : index
    %c0_23 = arith.constant 0 : index
    %27 = vector.load %arg1[%c0_22, %c5, %c0_23] : memref<1x16x64xf32, #tpu.memory_space<vmem>>, vector<1x6x64xf32>
    %28 = vector.shape_cast %27 : vector<1x6x64xf32> to vector<6x64xf32>
    %29 = arith.truncf %28 : vector<6x64xf32> to vector<6x64xbf16>
    %c4_24 = arith.constant 4 : index
    %c0_25 = arith.constant 0 : index
    %c0_26 = arith.constant 0 : index
    %30 = vector.load %arg2[%c4_24, %c0_25, %c0_26] : memref<9x64x128xbf16, #tpu.memory_space<vmem>>, vector<1x64x128xbf16>
    %31 = vector.shape_cast %30 : vector<1x64x128xbf16> to vector<64x128xbf16>
    %cst_27 = arith.constant dense<0.000000e+00> : vector<6x128xf32>
    %32 = tpu.matmul %29, %31, %cst_27 {dimension_numbers = #tpu.dot_dimension_numbers<[1], [0], [0], [1], [0, 0, 1, 1], [], []>} : vector<6x64xbf16>, vector<64x128xbf16>, vector<6x128xf32> -> vector<6x128xf32>
    %33 = arith.addf %26, %32 : vector<6x128xf32>
    %c0_28 = arith.constant 0 : index
    %c6 = arith.constant 6 : index
    %c0_29 = arith.constant 0 : index
    %34 = vector.load %arg1[%c0_28, %c6, %c0_29] : memref<1x16x64xf32, #tpu.memory_space<vmem>>, vector<1x6x64xf32>
    %35 = vector.shape_cast %34 : vector<1x6x64xf32> to vector<6x64xf32>
    %36 = arith.truncf %35 : vector<6x64xf32> to vector<6x64xbf16>
    %c5_30 = arith.constant 5 : index
    %c0_31 = arith.constant 0 : index
    %c0_32 = arith.constant 0 : index
    %37 = vector.load %arg2[%c5_30, %c0_31, %c0_32] : memref<9x64x128xbf16, #tpu.memory_space<vmem>>, vector<1x64x128xbf16>
    %38 = vector.shape_cast %37 : vector<1x64x128xbf16> to vector<64x128xbf16>
    %cst_33 = arith.constant dense<0.000000e+00> : vector<6x128xf32>
    %39 = tpu.matmul %36, %38, %cst_33 {dimension_numbers = #tpu.dot_dimension_numbers<[1], [0], [0], [1], [0, 0, 1, 1], [], []>} : vector<6x64xbf16>, vector<64x128xbf16>, vector<6x128xf32> -> vector<6x128xf32>
    %40 = arith.addf %33, %39 : vector<6x128xf32>
    %c0_34 = arith.constant 0 : index
    %c8 = arith.constant 8 : index
    %c0_35 = arith.constant 0 : index
    %41 = vector.load %arg1[%c0_34, %c8, %c0_35] : memref<1x16x64xf32, #tpu.memory_space<vmem>>, vector<1x6x64xf32>
    %42 = vector.shape_cast %41 : vector<1x6x64xf32> to vector<6x64xf32>
    %43 = arith.truncf %42 : vector<6x64xf32> to vector<6x64xbf16>
    %c6_36 = arith.constant 6 : index
    %c0_37 = arith.constant 0 : index
    %c0_38 = arith.constant 0 : index
    %44 = vector.load %arg2[%c6_36, %c0_37, %c0_38] : memref<9x64x128xbf16, #tpu.memory_space<vmem>>, vector<1x64x128xbf16>
    %45 = vector.shape_cast %44 : vector<1x64x128xbf16> to vector<64x128xbf16>
    %cst_39 = arith.constant dense<0.000000e+00> : vector<6x128xf32>
    %46 = tpu.matmul %43, %45, %cst_39 {dimension_numbers = #tpu.dot_dimension_numbers<[1], [0], [0], [1], [0, 0, 1, 1], [], []>} : vector<6x64xbf16>, vector<64x128xbf16>, vector<6x128xf32> -> vector<6x128xf32>
    %47 = arith.addf %40, %46 : vector<6x128xf32>
    %c0_40 = arith.constant 0 : index
    %c9 = arith.constant 9 : index
    %c0_41 = arith.constant 0 : index
    %48 = vector.load %arg1[%c0_40, %c9, %c0_41] : memref<1x16x64xf32, #tpu.memory_space<vmem>>, vector<1x6x64xf32>
    %49 = vector.shape_cast %48 : vector<1x6x64xf32> to vector<6x64xf32>
    %50 = arith.truncf %49 : vector<6x64xf32> to vector<6x64xbf16>
    %c7 = arith.constant 7 : index
    %c0_42 = arith.constant 0 : index
    %c0_43 = arith.constant 0 : index
    %51 = vector.load %arg2[%c7, %c0_42, %c0_43] : memref<9x64x128xbf16, #tpu.memory_space<vmem>>, vector<1x64x128xbf16>
    %52 = vector.shape_cast %51 : vector<1x64x128xbf16> to vector<64x128xbf16>
    %cst_44 = arith.constant dense<0.000000e+00> : vector<6x128xf32>
    %53 = tpu.matmul %50, %52, %cst_44 {dimension_numbers = #tpu.dot_dimension_numbers<[1], [0], [0], [1], [0, 0, 1, 1], [], []>} : vector<6x64xbf16>, vector<64x128xbf16>, vector<6x128xf32> -> vector<6x128xf32>
    %54 = arith.addf %47, %53 : vector<6x128xf32>
    %c0_45 = arith.constant 0 : index
    %c10 = arith.constant 10 : index
    %c0_46 = arith.constant 0 : index
    %55 = vector.load %arg1[%c0_45, %c10, %c0_46] : memref<1x16x64xf32, #tpu.memory_space<vmem>>, vector<1x6x64xf32>
    %56 = vector.shape_cast %55 : vector<1x6x64xf32> to vector<6x64xf32>
    %57 = arith.truncf %56 : vector<6x64xf32> to vector<6x64xbf16>
    %c8_47 = arith.constant 8 : index
    %c0_48 = arith.constant 0 : index
    %c0_49 = arith.constant 0 : index
    %58 = vector.load %arg2[%c8_47, %c0_48, %c0_49] : memref<9x64x128xbf16, #tpu.memory_space<vmem>>, vector<1x64x128xbf16>
    %59 = vector.shape_cast %58 : vector<1x64x128xbf16> to vector<64x128xbf16>
    %cst_50 = arith.constant dense<0.000000e+00> : vector<6x128xf32>
    %60 = tpu.matmul %57, %59, %cst_50 {dimension_numbers = #tpu.dot_dimension_numbers<[1], [0], [0], [1], [0, 0, 1, 1], [], []>} : vector<6x64xbf16>, vector<64x128xbf16>, vector<6x128xf32> -> vector<6x128xf32>
    %61 = arith.addf %54, %60 : vector<6x128xf32>
    %c0_51 = arith.constant 0 : index
    %c0_52 = arith.constant 0 : index
    %62 = vector.load %arg3[%c0_51, %c0_52] : memref<1x128xf32, #tpu.memory_space<vmem>>, vector<1x128xf32>
    %63 = vector.broadcast %62 : vector<1x128xf32> to vector<6x128xf32>
    %64 = arith.addf %61, %63 : vector<6x128xf32>
    %cst_53 = arith.constant 0.000000e+00 : f32
    %65 = vector.broadcast %cst_53 : f32 to vector<6x128xf32>
    %66 = arith.maximumf %64, %65 : vector<6x128xf32>
    %c0_54 = arith.constant 0 : index
    %c0_55 = arith.constant 0 : index
    %67 = vector.load %arg5[%c0_54, %c0_55] : memref<6x128xf32, #tpu.memory_space<vmem>>, vector<6x128xf32>
    tpu.vector_store %arg5[%c0_54, %c0_55], %66 {strides = array<i32>} : memref<6x128xf32, #tpu.memory_space<vmem>>, vector<6x128xf32>,
    %c0_56 = arith.constant 0 : index
    %c0_57 = arith.constant 0 : index
    %68 = vector.load %arg5[%c0_56, %c0_57] : memref<6x128xf32, #tpu.memory_space<vmem>>, vector<1x128xf32>
    %c1_58 = arith.constant 1 : index
    %c0_59 = arith.constant 0 : index
    %69 = vector.load %arg5[%c1_58, %c0_59] : memref<6x128xf32, #tpu.memory_space<vmem>>, vector<1x128xf32>
    %70 = arith.maximumf %68, %69 : vector<1x128xf32>
    %c4_60 = arith.constant 4 : index
    %c0_61 = arith.constant 0 : index
    %71 = vector.load %arg5[%c4_60, %c0_61] : memref<6x128xf32, #tpu.memory_space<vmem>>, vector<1x128xf32>
    %c5_62 = arith.constant 5 : index
    %c0_63 = arith.constant 0 : index
    %72 = vector.load %arg5[%c5_62, %c0_63] : memref<6x128xf32, #tpu.memory_space<vmem>>, vector<1x128xf32>
    %73 = arith.maximumf %71, %72 : vector<1x128xf32>
    %74 = arith.maximumf %70, %73 : vector<1x128xf32>
    %c0_64 = arith.constant 0 : index
    %c0_65 = arith.constant 0 : index
    %c0_66 = arith.constant 0 : index
    %75 = vector.load %arg4[%c0_64, %c0_65, %c0_66] : memref<1x1x128xf32, #tpu.memory_space<vmem>>, vector<1x1x128xf32>
    %76 = vector.shape_cast %75 : vector<1x1x128xf32> to vector<1x128xf32>
    %77 = vector.shape_cast %74 : vector<1x128xf32> to vector<1x1x128xf32>
    tpu.vector_store %arg4[%c0_64, %c0_65, %c0_66], %77 {strides = array<i32>} : memref<1x1x128xf32, #tpu.memory_space<vmem>>, vector<1x1x128xf32>,
    return
  }
  func.func @transform_0(%arg0: i32) -> (i32, i32, i32) {
    %c0_i32 = arith.constant 0 : i32
    %c0_i32_0 = arith.constant 0 : i32
    %c0_i32_1 = arith.constant 0 : i32
    return %arg0, %c0_i32, %c0_i32_0 : i32, i32, i32
  }
  func.func @transform_1(%arg0: i32) -> (i32, i32, i32) {
    %c0_i32 = arith.constant 0 : i32
    %c0_i32_0 = arith.constant 0 : i32
    %c0_i32_1 = arith.constant 0 : i32
    %c0_i32_2 = arith.constant 0 : i32
    return %c0_i32, %c0_i32_0, %c0_i32_1 : i32, i32, i32
  }
  func.func @transform_2(%arg0: i32) -> (i32, i32) {
    %c0_i32 = arith.constant 0 : i32
    %c0_i32_0 = arith.constant 0 : i32
    %c0_i32_1 = arith.constant 0 : i32
    return %c0_i32, %c0_i32_0 : i32, i32
  }
  func.func @transform_3(%arg0: i32) -> (i32, i32, i32) {
    %c0_i32 = arith.constant 0 : i32
    %c0_i32_0 = arith.constant 0 : i32
    %c0_i32_1 = arith.constant 0 : i32
    return %arg0, %c0_i32, %c0_i32_0 : i32, i32, i32
  }
}

module attributes {stable_mosaic.version = 11 : i64} {
  func.func @_lstm_fc_kernel(%arg0: i32, %arg1: memref<1x2x512xf32, #tpu.memory_space<vmem>>, %arg2: memref<128x512xbf16, #tpu.memory_space<vmem>>, %arg3: memref<128x64xbf16, #tpu.memory_space<vmem>>, %arg4: memref<1x64xf32, #tpu.memory_space<vmem>>, %arg5: memref<1x64xf32, #tpu.memory_space<vmem>>, %arg6: memref<1x1xf32, #tpu.memory_space<vmem>>, %arg7: memref<2x1xf32, #tpu.memory_space<vmem>>, %arg8: memref<2x128xf32, #tpu.memory_space<vmem>>, %arg9: memref<2x128xf32, #tpu.memory_space<vmem>>) attributes {dimension_semantics = [#tpu.dimension_semantics<arbitrary>], iteration_bounds = array<i64: 4>, scalar_prefetch = 0 : i64, scratch_operands = 2 : i64, tpu.core_type = #tpu.core_type<tc>, window_params = [{transform_indices = @transform_0, window_bounds = array<i64: 1, 2, 512>}, {pipeline_mode = #tpu.pipeline_mode<synchronous>, transform_indices = @transform_1, window_bounds = array<i64: 128, 512>}, {pipeline_mode = #tpu.pipeline_mode<synchronous>, transform_indices = @transform_2, window_bounds = array<i64: 128, 64>}, {pipeline_mode = #tpu.pipeline_mode<synchronous>, transform_indices = @transform_3, window_bounds = array<i64: 1, 64>}, {pipeline_mode = #tpu.pipeline_mode<synchronous>, transform_indices = @transform_4, window_bounds = array<i64: 1, 64>}, {pipeline_mode = #tpu.pipeline_mode<synchronous>, transform_indices = @transform_5, window_bounds = array<i64: 1, 1>}, {pipeline_mode = #tpu.pipeline_mode<synchronous>, transform_indices = @transform_6, window_bounds = array<i64: 2, 1>}]} {
    %c0_i32 = arith.constant 0 : i32
    %0 = arith.cmpi eq, %arg0, %c0_i32 : i32
    %1 = arith.extui %0 : i1 to i32
    %c0_i32_0 = arith.constant 0 : i32
    %2 = arith.cmpi ne, %1, %c0_i32_0 : i32
    scf.if %2 {
      %cst_17 = arith.constant 0.000000e+00 : f32
      %41 = vector.broadcast %cst_17 : f32 to vector<2x128xf32>
      %c0_18 = arith.constant 0 : index
      %c0_19 = arith.constant 0 : index
      %42 = vector.load %arg8[%c0_18, %c0_19] : memref<2x128xf32, #tpu.memory_space<vmem>>, vector<2x128xf32>
      tpu.vector_store %arg8[%c0_18, %c0_19], %41 {strides = array<i32>} : memref<2x128xf32, #tpu.memory_space<vmem>>, vector<2x128xf32>,
      %cst_20 = arith.constant 0.000000e+00 : f32
      %43 = vector.broadcast %cst_20 : f32 to vector<2x128xf32>
      %c0_21 = arith.constant 0 : index
      %c0_22 = arith.constant 0 : index
      %44 = vector.load %arg9[%c0_21, %c0_22] : memref<2x128xf32, #tpu.memory_space<vmem>>, vector<2x128xf32>
      tpu.vector_store %arg9[%c0_21, %c0_22], %43 {strides = array<i32>} : memref<2x128xf32, #tpu.memory_space<vmem>>, vector<2x128xf32>,
    } else {
    }
    %c0 = arith.constant 0 : index
    %c0_1 = arith.constant 0 : index
    %c0_2 = arith.constant 0 : index
    %3 = vector.load %arg1[%c0, %c0_1, %c0_2] : memref<1x2x512xf32, #tpu.memory_space<vmem>>, vector<1x2x512xf32>
    %4 = vector.shape_cast %3 : vector<1x2x512xf32> to vector<2x512xf32>
    %c0_3 = arith.constant 0 : index
    %c0_4 = arith.constant 0 : index
    %5 = vector.load %arg8[%c0_3, %c0_4] : memref<2x128xf32, #tpu.memory_space<vmem>>, vector<2x128xf32>
    %6 = arith.truncf %5 : vector<2x128xf32> to vector<2x128xbf16>
    %c0_5 = arith.constant 0 : index
    %c0_6 = arith.constant 0 : index
    %7 = vector.load %arg2[%c0_5, %c0_6] : memref<128x512xbf16, #tpu.memory_space<vmem>>, vector<128x512xbf16>
    %cst = arith.constant dense<0.000000e+00> : vector<2x512xf32>
    %8 = tpu.matmul %6, %7, %cst {dimension_numbers = #tpu.dot_dimension_numbers<[1], [0], [0], [1], [0, 0, 1, 1], [], []>} : vector<2x128xbf16>, vector<128x512xbf16>, vector<2x512xf32> -> vector<2x512xf32>
    %9 = arith.addf %4, %8 : vector<2x512xf32>
    %10 = vector.extract_strided_slice %9 {offsets = [0, 0], sizes = [2, 128], strides = [1, 1]} : vector<2x512xf32> to vector<2x128xf32>
    %11 = arith.negf %10 : vector<2x128xf32>
    %12 = math.exp %11 : vector<2x128xf32>
    %cst_7 = arith.constant 1.000000e+00 : f32
    %13 = vector.broadcast %cst_7 : f32 to vector<2x128xf32>
    %14 = arith.addf %13, %12 : vector<2x128xf32>
    %15 = arith.divf %13, %14 : vector<2x128xf32>
    %16 = vector.extract_strided_slice %9 {offsets = [0, 128], sizes = [2, 128], strides = [1, 1]} : vector<2x512xf32> to vector<2x128xf32>
    %17 = arith.negf %16 : vector<2x128xf32>
    %18 = math.exp %17 : vector<2x128xf32>
    %cst_8 = arith.constant 1.000000e+00 : f32
    %19 = vector.broadcast %cst_8 : f32 to vector<2x128xf32>
    %20 = arith.addf %19, %18 : vector<2x128xf32>
    %21 = arith.divf %19, %20 : vector<2x128xf32>
    %22 = vector.extract_strided_slice %9 {offsets = [0, 256], sizes = [2, 128], strides = [1, 1]} : vector<2x512xf32> to vector<2x128xf32>
    %23 = math.tanh %22 : vector<2x128xf32>
    %24 = vector.extract_strided_slice %9 {offsets = [0, 384], sizes = [2, 128], strides = [1, 1]} : vector<2x512xf32> to vector<2x128xf32>
    %25 = arith.negf %24 : vector<2x128xf32>
    %26 = math.exp %25 : vector<2x128xf32>
    %cst_9 = arith.constant 1.000000e+00 : f32
    %27 = vector.broadcast %cst_9 : f32 to vector<2x128xf32>
    %28 = arith.addf %27, %26 : vector<2x128xf32>
    %29 = arith.divf %27, %28 : vector<2x128xf32>
    %c0_10 = arith.constant 0 : index
    %c0_11 = arith.constant 0 : index
    %30 = vector.load %arg9[%c0_10, %c0_11] : memref<2x128xf32, #tpu.memory_space<vmem>>, vector<2x128xf32>
    %31 = arith.mulf %21, %30 : vector<2x128xf32>
    %32 = arith.mulf %15, %23 : vector<2x128xf32>
    %33 = arith.addf %31, %32 : vector<2x128xf32>
    %34 = math.tanh %33 : vector<2x128xf32>
    %35 = arith.mulf %29, %34 : vector<2x128xf32>
    %c0_12 = arith.constant 0 : index
    %c0_13 = arith.constant 0 : index
    %36 = vector.load %arg9[%c0_12, %c0_13] : memref<2x128xf32, #tpu.memory_space<vmem>>, vector<2x128xf32>
    tpu.vector_store %arg9[%c0_12, %c0_13], %33 {strides = array<i32>} : memref<2x128xf32, #tpu.memory_space<vmem>>, vector<2x128xf32>,
    %c0_14 = arith.constant 0 : index
    %c0_15 = arith.constant 0 : index
    %37 = vector.load %arg8[%c0_14, %c0_15] : memref<2x128xf32, #tpu.memory_space<vmem>>, vector<2x128xf32>
    tpu.vector_store %arg8[%c0_14, %c0_15], %35 {strides = array<i32>} : memref<2x128xf32, #tpu.memory_space<vmem>>, vector<2x128xf32>,
    %c3_i32 = arith.constant 3 : i32
    %38 = arith.cmpi eq, %arg0, %c3_i32 : i32
    %39 = arith.extui %38 : i1 to i32
    %c0_i32_16 = arith.constant 0 : i32
    %40 = arith.cmpi ne, %39, %c0_i32_16 : i32
    scf.if %40 {
      %41 = arith.truncf %35 : vector<2x128xf32> to vector<2x128xbf16>
      %c0_17 = arith.constant 0 : index
      %c0_18 = arith.constant 0 : index
      %42 = vector.load %arg3[%c0_17, %c0_18] : memref<128x64xbf16, #tpu.memory_space<vmem>>, vector<128x64xbf16>
      %cst_19 = arith.constant dense<0.000000e+00> : vector<2x64xf32>
      %43 = tpu.matmul %41, %42, %cst_19 {dimension_numbers = #tpu.dot_dimension_numbers<[1], [0], [0], [1], [0, 0, 1, 1], [], []>} : vector<2x128xbf16>, vector<128x64xbf16>, vector<2x64xf32> -> vector<2x64xf32>
      %c0_20 = arith.constant 0 : index
      %c0_21 = arith.constant 0 : index
      %44 = vector.load %arg4[%c0_20, %c0_21] : memref<1x64xf32, #tpu.memory_space<vmem>>, vector<1x64xf32>
      %45 = vector.broadcast %44 : vector<1x64xf32> to vector<2x64xf32>
      %46 = arith.addf %43, %45 : vector<2x64xf32>
      %cst_22 = arith.constant 0.000000e+00 : f32
      %47 = vector.broadcast %cst_22 : f32 to vector<2x64xf32>
      %48 = arith.maximumf %46, %47 : vector<2x64xf32>
      %c0_23 = arith.constant 0 : index
      %c0_24 = arith.constant 0 : index
      %49 = vector.load %arg5[%c0_23, %c0_24] : memref<1x64xf32, #tpu.memory_space<vmem>>, vector<1x64xf32>
      %50 = vector.broadcast %49 : vector<1x64xf32> to vector<2x64xf32>
      %51 = arith.mulf %48, %50 : vector<2x64xf32>
      %cst_25 = arith.constant dense<0.000000e+00> : vector<2xf32>
      %52 = vector.multi_reduction <add>, %51, %cst_25 [1] : vector<2x64xf32> to vector<2xf32>
      %53 = vector.shape_cast %52 : vector<2xf32> to vector<2x1xf32>
      %c0_26 = arith.constant 0 : index
      %c0_27 = arith.constant 0 : index
      %54 = vector.load %arg6[%c0_26, %c0_27] : memref<1x1xf32, #tpu.memory_space<vmem>>, vector<1x1xf32>
      %55 = vector.broadcast %54 : vector<1x1xf32> to vector<2x1xf32>
      %56 = arith.addf %53, %55 : vector<2x1xf32>
      %c0_28 = arith.constant 0 : index
      %c0_29 = arith.constant 0 : index
      %57 = vector.load %arg7[%c0_28, %c0_29] : memref<2x1xf32, #tpu.memory_space<vmem>>, vector<2x1xf32>
      tpu.vector_store %arg7[%c0_28, %c0_29], %56 {strides = array<i32>} : memref<2x1xf32, #tpu.memory_space<vmem>>, vector<2x1xf32>,
    } else {
    }
    return
  }
  func.func @transform_0(%arg0: i32) -> (i32, i32, i32) {
    %c0_i32 = arith.constant 0 : i32
    %c0_i32_0 = arith.constant 0 : i32
    %c0_i32_1 = arith.constant 0 : i32
    return %arg0, %c0_i32, %c0_i32_0 : i32, i32, i32
  }
  func.func @transform_1(%arg0: i32) -> (i32, i32) {
    %c0_i32 = arith.constant 0 : i32
    %c0_i32_0 = arith.constant 0 : i32
    %c0_i32_1 = arith.constant 0 : i32
    return %c0_i32, %c0_i32_0 : i32, i32
  }
  func.func @transform_2(%arg0: i32) -> (i32, i32) {
    %c0_i32 = arith.constant 0 : i32
    %c0_i32_0 = arith.constant 0 : i32
    %c0_i32_1 = arith.constant 0 : i32
    return %c0_i32, %c0_i32_0 : i32, i32
  }
  func.func @transform_3(%arg0: i32) -> (i32, i32) {
    %c0_i32 = arith.constant 0 : i32
    %c0_i32_0 = arith.constant 0 : i32
    %c0_i32_1 = arith.constant 0 : i32
    return %c0_i32, %c0_i32_0 : i32, i32
  }
  func.func @transform_4(%arg0: i32) -> (i32, i32) {
    %c0_i32 = arith.constant 0 : i32
    %c0_i32_0 = arith.constant 0 : i32
    %c0_i32_1 = arith.constant 0 : i32
    return %c0_i32, %c0_i32_0 : i32, i32
  }
  func.func @transform_5(%arg0: i32) -> (i32, i32) {
    %c0_i32 = arith.constant 0 : i32
    %c0_i32_0 = arith.constant 0 : i32
    %c0_i32_1 = arith.constant 0 : i32
    return %c0_i32, %c0_i32_0 : i32, i32
  }
  func.func @transform_6(%arg0: i32) -> (i32, i32) {
    %c0_i32 = arith.constant 0 : i32
    %c0_i32_0 = arith.constant 0 : i32
    %c0_i32_1 = arith.constant 0 : i32
    return %c0_i32, %c0_i32_0 : i32, i32
  }
}

</mosaic_0001>

<llo_original>
// kernel: cnn_lstm_forward.6
$region0: #{cnn_lstm_forward.6}
  #allocation0 [shape = 'u32[]', space=smem, size = 0x4, offset = 0x4, fixed_abs, tag = 'smem constant byte address 0x4 - core index']
  #allocation1 [shape = 'u32[144,128]{1,0:T(1,128)}', space=vmem, size = 0x12000, scoped, tag = 'internal scratch']
  #allocation2 [shape = 'f32[97,64]{1,0:T(8,128)}', space=vmem, size = 0xd000, scoped, tag = 'scratch operand']
  %s0 = inlined_call_operand.vmem [shape: f32[8,121,32], index: 0, kind: input, shape index: {}]
  %s1 = inlined_call_operand.vmem [shape: bf16[9,32,64], index: 1, kind: input, shape index: {}]
  %s2 = inlined_call_operand.vmem [shape: f32[1,64], index: 2, kind: input, shape index: {}]
  %s3 = inlined_call_operand.vmem [shape: f32[8,85,64], index: 3, kind: output, shape index: {}]
  %s4 = sld [smem:[#allocation0]]
  $region45: #{cnn_lstm_forward.6} parent=0
    _
  %s6 = ssub.s32 1, %s4
  %s7 = scalar_select 0, %s6, %s4
  loop: start=0, step=1, limit=10
  $region2: #{cnn_lstm_forward.6} parent=0 // loop_pre_header
    _
  $region3: #{cnn_lstm_forward.6} parent=0 // loop_header
    %s9 = sphi 0, %s13
    %p10 = scmp.ge.s32.totalorder %s9, 10
    %s19 = sphi 0, %s21
    %s22 = sphi 0, %s19
    %s23 = sphi 0, %s22
    %s39 = sphi 0, %s23
    %s43 = sphi 0, %s43
    %s45 = sphi 0, %s43
    %s46 = sphi 0, %s45
    %s60 = sphi 0, %s46
    %s64 = sphi 0, %s64
    %s66 = sphi 0, %s64
    %s67 = sphi 0, %s66
    %s81 = sphi 0, %s67
    %s87 = sphi 0, %s89
    %s90 = sphi 0, %s87
    %s91 = sphi 0, %s90
    %s107 = sphi 0, %s91
  $region4: #{cnn_lstm_forward.6} parent=0 // loop_header_branch
    %12 = sbr.rel (%p10) target = $region8
  $region5: #{cnn_lstm_forward.6} parent=0 // loop_body
    %s14 = ssub.s32 %s9, 1
    %s15 = ssub.s32 %s9, 2
    %s16 = sadd.s32 %s9, 1
    %s17 = ssub.s32 %s9, %s16
    %p18 = scmp.eq.s32.totalorder %s17, 0
    %s20 = sadd.s32 %s19, 1
    %s21 = scalar_select %p18, %s19, %s20
    %p24 = pneg %p18
    %p25 = scmp.eq.s32.totalorder %s9, 7
    %p26 = por %p24, %p25
    %p27 = scmp.ne.s32.totalorder %s19, %s22
    %p28 = scmp.eq.s32.totalorder %s9, 0
    %p29 = por %p27, %p28
    %p30 = scmp.ne.s32.totalorder %s19, %s22
    %p31 = scmp.eq.s32.totalorder %s14, 7
    %p32 = por %p30, %p31
    %p33 = scmp.ne.s32.totalorder %s22, %s23
    %p34 = scmp.eq.s32.totalorder %s14, 0
    %p35 = por %p33, %p34
    %p36 = scmp.ne.s32.totalorder %s22, %s23
    %p37 = scmp.eq.s32.totalorder %s15, 7
    %p38 = por %p36, %p37
    %p40 = scmp.ne.s32.totalorder %s23, %s39
    %p41 = scmp.eq.s32.totalorder %s15, 0
    %p42 = por %p40, %p41
    %s44 = sadd.s32 %s43, 1
    %p47 = scmp.eq.s32.totalorder %s9, 7
    %p48 = scmp.ne.s32.totalorder %s43, %s45
    %p49 = scmp.eq.s32.totalorder %s9, 0
    %p50 = por %p48, %p49
    %p51 = scmp.ne.s32.totalorder %s43, %s45
    %p52 = scmp.eq.s32.totalorder %s14, 7
    %p53 = por %p51, %p52
    %p54 = scmp.ne.s32.totalorder %s45, %s46
    %p55 = scmp.eq.s32.totalorder %s14, 0
    %p56 = por %p54, %p55
    %p57 = scmp.ne.s32.totalorder %s45, %s46
    %p58 = scmp.eq.s32.totalorder %s15, 7
    %p59 = por %p57, %p58
    %p61 = scmp.ne.s32.totalorder %s46, %s60
    %p62 = scmp.eq.s32.totalorder %s15, 0
    %p63 = por %p61, %p62
    %s65 = sadd.s32 %s64, 1
    %p68 = scmp.eq.s32.totalorder %s9, 7
    %p69 = scmp.ne.s32.totalorder %s64, %s66
    %p70 = scmp.eq.s32.totalorder %s9, 0
    %p71 = por %p69, %p70
    %p72 = scmp.ne.s32.totalorder %s64, %s66
    %p73 = scmp.eq.s32.totalorder %s14, 7
    %p74 = por %p72, %p73
    %p75 = scmp.ne.s32.totalorder %s66, %s67
    %p76 = scmp.eq.s32.totalorder %s14, 0
    %p77 = por %p75, %p76
    %p78 = scmp.ne.s32.totalorder %s66, %s67
    %p79 = scmp.eq.s32.totalorder %s15, 7
    %p80 = por %p78, %p79
    %p82 = scmp.ne.s32.totalorder %s67, %s81
    %p83 = scmp.eq.s32.totalorder %s15, 0
    %p84 = por %p82, %p83
    %s85 = ssub.s32 %s9, %s16
    %p86 = scmp.eq.s32.totalorder %s85, 0
    %s88 = sadd.s32 %s87, 1
    %s89 = scalar_select %p86, %s87, %s88
    %p92 = pneg %p86
    %p93 = scmp.eq.s32.totalorder %s9, 7
    %p94 = por %p92, %p93
    %p95 = scmp.ne.s32.totalorder %s87, %s90
    %p96 = scmp.eq.s32.totalorder %s9, 0
    %p97 = por %p95, %p96
    %p98 = scmp.ne.s32.totalorder %s87, %s90
    %p99 = scmp.eq.s32.totalorder %s14, 7
    %p100 = por %p98, %p99
    %p101 = scmp.ne.s32.totalorder %s90, %s91
    %p102 = scmp.eq.s32.totalorder %s14, 0
    %p103 = por %p101, %p102
    %p104 = scmp.ne.s32.totalorder %s90, %s91
    %p105 = scmp.eq.s32.totalorder %s15, 7
    %p106 = por %p104, %p105
    %p108 = scmp.ne.s32.totalorder %s91, %s107
    %p109 = scmp.eq.s32.totalorder %s15, 0
    %p110 = por %p108, %p109
    %p111 = scmp.le.s32.totalorder 1, %s9
    %p112 = scmp.lt.s32.totalorder %s9, 9
    %p113 = pnand %p111, %p112
    %p114 = pneg %p113
    // Predicated region
    $region9: #{cnn_lstm_forward.6} parent=5 // pred_check
      _
    $region10: #{cnn_lstm_forward.6} parent=5 // pred_check_branch
      %116 = sbr.rel (%p113) target = $region12
    $region11: #{cnn_lstm_forward.6} parent=5 // pred_region
      %s117 = ssub.s32 %s9, 1
      // Predicated region
      $region13: #{cnn_lstm_forward.6} parent=11 // pred_check
        %p118 = pneg %p56
      $region14: #{cnn_lstm_forward.6} parent=11 // pred_check_branch
        %120 = sbr.rel (%p118) target = $region16
      $region15: #{cnn_lstm_forward.6} parent=11 // pred_region
        _
      $region16: #{cnn_lstm_forward.6} parent=11 // pred_fallthru
        _
      // Predicated region
      $region17: #{cnn_lstm_forward.6} parent=11 // pred_check
        %p121 = pneg %p77
      $region18: #{cnn_lstm_forward.6} parent=11 // pred_check_branch
        %123 = sbr.rel (%p121) target = $region20
      $region19: #{cnn_lstm_forward.6} parent=11 // pred_region
        _
      $region20: #{cnn_lstm_forward.6} parent=11 // pred_fallthru
        _
    $region12: #{cnn_lstm_forward.6} parent=5 // pred_fallthru
      _
    %p124 = scmp.lt.s32.totalorder %s9, 8
    // Predicated region
    $region21: #{cnn_lstm_forward.6} parent=5 // pred_check
      %p125 = pneg %p124
    $region22: #{cnn_lstm_forward.6} parent=5 // pred_check_branch
      %127 = sbr.rel (%p125) target = $region24
    $region23: #{cnn_lstm_forward.6} parent=5 // pred_region
      // Predicated region
      $region25: #{cnn_lstm_forward.6} parent=23 // pred_check
        %p128 = pneg %p29
      $region26: #{cnn_lstm_forward.6} parent=23 // pred_check_branch
        %130 = sbr.rel (%p128) target = $region28
      $region27: #{cnn_lstm_forward.6} parent=23 // pred_region
        %p131 = scmp.lt.s32.totalorder %s9, 7
        %s132 = scalar_select %p131, %s9, 7
        %s133 = smul.addr %s132, 16
        %s134 = smul.addr %s133, 8
        %s135 = scalar_lea.vmem %s0, %s134
      $region28: #{cnn_lstm_forward.6} parent=23 // pred_fallthru
        _
    $region24: #{cnn_lstm_forward.6} parent=5 // pred_fallthru
      _
    %p136 = scmp.le.s32.totalorder 1, %s9
    %p137 = scmp.lt.s32.totalorder %s9, 9
    %p138 = pnand %p136, %p137
    %p139 = pneg %p138
    // Predicated region
    $region29: #{cnn_lstm_forward.6} parent=5 // pred_check
      _
    $region30: #{cnn_lstm_forward.6} parent=5 // pred_check_branch
      %141 = sbr.rel (%p138) target = $region32
    $region31: #{cnn_lstm_forward.6} parent=5 // pred_region
      %s142 = ssub.s32 %s9, 1
      %p143 = scmp.lt.s32.totalorder %s14, 7
      %s144 = scalar_select %p143, %s14, 7
      %s145 = smul.addr %s144, 16
      %s146 = smul.addr %s145, 8
      %s147 = scalar_lea.vmem %s0, %s146
      %p148 = pneg %p35
      %p149 = pneg %p32
      %p150 = pneg %p56
      %p151 = pneg %p53
      %p152 = pneg %p77
      %p153 = pneg %p74
      %p154 = pneg %p103
      %p155 = pneg %p100
      %p156 = scmp.lt.s32.totalorder %s14, 7
      %s157 = scalar_select %p156, %s14, 7
      %s158 = smul.addr %s157, 11
      %s159 = smul.addr %s158, 8
      %s160 = scalar_lea.vmem %s3, %s159
      %p161 = scmp.lt.s32.totalorder %s14, 7
      %s162 = scalar_select %p161, %s14, 7
      %s163 = smul.addr %s162, 16
      %s164 = smul.addr %s163, 8
      %s165 = scalar_lea.vmem %s0, %s164
      %p166 = scmp.lt.s32.totalorder %s14, 7
      %s167 = scalar_select %p166, %s14, 7
      %s168 = smul.addr %s167, 11
      %s169 = smul.addr %s168, 8
      %s170 = scalar_lea.vmem %s3, %s169
      %v172 = vld [vmem:[%s165] sm:$0xff]
      %v173 = vld [vmem:[%s165 + $0x8] sm:$0xff]
      %v174 = vld [vmem:[%s165 + $0x10] sm:$0xff]
      %v175 = vld [vmem:[%s165 + $0x18] sm:$0xff]
      %v176 = vld [vmem:[%s165 + $0x20] sm:$0xff]
      %v177 = vld [vmem:[%s165 + $0x28] sm:$0xff]
      %v178 = vld [vmem:[%s165 + $0x30] sm:$0xff]
      %v179 = vld [vmem:[%s165 + $0x38] sm:$0xff]
      %v180 = vld [vmem:[%s165 + $0x40] sm:$0xff]
      %v181 = vld [vmem:[%s165 + $0x48] sm:$0xff]
      %v182 = vld [vmem:[%s165 + $0x50] sm:$0xff]
      %v183 = vld [vmem:[%s165 + $0x58] sm:$0xff]
      %v184 = vld [vmem:[%s165 + $0x60] sm:$0x1]
      %v185 = vpack.c.bf16 %v173, %v172
      %v186 = vpack.c.bf16 %v175, %v174
      %v187 = vpack.c.bf16 %v177, %v176
      %v188 = vpack.c.bf16 %v179, %v178
      %v189 = vpack.c.bf16 %v181, %v180
      %v190 = vpack.c.bf16 %v183, %v182
      %v191 = vpack.c.bf16 %v184, %v184
      %v192 = vld [vmem:[%s1] sm:$0xf]
      %v193 = vld [vmem:[%s1 + $0x4] sm:$0xf]
      %v194 = vld [vmem:[%s1 + $0x8] sm:$0xf]
      %v195 = vld [vmem:[%s1 + $0xc] sm:$0xf]
      %v196 = vld [vmem:[%s165 + $0x1] sm:$0xff]
      %v197 = vld [vmem:[%s165 + $0x9] sm:$0xff]
      %v198 = vld [vmem:[%s165 + $0x11] sm:$0xff]
      %v199 = vld [vmem:[%s165 + $0x19] sm:$0xff]
      %v200 = vld [vmem:[%s165 + $0x21] sm:$0xff]
      %v201 = vld [vmem:[%s165 + $0x29] sm:$0xff]
      %v202 = vld [vmem:[%s165 + $0x31] sm:$0xff]
      %v203 = vld [vmem:[%s165 + $0x39] sm:$0xff]
      %v204 = vld [vmem:[%s165 + $0x41] sm:$0xff]
      %v205 = vld [vmem:[%s165 + $0x49] sm:$0xff]
      %v206 = vld [vmem:[%s165 + $0x51] sm:$0xff]
      %v207 = vld [vmem:[%s165 + $0x59] sm:$0xff]
      %v208 = vld [vmem:[%s165 + $0x61] sm:$0x1]
      %v209 = vpack.c.bf16 %v197, %v196
      %v210 = vpack.c.bf16 %v199, %v198
      %v211 = vpack.c.bf16 %v201, %v200
      %v212 = vpack.c.bf16 %v203, %v202
      %v213 = vpack.c.bf16 %v205, %v204
      %v214 = vpack.c.bf16 %v207, %v206
      %v215 = vpack.c.bf16 %v208, %v208
      %s216 = scalar_lea.vmem %s1, 16
      %v217 = vld [vmem:[%s216] sm:$0xf]
      %v218 = vld [vmem:[%s216 + $0x4] sm:$0xf]
      %v219 = vld [vmem:[%s216 + $0x8] sm:$0xf]
      %v220 = vld [vmem:[%s216 + $0xc] sm:$0xf]
      %v225 = vunpack.c.l.b16 %v217
      %v226 = vunpack.c.l.b16 %v218
      %v227 = vunpack.c.l.b16 %v219
      %v228 = vunpack.c.l.b16 %v220
      %v229 = vpack.c.b16 %v226, %v225
      %v230 = vpack.c.b16 %v228, %v227
      %vm233 = vcmask 261120
      %v235 = vsel %vm233, %v209, 0
      %v238 = vsel %vm233, %v210, 0
      %v241 = vsel %vm233, %v211, 0
      %v244 = vsel %vm233, %v212, 0
      %v247 = vsel %vm233, %v213, 0
      %v250 = vsel %vm233, %v214, 0
      %v253 = vsel %vm233, %v215, 0
      %255 = vmatprep.subr.bf16.mxu0 0
      %256 = vmatpush1.bf16.msra.mxu0 %v229
      %257 = vmatprep.subr.bf16.mxu0 0
      %258 = vmatpush1.bf16.msra.mxu0 %v230
      %259 = vmatprep.subr.bf16.mxu0 0
      %260 = vmatpush1.bf16.msra.mxu0 0
      %261 = vmatprep.subr.bf16.mxu0 0
      %262 = vmatpush1.bf16.msra.mxu0 0
      %263 = vmatprep.subr.bf16.mxu0 0
      %264 = vmatpush1.bf16.msra.mxu0 0
      %265 = vmatprep.subr.bf16.mxu0 0
      %266 = vmatpush1.bf16.msra.mxu0 0
      %267 = vmatprep.subr.bf16.mxu0 0
      %268 = vmatpush1.bf16.msra.mxu0 0
      %269 = vmatprep.subr.bf16.mxu0 0
      %270 = vmatpush1.bf16.msra.mxu0 0
      %271 = vmatprep.subr.bf16.mxu0 0
      %272 = vmatpush1.bf16.msra.mxu0 0
      %273 = vmatprep.subr.bf16.mxu0 0
      %274 = vmatpush1.bf16.msra.mxu0 0
      %275 = vmatprep.subr.bf16.mxu0 0
      %276 = vmatpush1.bf16.msra.mxu0 0
      %277 = vmatprep.subr.bf16.mxu0 0
      %278 = vmatpush1.bf16.msra.mxu0 0
      %279 = vmatprep.subr.bf16.mxu0 0
      %280 = vmatpush1.bf16.msra.mxu0 0
      %281 = vmatprep.subr.bf16.mxu0 0
      %282 = vmatpush1.bf16.msra.mxu0 0
      %283 = vmatprep.subr.bf16.mxu0 0
      %284 = vmatpush1.bf16.msra.mxu0 0
      %285 = vmatprep.subr.bf16.mxu0 0
      %286 = vmatpush1.bf16.msra.mxu0 0
      %287 = vmatprep.mubr.bf16.mxu0 0
      %288 = vmatmul.mubr.bf16.gmra.mrb[0].mxu0 %v235
      %v289 = vpop.f32.mrb[0].mxu0
      %v290 = vadd.f32 0.0, %v289
      %v291 = vpop.f32.mrb[0].mxu0
      %v292 = vpop.f32.mrb[0].mxu0
      %v293 = vadd.f32 0.0, %v292
      %v294 = vpop.f32.mrb[0].mxu0
      %295 = vmatprep.mubr.bf16.mxu0 0
      %296 = vmatmul.mubr.bf16.gmra.mrb[0].mxu0 %v238
      %v297 = vpop.f32.mrb[0].mxu0
      %v298 = vadd.f32 0.0, %v297
      %v299 = vpop.f32.mrb[0].mxu0
      %v300 = vpop.f32.mrb[0].mxu0
      %v301 = vadd.f32 0.0, %v300
      %v302 = vpop.f32.mrb[0].mxu0
      %303 = vmatprep.mubr.bf16.mxu0 0
      %304 = vmatmul.mubr.bf16.gmra.mrb[0].mxu0 %v241
      %v305 = vpop.f32.mrb[0].mxu0
      %v306 = vadd.f32 0.0, %v305
      %v307 = vpop.f32.mrb[0].mxu0
      %v308 = vpop.f32.mrb[0].mxu0
      %v309 = vadd.f32 0.0, %v308
      %v310 = vpop.f32.mrb[0].mxu0
      %311 = vmatprep.mubr.bf16.mxu0 0
      %312 = vmatmul.mubr.bf16.gmra.mrb[0].mxu0 %v244
      %v313 = vpop.f32.mrb[0].mxu0
      %v314 = vadd.f32 0.0, %v313
      %v315 = vpop.f32.mrb[0].mxu0
      %v316 = vpop.f32.mrb[0].mxu0
      %v317 = vadd.f32 0.0, %v316
      %v318 = vpop.f32.mrb[0].mxu0
      %319 = vmatprep.mubr.bf16.mxu0 0
      %320 = vmatmul.mubr.bf16.gmra.mrb[0].mxu0 %v247
      %v321 = vpop.f32.mrb[0].mxu0
      %v322 = vadd.f32 0.0, %v321
      %v323 = vpop.f32.mrb[0].mxu0
      %v324 = vpop.f32.mrb[0].mxu0
      %v325 = vadd.f32 0.0, %v324
      %v326 = vpop.f32.mrb[0].mxu0
      %327 = vmatprep.mubr.bf16.mxu0 0
      %328 = vmatmul.mubr.bf16.gmra.mrb[0].mxu0 %v250
      %v329 = vpop.f32.mrb[0].mxu0
      %v330 = vadd.f32 0.0, %v329
      %v331 = vpop.f32.mrb[0].mxu0
      %v332 = vpop.f32.mrb[0].mxu0
      %v333 = vadd.f32 0.0, %v332
      %v334 = vpop.f32.mrb[0].mxu0
      %335 = vmatprep.mubr.bf16.mxu0 0
      %336 = vmatmul.mubr.bf16.gmra.mrb[0].mxu0 %v253
      %v337 = vpop.f32.mrb[0].mxu0
      %v338 = vadd.f32 0.0, %v337
      %v339 = vpop.f32.mrb[0].mxu0
      %v340 = vpop.f32.mrb[0].mxu0
      %v341 = vpop.f32.mrb[0].mxu0
      %342 = vdwg.mxu0
      %v347 = vunpack.c.l.b16 %v192
      %v348 = vunpack.c.l.b16 %v193
      %v349 = vunpack.c.l.b16 %v194
      %v350 = vunpack.c.l.b16 %v195
      %v351 = vpack.c.b16 %v348, %v347
      %v352 = vpack.c.b16 %v350, %v349
      %v356 = vsel %vm233, %v185, 0
      %v359 = vsel %vm233, %v186, 0
      %v362 = vsel %vm233, %v187, 0
      %v365 = vsel %vm233, %v188, 0
      %v368 = vsel %vm233, %v189, 0
      %v371 = vsel %vm233, %v190, 0
      %v374 = vsel %vm233, %v191, 0
      %376 = vmatprep.subr.bf16.mxu0 0
      %377 = vmatpush1.bf16.msra.mxu0 %v351
      %378 = vmatprep.subr.bf16.mxu0 0
      %379 = vmatpush1.bf16.msra.mxu0 %v352
      %380 = vmatprep.subr.bf16.mxu0 0
      %381 = vmatpush1.bf16.msra.mxu0 0
      %382 = vmatprep.subr.bf16.mxu0 0
      %383 = vmatpush1.bf16.msra.mxu0 0
      %384 = vmatprep.subr.bf16.mxu0 0
      %385 = vmatpush1.bf16.msra.mxu0 0
      %386 = vmatprep.subr.bf16.mxu0 0
      %387 = vmatpush1.bf16.msra.mxu0 0
      %388 = vmatprep.subr.bf16.mxu0 0
      %389 = vmatpush1.bf16.msra.mxu0 0
      %390 = vmatprep.subr.bf16.mxu0 0
      %391 = vmatpush1.bf16.msra.mxu0 0
      %392 = vmatprep.subr.bf16.mxu0 0
      %393 = vmatpush1.bf16.msra.mxu0 0
      %394 = vmatprep.subr.bf16.mxu0 0
      %395 = vmatpush1.bf16.msra.mxu0 0
      %396 = vmatprep.subr.bf16.mxu0 0
      %397 = vmatpush1.bf16.msra.mxu0 0
      %398 = vmatprep.subr.bf16.mxu0 0
      %399 = vmatpush1.bf16.msra.mxu0 0
      %400 = vmatprep.subr.bf16.mxu0 0
      %401 = vmatpush1.bf16.msra.mxu0 0
      %402 = vmatprep.subr.bf16.mxu0 0
      %403 = vmatpush1.bf16.msra.mxu0 0
      %404 = vmatprep.subr.bf16.mxu0 0
      %405 = vmatpush1.bf16.msra.mxu0 0
      %406 = vmatprep.subr.bf16.mxu0 0
      %407 = vmatpush1.bf16.msra.mxu0 0
      %408 = vmatprep.mubr.bf16.mxu0 0
      %409 = vmatmul.mubr.bf16.gmra.mrb[0].mxu0 %v356
      %v410 = vpop.f32.mrb[0].mxu0
      %v411 = vadd.f32 %v290, %v410
      %v412 = vpop.f32.mrb[0].mxu0
      %v413 = vpop.f32.mrb[0].mxu0
      %v414 = vadd.f32 %v293, %v413
      %v415 = vpop.f32.mrb[0].mxu0
      %416 = vmatprep.mubr.bf16.mxu0 0
      %417 = vmatmul.mubr.bf16.gmra.mrb[0].mxu0 %v359
      %v418 = vpop.f32.mrb[0].mxu0
      %v419 = vadd.f32 %v298, %v418
      %v420 = vpop.f32.mrb[0].mxu0
      %v421 = vpop.f32.mrb[0].mxu0
      %v422 = vadd.f32 %v301, %v421
      %v423 = vpop.f32.mrb[0].mxu0
      %424 = vmatprep.mubr.bf16.mxu0 0
      %425 = vmatmul.mubr.bf16.gmra.mrb[0].mxu0 %v362
      %v426 = vpop.f32.mrb[0].mxu0
      %v427 = vadd.f32 %v306, %v426
      %v428 = vpop.f32.mrb[0].mxu0
      %v429 = vpop.f32.mrb[0].mxu0
      %v430 = vadd.f32 %v309, %v429
      %v431 = vpop.f32.mrb[0].mxu0
      %432 = vmatprep.mubr.bf16.mxu0 0
      %433 = vmatmul.mubr.bf16.gmra.mrb[0].mxu0 %v365
      %v434 = vpop.f32.mrb[0].mxu0
      %v435 = vadd.f32 %v314, %v434
      %v436 = vpop.f32.mrb[0].mxu0
      %v437 = vpop.f32.mrb[0].mxu0
      %v438 = vadd.f32 %v317, %v437
      %v439 = vpop.f32.mrb[0].mxu0
      %440 = vmatprep.mubr.bf16.mxu0 0
      %441 = vmatmul.mubr.bf16.gmra.mrb[0].mxu0 %v368
      %v442 = vpop.f32.mrb[0].mxu0
      %v443 = vadd.f32 %v322, %v442
      %v444 = vpop.f32.mrb[0].mxu0
      %v445 = vpop.f32.mrb[0].mxu0
      %v446 = vadd.f32 %v325, %v445
      %v447 = vpop.f32.mrb[0].mxu0
      %448 = vmatprep.mubr.bf16.mxu0 0
      %449 = vmatmul.mubr.bf16.gmra.mrb[0].mxu0 %v371
      %v450 = vpop.f32.mrb[0].mxu0
      %v451 = vadd.f32 %v330, %v450
      %v452 = vpop.f32.mrb[0].mxu0
      %v453 = vpop.f32.mrb[0].mxu0
      %v454 = vadd.f32 %v333, %v453
      %v455 = vpop.f32.mrb[0].mxu0
      %456 = vmatprep.mubr.bf16.mxu0 0
      %457 = vmatmul.mubr.bf16.gmra.mrb[0].mxu0 %v374
      %v458 = vpop.f32.mrb[0].mxu0
      %v459 = vadd.f32 %v338, %v458
      %v460 = vpop.f32.mrb[0].mxu0
      %v461 = vpop.f32.mrb[0].mxu0
      %v462 = vpop.f32.mrb[0].mxu0
      %463 = vdwg.mxu0
      %v464 = vld [vmem:[%s165 + $0x2] sm:$0xff]
      %v465 = vld [vmem:[%s165 + $0xa] sm:$0xff]
      %v466 = vld [vmem:[%s165 + $0x12] sm:$0xff]
      %v467 = vld [vmem:[%s165 + $0x1a] sm:$0xff]
      %v468 = vld [vmem:[%s165 + $0x22] sm:$0xff]
      %v469 = vld [vmem:[%s165 + $0x2a] sm:$0xff]
      %v470 = vld [vmem:[%s165 + $0x32] sm:$0xff]
      %v471 = vld [vmem:[%s165 + $0x3a] sm:$0xff]
      %v472 = vld [vmem:[%s165 + $0x42] sm:$0xff]
      %v473 = vld [vmem:[%s165 + $0x4a] sm:$0xff]
      %v474 = vld [vmem:[%s165 + $0x52] sm:$0xff]
      %v475 = vld [vmem:[%s165 + $0x5a] sm:$0xff]
      %v476 = vld [vmem:[%s165 + $0x62] sm:$0x1]
      %v477 = vpack.c.bf16 %v465, %v464
      %v478 = vpack.c.bf16 %v467, %v466
      %v479 = vpack.c.bf16 %v469, %v468
      %v480 = vpack.c.bf16 %v471, %v470
      %v481 = vpack.c.bf16 %v473, %v472
      %v482 = vpack.c.bf16 %v475, %v474
      %v483 = vpack.c.bf16 %v476, %v476
      %s484 = scalar_lea.vmem %s1, 32
      %v485 = vld [vmem:[%s484] sm:$0xf]
      %v486 = vld [vmem:[%s484 + $0x4] sm:$0xf]
      %v487 = vld [vmem:[%s484 + $0x8] sm:$0xf]
      %v488 = vld [vmem:[%s484 + $0xc] sm:$0xf]
      %v493 = vunpack.c.l.b16 %v485
      %v494 = vunpack.c.l.b16 %v486
      %v495 = vunpack.c.l.b16 %v487
      %v496 = vunpack.c.l.b16 %v488
      %v497 = vpack.c.b16 %v494, %v493
      %v498 = vpack.c.b16 %v496, %v495
      %v502 = vsel %vm233, %v477, 0
      %v505 = vsel %vm233, %v478, 0
      %v508 = vsel %vm233, %v479, 0
      %v511 = vsel %vm233, %v480, 0
      %v514 = vsel %vm233, %v481, 0
      %v517 = vsel %vm233, %v482, 0
      %v520 = vsel %vm233, %v483, 0
      %522 = vmatprep.subr.bf16.mxu0 0
      %523 = vmatpush1.bf16.msra.mxu0 %v497
      %524 = vmatprep.subr.bf16.mxu0 0
      %525 = vmatpush1.bf16.msra.mxu0 %v498
      %526 = vmatprep.subr.bf16.mxu0 0
      %527 = vmatpush1.bf16.msra.mxu0 0
      %528 = vmatprep.subr.bf16.mxu0 0
      %529 = vmatpush1.bf16.msra.mxu0 0
      %530 = vmatprep.subr.bf16.mxu0 0
      %531 = vmatpush1.bf16.msra.mxu0 0
      %532 = vmatprep.subr.bf16.mxu0 0
      %533 = vmatpush1.bf16.msra.mxu0 0
      %534 = vmatprep.subr.bf16.mxu0 0
      %535 = vmatpush1.bf16.msra.mxu0 0
      %536 = vmatprep.subr.bf16.mxu0 0
      %537 = vmatpush1.bf16.msra.mxu0 0
      %538 = vmatprep.subr.bf16.mxu0 0
      %539 = vmatpush1.bf16.msra.mxu0 0
      %540 = vmatprep.subr.bf16.mxu0 0
      %541 = vmatpush1.bf16.msra.mxu0 0
      %542 = vmatprep.subr.bf16.mxu0 0
      %543 = vmatpush1.bf16.msra.mxu0 0
      %544 = vmatprep.subr.bf16.mxu0 0
      %545 = vmatpush1.bf16.msra.mxu0 0
      %546 = vmatprep.subr.bf16.mxu0 0
      %547 = vmatpush1.bf16.msra.mxu0 0
      %548 = vmatprep.subr.bf16.mxu0 0
      %549 = vmatpush1.bf16.msra.mxu0 0
      %550 = vmatprep.subr.bf16.mxu0 0
      %551 = vmatpush1.bf16.msra.mxu0 0
      %552 = vmatprep.subr.bf16.mxu0 0
      %553 = vmatpush1.bf16.msra.mxu0 0
      %554 = vmatprep.mubr.bf16.mxu0 0
      %555 = vmatmul.mubr.bf16.gmra.mrb[0].mxu0 %v502
      %v556 = vpop.f32.mrb[0].mxu0
      %v557 = vadd.f32 0.0, %v556
      %v558 = vpop.f32.mrb[0].mxu0
      %v559 = vpop.f32.mrb[0].mxu0
      %v560 = vadd.f32 0.0, %v559
      %v561 = vpop.f32.mrb[0].mxu0
      %562 = vmatprep.mubr.bf16.mxu0 0
      %563 = vmatmul.mubr.bf16.gmra.mrb[0].mxu0 %v505
      %v564 = vpop.f32.mrb[0].mxu0
      %v565 = vadd.f32 0.0, %v564
      %v566 = vpop.f32.mrb[0].mxu0
      %v567 = vpop.f32.mrb[0].mxu0
      %v568 = vadd.f32 0.0, %v567
      %v569 = vpop.f32.mrb[0].mxu0
      %570 = vmatprep.mubr.bf16.mxu0 0
      %571 = vmatmul.mubr.bf16.gmra.mrb[0].mxu0 %v508
      %v572 = vpop.f32.mrb[0].mxu0
      %v573 = vadd.f32 0.0, %v572
      %v574 = vpop.f32.mrb[0].mxu0
      %v575 = vpop.f32.mrb[0].mxu0
      %v576 = vadd.f32 0.0, %v575
      %v577 = vpop.f32.mrb[0].mxu0
      %578 = vmatprep.mubr.bf16.mxu0 0
      %579 = vmatmul.mubr.bf16.gmra.mrb[0].mxu0 %v511
      %v580 = vpop.f32.mrb[0].mxu0
      %v581 = vadd.f32 0.0, %v580
      %v582 = vpop.f32.mrb[0].mxu0
      %v583 = vpop.f32.mrb[0].mxu0
      %v584 = vadd.f32 0.0, %v583
      %v585 = vpop.f32.mrb[0].mxu0
      %586 = vmatprep.mubr.bf16.mxu0 0
      %587 = vmatmul.mubr.bf16.gmra.mrb[0].mxu0 %v514
      %v588 = vpop.f32.mrb[0].mxu0
      %v589 = vadd.f32 0.0, %v588
      %v590 = vpop.f32.mrb[0].mxu0
      %v591 = vpop.f32.mrb[0].mxu0
      %v592 = vadd.f32 0.0, %v591
      %v593 = vpop.f32.mrb[0].mxu0
      %594 = vmatprep.mubr.bf16.mxu0 0
      %595 = vmatmul.mubr.bf16.gmra.mrb[0].mxu0 %v517
      %v596 = vpop.f32.mrb[0].mxu0
      %v597 = vadd.f32 0.0, %v596
      %v598 = vpop.f32.mrb[0].mxu0
      %v599 = vpop.f32.mrb[0].mxu0
      %v600 = vadd.f32 0.0, %v599
      %v601 = vpop.f32.mrb[0].mxu0
      %602 = vmatprep.mubr.bf16.mxu0 0
      %603 = vmatmul.mubr.bf16.gmra.mrb[0].mxu0 %v520
      %v604 = vpop.f32.mrb[0].mxu0
      %v605 = vadd.f32 0.0, %v604
      %v606 = vpop.f32.mrb[0].mxu0
      %v607 = vpop.f32.mrb[0].mxu0
      %v608 = vpop.f32.mrb[0].mxu0
      %609 = vdwg.mxu0
      %v610 = vadd.f32 %v411, %v557
      %v611 = vadd.f32 %v414, %v560
      %v612 = vadd.f32 %v419, %v565
      %v613 = vadd.f32 %v422, %v568
      %v614 = vadd.f32 %v427, %v573
      %v615 = vadd.f32 %v430, %v576
      %v616 = vadd.f32 %v435, %v581
      %v617 = vadd.f32 %v438, %v584
      %v618 = vadd.f32 %v443, %v589
      %v619 = vadd.f32 %v446, %v592
      %v620 = vadd.f32 %v451, %v597
      %v621 = vadd.f32 %v454, %v600
      %v622 = vadd.f32 %v459, %v605
      %v623 = vld [vmem:[%s165 + $0xb] sm:$0xff]
      %v624 = vld [vmem:[%s165 + $0x13] sm:$0xff]
      %v625 = vld [vmem:[%s165 + $0x1b] sm:$0xff]
      %v626 = vld [vmem:[%s165 + $0x23] sm:$0xff]
      %v627 = vld [vmem:[%s165 + $0x2b] sm:$0xff]
      %v628 = vld [vmem:[%s165 + $0x33] sm:$0xff]
      %v629 = vld [vmem:[%s165 + $0x3b] sm:$0xff]
      %v630 = vld [vmem:[%s165 + $0x43] sm:$0xff]
      %v631 = vld [vmem:[%s165 + $0x4b] sm:$0xff]
      %v632 = vld [vmem:[%s165 + $0x53] sm:$0xff]
      %v633 = vld [vmem:[%s165 + $0x5b] sm:$0xff]
      %v634 = vld [vmem:[%s165 + $0x63] sm:$0xff]
      %v635 = vld [vmem:[%s165 + $0x6b] sm:$0x1]
      %v636 = vpack.c.bf16 %v624, %v623
      %v637 = vpack.c.bf16 %v626, %v625
      %v638 = vpack.c.bf16 %v628, %v627
      %v639 = vpack.c.bf16 %v630, %v629
      %v640 = vpack.c.bf16 %v632, %v631
      %v641 = vpack.c.bf16 %v634, %v633
      %v642 = vpack.c.bf16 %v635, %v635
      %s643 = scalar_lea.vmem %s1, 48
      %v644 = vld [vmem:[%s643] sm:$0xf]
      %v645 = vld [vmem:[%s643 + $0x4] sm:$0xf]
      %v646 = vld [vmem:[%s643 + $0x8] sm:$0xf]
      %v647 = vld [vmem:[%s643 + $0xc] sm:$0xf]
      %v652 = vunpack.c.l.b16 %v644
      %v653 = vunpack.c.l.b16 %v645
      %v654 = vunpack.c.l.b16 %v646
      %v655 = vunpack.c.l.b16 %v647
      %v656 = vpack.c.b16 %v653, %v652
      %v657 = vpack.c.b16 %v655, %v654
      %v661 = vsel %vm233, %v636, 0
      %v664 = vsel %vm233, %v637, 0
      %v667 = vsel %vm233, %v638, 0
      %v670 = vsel %vm233, %v639, 0
      %v673 = vsel %vm233, %v640, 0
      %v676 = vsel %vm233, %v641, 0
      %v679 = vsel %vm233, %v642, 0
      %681 = vmatprep.subr.bf16.mxu0 0
      %682 = vmatpush1.bf16.msra.mxu0 %v656
      %683 = vmatprep.subr.bf16.mxu0 0
      %684 = vmatpush1.bf16.msra.mxu0 %v657
      %685 = vmatprep.subr.bf16.mxu0 0
      %686 = vmatpush1.bf16.msra.mxu0 0
      %687 = vmatprep.subr.bf16.mxu0 0
      %688 = vmatpush1.bf16.msra.mxu0 0
      %689 = vmatprep.subr.bf16.mxu0 0
      %690 = vmatpush1.bf16.msra.mxu0 0
      %691 = vmatprep.subr.bf16.mxu0 0
      %692 = vmatpush1.bf16.msra.mxu0 0
      %693 = vmatprep.subr.bf16.mxu0 0
      %694 = vmatpush1.bf16.msra.mxu0 0
      %695 = vmatprep.subr.bf16.mxu0 0
      %696 = vmatpush1.bf16.msra.mxu0 0
      %697 = vmatprep.subr.bf16.mxu0 0
      %698 = vmatpush1.bf16.msra.mxu0 0
      %699 = vmatprep.subr.bf16.mxu0 0
      %700 = vmatpush1.bf16.msra.mxu0 0
      %701 = vmatprep.subr.bf16.mxu0 0
      %702 = vmatpush1.bf16.msra.mxu0 0
      %703 = vmatprep.subr.bf16.mxu0 0
      %704 = vmatpush1.bf16.msra.mxu0 0
      %705 = vmatprep.subr.bf16.mxu0 0
      %706 = vmatpush1.bf16.msra.mxu0 0
      %707 = vmatprep.subr.bf16.mxu0 0
      %708 = vmatpush1.bf16.msra.mxu0 0
      %709 = vmatprep.subr.bf16.mxu0 0
      %710 = vmatpush1.bf16.msra.mxu0 0
      %711 = vmatprep.subr.bf16.mxu0 0
      %712 = vmatpush1.bf16.msra.mxu0 0
      %713 = vmatprep.mubr.bf16.mxu0 0
      %714 = vmatmul.mubr.bf16.gmra.mrb[0].mxu0 %v661
      %v715 = vpop.f32.mrb[0].mxu0
      %v716 = vadd.f32 0.0, %v715
      %v717 = vpop.f32.mrb[0].mxu0
      %v718 = vpop.f32.mrb[0].mxu0
      %v719 = vadd.f32 0.0, %v718
      %v720 = vpop.f32.mrb[0].mxu0
      %721 = vmatprep.mubr.bf16.mxu0 0
      %722 = vmatmul.mubr.bf16.gmra.mrb[0].mxu0 %v664
      %v723 = vpop.f32.mrb[0].mxu0
      %v724 = vadd.f32 0.0, %v723
      %v725 = vpop.f32.mrb[0].mxu0
      %v726 = vpop.f32.mrb[0].mxu0
      %v727 = vadd.f32 0.0, %v726
      %v728 = vpop.f32.mrb[0].mxu0
      %729 = vmatprep.mubr.bf16.mxu0 0
      %730 = vmatmul.mubr.bf16.gmra.mrb[0].mxu0 %v667
      %v731 = vpop.f32.mrb[0].mxu0
      %v732 = vadd.f32 0.0, %v731
      %v733 = vpop.f32.mrb[0].mxu0
      %v734 = vpop.f32.mrb[0].mxu0
      %v735 = vadd.f32 0.0, %v734
      %v736 = vpop.f32.mrb[0].mxu0
      %737 = vmatprep.mubr.bf16.mxu0 0
      %738 = vmatmul.mubr.bf16.gmra.mrb[0].mxu0 %v670
      %v739 = vpop.f32.mrb[0].mxu0
      %v740 = vadd.f32 0.0, %v739
      %v741 = vpop.f32.mrb[0].mxu0
      %v742 = vpop.f32.mrb[0].mxu0
      %v743 = vadd.f32 0.0, %v742
      %v744 = vpop.f32.mrb[0].mxu0
      %745 = vmatprep.mubr.bf16.mxu0 0
      %746 = vmatmul.mubr.bf16.gmra.mrb[0].mxu0 %v673
      %v747 = vpop.f32.mrb[0].mxu0
      %v748 = vadd.f32 0.0, %v747
      %v749 = vpop.f32.mrb[0].mxu0
      %v750 = vpop.f32.mrb[0].mxu0
      %v751 = vadd.f32 0.0, %v750
      %v752 = vpop.f32.mrb[0].mxu0
      %753 = vmatprep.mubr.bf16.mxu0 0
      %754 = vmatmul.mubr.bf16.gmra.mrb[0].mxu0 %v676
      %v755 = vpop.f32.mrb[0].mxu0
      %v756 = vadd.f32 0.0, %v755
      %v757 = vpop.f32.mrb[0].mxu0
      %v758 = vpop.f32.mrb[0].mxu0
      %v759 = vadd.f32 0.0, %v758
      %v760 = vpop.f32.mrb[0].mxu0
      %761 = vmatprep.mubr.bf16.mxu0 0
      %762 = vmatmul.mubr.bf16.gmra.mrb[0].mxu0 %v679
      %v763 = vpop.f32.mrb[0].mxu0
      %v764 = vadd.f32 0.0, %v763
      %v765 = vpop.f32.mrb[0].mxu0
      %v766 = vpop.f32.mrb[0].mxu0
      %v767 = vpop.f32.mrb[0].mxu0
      %768 = vdwg.mxu0
      %v769 = vadd.f32 %v610, %v716
      %v770 = vadd.f32 %v611, %v719
      %v771 = vadd.f32 %v612, %v724
      %v772 = vadd.f32 %v613, %v727
      %v773 = vadd.f32 %v614, %v732
      %v774 = vadd.f32 %v615, %v735
      %v775 = vadd.f32 %v616, %v740
      %v776 = vadd.f32 %v617, %v743
      %v777 = vadd.f32 %v618, %v748
      %v778 = vadd.f32 %v619, %v751
      %v779 = vadd.f32 %v620, %v756
      %v780 = vadd.f32 %v621, %v759
      %v781 = vadd.f32 %v622, %v764
      %v782 = vld [vmem:[%s165 + $0xc] sm:$0xff]
      %v783 = vld [vmem:[%s165 + $0x14] sm:$0xff]
      %v784 = vld [vmem:[%s165 + $0x1c] sm:$0xff]
      %v785 = vld [vmem:[%s165 + $0x24] sm:$0xff]
      %v786 = vld [vmem:[%s165 + $0x2c] sm:$0xff]
      %v787 = vld [vmem:[%s165 + $0x34] sm:$0xff]
      %v788 = vld [vmem:[%s165 + $0x3c] sm:$0xff]
      %v789 = vld [vmem:[%s165 + $0x44] sm:$0xff]
      %v790 = vld [vmem:[%s165 + $0x4c] sm:$0xff]
      %v791 = vld [vmem:[%s165 + $0x54] sm:$0xff]
      %v792 = vld [vmem:[%s165 + $0x5c] sm:$0xff]
      %v793 = vld [vmem:[%s165 + $0x64] sm:$0xff]
      %v794 = vld [vmem:[%s165 + $0x6c] sm:$0x1]
      %v795 = vpack.c.bf16 %v783, %v782
      %v796 = vpack.c.bf16 %v785, %v784
      %v797 = vpack.c.bf16 %v787, %v786
      %v798 = vpack.c.bf16 %v789, %v788
      %v799 = vpack.c.bf16 %v791, %v790
      %v800 = vpack.c.bf16 %v793, %v792
      %v801 = vpack.c.bf16 %v794, %v794
      %s802 = scalar_lea.vmem %s1, 64
      %v803 = vld [vmem:[%s802] sm:$0xf]
      %v804 = vld [vmem:[%s802 + $0x4] sm:$0xf]
      %v805 = vld [vmem:[%s802 + $0x8] sm:$0xf]
      %v806 = vld [vmem:[%s802 + $0xc] sm:$0xf]
      %v811 = vunpack.c.l.b16 %v803
      %v812 = vunpack.c.l.b16 %v804
      %v813 = vunpack.c.l.b16 %v805
      %v814 = vunpack.c.l.b16 %v806
      %v815 = vpack.c.b16 %v812, %v811
      %v816 = vpack.c.b16 %v814, %v813
      %v820 = vsel %vm233, %v795, 0
      %v823 = vsel %vm233, %v796, 0
      %v826 = vsel %vm233, %v797, 0
      %v829 = vsel %vm233, %v798, 0
      %v832 = vsel %vm233, %v799, 0
      %v835 = vsel %vm233, %v800, 0
      %v838 = vsel %vm233, %v801, 0
      %840 = vmatprep.subr.bf16.mxu0 0
      %841 = vmatpush1.bf16.msra.mxu0 %v815
      %842 = vmatprep.subr.bf16.mxu0 0
      %843 = vmatpush1.bf16.msra.mxu0 %v816
      %844 = vmatprep.subr.bf16.mxu0 0
      %845 = vmatpush1.bf16.msra.mxu0 0
      %846 = vmatprep.subr.bf16.mxu0 0
      %847 = vmatpush1.bf16.msra.mxu0 0
      %848 = vmatprep.subr.bf16.mxu0 0
      %849 = vmatpush1.bf16.msra.mxu0 0
      %850 = vmatprep.subr.bf16.mxu0 0
      %851 = vmatpush1.bf16.msra.mxu0 0
      %852 = vmatprep.subr.bf16.mxu0 0
      %853 = vmatpush1.bf16.msra.mxu0 0
      %854 = vmatprep.subr.bf16.mxu0 0
      %855 = vmatpush1.bf16.msra.mxu0 0
      %856 = vmatprep.subr.bf16.mxu0 0
      %857 = vmatpush1.bf16.msra.mxu0 0
      %858 = vmatprep.subr.bf16.mxu0 0
      %859 = vmatpush1.bf16.msra.mxu0 0
      %860 = vmatprep.subr.bf16.mxu0 0
      %861 = vmatpush1.bf16.msra.mxu0 0
      %862 = vmatprep.subr.bf16.mxu0 0
      %863 = vmatpush1.bf16.msra.mxu0 0
      %864 = vmatprep.subr.bf16.mxu0 0
      %865 = vmatpush1.bf16.msra.mxu0 0
      %866 = vmatprep.subr.bf16.mxu0 0
      %867 = vmatpush1.bf16.msra.mxu0 0
      %868 = vmatprep.subr.bf16.mxu0 0
      %869 = vmatpush1.bf16.msra.mxu0 0
      %870 = vmatprep.subr.bf16.mxu0 0
      %871 = vmatpush1.bf16.msra.mxu0 0
      %872 = vmatprep.mubr.bf16.mxu0 0
      %873 = vmatmul.mubr.bf16.gmra.mrb[0].mxu0 %v820
      %v874 = vpop.f32.mrb[0].mxu0
      %v875 = vadd.f32 0.0, %v874
      %v876 = vpop.f32.mrb[0].mxu0
      %v877 = vpop.f32.mrb[0].mxu0
      %v878 = vadd.f32 0.0, %v877
      %v879 = vpop.f32.mrb[0].mxu0
      %880 = vmatprep.mubr.bf16.mxu0 0
      %881 = vmatmul.mubr.bf16.gmra.mrb[0].mxu0 %v823
      %v882 = vpop.f32.mrb[0].mxu0
      %v883 = vadd.f32 0.0, %v882
      %v884 = vpop.f32.mrb[0].mxu0
      %v885 = vpop.f32.mrb[0].mxu0
      %v886 = vadd.f32 0.0, %v885
      %v887 = vpop.f32.mrb[0].mxu0
      %888 = vmatprep.mubr.bf16.mxu0 0
      %889 = vmatmul.mubr.bf16.gmra.mrb[0].mxu0 %v826
      %v890 = vpop.f32.mrb[0].mxu0
      %v891 = vadd.f32 0.0, %v890
      %v892 = vpop.f32.mrb[0].mxu0
      %v893 = vpop.f32.mrb[0].mxu0
      %v894 = vadd.f32 0.0, %v893
      %v895 = vpop.f32.mrb[0].mxu0
      %896 = vmatprep.mubr.bf16.mxu0 0
      %897 = vmatmul.mubr.bf16.gmra.mrb[0].mxu0 %v829
      %v898 = vpop.f32.mrb[0].mxu0
      %v899 = vadd.f32 0.0, %v898
      %v900 = vpop.f32.mrb[0].mxu0
      %v901 = vpop.f32.mrb[0].mxu0
      %v902 = vadd.f32 0.0, %v901
      %v903 = vpop.f32.mrb[0].mxu0
      %904 = vmatprep.mubr.bf16.mxu0 0
      %905 = vmatmul.mubr.bf16.gmra.mrb[0].mxu0 %v832
      %v906 = vpop.f32.mrb[0].mxu0
      %v907 = vadd.f32 0.0, %v906
      %v908 = vpop.f32.mrb[0].mxu0
      %v909 = vpop.f32.mrb[0].mxu0
      %v910 = vadd.f32 0.0, %v909
      %v911 = vpop.f32.mrb[0].mxu0
      %912 = vmatprep.mubr.bf16.mxu0 0
      %913 = vmatmul.mubr.bf16.gmra.mrb[0].mxu0 %v835
      %v914 = vpop.f32.mrb[0].mxu0
      %v915 = vadd.f32 0.0, %v914
      %v916 = vpop.f32.mrb[0].mxu0
      %v917 = vpop.f32.mrb[0].mxu0
      %v918 = vadd.f32 0.0, %v917
      %v919 = vpop.f32.mrb[0].mxu0
      %920 = vmatprep.mubr.bf16.mxu0 0
      %921 = vmatmul.mubr.bf16.gmra.mrb[0].mxu0 %v838
      %v922 = vpop.f32.mrb[0].mxu0
      %v923 = vadd.f32 0.0, %v922
      %v924 = vpop.f32.mrb[0].mxu0
      %v925 = vpop.f32.mrb[0].mxu0
      %v926 = vpop.f32.mrb[0].mxu0
      %927 = vdwg.mxu0
      %v928 = vadd.f32 %v769, %v875
      %v929 = vadd.f32 %v770, %v878
      %v930 = vadd.f32 %v771, %v883
      %v931 = vadd.f32 %v772, %v886
      %v932 = vadd.f32 %v773, %v891
      %v933 = vadd.f32 %v774, %v894
      %v934 = vadd.f32 %v775, %v899
      %v935 = vadd.f32 %v776, %v902
      %v936 = vadd.f32 %v777, %v907
      %v937 = vadd.f32 %v778, %v910
      %v938 = vadd.f32 %v779, %v915
      %v939 = vadd.f32 %v780, %v918
      %v940 = vadd.f32 %v781, %v923
      %v941 = vld [vmem:[%s165 + $0xd] sm:$0xff]
      %v942 = vld [vmem:[%s165 + $0x15] sm:$0xff]
      %v943 = vld [vmem:[%s165 + $0x1d] sm:$0xff]
      %v944 = vld [vmem:[%s165 + $0x25] sm:$0xff]
      %v945 = vld [vmem:[%s165 + $0x2d] sm:$0xff]
      %v946 = vld [vmem:[%s165 + $0x35] sm:$0xff]
      %v947 = vld [vmem:[%s165 + $0x3d] sm:$0xff]
      %v948 = vld [vmem:[%s165 + $0x45] sm:$0xff]
      %v949 = vld [vmem:[%s165 + $0x4d] sm:$0xff]
      %v950 = vld [vmem:[%s165 + $0x55] sm:$0xff]
      %v951 = vld [vmem:[%s165 + $0x5d] sm:$0xff]
      %v952 = vld [vmem:[%s165 + $0x65] sm:$0xff]
      %v953 = vld [vmem:[%s165 + $0x6d] sm:$0x1]
      %v954 = vpack.c.bf16 %v942, %v941
      %v955 = vpack.c.bf16 %v944, %v943
      %v956 = vpack.c.bf16 %v946, %v945
      %v957 = vpack.c.bf16 %v948, %v947
      %v958 = vpack.c.bf16 %v950, %v949
      %v959 = vpack.c.bf16 %v952, %v951
      %v960 = vpack.c.bf16 %v953, %v953
      %s961 = scalar_lea.vmem %s1, 80
      %v962 = vld [vmem:[%s961] sm:$0xf]
      %v963 = vld [vmem:[%s961 + $0x4] sm:$0xf]
      %v964 = vld [vmem:[%s961 + $0x8] sm:$0xf]
      %v965 = vld [vmem:[%s961 + $0xc] sm:$0xf]
      %v970 = vunpack.c.l.b16 %v962
      %v971 = vunpack.c.l.b16 %v963
      %v972 = vunpack.c.l.b16 %v964
      %v973 = vunpack.c.l.b16 %v965
      %v974 = vpack.c.b16 %v971, %v970
      %v975 = vpack.c.b16 %v973, %v972
      %v979 = vsel %vm233, %v954, 0
      %v982 = vsel %vm233, %v955, 0
      %v985 = vsel %vm233, %v956, 0
      %v988 = vsel %vm233, %v957, 0
      %v991 = vsel %vm233, %v958, 0
      %v994 = vsel %vm233, %v959, 0
      %v997 = vsel %vm233, %v960, 0
      %999 = vmatprep.subr.bf16.mxu0 0
      %1000 = vmatpush1.bf16.msra.mxu0 %v974
      %1001 = vmatprep.subr.bf16.mxu0 0
      %1002 = vmatpush1.bf16.msra.mxu0 %v975
      %1003 = vmatprep.subr.bf16.mxu0 0
      %1004 = vmatpush1.bf16.msra.mxu0 0
      %1005 = vmatprep.subr.bf16.mxu0 0
      %1006 = vmatpush1.bf16.msra.mxu0 0
      %1007 = vmatprep.subr.bf16.mxu0 0
      %1008 = vmatpush1.bf16.msra.mxu0 0
      %1009 = vmatprep.subr.bf16.mxu0 0
      %1010 = vmatpush1.bf16.msra.mxu0 0
      %1011 = vmatprep.subr.bf16.mxu0 0
      %1012 = vmatpush1.bf16.msra.mxu0 0
      %1013 = vmatprep.subr.bf16.mxu0 0
      %1014 = vmatpush1.bf16.msra.mxu0 0
      %1015 = vmatprep.subr.bf16.mxu0 0
      %1016 = vmatpush1.bf16.msra.mxu0 0
      %1017 = vmatprep.subr.bf16.mxu0 0
      %1018 = vmatpush1.bf16.msra.mxu0 0
      %1019 = vmatprep.subr.bf16.mxu0 0
      %1020 = vmatpush1.bf16.msra.mxu0 0
      %1021 = vmatprep.subr.bf16.mxu0 0
      %1022 = vmatpush1.bf16.msra.mxu0 0
      %1023 = vmatprep.subr.bf16.mxu0 0
      %1024 = vmatpush1.bf16.msra.mxu0 0
      %1025 = vmatprep.subr.bf16.mxu0 0
      %1026 = vmatpush1.bf16.msra.mxu0 0
      %1027 = vmatprep.subr.bf16.mxu0 0
      %1028 = vmatpush1.bf16.msra.mxu0 0
      %1029 = vmatprep.subr.bf16.mxu0 0
      %1030 = vmatpush1.bf16.msra.mxu0 0
      %1031 = vmatprep.mubr.bf16.mxu0 0
      %1032 = vmatmul.mubr.bf16.gmra.mrb[0].mxu0 %v979
      %v1033 = vpop.f32.mrb[0].mxu0
      %v1034 = vadd.f32 0.0, %v1033
      %v1035 = vpop.f32.mrb[0].mxu0
      %v1036 = vpop.f32.mrb[0].mxu0
      %v1037 = vadd.f32 0.0, %v1036
      %v1038 = vpop.f32.mrb[0].mxu0
      %1039 = vmatprep.mubr.bf16.mxu0 0
      %1040 = vmatmul.mubr.bf16.gmra.mrb[0].mxu0 %v982
      %v1041 = vpop.f32.mrb[0].mxu0
      %v1042 = vadd.f32 0.0, %v1041
      %v1043 = vpop.f32.mrb[0].mxu0
      %v1044 = vpop.f32.mrb[0].mxu0
      %v1045 = vadd.f32 0.0, %v1044
      %v1046 = vpop.f32.mrb[0].mxu0
      %1047 = vmatprep.mubr.bf16.mxu0 0
      %1048 = vmatmul.mubr.bf16.gmra.mrb[0].mxu0 %v985
      %v1049 = vpop.f32.mrb[0].mxu0
      %v1050 = vadd.f32 0.0, %v1049
      %v1051 = vpop.f32.mrb[0].mxu0
      %v1052 = vpop.f32.mrb[0].mxu0
      %v1053 = vadd.f32 0.0, %v1052
      %v1054 = vpop.f32.mrb[0].mxu0
      %1055 = vmatprep.mubr.bf16.mxu0 0
      %1056 = vmatmul.mubr.bf16.gmra.mrb[0].mxu0 %v988
      %v1057 = vpop.f32.mrb[0].mxu0
      %v1058 = vadd.f32 0.0, %v1057
      %v1059 = vpop.f32.mrb[0].mxu0
      %v1060 = vpop.f32.mrb[0].mxu0
      %v1061 = vadd.f32 0.0, %v1060
      %v1062 = vpop.f32.mrb[0].mxu0
      %1063 = vmatprep.mubr.bf16.mxu0 0
      %1064 = vmatmul.mubr.bf16.gmra.mrb[0].mxu0 %v991
      %v1065 = vpop.f32.mrb[0].mxu0
      %v1066 = vadd.f32 0.0, %v1065
      %v1067 = vpop.f32.mrb[0].mxu0
      %v1068 = vpop.f32.mrb[0].mxu0
      %v1069 = vadd.f32 0.0, %v1068
      %v1070 = vpop.f32.mrb[0].mxu0
      %1071 = vmatprep.mubr.bf16.mxu0 0
      %1072 = vmatmul.mubr.bf16.gmra.mrb[0].mxu0 %v994
      %v1073 = vpop.f32.mrb[0].mxu0
      %v1074 = vadd.f32 0.0, %v1073
      %v1075 = vpop.f32.mrb[0].mxu0
      %v1076 = vpop.f32.mrb[0].mxu0
      %v1077 = vadd.f32 0.0, %v1076
      %v1078 = vpop.f32.mrb[0].mxu0
      %1079 = vmatprep.mubr.bf16.mxu0 0
      %1080 = vmatmul.mubr.bf16.gmra.mrb[0].mxu0 %v997
      %v1081 = vpop.f32.mrb[0].mxu0
      %v1082 = vadd.f32 0.0, %v1081
      %v1083 = vpop.f32.mrb[0].mxu0
      %v1084 = vpop.f32.mrb[0].mxu0
      %v1085 = vpop.f32.mrb[0].mxu0
      %1086 = vdwg.mxu0
      %v1087 = vadd.f32 %v928, %v1034
      %v1088 = vadd.f32 %v929, %v1037
      %v1089 = vadd.f32 %v930, %v1042
      %v1090 = vadd.f32 %v931, %v1045
      %v1091 = vadd.f32 %v932, %v1050
      %v1092 = vadd.f32 %v933, %v1053
      %v1093 = vadd.f32 %v934, %v1058
      %v1094 = vadd.f32 %v935, %v1061
      %v1095 = vadd.f32 %v936, %v1066
      %v1096 = vadd.f32 %v937, %v1069
      %v1097 = vadd.f32 %v938, %v1074
      %v1098 = vadd.f32 %v939, %v1077
      %v1099 = vadd.f32 %v940, %v1082
      %v1100 = vld [vmem:[%s165 + $0x16] sm:$0xff]
      %v1101 = vld [vmem:[%s165 + $0x1e] sm:$0xff]
      %v1102 = vld [vmem:[%s165 + $0x26] sm:$0xff]
      %v1103 = vld [vmem:[%s165 + $0x2e] sm:$0xff]
      %v1104 = vld [vmem:[%s165 + $0x36] sm:$0xff]
      %v1105 = vld [vmem:[%s165 + $0x3e] sm:$0xff]
      %v1106 = vld [vmem:[%s165 + $0x46] sm:$0xff]
      %v1107 = vld [vmem:[%s165 + $0x4e] sm:$0xff]
      %v1108 = vld [vmem:[%s165 + $0x56] sm:$0xff]
      %v1109 = vld [vmem:[%s165 + $0x5e] sm:$0xff]
      %v1110 = vld [vmem:[%s165 + $0x66] sm:$0xff]
      %v1111 = vld [vmem:[%s165 + $0x6e] sm:$0xff]
      %v1112 = vld [vmem:[%s165 + $0x76] sm:$0x1]
      %v1113 = vpack.c.bf16 %v1101, %v1100
      %v1114 = vpack.c.bf16 %v1103, %v1102
      %v1115 = vpack.c.bf16 %v1105, %v1104
      %v1116 = vpack.c.bf16 %v1107, %v1106
      %v1117 = vpack.c.bf16 %v1109, %v1108
      %v1118 = vpack.c.bf16 %v1111, %v1110
      %v1119 = vpack.c.bf16 %v1112, %v1112
      %s1120 = scalar_lea.vmem %s1, 96
      %v1121 = vld [vmem:[%s1120] sm:$0xf]
      %v1122 = vld [vmem:[%s1120 + $0x4] sm:$0xf]
      %v1123 = vld [vmem:[%s1120 + $0x8] sm:$0xf]
      %v1124 = vld [vmem:[%s1120 + $0xc] sm:$0xf]
      %v1129 = vunpack.c.l.b16 %v1121
      %v1130 = vunpack.c.l.b16 %v1122
      %v1131 = vunpack.c.l.b16 %v1123
      %v1132 = vunpack.c.l.b16 %v1124
      %v1133 = vpack.c.b16 %v1130, %v1129
      %v1134 = vpack.c.b16 %v1132, %v1131
      %v1138 = vsel %vm233, %v1113, 0
      %v1141 = vsel %vm233, %v1114, 0
      %v1144 = vsel %vm233, %v1115, 0
      %v1147 = vsel %vm233, %v1116, 0
      %v1150 = vsel %vm233, %v1117, 0
      %v1153 = vsel %vm233, %v1118, 0
      %v1156 = vsel %vm233, %v1119, 0
      %1158 = vmatprep.subr.bf16.mxu0 0
      %1159 = vmatpush1.bf16.msra.mxu0 %v1133
      %1160 = vmatprep.subr.bf16.mxu0 0
      %1161 = vmatpush1.bf16.msra.mxu0 %v1134
      %1162 = vmatprep.subr.bf16.mxu0 0
      %1163 = vmatpush1.bf16.msra.mxu0 0
      %1164 = vmatprep.subr.bf16.mxu0 0
      %1165 = vmatpush1.bf16.msra.mxu0 0
      %1166 = vmatprep.subr.bf16.mxu0 0
      %1167 = vmatpush1.bf16.msra.mxu0 0
      %1168 = vmatprep.subr.bf16.mxu0 0
      %1169 = vmatpush1.bf16.msra.mxu0 0
      %1170 = vmatprep.subr.bf16.mxu0 0
      %1171 = vmatpush1.bf16.msra.mxu0 0
      %1172 = vmatprep.subr.bf16.mxu0 0
      %1173 = vmatpush1.bf16.msra.mxu0 0
      %1174 = vmatprep.subr.bf16.mxu0 0
      %1175 = vmatpush1.bf16.msra.mxu0 0
      %1176 = vmatprep.subr.bf16.mxu0 0
      %1177 = vmatpush1.bf16.msra.mxu0 0
      %1178 = vmatprep.subr.bf16.mxu0 0
      %1179 = vmatpush1.bf16.msra.mxu0 0
      %1180 = vmatprep.subr.bf16.mxu0 0
      %1181 = vmatpush1.bf16.msra.mxu0 0
      %1182 = vmatprep.subr.bf16.mxu0 0
      %1183 = vmatpush1.bf16.msra.mxu0 0
      %1184 = vmatprep.subr.bf16.mxu0 0
      %1185 = vmatpush1.bf16.msra.mxu0 0
      %1186 = vmatprep.subr.bf16.mxu0 0
      %1187 = vmatpush1.bf16.msra.mxu0 0
      %1188 = vmatprep.subr.bf16.mxu0 0
      %1189 = vmatpush1.bf16.msra.mxu0 0
      %1190 = vmatprep.mubr.bf16.mxu0 0
      %1191 = vmatmul.mubr.bf16.gmra.mrb[0].mxu0 %v1138
      %v1192 = vpop.f32.mrb[0].mxu0
      %v1193 = vadd.f32 0.0, %v1192
      %v1194 = vpop.f32.mrb[0].mxu0
      %v1195 = vpop.f32.mrb[0].mxu0
      %v1196 = vadd.f32 0.0, %v1195
      %v1197 = vpop.f32.mrb[0].mxu0
      %1198 = vmatprep.mubr.bf16.mxu0 0
      %1199 = vmatmul.mubr.bf16.gmra.mrb[0].mxu0 %v1141
      %v1200 = vpop.f32.mrb[0].mxu0
      %v1201 = vadd.f32 0.0, %v1200
      %v1202 = vpop.f32.mrb[0].mxu0
      %v1203 = vpop.f32.mrb[0].mxu0
      %v1204 = vadd.f32 0.0, %v1203
      %v1205 = vpop.f32.mrb[0].mxu0
      %1206 = vmatprep.mubr.bf16.mxu0 0
      %1207 = vmatmul.mubr.bf16.gmra.mrb[0].mxu0 %v1144
      %v1208 = vpop.f32.mrb[0].mxu0
      %v1209 = vadd.f32 0.0, %v1208
      %v1210 = vpop.f32.mrb[0].mxu0
      %v1211 = vpop.f32.mrb[0].mxu0
      %v1212 = vadd.f32 0.0, %v1211
      %v1213 = vpop.f32.mrb[0].mxu0
      %1214 = vmatprep.mubr.bf16.mxu0 0
      %1215 = vmatmul.mubr.bf16.gmra.mrb[0].mxu0 %v1147
      %v1216 = vpop.f32.mrb[0].mxu0
      %v1217 = vadd.f32 0.0, %v1216
      %v1218 = vpop.f32.mrb[0].mxu0
      %v1219 = vpop.f32.mrb[0].mxu0
      %v1220 = vadd.f32 0.0, %v1219
      %v1221 = vpop.f32.mrb[0].mxu0
      %1222 = vmatprep.mubr.bf16.mxu0 0
      %1223 = vmatmul.mubr.bf16.gmra.mrb[0].mxu0 %v1150
      %v1224 = vpop.f32.mrb[0].mxu0
      %v1225 = vadd.f32 0.0, %v1224
      %v1226 = vpop.f32.mrb[0].mxu0
      %v1227 = vpop.f32.mrb[0].mxu0
      %v1228 = vadd.f32 0.0, %v1227
      %v1229 = vpop.f32.mrb[0].mxu0
      %1230 = vmatprep.mubr.bf16.mxu0 0
      %1231 = vmatmul.mubr.bf16.gmra.mrb[0].mxu0 %v1153
      %v1232 = vpop.f32.mrb[0].mxu0
      %v1233 = vadd.f32 0.0, %v1232
      %v1234 = vpop.f32.mrb[0].mxu0
      %v1235 = vpop.f32.mrb[0].mxu0
      %v1236 = vadd.f32 0.0, %v1235
      %v1237 = vpop.f32.mrb[0].mxu0
      %1238 = vmatprep.mubr.bf16.mxu0 0
      %1239 = vmatmul.mubr.bf16.gmra.mrb[0].mxu0 %v1156
      %v1240 = vpop.f32.mrb[0].mxu0
      %v1241 = vadd.f32 0.0, %v1240
      %v1242 = vpop.f32.mrb[0].mxu0
      %v1243 = vpop.f32.mrb[0].mxu0
      %v1244 = vpop.f32.mrb[0].mxu0
      %1245 = vdwg.mxu0
      %v1246 = vadd.f32 %v1087, %v1193
      %v1247 = vadd.f32 %v1088, %v1196
      %v1248 = vadd.f32 %v1089, %v1201
      %v1249 = vadd.f32 %v1090, %v1204
      %v1250 = vadd.f32 %v1091, %v1209
      %v1251 = vadd.f32 %v1092, %v1212
      %v1252 = vadd.f32 %v1093, %v1217
      %v1253 = vadd.f32 %v1094, %v1220
      %v1254 = vadd.f32 %v1095, %v1225
      %v1255 = vadd.f32 %v1096, %v1228
      %v1256 = vadd.f32 %v1097, %v1233
      %v1257 = vadd.f32 %v1098, %v1236
      %v1258 = vadd.f32 %v1099, %v1241
      %v1259 = vld [vmem:[%s165 + $0x17] sm:$0xff]
      %v1260 = vld [vmem:[%s165 + $0x1f] sm:$0xff]
      %v1261 = vld [vmem:[%s165 + $0x27] sm:$0xff]
      %v1262 = vld [vmem:[%s165 + $0x2f] sm:$0xff]
      %v1263 = vld [vmem:[%s165 + $0x37] sm:$0xff]
      %v1264 = vld [vmem:[%s165 + $0x3f] sm:$0xff]
      %v1265 = vld [vmem:[%s165 + $0x47] sm:$0xff]
      %v1266 = vld [vmem:[%s165 + $0x4f] sm:$0xff]
      %v1267 = vld [vmem:[%s165 + $0x57] sm:$0xff]
      %v1268 = vld [vmem:[%s165 + $0x5f] sm:$0xff]
      %v1269 = vld [vmem:[%s165 + $0x67] sm:$0xff]
      %v1270 = vld [vmem:[%s165 + $0x6f] sm:$0xff]
      %v1271 = vld [vmem:[%s165 + $0x77] sm:$0x1]
      %v1272 = vpack.c.bf16 %v1260, %v1259
      %v1273 = vpack.c.bf16 %v1262, %v1261
      %v1274 = vpack.c.bf16 %v1264, %v1263
      %v1275 = vpack.c.bf16 %v1266, %v1265
      %v1276 = vpack.c.bf16 %v1268, %v1267
      %v1277 = vpack.c.bf16 %v1270, %v1269
      %v1278 = vpack.c.bf16 %v1271, %v1271
      %s1279 = scalar_lea.vmem %s1, 112
      %v1280 = vld [vmem:[%s1279] sm:$0xf]
      %v1281 = vld [vmem:[%s1279 + $0x4] sm:$0xf]
      %v1282 = vld [vmem:[%s1279 + $0x8] sm:$0xf]
      %v1283 = vld [vmem:[%s1279 + $0xc] sm:$0xf]
      %v1288 = vunpack.c.l.b16 %v1280
      %v1289 = vunpack.c.l.b16 %v1281
      %v1290 = vunpack.c.l.b16 %v1282
      %v1291 = vunpack.c.l.b16 %v1283
      %v1292 = vpack.c.b16 %v1289, %v1288
      %v1293 = vpack.c.b16 %v1291, %v1290
      %v1297 = vsel %vm233, %v1272, 0
      %v1300 = vsel %vm233, %v1273, 0
      %v1303 = vsel %vm233, %v1274, 0
      %v1306 = vsel %vm233, %v1275, 0
      %v1309 = vsel %vm233, %v1276, 0
      %v1312 = vsel %vm233, %v1277, 0
      %v1315 = vsel %vm233, %v1278, 0
      %1317 = vmatprep.subr.bf16.mxu0 0
      %1318 = vmatpush1.bf16.msra.mxu0 %v1292
      %1319 = vmatprep.subr.bf16.mxu0 0
      %1320 = vmatpush1.bf16.msra.mxu0 %v1293
      %1321 = vmatprep.subr.bf16.mxu0 0
      %1322 = vmatpush1.bf16.msra.mxu0 0
      %1323 = vmatprep.subr.bf16.mxu0 0
      %1324 = vmatpush1.bf16.msra.mxu0 0
      %1325 = vmatprep.subr.bf16.mxu0 0
      %1326 = vmatpush1.bf16.msra.mxu0 0
      %1327 = vmatprep.subr.bf16.mxu0 0
      %1328 = vmatpush1.bf16.msra.mxu0 0
      %1329 = vmatprep.subr.bf16.mxu0 0
      %1330 = vmatpush1.bf16.msra.mxu0 0
      %1331 = vmatprep.subr.bf16.mxu0 0
      %1332 = vmatpush1.bf16.msra.mxu0 0
      %1333 = vmatprep.subr.bf16.mxu0 0
      %1334 = vmatpush1.bf16.msra.mxu0 0
      %1335 = vmatprep.subr.bf16.mxu0 0
      %1336 = vmatpush1.bf16.msra.mxu0 0
      %1337 = vmatprep.subr.bf16.mxu0 0
      %1338 = vmatpush1.bf16.msra.mxu0 0
      %1339 = vmatprep.subr.bf16.mxu0 0
      %1340 = vmatpush1.bf16.msra.mxu0 0
      %1341 = vmatprep.subr.bf16.mxu0 0
      %1342 = vmatpush1.bf16.msra.mxu0 0
      %1343 = vmatprep.subr.bf16.mxu0 0
      %1344 = vmatpush1.bf16.msra.mxu0 0
      %1345 = vmatprep.subr.bf16.mxu0 0
      %1346 = vmatpush1.bf16.msra.mxu0 0
      %1347 = vmatprep.subr.bf16.mxu0 0
      %1348 = vmatpush1.bf16.msra.mxu0 0
      %1349 = vmatprep.mubr.bf16.mxu0 0
      %1350 = vmatmul.mubr.bf16.gmra.mrb[0].mxu0 %v1297
      %v1351 = vpop.f32.mrb[0].mxu0
      %v1352 = vadd.f32 0.0, %v1351
      %v1353 = vpop.f32.mrb[0].mxu0
      %v1354 = vpop.f32.mrb[0].mxu0
      %v1355 = vadd.f32 0.0, %v1354
      %v1356 = vpop.f32.mrb[0].mxu0
      %1357 = vmatprep.mubr.bf16.mxu0 0
      %1358 = vmatmul.mubr.bf16.gmra.mrb[0].mxu0 %v1300
      %v1359 = vpop.f32.mrb[0].mxu0
      %v1360 = vadd.f32 0.0, %v1359
      %v1361 = vpop.f32.mrb[0].mxu0
      %v1362 = vpop.f32.mrb[0].mxu0
      %v1363 = vadd.f32 0.0, %v1362
      %v1364 = vpop.f32.mrb[0].mxu0
      %1365 = vmatprep.mubr.bf16.mxu0 0
      %1366 = vmatmul.mubr.bf16.gmra.mrb[0].mxu0 %v1303
      %v1367 = vpop.f32.mrb[0].mxu0
      %v1368 = vadd.f32 0.0, %v1367
      %v1369 = vpop.f32.mrb[0].mxu0
      %v1370 = vpop.f32.mrb[0].mxu0
      %v1371 = vadd.f32 0.0, %v1370
      %v1372 = vpop.f32.mrb[0].mxu0
      %1373 = vmatprep.mubr.bf16.mxu0 0
      %1374 = vmatmul.mubr.bf16.gmra.mrb[0].mxu0 %v1306
      %v1375 = vpop.f32.mrb[0].mxu0
      %v1376 = vadd.f32 0.0, %v1375
      %v1377 = vpop.f32.mrb[0].mxu0
      %v1378 = vpop.f32.mrb[0].mxu0
      %v1379 = vadd.f32 0.0, %v1378
      %v1380 = vpop.f32.mrb[0].mxu0
      %1381 = vmatprep.mubr.bf16.mxu0 0
      %1382 = vmatmul.mubr.bf16.gmra.mrb[0].mxu0 %v1309
      %v1383 = vpop.f32.mrb[0].mxu0
      %v1384 = vadd.f32 0.0, %v1383
      %v1385 = vpop.f32.mrb[0].mxu0
      %v1386 = vpop.f32.mrb[0].mxu0
      %v1387 = vadd.f32 0.0, %v1386
      %v1388 = vpop.f32.mrb[0].mxu0
      %1389 = vmatprep.mubr.bf16.mxu0 0
      %1390 = vmatmul.mubr.bf16.gmra.mrb[0].mxu0 %v1312
      %v1391 = vpop.f32.mrb[0].mxu0
      %v1392 = vadd.f32 0.0, %v1391
      %v1393 = vpop.f32.mrb[0].mxu0
      %v1394 = vpop.f32.mrb[0].mxu0
      %v1395 = vadd.f32 0.0, %v1394
      %v1396 = vpop.f32.mrb[0].mxu0
      %1397 = vmatprep.mubr.bf16.mxu0 0
      %1398 = vmatmul.mubr.bf16.gmra.mrb[0].mxu0 %v1315
      %v1399 = vpop.f32.mrb[0].mxu0
      %v1400 = vadd.f32 0.0, %v1399
      %v1401 = vpop.f32.mrb[0].mxu0
      %v1402 = vpop.f32.mrb[0].mxu0
      %v1403 = vpop.f32.mrb[0].mxu0
      %1404 = vdwg.mxu0
      %v1405 = vadd.f32 %v1246, %v1352
      %v1406 = vadd.f32 %v1247, %v1355
      %v1407 = vadd.f32 %v1248, %v1360
      %v1408 = vadd.f32 %v1249, %v1363
      %v1409 = vadd.f32 %v1250, %v1368
      %v1410 = vadd.f32 %v1251, %v1371
      %v1411 = vadd.f32 %v1252, %v1376
      %v1412 = vadd.f32 %v1253, %v1379
      %v1413 = vadd.f32 %v1254, %v1384
      %v1414 = vadd.f32 %v1255, %v1387
      %v1415 = vadd.f32 %v1256, %v1392
      %v1416 = vadd.f32 %v1257, %v1395
      %v1417 = vadd.f32 %v1258, %v1400
      %v1418 = vld [vmem:[%s165 + $0x18] sm:$0xff]
      %v1419 = vld [vmem:[%s165 + $0x20] sm:$0xff]
      %v1420 = vld [vmem:[%s165 + $0x28] sm:$0xff]
      %v1421 = vld [vmem:[%s165 + $0x30] sm:$0xff]
      %v1422 = vld [vmem:[%s165 + $0x38] sm:$0xff]
      %v1423 = vld [vmem:[%s165 + $0x40] sm:$0xff]
      %v1424 = vld [vmem:[%s165 + $0x48] sm:$0xff]
      %v1425 = vld [vmem:[%s165 + $0x50] sm:$0xff]
      %v1426 = vld [vmem:[%s165 + $0x58] sm:$0xff]
      %v1427 = vld [vmem:[%s165 + $0x60] sm:$0xff]
      %v1428 = vld [vmem:[%s165 + $0x68] sm:$0xff]
      %v1429 = vld [vmem:[%s165 + $0x70] sm:$0xff]
      %v1430 = vld [vmem:[%s165 + $0x78] sm:$0x1]
      %v1431 = vpack.c.bf16 %v1419, %v1418
      %v1432 = vpack.c.bf16 %v1421, %v1420
      %v1433 = vpack.c.bf16 %v1423, %v1422
      %v1434 = vpack.c.bf16 %v1425, %v1424
      %v1435 = vpack.c.bf16 %v1427, %v1426
      %v1436 = vpack.c.bf16 %v1429, %v1428
      %v1437 = vpack.c.bf16 %v1430, %v1430
      %s1438 = scalar_lea.vmem %s1, 128
      %v1439 = vld [vmem:[%s1438] sm:$0xf]
      %v1440 = vld [vmem:[%s1438 + $0x4] sm:$0xf]
      %v1441 = vld [vmem:[%s1438 + $0x8] sm:$0xf]
      %v1442 = vld [vmem:[%s1438 + $0xc] sm:$0xf]
      %v1447 = vunpack.c.l.b16 %v1439
      %v1448 = vunpack.c.l.b16 %v1440
      %v1449 = vunpack.c.l.b16 %v1441
      %v1450 = vunpack.c.l.b16 %v1442
      %v1451 = vpack.c.b16 %v1448, %v1447
      %v1452 = vpack.c.b16 %v1450, %v1449
      %v1456 = vsel %vm233, %v1431, 0
      %v1459 = vsel %vm233, %v1432, 0
      %v1462 = vsel %vm233, %v1433, 0
      %v1465 = vsel %vm233, %v1434, 0
      %v1468 = vsel %vm233, %v1435, 0
      %v1471 = vsel %vm233, %v1436, 0
      %v1474 = vsel %vm233, %v1437, 0
      %1476 = vmatprep.subr.bf16.mxu0 0
      %1477 = vmatpush1.bf16.msra.mxu0 %v1451
      %1478 = vmatprep.subr.bf16.mxu0 0
      %1479 = vmatpush1.bf16.msra.mxu0 %v1452
      %1480 = vmatprep.subr.bf16.mxu0 0
      %1481 = vmatpush1.bf16.msra.mxu0 0
      %1482 = vmatprep.subr.bf16.mxu0 0
      %1483 = vmatpush1.bf16.msra.mxu0 0
      %1484 = vmatprep.subr.bf16.mxu0 0
      %1485 = vmatpush1.bf16.msra.mxu0 0
      %1486 = vmatprep.subr.bf16.mxu0 0
      %1487 = vmatpush1.bf16.msra.mxu0 0
      %1488 = vmatprep.subr.bf16.mxu0 0
      %1489 = vmatpush1.bf16.msra.mxu0 0
      %1490 = vmatprep.subr.bf16.mxu0 0
      %1491 = vmatpush1.bf16.msra.mxu0 0
      %1492 = vmatprep.subr.bf16.mxu0 0
      %1493 = vmatpush1.bf16.msra.mxu0 0
      %1494 = vmatprep.subr.bf16.mxu0 0
      %1495 = vmatpush1.bf16.msra.mxu0 0
      %1496 = vmatprep.subr.bf16.mxu0 0
      %1497 = vmatpush1.bf16.msra.mxu0 0
      %1498 = vmatprep.subr.bf16.mxu0 0
      %1499 = vmatpush1.bf16.msra.mxu0 0
      %1500 = vmatprep.subr.bf16.mxu0 0
      %1501 = vmatpush1.bf16.msra.mxu0 0
      %1502 = vmatprep.subr.bf16.mxu0 0
      %1503 = vmatpush1.bf16.msra.mxu0 0
      %1504 = vmatprep.subr.bf16.mxu0 0
      %1505 = vmatpush1.bf16.msra.mxu0 0
      %1506 = vmatprep.subr.bf16.mxu0 0
      %1507 = vmatpush1.bf16.msra.mxu0 0
      %1508 = vmatprep.mubr.bf16.mxu0 0
      %1509 = vmatmul.mubr.bf16.gmra.mrb[0].mxu0 %v1456
      %v1510 = vpop.f32.mrb[0].mxu0
      %v1511 = vadd.f32 0.0, %v1510
      %v1512 = vpop.f32.mrb[0].mxu0
      %v1513 = vpop.f32.mrb[0].mxu0
      %v1514 = vadd.f32 0.0, %v1513
      %v1515 = vpop.f32.mrb[0].mxu0
      %1516 = vmatprep.mubr.bf16.mxu0 0
      %1517 = vmatmul.mubr.bf16.gmra.mrb[0].mxu0 %v1459
      %v1518 = vpop.f32.mrb[0].mxu0
      %v1519 = vadd.f32 0.0, %v1518
      %v1520 = vpop.f32.mrb[0].mxu0
      %v1521 = vpop.f32.mrb[0].mxu0
      %v1522 = vadd.f32 0.0, %v1521
      %v1523 = vpop.f32.mrb[0].mxu0
      %1524 = vmatprep.mubr.bf16.mxu0 0
      %1525 = vmatmul.mubr.bf16.gmra.mrb[0].mxu0 %v1462
      %v1526 = vpop.f32.mrb[0].mxu0
      %v1527 = vadd.f32 0.0, %v1526
      %v1528 = vpop.f32.mrb[0].mxu0
      %v1529 = vpop.f32.mrb[0].mxu0
      %v1530 = vadd.f32 0.0, %v1529
      %v1531 = vpop.f32.mrb[0].mxu0
      %1532 = vmatprep.mubr.bf16.mxu0 0
      %1533 = vmatmul.mubr.bf16.gmra.mrb[0].mxu0 %v1465
      %v1534 = vpop.f32.mrb[0].mxu0
      %v1535 = vadd.f32 0.0, %v1534
      %v1536 = vpop.f32.mrb[0].mxu0
      %v1537 = vpop.f32.mrb[0].mxu0
      %v1538 = vadd.f32 0.0, %v1537
      %v1539 = vpop.f32.mrb[0].mxu0
      %1540 = vmatprep.mubr.bf16.mxu0 0
      %1541 = vmatmul.mubr.bf16.gmra.mrb[0].mxu0 %v1468
      %v1542 = vpop.f32.mrb[0].mxu0
      %v1543 = vadd.f32 0.0, %v1542
      %v1544 = vpop.f32.mrb[0].mxu0
      %v1545 = vpop.f32.mrb[0].mxu0
      %v1546 = vadd.f32 0.0, %v1545
      %v1547 = vpop.f32.mrb[0].mxu0
      %1548 = vmatprep.mubr.bf16.mxu0 0
      %1549 = vmatmul.mubr.bf16.gmra.mrb[0].mxu0 %v1471
      %v1550 = vpop.f32.mrb[0].mxu0
      %v1551 = vadd.f32 0.0, %v1550
      %v1552 = vpop.f32.mrb[0].mxu0
      %v1553 = vpop.f32.mrb[0].mxu0
      %v1554 = vadd.f32 0.0, %v1553
      %v1555 = vpop.f32.mrb[0].mxu0
      %1556 = vmatprep.mubr.bf16.mxu0 0
      %1557 = vmatmul.mubr.bf16.gmra.mrb[0].mxu0 %v1474
      %v1558 = vpop.f32.mrb[0].mxu0
      %v1559 = vadd.f32 0.0, %v1558
      %v1560 = vpop.f32.mrb[0].mxu0
      %v1561 = vpop.f32.mrb[0].mxu0
      %v1562 = vpop.f32.mrb[0].mxu0
      %1563 = vdwg.mxu0
      %v1564 = vadd.f32 %v1405, %v1511
      %v1565 = vadd.f32 %v1406, %v1514
      %v1566 = vadd.f32 %v1407, %v1519
      %v1567 = vadd.f32 %v1408, %v1522
      %v1568 = vadd.f32 %v1409, %v1527
      %v1569 = vadd.f32 %v1410, %v1530
      %v1570 = vadd.f32 %v1411, %v1535
      %v1571 = vadd.f32 %v1412, %v1538
      %v1572 = vadd.f32 %v1413, %v1543
      %v1573 = vadd.f32 %v1414, %v1546
      %v1574 = vadd.f32 %v1415, %v1551
      %v1575 = vadd.f32 %v1416, %v1554
      %v1576 = vadd.f32 %v1417, %v1559
      %v1577 = vld [vmem:[%s2] sm:$0x1]
      %v1579 = vlaneseq
      %v1580 = vshrl.u32 %v1579, 7
      %v1581 = vsub.s32 0, %v1580
      %v1582 = vrot.slane %v1577, %v1581
      %v1584 = vadd.f32 %v1564, %v1582
      %v1585 = vadd.f32 %v1565, %v1582
      %v1586 = vadd.f32 %v1566, %v1582
      %v1587 = vadd.f32 %v1567, %v1582
      %v1588 = vadd.f32 %v1568, %v1582
      %v1589 = vadd.f32 %v1569, %v1582
      %v1590 = vadd.f32 %v1570, %v1582
      %v1591 = vadd.f32 %v1571, %v1582
      %v1592 = vadd.f32 %v1572, %v1582
      %v1593 = vadd.f32 %v1573, %v1582
      %v1594 = vadd.f32 %v1574, %v1582
      %v1595 = vadd.f32 %v1575, %v1582
      %v1596 = vadd.f32 %v1576, %v1582
      %v1597 = vmax.f32 %v1584, 0.0
      %v1598 = vmax.f32 %v1585, 0.0
      %v1599 = vmax.f32 %v1586, 0.0
      %v1600 = vmax.f32 %v1587, 0.0
      %v1601 = vmax.f32 %v1588, 0.0
      %v1602 = vmax.f32 %v1589, 0.0
      %v1603 = vmax.f32 %v1590, 0.0
      %v1604 = vmax.f32 %v1591, 0.0
      %v1605 = vmax.f32 %v1592, 0.0
      %v1606 = vmax.f32 %v1593, 0.0
      %v1607 = vmax.f32 %v1594, 0.0
      %v1608 = vmax.f32 %v1595, 0.0
      %v1609 = vmax.f32 %v1596, 0.0
      %vm1610 = vcmask 523264
      %1611 = vst.msk [vmem:[#allocation2] sm:$0xff] %vm1610, %v1597
      %1612 = vst.msk [vmem:[#allocation2 + $0x8] sm:$0xff] %vm1610, %v1598
      %1613 = vst.msk [vmem:[#allocation2 + $0x10] sm:$0xff] %vm1610, %v1599
      %1614 = vst.msk [vmem:[#allocation2 + $0x18] sm:$0xff] %vm1610, %v1600
      %1615 = vst.msk [vmem:[#allocation2 + $0x20] sm:$0xff] %vm1610, %v1601
      %1616 = vst.msk [vmem:[#allocation2 + $0x28] sm:$0xff] %vm1610, %v1602
      %1617 = vst.msk [vmem:[#allocation2 + $0x30] sm:$0xff] %vm1610, %v1603
      %1618 = vst.msk [vmem:[#allocation2 + $0x38] sm:$0xff] %vm1610, %v1604
      %1619 = vst.msk [vmem:[#allocation2 + $0x40] sm:$0xff] %vm1610, %v1605
      %1620 = vst.msk [vmem:[#allocation2 + $0x48] sm:$0xff] %vm1610, %v1606
      %1621 = vst.msk [vmem:[#allocation2 + $0x50] sm:$0xff] %vm1610, %v1607
      %1622 = vst.msk [vmem:[#allocation2 + $0x58] sm:$0xff] %vm1610, %v1608
      %vm1623 = vcmask 516096
      %1624 = vst.msk [vmem:[#allocation2 + $0x60] sm:$0x1] %vm1623, %v1609
      %v1625 = vld [vmem:[#allocation2] sm:$0xff]
      %v1626 = vld [vmem:[#allocation2 + $0x8] sm:$0xff]
      %v1627 = vld [vmem:[#allocation2 + $0x10] sm:$0xff]
      %v1628 = vld [vmem:[#allocation2 + $0x18] sm:$0xff]
      %v1629 = vld [vmem:[#allocation2 + $0x20] sm:$0xff]
      %v1630 = vld [vmem:[#allocation2 + $0x28] sm:$0xff]
      %v1631 = vld [vmem:[#allocation2 + $0x30] sm:$0xff]
      %v1632 = vld [vmem:[#allocation2 + $0x38] sm:$0xff]
      %v1633 = vld [vmem:[#allocation2 + $0x40] sm:$0xff]
      %v1634 = vld [vmem:[#allocation2 + $0x48] sm:$0xff]
      %v1635 = vld [vmem:[#allocation2 + $0x50] sm:$0x1f]
      %v1636 = vld [vmem:[#allocation2 + $0x1] sm:$0xff]
      %v1637 = vld [vmem:[#allocation2 + $0x9] sm:$0xff]
      %v1638 = vld [vmem:[#allocation2 + $0x11] sm:$0xff]
      %v1639 = vld [vmem:[#allocation2 + $0x19] sm:$0xff]
      %v1640 = vld [vmem:[#allocation2 + $0x21] sm:$0xff]
      %v1641 = vld [vmem:[#allocation2 + $0x29] sm:$0xff]
      %v1642 = vld [vmem:[#allocation2 + $0x31] sm:$0xff]
      %v1643 = vld [vmem:[#allocation2 + $0x39] sm:$0xff]
      %v1644 = vld [vmem:[#allocation2 + $0x41] sm:$0xff]
      %v1645 = vld [vmem:[#allocation2 + $0x49] sm:$0xff]
      %v1646 = vld [vmem:[#allocation2 + $0x51] sm:$0x1f]
      %v1647 = vmax.f32 %v1625, %v1636
      %v1648 = vmax.f32 %v1626, %v1637
      %v1649 = vmax.f32 %v1627, %v1638
      %v1650 = vmax.f32 %v1628, %v1639
      %v1651 = vmax.f32 %v1629, %v1640
      %v1652 = vmax.f32 %v1630, %v1641
      %v1653 = vmax.f32 %v1631, %v1642
      %v1654 = vmax.f32 %v1632, %v1643
      %v1655 = vmax.f32 %v1633, %v1644
      %v1656 = vmax.f32 %v1634, %v1645
      %v1657 = vmax.f32 %v1635, %v1646
      %v1658 = vld [vmem:[#allocation2 + $0xb] sm:$0xff]
      %v1659 = vld [vmem:[#allocation2 + $0x13] sm:$0xff]
      %v1660 = vld [vmem:[#allocation2 + $0x1b] sm:$0xff]
      %v1661 = vld [vmem:[#allocation2 + $0x23] sm:$0xff]
      %v1662 = vld [vmem:[#allocation2 + $0x2b] sm:$0xff]
      %v1663 = vld [vmem:[#allocation2 + $0x33] sm:$0xff]
      %v1664 = vld [vmem:[#allocation2 + $0x3b] sm:$0xff]
      %v1665 = vld [vmem:[#allocation2 + $0x43] sm:$0xff]
      %v1666 = vld [vmem:[#allocation2 + $0x4b] sm:$0xff]
      %v1667 = vld [vmem:[#allocation2 + $0x53] sm:$0xff]
      %v1668 = vld [vmem:[#allocation2 + $0x5b] sm:$0x1f]
      %v1669 = vld [vmem:[#allocation2 + $0xc] sm:$0xff]
      %v1670 = vld [vmem:[#allocation2 + $0x14] sm:$0xff]
      %v1671 = vld [vmem:[#allocation2 + $0x1c] sm:$0xff]
      %v1672 = vld [vmem:[#allocation2 + $0x24] sm:$0xff]
      %v1673 = vld [vmem:[#allocation2 + $0x2c] sm:$0xff]
      %v1674 = vld [vmem:[#allocation2 + $0x34] sm:$0xff]
      %v1675 = vld [vmem:[#allocation2 + $0x3c] sm:$0xff]
      %v1676 = vld [vmem:[#allocation2 + $0x44] sm:$0xff]
      %v1677 = vld [vmem:[#allocation2 + $0x4c] sm:$0xff]
      %v1678 = vld [vmem:[#allocation2 + $0x54] sm:$0xff]
      %v1679 = vld [vmem:[#allocation2 + $0x5c] sm:$0x1f]
      %v1680 = vmax.f32 %v1658, %v1669
      %v1681 = vmax.f32 %v1659, %v1670
      %v1682 = vmax.f32 %v1660, %v1671
      %v1683 = vmax.f32 %v1661, %v1672
      %v1684 = vmax.f32 %v1662, %v1673
      %v1685 = vmax.f32 %v1663, %v1674
      %v1686 = vmax.f32 %v1664, %v1675
      %v1687 = vmax.f32 %v1665, %v1676
      %v1688 = vmax.f32 %v1666, %v1677
      %v1689 = vmax.f32 %v1667, %v1678
      %v1690 = vmax.f32 %v1668, %v1679
      %v1691 = vmax.f32 %v1647, %v1680
      %v1692 = vmax.f32 %v1648, %v1681
      %v1693 = vmax.f32 %v1649, %v1682
      %v1694 = vmax.f32 %v1650, %v1683
      %v1695 = vmax.f32 %v1651, %v1684
      %v1696 = vmax.f32 %v1652, %v1685
      %v1697 = vmax.f32 %v1653, %v1686
      %v1698 = vmax.f32 %v1654, %v1687
      %v1699 = vmax.f32 %v1655, %v1688
      %v1700 = vmax.f32 %v1656, %v1689
      %v1701 = vmax.f32 %v1657, %v1690
      %1702 = vst.msk [vmem:[%s170] sm:$0xff] %vm1610, %v1691
      %1703 = vst.msk [vmem:[%s170 + $0x8] sm:$0xff] %vm1610, %v1692
      %1704 = vst.msk [vmem:[%s170 + $0x10] sm:$0xff] %vm1610, %v1693
      %1705 = vst.msk [vmem:[%s170 + $0x18] sm:$0xff] %vm1610, %v1694
      %1706 = vst.msk [vmem:[%s170 + $0x20] sm:$0xff] %vm1610, %v1695
      %1707 = vst.msk [vmem:[%s170 + $0x28] sm:$0xff] %vm1610, %v1696
      %1708 = vst.msk [vmem:[%s170 + $0x30] sm:$0xff] %vm1610, %v1697
      %1709 = vst.msk [vmem:[%s170 + $0x38] sm:$0xff] %vm1610, %v1698
      %1710 = vst.msk [vmem:[%s170 + $0x40] sm:$0xff] %vm1610, %v1699
      %1711 = vst.msk [vmem:[%s170 + $0x48] sm:$0xff] %vm1610, %v1700
      %vm1712 = vcmask 520192
      %1713 = vst.msk [vmem:[%s170 + $0x50] sm:$0x1f] %vm1712, %v1701
      %p1714 = scmp.lt.s32.totalorder %s14, 7
      %s1715 = scalar_select %p1714, %s14, 7
      %s1716 = smul.addr %s1715, 11
      %s1717 = smul.addr %s1716, 8
      %s1718 = scalar_lea.vmem %s3, %s1717
      // Predicated region
      $region33: #{cnn_lstm_forward.6} parent=31 // pred_check
        %p1719 = pneg %p100
      $region34: #{cnn_lstm_forward.6} parent=31 // pred_check_branch
        %1721 = sbr.rel (%p1719) target = $region36
      $region35: #{cnn_lstm_forward.6} parent=31 // pred_region
        _
      $region36: #{cnn_lstm_forward.6} parent=31 // pred_fallthru
        _
    $region32: #{cnn_lstm_forward.6} parent=5 // pred_fallthru
      _
    %p1722 = scmp.le.s32.totalorder 2, %s9
    // Predicated region
    $region37: #{cnn_lstm_forward.6} parent=5 // pred_check
      %p1723 = pneg %p1722
    $region38: #{cnn_lstm_forward.6} parent=5 // pred_check_branch
      %1725 = sbr.rel (%p1723) target = $region40
    $region39: #{cnn_lstm_forward.6} parent=5 // pred_region
      %s1726 = ssub.s32 %s9, 2
      // Predicated region
      $region41: #{cnn_lstm_forward.6} parent=39 // pred_check
        %p1727 = pneg %p106
      $region42: #{cnn_lstm_forward.6} parent=39 // pred_check_branch
        %1729 = sbr.rel (%p1727) target = $region44
      $region43: #{cnn_lstm_forward.6} parent=39 // pred_region
        %p1730 = scmp.lt.s32.totalorder %s15, 7
        %s1731 = scalar_select %p1730, %s15, 7
        %s1732 = smul.addr %s1731, 11
        %s1733 = smul.addr %s1732, 8
        %s1734 = scalar_lea.vmem %s3, %s1733
      $region44: #{cnn_lstm_forward.6} parent=39 // pred_fallthru
        _
    $region40: #{cnn_lstm_forward.6} parent=5 // pred_fallthru
      _
  $region6: #{cnn_lstm_forward.6} parent=0 // loop_footer
    %s13 = sadd.s32 1, %s9
  $region7: #{cnn_lstm_forward.6} parent=0 // loop_footer_branch
    %8 = sbr.rel target = $region3
  $region8: #{cnn_lstm_forward.6} parent=0 // loop_exit
    _

// kernel: cnn_lstm_forward.8
$region0: #{cnn_lstm_forward.8}
  #allocation0 [shape = 'u32[]', space=smem, size = 0x4, offset = 0x4, fixed_abs, tag = 'smem constant byte address 0x4 - core index']
  #allocation1 [shape = 'u32[144,128]{1,0:T(1,128)}', space=vmem, size = 0x12000, scoped, tag = 'internal scratch']
  %s0 = inlined_call_operand.vmem [shape: f32[8,128], index: 0, kind: input, shape index: {}]
  %s1 = inlined_call_operand.vmem [shape: bf16[128,512], index: 1, kind: input, shape index: {}]
  %s2 = inlined_call_operand.vmem [shape: f32[8,1], index: 2, kind: input, shape index: {}]
  %s3 = inlined_call_operand.vmem [shape: f32[1,512], index: 3, kind: input, shape index: {}]
  %s4 = inlined_call_operand.vmem [shape: f32[1,512], index: 4, kind: input, shape index: {}]
  %s5 = inlined_call_operand.vmem [shape: f32[8,512], index: 5, kind: output, shape index: {}]
  %s6 = sld [smem:[#allocation0]]
  $region30: #{cnn_lstm_forward.8} parent=0
    _
  %s8 = ssub.s32 1, %s6
  %s9 = scalar_select 0, %s8, %s6
  // Predicated region
  $region2: #{cnn_lstm_forward.8} parent=0 // pred_check
    _
  $region3: #{cnn_lstm_forward.8} parent=0 // pred_check_branch
    %11 = sbr.rel (0) target = $region5
  $region4: #{cnn_lstm_forward.8} parent=0 // pred_region
    _
  $region5: #{cnn_lstm_forward.8} parent=0 // pred_fallthru
    _
  // Predicated region
  $region6: #{cnn_lstm_forward.8} parent=0 // pred_check
    _
  $region7: #{cnn_lstm_forward.8} parent=0 // pred_check_branch
    %13 = sbr.rel (0) target = $region9
  $region8: #{cnn_lstm_forward.8} parent=0 // pred_region
    _
  $region9: #{cnn_lstm_forward.8} parent=0 // pred_fallthru
    _
  // Predicated region
  $region10: #{cnn_lstm_forward.8} parent=0 // pred_check
    _
  $region11: #{cnn_lstm_forward.8} parent=0 // pred_check_branch
    %15 = sbr.rel (0) target = $region13
  $region12: #{cnn_lstm_forward.8} parent=0 // pred_region
    _
  $region13: #{cnn_lstm_forward.8} parent=0 // pred_fallthru
    _
  // Predicated region
  $region14: #{cnn_lstm_forward.8} parent=0 // pred_check
    _
  $region15: #{cnn_lstm_forward.8} parent=0 // pred_check_branch
    %17 = sbr.rel (0) target = $region17
  $region16: #{cnn_lstm_forward.8} parent=0 // pred_region
    _
  $region17: #{cnn_lstm_forward.8} parent=0 // pred_fallthru
    _
  // Predicated region
  $region18: #{cnn_lstm_forward.8} parent=0 // pred_check
    _
  $region19: #{cnn_lstm_forward.8} parent=0 // pred_check_branch
    %19 = sbr.rel (0) target = $region21
  $region20: #{cnn_lstm_forward.8} parent=0 // pred_region
    _
  $region21: #{cnn_lstm_forward.8} parent=0 // pred_fallthru
    _
  %v21 = vld [vmem:[%s0] sm:$0xff]
  %v22 = vpack.c.bf16 %v21, %v21
  %v23 = vld [vmem:[%s1] sm:$0xff]
  %v24 = vld [vmem:[%s1 + $0x8] sm:$0xff]
  %v25 = vld [vmem:[%s1 + $0x10] sm:$0xff]
  %v26 = vld [vmem:[%s1 + $0x18] sm:$0xff]
  %v27 = vld [vmem:[%s1 + $0x20] sm:$0xff]
  %v28 = vld [vmem:[%s1 + $0x28] sm:$0xff]
  %v29 = vld [vmem:[%s1 + $0x30] sm:$0xff]
  %v30 = vld [vmem:[%s1 + $0x38] sm:$0xff]
  %v31 = vld [vmem:[%s1 + $0x40] sm:$0xff]
  %v32 = vld [vmem:[%s1 + $0x48] sm:$0xff]
  %v33 = vld [vmem:[%s1 + $0x50] sm:$0xff]
  %v34 = vld [vmem:[%s1 + $0x58] sm:$0xff]
  %v35 = vld [vmem:[%s1 + $0x60] sm:$0xff]
  %v36 = vld [vmem:[%s1 + $0x68] sm:$0xff]
  %v37 = vld [vmem:[%s1 + $0x70] sm:$0xff]
  %v38 = vld [vmem:[%s1 + $0x78] sm:$0xff]
  %v39 = vld [vmem:[%s1 + $0x80] sm:$0xff]
  %v40 = vld [vmem:[%s1 + $0x88] sm:$0xff]
  %v41 = vld [vmem:[%s1 + $0x90] sm:$0xff]
  %v42 = vld [vmem:[%s1 + $0x98] sm:$0xff]
  %v43 = vld [vmem:[%s1 + $0xa0] sm:$0xff]
  %v44 = vld [vmem:[%s1 + $0xa8] sm:$0xff]
  %v45 = vld [vmem:[%s1 + $0xb0] sm:$0xff]
  %v46 = vld [vmem:[%s1 + $0xb8] sm:$0xff]
  %v47 = vld [vmem:[%s1 + $0xc0] sm:$0xff]
  %v48 = vld [vmem:[%s1 + $0xc8] sm:$0xff]
  %v49 = vld [vmem:[%s1 + $0xd0] sm:$0xff]
  %v50 = vld [vmem:[%s1 + $0xd8] sm:$0xff]
  %v51 = vld [vmem:[%s1 + $0xe0] sm:$0xff]
  %v52 = vld [vmem:[%s1 + $0xe8] sm:$0xff]
  %v53 = vld [vmem:[%s1 + $0xf0] sm:$0xff]
  %v54 = vld [vmem:[%s1 + $0xf8] sm:$0xff]
  %v55 = vld [vmem:[%s2] sm:$0xff]
  %v56 = vld [vmem:[%s3] sm:$0xf]
  %58 = vset.pattern.permute.xlu0 0
  %59 = vperm.xlu0 %58, %v55
  %v60 = vpop.permute.xlu0 %59
  %v63 = vlaneseq
  %v64 = vshrl.u32 %v63, 7
  %v65 = vsub.s32 0, %v64
  %v66 = vrot.slane %v56, %v65
  %v67 = vlaneseq
  %v68 = vshrl.u32 %v67, 7
  %v69 = vsub.s32 1, %v68
  %v70 = vrot.slane %v56, %v69
  %v71 = vlaneseq
  %v72 = vshrl.u32 %v71, 7
  %v73 = vsub.s32 2, %v72
  %v74 = vrot.slane %v56, %v73
  %v75 = vlaneseq
  %v76 = vshrl.u32 %v75, 7
  %v77 = vsub.s32 3, %v76
  %v78 = vrot.slane %v56, %v77
  %v83 = vmul.f32 %v60, %v66
  %v84 = vmul.f32 %v60, %v70
  %v85 = vmul.f32 %v60, %v74
  %v86 = vmul.f32 %v60, %v78
  %v119 = vunpack.c.l.b16 %v23
  %v120 = vunpack.c.h.b16 %v23
  %v121 = vunpack.c.l.b16 %v24
  %v122 = vunpack.c.h.b16 %v24
  %v123 = vunpack.c.l.b16 %v25
  %v124 = vunpack.c.h.b16 %v25
  %v125 = vunpack.c.l.b16 %v26
  %v126 = vunpack.c.h.b16 %v26
  %v127 = vunpack.c.l.b16 %v27
  %v128 = vunpack.c.h.b16 %v27
  %v129 = vunpack.c.l.b16 %v28
  %v130 = vunpack.c.h.b16 %v28
  %v131 = vunpack.c.l.b16 %v29
  %v132 = vunpack.c.h.b16 %v29
  %v133 = vunpack.c.l.b16 %v30
  %v134 = vunpack.c.h.b16 %v30
  %v135 = vunpack.c.l.b16 %v31
  %v136 = vunpack.c.h.b16 %v31
  %v137 = vunpack.c.l.b16 %v32
  %v138 = vunpack.c.h.b16 %v32
  %v139 = vunpack.c.l.b16 %v33
  %v140 = vunpack.c.h.b16 %v33
  %v141 = vunpack.c.l.b16 %v34
  %v142 = vunpack.c.h.b16 %v34
  %v143 = vunpack.c.l.b16 %v35
  %v144 = vunpack.c.h.b16 %v35
  %v145 = vunpack.c.l.b16 %v36
  %v146 = vunpack.c.h.b16 %v36
  %v147 = vunpack.c.l.b16 %v37
  %v148 = vunpack.c.h.b16 %v37
  %v149 = vunpack.c.l.b16 %v38
  %v150 = vunpack.c.h.b16 %v38
  %v151 = vunpack.c.l.b16 %v39
  %v152 = vunpack.c.h.b16 %v39
  %v153 = vunpack.c.l.b16 %v40
  %v154 = vunpack.c.h.b16 %v40
  %v155 = vunpack.c.l.b16 %v41
  %v156 = vunpack.c.h.b16 %v41
  %v157 = vunpack.c.l.b16 %v42
  %v158 = vunpack.c.h.b16 %v42
  %v159 = vunpack.c.l.b16 %v43
  %v160 = vunpack.c.h.b16 %v43
  %v161 = vunpack.c.l.b16 %v44
  %v162 = vunpack.c.h.b16 %v44
  %v163 = vunpack.c.l.b16 %v45
  %v164 = vunpack.c.h.b16 %v45
  %v165 = vunpack.c.l.b16 %v46
  %v166 = vunpack.c.h.b16 %v46
  %v167 = vunpack.c.l.b16 %v47
  %v168 = vunpack.c.h.b16 %v47
  %v169 = vunpack.c.l.b16 %v48
  %v170 = vunpack.c.h.b16 %v48
  %v171 = vunpack.c.l.b16 %v49
  %v172 = vunpack.c.h.b16 %v49
  %v173 = vunpack.c.l.b16 %v50
  %v174 = vunpack.c.h.b16 %v50
  %v175 = vunpack.c.l.b16 %v51
  %v176 = vunpack.c.h.b16 %v51
  %v177 = vunpack.c.l.b16 %v52
  %v178 = vunpack.c.h.b16 %v52
  %v179 = vunpack.c.l.b16 %v53
  %v180 = vunpack.c.h.b16 %v53
  %v181 = vunpack.c.l.b16 %v54
  %v182 = vunpack.c.h.b16 %v54
  %v183 = vpack.c.b16 %v123, %v119
  %v184 = vpack.c.b16 %v124, %v120
  %v185 = vpack.c.b16 %v125, %v121
  %v186 = vpack.c.b16 %v126, %v122
  %v187 = vpack.c.b16 %v131, %v127
  %v188 = vpack.c.b16 %v132, %v128
  %v189 = vpack.c.b16 %v133, %v129
  %v190 = vpack.c.b16 %v134, %v130
  %v191 = vpack.c.b16 %v139, %v135
  %v192 = vpack.c.b16 %v140, %v136
  %v193 = vpack.c.b16 %v141, %v137
  %v194 = vpack.c.b16 %v142, %v138
  %v195 = vpack.c.b16 %v147, %v143
  %v196 = vpack.c.b16 %v148, %v144
  %v197 = vpack.c.b16 %v149, %v145
  %v198 = vpack.c.b16 %v150, %v146
  %v199 = vpack.c.b16 %v155, %v151
  %v200 = vpack.c.b16 %v156, %v152
  %v201 = vpack.c.b16 %v157, %v153
  %v202 = vpack.c.b16 %v158, %v154
  %v203 = vpack.c.b16 %v163, %v159
  %v204 = vpack.c.b16 %v164, %v160
  %v205 = vpack.c.b16 %v165, %v161
  %v206 = vpack.c.b16 %v166, %v162
  %v207 = vpack.c.b16 %v171, %v167
  %v208 = vpack.c.b16 %v172, %v168
  %v209 = vpack.c.b16 %v173, %v169
  %v210 = vpack.c.b16 %v174, %v170
  %v211 = vpack.c.b16 %v179, %v175
  %v212 = vpack.c.b16 %v180, %v176
  %v213 = vpack.c.b16 %v181, %v177
  %v214 = vpack.c.b16 %v182, %v178
  %247 = vmatprep.subr.bf16.mxu0 %v184
  %248 = vmatpush1.bf16.msra.mxu0 %v183
  %249 = vmatprep.subr.bf16.mxu0 %v188
  %250 = vmatpush1.bf16.msra.mxu0 %v187
  %251 = vmatprep.subr.bf16.mxu0 %v192
  %252 = vmatpush1.bf16.msra.mxu0 %v191
  %253 = vmatprep.subr.bf16.mxu0 %v196
  %254 = vmatpush1.bf16.msra.mxu0 %v195
  %255 = vmatprep.subr.bf16.mxu0 %v200
  %256 = vmatpush1.bf16.msra.mxu0 %v199
  %257 = vmatprep.subr.bf16.mxu0 %v204
  %258 = vmatpush1.bf16.msra.mxu0 %v203
  %259 = vmatprep.subr.bf16.mxu0 %v208
  %260 = vmatpush1.bf16.msra.mxu0 %v207
  %261 = vmatprep.subr.bf16.mxu0 %v212
  %262 = vmatpush1.bf16.msra.mxu0 %v211
  %263 = vmatprep.subr.bf16.mxu0 0
  %264 = vmatpush1.bf16.msra.mxu0 0
  %265 = vmatprep.subr.bf16.mxu0 0
  %266 = vmatpush1.bf16.msra.mxu0 0
  %267 = vmatprep.subr.bf16.mxu0 0
  %268 = vmatpush1.bf16.msra.mxu0 0
  %269 = vmatprep.subr.bf16.mxu0 0
  %270 = vmatpush1.bf16.msra.mxu0 0
  %271 = vmatprep.subr.bf16.mxu0 0
  %272 = vmatpush1.bf16.msra.mxu0 0
  %273 = vmatprep.subr.bf16.mxu0 0
  %274 = vmatpush1.bf16.msra.mxu0 0
  %275 = vmatprep.subr.bf16.mxu0 0
  %276 = vmatpush1.bf16.msra.mxu0 0
  %277 = vmatprep.subr.bf16.mxu0 0
  %278 = vmatpush1.bf16.msra.mxu0 0
  %279 = vmatprep.mubr.bf16.mxu0 0
  %280 = vmatmul.mubr.bf16.gmra.mrb[0].mxu0 %v22
  %v281 = vpop.f32.mrb[0].mxu0
  %v282 = vadd.f32 %v83, %v281
  %v283 = vpop.f32.mrb[0].mxu0
  %v284 = vadd.f32 %v84, %v283
  %v285 = vpop.f32.mrb[0].mxu0
  %v286 = vpop.f32.mrb[0].mxu0
  %287 = vdwg.mxu0
  %288 = vmatprep.subr.bf16.mxu0 %v186
  %289 = vmatpush1.bf16.msra.mxu0 %v185
  %290 = vmatprep.subr.bf16.mxu0 %v190
  %291 = vmatpush1.bf16.msra.mxu0 %v189
  %292 = vmatprep.subr.bf16.mxu0 %v194
  %293 = vmatpush1.bf16.msra.mxu0 %v193
  %294 = vmatprep.subr.bf16.mxu0 %v198
  %295 = vmatpush1.bf16.msra.mxu0 %v197
  %296 = vmatprep.subr.bf16.mxu0 %v202
  %297 = vmatpush1.bf16.msra.mxu0 %v201
  %298 = vmatprep.subr.bf16.mxu0 %v206
  %299 = vmatpush1.bf16.msra.mxu0 %v205
  %300 = vmatprep.subr.bf16.mxu0 %v210
  %301 = vmatpush1.bf16.msra.mxu0 %v209
  %302 = vmatprep.subr.bf16.mxu0 %v214
  %303 = vmatpush1.bf16.msra.mxu0 %v213
  %304 = vmatprep.subr.bf16.mxu0 0
  %305 = vmatpush1.bf16.msra.mxu0 0
  %306 = vmatprep.subr.bf16.mxu0 0
  %307 = vmatpush1.bf16.msra.mxu0 0
  %308 = vmatprep.subr.bf16.mxu0 0
  %309 = vmatpush1.bf16.msra.mxu0 0
  %310 = vmatprep.subr.bf16.mxu0 0
  %311 = vmatpush1.bf16.msra.mxu0 0
  %312 = vmatprep.subr.bf16.mxu0 0
  %313 = vmatpush1.bf16.msra.mxu0 0
  %314 = vmatprep.subr.bf16.mxu0 0
  %315 = vmatpush1.bf16.msra.mxu0 0
  %316 = vmatprep.subr.bf16.mxu0 0
  %317 = vmatpush1.bf16.msra.mxu0 0
  %318 = vmatprep.subr.bf16.mxu0 0
  %319 = vmatpush1.bf16.msra.mxu0 0
  %320 = vmatprep.mubr.bf16.mxu0 0
  %321 = vmatmul.mubr.bf16.gmra.mrb[0].mxu0 %v22
  %v322 = vpop.f32.mrb[0].mxu0
  %v323 = vadd.f32 %v85, %v322
  %v324 = vpop.f32.mrb[0].mxu0
  %v325 = vadd.f32 %v86, %v324
  %v326 = vpop.f32.mrb[0].mxu0
  %v327 = vpop.f32.mrb[0].mxu0
  %328 = vdwg.mxu0
  %v329 = vld [vmem:[%s4] sm:$0xf]
  %v331 = vlaneseq
  %v332 = vshrl.u32 %v331, 7
  %v333 = vsub.s32 0, %v332
  %v334 = vrot.slane %v329, %v333
  %v335 = vlaneseq
  %v336 = vshrl.u32 %v335, 7
  %v337 = vsub.s32 1, %v336
  %v338 = vrot.slane %v329, %v337
  %v339 = vlaneseq
  %v340 = vshrl.u32 %v339, 7
  %v341 = vsub.s32 2, %v340
  %v342 = vrot.slane %v329, %v341
  %v343 = vlaneseq
  %v344 = vshrl.u32 %v343, 7
  %v345 = vsub.s32 3, %v344
  %v346 = vrot.slane %v329, %v345
  %v351 = vadd.f32 %v282, %v334
  %v352 = vadd.f32 %v284, %v338
  %v353 = vadd.f32 %v323, %v342
  %v354 = vadd.f32 %v325, %v346
  %355 = vst [vmem:[%s5] sm:$0xff] %v351
  %356 = vst [vmem:[%s5 + $0x8] sm:$0xff] %v352
  %357 = vst [vmem:[%s5 + $0x10] sm:$0xff] %v353
  %358 = vst [vmem:[%s5 + $0x18] sm:$0xff] %v354
  // Predicated region
  $region22: #{cnn_lstm_forward.8} parent=0 // pred_check
    _
  $region23: #{cnn_lstm_forward.8} parent=0 // pred_check_branch
    %360 = sbr.rel (0) target = $region25
  $region24: #{cnn_lstm_forward.8} parent=0 // pred_region
    _
  $region25: #{cnn_lstm_forward.8} parent=0 // pred_fallthru
    _
  // Predicated region
  $region26: #{cnn_lstm_forward.8} parent=0 // pred_check
    _
  $region27: #{cnn_lstm_forward.8} parent=0 // pred_check_branch
    %362 = sbr.rel (0) target = $region29
  $region28: #{cnn_lstm_forward.8} parent=0 // pred_region
    _
  $region29: #{cnn_lstm_forward.8} parent=0 // pred_fallthru
    _

// kernel: cnn_lstm_forward.7
$region0: #{cnn_lstm_forward.7}
  #allocation0 [shape = 'u32[]', space=smem, size = 0x4, offset = 0x4, fixed_abs, tag = 'smem constant byte address 0x4 - core index']
  #allocation1 [shape = 'u32[144,128]{1,0:T(1,128)}', space=vmem, size = 0x12000, scoped, tag = 'internal scratch']
  #allocation2 [shape = 'f32[6,128]{1,0:T(8,128)}', space=vmem, size = 0x1000, scoped, tag = 'scratch operand']
  %s0 = inlined_call_operand.vmem [shape: f32[8,16,64], index: 0, kind: input, shape index: {}]
  %s1 = inlined_call_operand.vmem [shape: bf16[9,64,128], index: 1, kind: input, shape index: {}]
  %s2 = inlined_call_operand.vmem [shape: f32[1,128], index: 2, kind: input, shape index: {}]
  %s3 = inlined_call_operand.vmem [shape: f32[8,1,128], index: 3, kind: output, shape index: {}]
  %s4 = sld [smem:[#allocation0]]
  $region45: #{cnn_lstm_forward.7} parent=0
    _
  %s6 = ssub.s32 1, %s4
  %s7 = scalar_select 0, %s6, %s4
  loop: start=0, step=1, limit=10
  $region2: #{cnn_lstm_forward.7} parent=0 // loop_pre_header
    _
  $region3: #{cnn_lstm_forward.7} parent=0 // loop_header
    %s9 = sphi 0, %s13
    %p10 = scmp.ge.s32.totalorder %s9, 10
    %s19 = sphi 0, %s21
    %s22 = sphi 0, %s19
    %s23 = sphi 0, %s22
    %s39 = sphi 0, %s23
    %s43 = sphi 0, %s43
    %s45 = sphi 0, %s43
    %s46 = sphi 0, %s45
    %s60 = sphi 0, %s46
    %s64 = sphi 0, %s64
    %s66 = sphi 0, %s64
    %s67 = sphi 0, %s66
    %s81 = sphi 0, %s67
    %s87 = sphi 0, %s89
    %s90 = sphi 0, %s87
    %s91 = sphi 0, %s90
    %s107 = sphi 0, %s91
  $region4: #{cnn_lstm_forward.7} parent=0 // loop_header_branch
    %12 = sbr.rel (%p10) target = $region8
  $region5: #{cnn_lstm_forward.7} parent=0 // loop_body
    %s14 = ssub.s32 %s9, 1
    %s15 = ssub.s32 %s9, 2
    %s16 = sadd.s32 %s9, 1
    %s17 = ssub.s32 %s9, %s16
    %p18 = scmp.eq.s32.totalorder %s17, 0
    %s20 = sadd.s32 %s19, 1
    %s21 = scalar_select %p18, %s19, %s20
    %p24 = pneg %p18
    %p25 = scmp.eq.s32.totalorder %s9, 7
    %p26 = por %p24, %p25
    %p27 = scmp.ne.s32.totalorder %s19, %s22
    %p28 = scmp.eq.s32.totalorder %s9, 0
    %p29 = por %p27, %p28
    %p30 = scmp.ne.s32.totalorder %s19, %s22
    %p31 = scmp.eq.s32.totalorder %s14, 7
    %p32 = por %p30, %p31
    %p33 = scmp.ne.s32.totalorder %s22, %s23
    %p34 = scmp.eq.s32.totalorder %s14, 0
    %p35 = por %p33, %p34
    %p36 = scmp.ne.s32.totalorder %s22, %s23
    %p37 = scmp.eq.s32.totalorder %s15, 7
    %p38 = por %p36, %p37
    %p40 = scmp.ne.s32.totalorder %s23, %s39
    %p41 = scmp.eq.s32.totalorder %s15, 0
    %p42 = por %p40, %p41
    %s44 = sadd.s32 %s43, 1
    %p47 = scmp.eq.s32.totalorder %s9, 7
    %p48 = scmp.ne.s32.totalorder %s43, %s45
    %p49 = scmp.eq.s32.totalorder %s9, 0
    %p50 = por %p48, %p49
    %p51 = scmp.ne.s32.totalorder %s43, %s45
    %p52 = scmp.eq.s32.totalorder %s14, 7
    %p53 = por %p51, %p52
    %p54 = scmp.ne.s32.totalorder %s45, %s46
    %p55 = scmp.eq.s32.totalorder %s14, 0
    %p56 = por %p54, %p55
    %p57 = scmp.ne.s32.totalorder %s45, %s46
    %p58 = scmp.eq.s32.totalorder %s15, 7
    %p59 = por %p57, %p58
    %p61 = scmp.ne.s32.totalorder %s46, %s60
    %p62 = scmp.eq.s32.totalorder %s15, 0
    %p63 = por %p61, %p62
    %s65 = sadd.s32 %s64, 1
    %p68 = scmp.eq.s32.totalorder %s9, 7
    %p69 = scmp.ne.s32.totalorder %s64, %s66
    %p70 = scmp.eq.s32.totalorder %s9, 0
    %p71 = por %p69, %p70
    %p72 = scmp.ne.s32.totalorder %s64, %s66
    %p73 = scmp.eq.s32.totalorder %s14, 7
    %p74 = por %p72, %p73
    %p75 = scmp.ne.s32.totalorder %s66, %s67
    %p76 = scmp.eq.s32.totalorder %s14, 0
    %p77 = por %p75, %p76
    %p78 = scmp.ne.s32.totalorder %s66, %s67
    %p79 = scmp.eq.s32.totalorder %s15, 7
    %p80 = por %p78, %p79
    %p82 = scmp.ne.s32.totalorder %s67, %s81
    %p83 = scmp.eq.s32.totalorder %s15, 0
    %p84 = por %p82, %p83
    %s85 = ssub.s32 %s9, %s16
    %p86 = scmp.eq.s32.totalorder %s85, 0
    %s88 = sadd.s32 %s87, 1
    %s89 = scalar_select %p86, %s87, %s88
    %p92 = pneg %p86
    %p93 = scmp.eq.s32.totalorder %s9, 7
    %p94 = por %p92, %p93
    %p95 = scmp.ne.s32.totalorder %s87, %s90
    %p96 = scmp.eq.s32.totalorder %s9, 0
    %p97 = por %p95, %p96
    %p98 = scmp.ne.s32.totalorder %s87, %s90
    %p99 = scmp.eq.s32.totalorder %s14, 7
    %p100 = por %p98, %p99
    %p101 = scmp.ne.s32.totalorder %s90, %s91
    %p102 = scmp.eq.s32.totalorder %s14, 0
    %p103 = por %p101, %p102
    %p104 = scmp.ne.s32.totalorder %s90, %s91
    %p105 = scmp.eq.s32.totalorder %s15, 7
    %p106 = por %p104, %p105
    %p108 = scmp.ne.s32.totalorder %s91, %s107
    %p109 = scmp.eq.s32.totalorder %s15, 0
    %p110 = por %p108, %p109
    %p111 = scmp.le.s32.totalorder 1, %s9
    %p112 = scmp.lt.s32.totalorder %s9, 9
    %p113 = pnand %p111, %p112
    %p114 = pneg %p113
    // Predicated region
    $region9: #{cnn_lstm_forward.7} parent=5 // pred_check
      _
    $region10: #{cnn_lstm_forward.7} parent=5 // pred_check_branch
      %116 = sbr.rel (%p113) target = $region12
    $region11: #{cnn_lstm_forward.7} parent=5 // pred_region
      %s117 = ssub.s32 %s9, 1
      // Predicated region
      $region13: #{cnn_lstm_forward.7} parent=11 // pred_check
        %p118 = pneg %p56
      $region14: #{cnn_lstm_forward.7} parent=11 // pred_check_branch
        %120 = sbr.rel (%p118) target = $region16
      $region15: #{cnn_lstm_forward.7} parent=11 // pred_region
        _
      $region16: #{cnn_lstm_forward.7} parent=11 // pred_fallthru
        _
      // Predicated region
      $region17: #{cnn_lstm_forward.7} parent=11 // pred_check
        %p121 = pneg %p77
      $region18: #{cnn_lstm_forward.7} parent=11 // pred_check_branch
        %123 = sbr.rel (%p121) target = $region20
      $region19: #{cnn_lstm_forward.7} parent=11 // pred_region
        _
      $region20: #{cnn_lstm_forward.7} parent=11 // pred_fallthru
        _
    $region12: #{cnn_lstm_forward.7} parent=5 // pred_fallthru
      _
    %p124 = scmp.lt.s32.totalorder %s9, 8
    // Predicated region
    $region21: #{cnn_lstm_forward.7} parent=5 // pred_check
      %p125 = pneg %p124
    $region22: #{cnn_lstm_forward.7} parent=5 // pred_check_branch
      %127 = sbr.rel (%p125) target = $region24
    $region23: #{cnn_lstm_forward.7} parent=5 // pred_region
      // Predicated region
      $region25: #{cnn_lstm_forward.7} parent=23 // pred_check
        %p128 = pneg %p29
      $region26: #{cnn_lstm_forward.7} parent=23 // pred_check_branch
        %130 = sbr.rel (%p128) target = $region28
      $region27: #{cnn_lstm_forward.7} parent=23 // pred_region
        %p131 = scmp.lt.s32.totalorder %s9, 7
        %s132 = scalar_select %p131, %s9, 7
        %s133 = smul.addr %s132, 2
        %s134 = smul.addr %s133, 8
        %s135 = scalar_lea.vmem %s0, %s134
      $region28: #{cnn_lstm_forward.7} parent=23 // pred_fallthru
        _
    $region24: #{cnn_lstm_forward.7} parent=5 // pred_fallthru
      _
    %p136 = scmp.le.s32.totalorder 1, %s9
    %p137 = scmp.lt.s32.totalorder %s9, 9
    %p138 = pnand %p136, %p137
    %p139 = pneg %p138
    // Predicated region
    $region29: #{cnn_lstm_forward.7} parent=5 // pred_check
      _
    $region30: #{cnn_lstm_forward.7} parent=5 // pred_check_branch
      %141 = sbr.rel (%p138) target = $region32
    $region31: #{cnn_lstm_forward.7} parent=5 // pred_region
      %s142 = ssub.s32 %s9, 1
      %p143 = scmp.lt.s32.totalorder %s14, 7
      %s144 = scalar_select %p143, %s14, 7
      %s145 = smul.addr %s144, 2
      %s146 = smul.addr %s145, 8
      %s147 = scalar_lea.vmem %s0, %s146
      %p148 = pneg %p35
      %p149 = pneg %p32
      %p150 = pneg %p56
      %p151 = pneg %p53
      %p152 = pneg %p77
      %p153 = pneg %p74
      %p154 = pneg %p103
      %p155 = pneg %p100
      %p156 = scmp.lt.s32.totalorder %s14, 7
      %s157 = scalar_select %p156, %s14, 7
      %s158 = scalar_lea.vmem %s3, %s157
      %p159 = scmp.lt.s32.totalorder %s14, 7
      %s160 = scalar_select %p159, %s14, 7
      %s161 = smul.addr %s160, 2
      %s162 = smul.addr %s161, 8
      %s163 = scalar_lea.vmem %s0, %s162
      %p164 = scmp.lt.s32.totalorder %s14, 7
      %s165 = scalar_select %p164, %s14, 7
      %s166 = scalar_lea.vmem %s3, %s165
      %v168 = vld [vmem:[%s163] sm:$0x3f]
      %v169 = vpack.c.bf16 %v168, %v168
      %v170 = vld [vmem:[%s1] sm:$0xf]
      %v171 = vld [vmem:[%s1 + $0x4] sm:$0xf]
      %v172 = vld [vmem:[%s1 + $0x8] sm:$0xf]
      %v173 = vld [vmem:[%s1 + $0xc] sm:$0xf]
      %v174 = vld [vmem:[%s1 + $0x10] sm:$0xf]
      %v175 = vld [vmem:[%s1 + $0x14] sm:$0xf]
      %v176 = vld [vmem:[%s1 + $0x18] sm:$0xf]
      %v177 = vld [vmem:[%s1 + $0x1c] sm:$0xf]
      %v178 = vld [vmem:[%s163 + $0x1] sm:$0x3f]
      %v179 = vpack.c.bf16 %v178, %v178
      %s180 = scalar_lea.vmem %s1, 32
      %v181 = vld [vmem:[%s180] sm:$0xf]
      %v182 = vld [vmem:[%s180 + $0x4] sm:$0xf]
      %v183 = vld [vmem:[%s180 + $0x8] sm:$0xf]
      %v184 = vld [vmem:[%s180 + $0xc] sm:$0xf]
      %v185 = vld [vmem:[%s180 + $0x10] sm:$0xf]
      %v186 = vld [vmem:[%s180 + $0x14] sm:$0xf]
      %v187 = vld [vmem:[%s180 + $0x18] sm:$0xf]
      %v188 = vld [vmem:[%s180 + $0x1c] sm:$0xf]
      %v197 = vunpack.c.l.b16 %v181
      %v198 = vunpack.c.l.b16 %v182
      %v199 = vunpack.c.l.b16 %v183
      %v200 = vunpack.c.l.b16 %v184
      %v201 = vunpack.c.l.b16 %v185
      %v202 = vunpack.c.l.b16 %v186
      %v203 = vunpack.c.l.b16 %v187
      %v204 = vunpack.c.l.b16 %v188
      %v205 = vpack.c.b16 %v198, %v197
      %v206 = vpack.c.b16 %v200, %v199
      %v207 = vpack.c.b16 %v202, %v201
      %v208 = vpack.c.b16 %v204, %v203
      %vm213 = vcmask 523264
      %v215 = vsel %vm213, %v179, 0
      %217 = vmatprep.subr.bf16.mxu0 0
      %218 = vmatpush1.bf16.msra.mxu0 %v205
      %219 = vmatprep.subr.bf16.mxu0 0
      %220 = vmatpush1.bf16.msra.mxu0 %v206
      %221 = vmatprep.subr.bf16.mxu0 0
      %222 = vmatpush1.bf16.msra.mxu0 %v207
      %223 = vmatprep.subr.bf16.mxu0 0
      %224 = vmatpush1.bf16.msra.mxu0 %v208
      %225 = vmatprep.subr.bf16.mxu0 0
      %226 = vmatpush1.bf16.msra.mxu0 0
      %227 = vmatprep.subr.bf16.mxu0 0
      %228 = vmatpush1.bf16.msra.mxu0 0
      %229 = vmatprep.subr.bf16.mxu0 0
      %230 = vmatpush1.bf16.msra.mxu0 0
      %231 = vmatprep.subr.bf16.mxu0 0
      %232 = vmatpush1.bf16.msra.mxu0 0
      %233 = vmatprep.subr.bf16.mxu0 0
      %234 = vmatpush1.bf16.msra.mxu0 0
      %235 = vmatprep.subr.bf16.mxu0 0
      %236 = vmatpush1.bf16.msra.mxu0 0
      %237 = vmatprep.subr.bf16.mxu0 0
      %238 = vmatpush1.bf16.msra.mxu0 0
      %239 = vmatprep.subr.bf16.mxu0 0
      %240 = vmatpush1.bf16.msra.mxu0 0
      %241 = vmatprep.subr.bf16.mxu0 0
      %242 = vmatpush1.bf16.msra.mxu0 0
      %243 = vmatprep.subr.bf16.mxu0 0
      %244 = vmatpush1.bf16.msra.mxu0 0
      %245 = vmatprep.subr.bf16.mxu0 0
      %246 = vmatpush1.bf16.msra.mxu0 0
      %247 = vmatprep.subr.bf16.mxu0 0
      %248 = vmatpush1.bf16.msra.mxu0 0
      %249 = vmatprep.mubr.bf16.mxu0 0
      %250 = vmatmul.mubr.bf16.gmra.mrb[0].mxu0 %v215
      %v251 = vpop.f32.mrb[0].mxu0
      %v252 = vadd.f32 0.0, %v251
      %v253 = vpop.f32.mrb[0].mxu0
      %v254 = vpop.f32.mrb[0].mxu0
      %v255 = vpop.f32.mrb[0].mxu0
      %256 = vdwg.mxu0
      %v265 = vunpack.c.l.b16 %v170
      %v266 = vunpack.c.l.b16 %v171
      %v267 = vunpack.c.l.b16 %v172
      %v268 = vunpack.c.l.b16 %v173
      %v269 = vunpack.c.l.b16 %v174
      %v270 = vunpack.c.l.b16 %v175
      %v271 = vunpack.c.l.b16 %v176
      %v272 = vunpack.c.l.b16 %v177
      %v273 = vpack.c.b16 %v266, %v265
      %v274 = vpack.c.b16 %v268, %v267
      %v275 = vpack.c.b16 %v270, %v269
      %v276 = vpack.c.b16 %v272, %v271
      %v282 = vsel %vm213, %v169, 0
      %284 = vmatprep.subr.bf16.mxu0 0
      %285 = vmatpush1.bf16.msra.mxu0 %v273
      %286 = vmatprep.subr.bf16.mxu0 0
      %287 = vmatpush1.bf16.msra.mxu0 %v274
      %288 = vmatprep.subr.bf16.mxu0 0
      %289 = vmatpush1.bf16.msra.mxu0 %v275
      %290 = vmatprep.subr.bf16.mxu0 0
      %291 = vmatpush1.bf16.msra.mxu0 %v276
      %292 = vmatprep.subr.bf16.mxu0 0
      %293 = vmatpush1.bf16.msra.mxu0 0
      %294 = vmatprep.subr.bf16.mxu0 0
      %295 = vmatpush1.bf16.msra.mxu0 0
      %296 = vmatprep.subr.bf16.mxu0 0
      %297 = vmatpush1.bf16.msra.mxu0 0
      %298 = vmatprep.subr.bf16.mxu0 0
      %299 = vmatpush1.bf16.msra.mxu0 0
      %300 = vmatprep.subr.bf16.mxu0 0
      %301 = vmatpush1.bf16.msra.mxu0 0
      %302 = vmatprep.subr.bf16.mxu0 0
      %303 = vmatpush1.bf16.msra.mxu0 0
      %304 = vmatprep.subr.bf16.mxu0 0
      %305 = vmatpush1.bf16.msra.mxu0 0
      %306 = vmatprep.subr.bf16.mxu0 0
      %307 = vmatpush1.bf16.msra.mxu0 0
      %308 = vmatprep.subr.bf16.mxu0 0
      %309 = vmatpush1.bf16.msra.mxu0 0
      %310 = vmatprep.subr.bf16.mxu0 0
      %311 = vmatpush1.bf16.msra.mxu0 0
      %312 = vmatprep.subr.bf16.mxu0 0
      %313 = vmatpush1.bf16.msra.mxu0 0
      %314 = vmatprep.subr.bf16.mxu0 0
      %315 = vmatpush1.bf16.msra.mxu0 0
      %316 = vmatprep.mubr.bf16.mxu0 0
      %317 = vmatmul.mubr.bf16.gmra.mrb[0].mxu0 %v282
      %v318 = vpop.f32.mrb[0].mxu0
      %v319 = vadd.f32 %v252, %v318
      %v320 = vpop.f32.mrb[0].mxu0
      %v321 = vpop.f32.mrb[0].mxu0
      %v322 = vpop.f32.mrb[0].mxu0
      %323 = vdwg.mxu0
      %v324 = vld [vmem:[%s163 + $0x2] sm:$0x3f]
      %v325 = vpack.c.bf16 %v324, %v324
      %s326 = scalar_lea.vmem %s1, 64
      %v327 = vld [vmem:[%s326] sm:$0xf]
      %v328 = vld [vmem:[%s326 + $0x4] sm:$0xf]
      %v329 = vld [vmem:[%s326 + $0x8] sm:$0xf]
      %v330 = vld [vmem:[%s326 + $0xc] sm:$0xf]
      %v331 = vld [vmem:[%s326 + $0x10] sm:$0xf]
      %v332 = vld [vmem:[%s326 + $0x14] sm:$0xf]
      %v333 = vld [vmem:[%s326 + $0x18] sm:$0xf]
      %v334 = vld [vmem:[%s326 + $0x1c] sm:$0xf]
      %v343 = vunpack.c.l.b16 %v327
      %v344 = vunpack.c.l.b16 %v328
      %v345 = vunpack.c.l.b16 %v329
      %v346 = vunpack.c.l.b16 %v330
      %v347 = vunpack.c.l.b16 %v331
      %v348 = vunpack.c.l.b16 %v332
      %v349 = vunpack.c.l.b16 %v333
      %v350 = vunpack.c.l.b16 %v334
      %v351 = vpack.c.b16 %v344, %v343
      %v352 = vpack.c.b16 %v346, %v345
      %v353 = vpack.c.b16 %v348, %v347
      %v354 = vpack.c.b16 %v350, %v349
      %v360 = vsel %vm213, %v325, 0
      %362 = vmatprep.subr.bf16.mxu0 0
      %363 = vmatpush1.bf16.msra.mxu0 %v351
      %364 = vmatprep.subr.bf16.mxu0 0
      %365 = vmatpush1.bf16.msra.mxu0 %v352
      %366 = vmatprep.subr.bf16.mxu0 0
      %367 = vmatpush1.bf16.msra.mxu0 %v353
      %368 = vmatprep.subr.bf16.mxu0 0
      %369 = vmatpush1.bf16.msra.mxu0 %v354
      %370 = vmatprep.subr.bf16.mxu0 0
      %371 = vmatpush1.bf16.msra.mxu0 0
      %372 = vmatprep.subr.bf16.mxu0 0
      %373 = vmatpush1.bf16.msra.mxu0 0
      %374 = vmatprep.subr.bf16.mxu0 0
      %375 = vmatpush1.bf16.msra.mxu0 0
      %376 = vmatprep.subr.bf16.mxu0 0
      %377 = vmatpush1.bf16.msra.mxu0 0
      %378 = vmatprep.subr.bf16.mxu0 0
      %379 = vmatpush1.bf16.msra.mxu0 0
      %380 = vmatprep.subr.bf16.mxu0 0
      %381 = vmatpush1.bf16.msra.mxu0 0
      %382 = vmatprep.subr.bf16.mxu0 0
      %383 = vmatpush1.bf16.msra.mxu0 0
      %384 = vmatprep.subr.bf16.mxu0 0
      %385 = vmatpush1.bf16.msra.mxu0 0
      %386 = vmatprep.subr.bf16.mxu0 0
      %387 = vmatpush1.bf16.msra.mxu0 0
      %388 = vmatprep.subr.bf16.mxu0 0
      %389 = vmatpush1.bf16.msra.mxu0 0
      %390 = vmatprep.subr.bf16.mxu0 0
      %391 = vmatpush1.bf16.msra.mxu0 0
      %392 = vmatprep.subr.bf16.mxu0 0
      %393 = vmatpush1.bf16.msra.mxu0 0
      %394 = vmatprep.mubr.bf16.mxu0 0
      %395 = vmatmul.mubr.bf16.gmra.mrb[0].mxu0 %v360
      %v396 = vpop.f32.mrb[0].mxu0
      %v397 = vadd.f32 0.0, %v396
      %v398 = vpop.f32.mrb[0].mxu0
      %v399 = vpop.f32.mrb[0].mxu0
      %v400 = vpop.f32.mrb[0].mxu0
      %401 = vdwg.mxu0
      %v402 = vadd.f32 %v319, %v397
      %v403 = vld [vmem:[%s163 + $0x4] sm:$0x3f]
      %v404 = vpack.c.bf16 %v403, %v403
      %s405 = scalar_lea.vmem %s1, 96
      %v406 = vld [vmem:[%s405] sm:$0xf]
      %v407 = vld [vmem:[%s405 + $0x4] sm:$0xf]
      %v408 = vld [vmem:[%s405 + $0x8] sm:$0xf]
      %v409 = vld [vmem:[%s405 + $0xc] sm:$0xf]
      %v410 = vld [vmem:[%s405 + $0x10] sm:$0xf]
      %v411 = vld [vmem:[%s405 + $0x14] sm:$0xf]
      %v412 = vld [vmem:[%s405 + $0x18] sm:$0xf]
      %v413 = vld [vmem:[%s405 + $0x1c] sm:$0xf]
      %v422 = vunpack.c.l.b16 %v406
      %v423 = vunpack.c.l.b16 %v407
      %v424 = vunpack.c.l.b16 %v408
      %v425 = vunpack.c.l.b16 %v409
      %v426 = vunpack.c.l.b16 %v410
      %v427 = vunpack.c.l.b16 %v411
      %v428 = vunpack.c.l.b16 %v412
      %v429 = vunpack.c.l.b16 %v413
      %v430 = vpack.c.b16 %v423, %v422
      %v431 = vpack.c.b16 %v425, %v424
      %v432 = vpack.c.b16 %v427, %v426
      %v433 = vpack.c.b16 %v429, %v428
      %v439 = vsel %vm213, %v404, 0
      %441 = vmatprep.subr.bf16.mxu0 0
      %442 = vmatpush1.bf16.msra.mxu0 %v430
      %443 = vmatprep.subr.bf16.mxu0 0
      %444 = vmatpush1.bf16.msra.mxu0 %v431
      %445 = vmatprep.subr.bf16.mxu0 0
      %446 = vmatpush1.bf16.msra.mxu0 %v432
      %447 = vmatprep.subr.bf16.mxu0 0
      %448 = vmatpush1.bf16.msra.mxu0 %v433
      %449 = vmatprep.subr.bf16.mxu0 0
      %450 = vmatpush1.bf16.msra.mxu0 0
      %451 = vmatprep.subr.bf16.mxu0 0
      %452 = vmatpush1.bf16.msra.mxu0 0
      %453 = vmatprep.subr.bf16.mxu0 0
      %454 = vmatpush1.bf16.msra.mxu0 0
      %455 = vmatprep.subr.bf16.mxu0 0
      %456 = vmatpush1.bf16.msra.mxu0 0
      %457 = vmatprep.subr.bf16.mxu0 0
      %458 = vmatpush1.bf16.msra.mxu0 0
      %459 = vmatprep.subr.bf16.mxu0 0
      %460 = vmatpush1.bf16.msra.mxu0 0
      %461 = vmatprep.subr.bf16.mxu0 0
      %462 = vmatpush1.bf16.msra.mxu0 0
      %463 = vmatprep.subr.bf16.mxu0 0
      %464 = vmatpush1.bf16.msra.mxu0 0
      %465 = vmatprep.subr.bf16.mxu0 0
      %466 = vmatpush1.bf16.msra.mxu0 0
      %467 = vmatprep.subr.bf16.mxu0 0
      %468 = vmatpush1.bf16.msra.mxu0 0
      %469 = vmatprep.subr.bf16.mxu0 0
      %470 = vmatpush1.bf16.msra.mxu0 0
      %471 = vmatprep.subr.bf16.mxu0 0
      %472 = vmatpush1.bf16.msra.mxu0 0
      %473 = vmatprep.mubr.bf16.mxu0 0
      %474 = vmatmul.mubr.bf16.gmra.mrb[0].mxu0 %v439
      %v475 = vpop.f32.mrb[0].mxu0
      %v476 = vadd.f32 0.0, %v475
      %v477 = vpop.f32.mrb[0].mxu0
      %v478 = vpop.f32.mrb[0].mxu0
      %v479 = vpop.f32.mrb[0].mxu0
      %480 = vdwg.mxu0
      %v481 = vadd.f32 %v402, %v476
      %v482 = vld [vmem:[%s163 + $0x5] sm:$0x3f]
      %v483 = vpack.c.bf16 %v482, %v482
      %s484 = scalar_lea.vmem %s1, 128
      %v485 = vld [vmem:[%s484] sm:$0xf]
      %v486 = vld [vmem:[%s484 + $0x4] sm:$0xf]
      %v487 = vld [vmem:[%s484 + $0x8] sm:$0xf]
      %v488 = vld [vmem:[%s484 + $0xc] sm:$0xf]
      %v489 = vld [vmem:[%s484 + $0x10] sm:$0xf]
      %v490 = vld [vmem:[%s484 + $0x14] sm:$0xf]
      %v491 = vld [vmem:[%s484 + $0x18] sm:$0xf]
      %v492 = vld [vmem:[%s484 + $0x1c] sm:$0xf]
      %v501 = vunpack.c.l.b16 %v485
      %v502 = vunpack.c.l.b16 %v486
      %v503 = vunpack.c.l.b16 %v487
      %v504 = vunpack.c.l.b16 %v488
      %v505 = vunpack.c.l.b16 %v489
      %v506 = vunpack.c.l.b16 %v490
      %v507 = vunpack.c.l.b16 %v491
      %v508 = vunpack.c.l.b16 %v492
      %v509 = vpack.c.b16 %v502, %v501
      %v510 = vpack.c.b16 %v504, %v503
      %v511 = vpack.c.b16 %v506, %v505
      %v512 = vpack.c.b16 %v508, %v507
      %v518 = vsel %vm213, %v483, 0
      %520 = vmatprep.subr.bf16.mxu0 0
      %521 = vmatpush1.bf16.msra.mxu0 %v509
      %522 = vmatprep.subr.bf16.mxu0 0
      %523 = vmatpush1.bf16.msra.mxu0 %v510
      %524 = vmatprep.subr.bf16.mxu0 0
      %525 = vmatpush1.bf16.msra.mxu0 %v511
      %526 = vmatprep.subr.bf16.mxu0 0
      %527 = vmatpush1.bf16.msra.mxu0 %v512
      %528 = vmatprep.subr.bf16.mxu0 0
      %529 = vmatpush1.bf16.msra.mxu0 0
      %530 = vmatprep.subr.bf16.mxu0 0
      %531 = vmatpush1.bf16.msra.mxu0 0
      %532 = vmatprep.subr.bf16.mxu0 0
      %533 = vmatpush1.bf16.msra.mxu0 0
      %534 = vmatprep.subr.bf16.mxu0 0
      %535 = vmatpush1.bf16.msra.mxu0 0
      %536 = vmatprep.subr.bf16.mxu0 0
      %537 = vmatpush1.bf16.msra.mxu0 0
      %538 = vmatprep.subr.bf16.mxu0 0
      %539 = vmatpush1.bf16.msra.mxu0 0
      %540 = vmatprep.subr.bf16.mxu0 0
      %541 = vmatpush1.bf16.msra.mxu0 0
      %542 = vmatprep.subr.bf16.mxu0 0
      %543 = vmatpush1.bf16.msra.mxu0 0
      %544 = vmatprep.subr.bf16.mxu0 0
      %545 = vmatpush1.bf16.msra.mxu0 0
      %546 = vmatprep.subr.bf16.mxu0 0
      %547 = vmatpush1.bf16.msra.mxu0 0
      %548 = vmatprep.subr.bf16.mxu0 0
      %549 = vmatpush1.bf16.msra.mxu0 0
      %550 = vmatprep.subr.bf16.mxu0 0
      %551 = vmatpush1.bf16.msra.mxu0 0
      %552 = vmatprep.mubr.bf16.mxu0 0
      %553 = vmatmul.mubr.bf16.gmra.mrb[0].mxu0 %v518
      %v554 = vpop.f32.mrb[0].mxu0
      %v555 = vadd.f32 0.0, %v554
      %v556 = vpop.f32.mrb[0].mxu0
      %v557 = vpop.f32.mrb[0].mxu0
      %v558 = vpop.f32.mrb[0].mxu0
      %559 = vdwg.mxu0
      %v560 = vadd.f32 %v481, %v555
      %v561 = vld [vmem:[%s163 + $0x6] sm:$0x3f]
      %v562 = vpack.c.bf16 %v561, %v561
      %s563 = scalar_lea.vmem %s1, 160
      %v564 = vld [vmem:[%s563] sm:$0xf]
      %v565 = vld [vmem:[%s563 + $0x4] sm:$0xf]
      %v566 = vld [vmem:[%s563 + $0x8] sm:$0xf]
      %v567 = vld [vmem:[%s563 + $0xc] sm:$0xf]
      %v568 = vld [vmem:[%s563 + $0x10] sm:$0xf]
      %v569 = vld [vmem:[%s563 + $0x14] sm:$0xf]
      %v570 = vld [vmem:[%s563 + $0x18] sm:$0xf]
      %v571 = vld [vmem:[%s563 + $0x1c] sm:$0xf]
      %v580 = vunpack.c.l.b16 %v564
      %v581 = vunpack.c.l.b16 %v565
      %v582 = vunpack.c.l.b16 %v566
      %v583 = vunpack.c.l.b16 %v567
      %v584 = vunpack.c.l.b16 %v568
      %v585 = vunpack.c.l.b16 %v569
      %v586 = vunpack.c.l.b16 %v570
      %v587 = vunpack.c.l.b16 %v571
      %v588 = vpack.c.b16 %v581, %v580
      %v589 = vpack.c.b16 %v583, %v582
      %v590 = vpack.c.b16 %v585, %v584
      %v591 = vpack.c.b16 %v587, %v586
      %v597 = vsel %vm213, %v562, 0
      %599 = vmatprep.subr.bf16.mxu0 0
      %600 = vmatpush1.bf16.msra.mxu0 %v588
      %601 = vmatprep.subr.bf16.mxu0 0
      %602 = vmatpush1.bf16.msra.mxu0 %v589
      %603 = vmatprep.subr.bf16.mxu0 0
      %604 = vmatpush1.bf16.msra.mxu0 %v590
      %605 = vmatprep.subr.bf16.mxu0 0
      %606 = vmatpush1.bf16.msra.mxu0 %v591
      %607 = vmatprep.subr.bf16.mxu0 0
      %608 = vmatpush1.bf16.msra.mxu0 0
      %609 = vmatprep.subr.bf16.mxu0 0
      %610 = vmatpush1.bf16.msra.mxu0 0
      %611 = vmatprep.subr.bf16.mxu0 0
      %612 = vmatpush1.bf16.msra.mxu0 0
      %613 = vmatprep.subr.bf16.mxu0 0
      %614 = vmatpush1.bf16.msra.mxu0 0
      %615 = vmatprep.subr.bf16.mxu0 0
      %616 = vmatpush1.bf16.msra.mxu0 0
      %617 = vmatprep.subr.bf16.mxu0 0
      %618 = vmatpush1.bf16.msra.mxu0 0
      %619 = vmatprep.subr.bf16.mxu0 0
      %620 = vmatpush1.bf16.msra.mxu0 0
      %621 = vmatprep.subr.bf16.mxu0 0
      %622 = vmatpush1.bf16.msra.mxu0 0
      %623 = vmatprep.subr.bf16.mxu0 0
      %624 = vmatpush1.bf16.msra.mxu0 0
      %625 = vmatprep.subr.bf16.mxu0 0
      %626 = vmatpush1.bf16.msra.mxu0 0
      %627 = vmatprep.subr.bf16.mxu0 0
      %628 = vmatpush1.bf16.msra.mxu0 0
      %629 = vmatprep.subr.bf16.mxu0 0
      %630 = vmatpush1.bf16.msra.mxu0 0
      %631 = vmatprep.mubr.bf16.mxu0 0
      %632 = vmatmul.mubr.bf16.gmra.mrb[0].mxu0 %v597
      %v633 = vpop.f32.mrb[0].mxu0
      %v634 = vadd.f32 0.0, %v633
      %v635 = vpop.f32.mrb[0].mxu0
      %v636 = vpop.f32.mrb[0].mxu0
      %v637 = vpop.f32.mrb[0].mxu0
      %638 = vdwg.mxu0
      %v639 = vadd.f32 %v560, %v634
      %v640 = vld [vmem:[%s163 + $0x8] sm:$0x3f]
      %v641 = vpack.c.bf16 %v640, %v640
      %s642 = scalar_lea.vmem %s1, 192
      %v643 = vld [vmem:[%s642] sm:$0xf]
      %v644 = vld [vmem:[%s642 + $0x4] sm:$0xf]
      %v645 = vld [vmem:[%s642 + $0x8] sm:$0xf]
      %v646 = vld [vmem:[%s642 + $0xc] sm:$0xf]
      %v647 = vld [vmem:[%s642 + $0x10] sm:$0xf]
      %v648 = vld [vmem:[%s642 + $0x14] sm:$0xf]
      %v649 = vld [vmem:[%s642 + $0x18] sm:$0xf]
      %v650 = vld [vmem:[%s642 + $0x1c] sm:$0xf]
      %v659 = vunpack.c.l.b16 %v643
      %v660 = vunpack.c.l.b16 %v644
      %v661 = vunpack.c.l.b16 %v645
      %v662 = vunpack.c.l.b16 %v646
      %v663 = vunpack.c.l.b16 %v647
      %v664 = vunpack.c.l.b16 %v648
      %v665 = vunpack.c.l.b16 %v649
      %v666 = vunpack.c.l.b16 %v650
      %v667 = vpack.c.b16 %v660, %v659
      %v668 = vpack.c.b16 %v662, %v661
      %v669 = vpack.c.b16 %v664, %v663
      %v670 = vpack.c.b16 %v666, %v665
      %v676 = vsel %vm213, %v641, 0
      %678 = vmatprep.subr.bf16.mxu0 0
      %679 = vmatpush1.bf16.msra.mxu0 %v667
      %680 = vmatprep.subr.bf16.mxu0 0
      %681 = vmatpush1.bf16.msra.mxu0 %v668
      %682 = vmatprep.subr.bf16.mxu0 0
      %683 = vmatpush1.bf16.msra.mxu0 %v669
      %684 = vmatprep.subr.bf16.mxu0 0
      %685 = vmatpush1.bf16.msra.mxu0 %v670
      %686 = vmatprep.subr.bf16.mxu0 0
      %687 = vmatpush1.bf16.msra.mxu0 0
      %688 = vmatprep.subr.bf16.mxu0 0
      %689 = vmatpush1.bf16.msra.mxu0 0
      %690 = vmatprep.subr.bf16.mxu0 0
      %691 = vmatpush1.bf16.msra.mxu0 0
      %692 = vmatprep.subr.bf16.mxu0 0
      %693 = vmatpush1.bf16.msra.mxu0 0
      %694 = vmatprep.subr.bf16.mxu0 0
      %695 = vmatpush1.bf16.msra.mxu0 0
      %696 = vmatprep.subr.bf16.mxu0 0
      %697 = vmatpush1.bf16.msra.mxu0 0
      %698 = vmatprep.subr.bf16.mxu0 0
      %699 = vmatpush1.bf16.msra.mxu0 0
      %700 = vmatprep.subr.bf16.mxu0 0
      %701 = vmatpush1.bf16.msra.mxu0 0
      %702 = vmatprep.subr.bf16.mxu0 0
      %703 = vmatpush1.bf16.msra.mxu0 0
      %704 = vmatprep.subr.bf16.mxu0 0
      %705 = vmatpush1.bf16.msra.mxu0 0
      %706 = vmatprep.subr.bf16.mxu0 0
      %707 = vmatpush1.bf16.msra.mxu0 0
      %708 = vmatprep.subr.bf16.mxu0 0
      %709 = vmatpush1.bf16.msra.mxu0 0
      %710 = vmatprep.mubr.bf16.mxu0 0
      %711 = vmatmul.mubr.bf16.gmra.mrb[0].mxu0 %v676
      %v712 = vpop.f32.mrb[0].mxu0
      %v713 = vadd.f32 0.0, %v712
      %v714 = vpop.f32.mrb[0].mxu0
      %v715 = vpop.f32.mrb[0].mxu0
      %v716 = vpop.f32.mrb[0].mxu0
      %717 = vdwg.mxu0
      %v718 = vadd.f32 %v639, %v713
      %v719 = vld [vmem:[%s163 + $0x9] sm:$0x3f]
      %v720 = vpack.c.bf16 %v719, %v719
      %s721 = scalar_lea.vmem %s1, 224
      %v722 = vld [vmem:[%s721] sm:$0xf]
      %v723 = vld [vmem:[%s721 + $0x4] sm:$0xf]
      %v724 = vld [vmem:[%s721 + $0x8] sm:$0xf]
      %v725 = vld [vmem:[%s721 + $0xc] sm:$0xf]
      %v726 = vld [vmem:[%s721 + $0x10] sm:$0xf]
      %v727 = vld [vmem:[%s721 + $0x14] sm:$0xf]
      %v728 = vld [vmem:[%s721 + $0x18] sm:$0xf]
      %v729 = vld [vmem:[%s721 + $0x1c] sm:$0xf]
      %v738 = vunpack.c.l.b16 %v722
      %v739 = vunpack.c.l.b16 %v723
      %v740 = vunpack.c.l.b16 %v724
      %v741 = vunpack.c.l.b16 %v725
      %v742 = vunpack.c.l.b16 %v726
      %v743 = vunpack.c.l.b16 %v727
      %v744 = vunpack.c.l.b16 %v728
      %v745 = vunpack.c.l.b16 %v729
      %v746 = vpack.c.b16 %v739, %v738
      %v747 = vpack.c.b16 %v741, %v740
      %v748 = vpack.c.b16 %v743, %v742
      %v749 = vpack.c.b16 %v745, %v744
      %v755 = vsel %vm213, %v720, 0
      %757 = vmatprep.subr.bf16.mxu0 0
      %758 = vmatpush1.bf16.msra.mxu0 %v746
      %759 = vmatprep.subr.bf16.mxu0 0
      %760 = vmatpush1.bf16.msra.mxu0 %v747
      %761 = vmatprep.subr.bf16.mxu0 0
      %762 = vmatpush1.bf16.msra.mxu0 %v748
      %763 = vmatprep.subr.bf16.mxu0 0
      %764 = vmatpush1.bf16.msra.mxu0 %v749
      %765 = vmatprep.subr.bf16.mxu0 0
      %766 = vmatpush1.bf16.msra.mxu0 0
      %767 = vmatprep.subr.bf16.mxu0 0
      %768 = vmatpush1.bf16.msra.mxu0 0
      %769 = vmatprep.subr.bf16.mxu0 0
      %770 = vmatpush1.bf16.msra.mxu0 0
      %771 = vmatprep.subr.bf16.mxu0 0
      %772 = vmatpush1.bf16.msra.mxu0 0
      %773 = vmatprep.subr.bf16.mxu0 0
      %774 = vmatpush1.bf16.msra.mxu0 0
      %775 = vmatprep.subr.bf16.mxu0 0
      %776 = vmatpush1.bf16.msra.mxu0 0
      %777 = vmatprep.subr.bf16.mxu0 0
      %778 = vmatpush1.bf16.msra.mxu0 0
      %779 = vmatprep.subr.bf16.mxu0 0
      %780 = vmatpush1.bf16.msra.mxu0 0
      %781 = vmatprep.subr.bf16.mxu0 0
      %782 = vmatpush1.bf16.msra.mxu0 0
      %783 = vmatprep.subr.bf16.mxu0 0
      %784 = vmatpush1.bf16.msra.mxu0 0
      %785 = vmatprep.subr.bf16.mxu0 0
      %786 = vmatpush1.bf16.msra.mxu0 0
      %787 = vmatprep.subr.bf16.mxu0 0
      %788 = vmatpush1.bf16.msra.mxu0 0
      %789 = vmatprep.mubr.bf16.mxu0 0
      %790 = vmatmul.mubr.bf16.gmra.mrb[0].mxu0 %v755
      %v791 = vpop.f32.mrb[0].mxu0
      %v792 = vadd.f32 0.0, %v791
      %v793 = vpop.f32.mrb[0].mxu0
      %v794 = vpop.f32.mrb[0].mxu0
      %v795 = vpop.f32.mrb[0].mxu0
      %796 = vdwg.mxu0
      %v797 = vadd.f32 %v718, %v792
      %v798 = vld [vmem:[%s163 + $0xa] sm:$0x3f]
      %v799 = vpack.c.bf16 %v798, %v798
      %s800 = scalar_lea.vmem %s1, 256
      %v801 = vld [vmem:[%s800] sm:$0xf]
      %v802 = vld [vmem:[%s800 + $0x4] sm:$0xf]
      %v803 = vld [vmem:[%s800 + $0x8] sm:$0xf]
      %v804 = vld [vmem:[%s800 + $0xc] sm:$0xf]
      %v805 = vld [vmem:[%s800 + $0x10] sm:$0xf]
      %v806 = vld [vmem:[%s800 + $0x14] sm:$0xf]
      %v807 = vld [vmem:[%s800 + $0x18] sm:$0xf]
      %v808 = vld [vmem:[%s800 + $0x1c] sm:$0xf]
      %v817 = vunpack.c.l.b16 %v801
      %v818 = vunpack.c.l.b16 %v802
      %v819 = vunpack.c.l.b16 %v803
      %v820 = vunpack.c.l.b16 %v804
      %v821 = vunpack.c.l.b16 %v805
      %v822 = vunpack.c.l.b16 %v806
      %v823 = vunpack.c.l.b16 %v807
      %v824 = vunpack.c.l.b16 %v808
      %v825 = vpack.c.b16 %v818, %v817
      %v826 = vpack.c.b16 %v820, %v819
      %v827 = vpack.c.b16 %v822, %v821
      %v828 = vpack.c.b16 %v824, %v823
      %v834 = vsel %vm213, %v799, 0
      %836 = vmatprep.subr.bf16.mxu0 0
      %837 = vmatpush1.bf16.msra.mxu0 %v825
      %838 = vmatprep.subr.bf16.mxu0 0
      %839 = vmatpush1.bf16.msra.mxu0 %v826
      %840 = vmatprep.subr.bf16.mxu0 0
      %841 = vmatpush1.bf16.msra.mxu0 %v827
      %842 = vmatprep.subr.bf16.mxu0 0
      %843 = vmatpush1.bf16.msra.mxu0 %v828
      %844 = vmatprep.subr.bf16.mxu0 0
      %845 = vmatpush1.bf16.msra.mxu0 0
      %846 = vmatprep.subr.bf16.mxu0 0
      %847 = vmatpush1.bf16.msra.mxu0 0
      %848 = vmatprep.subr.bf16.mxu0 0
      %849 = vmatpush1.bf16.msra.mxu0 0
      %850 = vmatprep.subr.bf16.mxu0 0
      %851 = vmatpush1.bf16.msra.mxu0 0
      %852 = vmatprep.subr.bf16.mxu0 0
      %853 = vmatpush1.bf16.msra.mxu0 0
      %854 = vmatprep.subr.bf16.mxu0 0
      %855 = vmatpush1.bf16.msra.mxu0 0
      %856 = vmatprep.subr.bf16.mxu0 0
      %857 = vmatpush1.bf16.msra.mxu0 0
      %858 = vmatprep.subr.bf16.mxu0 0
      %859 = vmatpush1.bf16.msra.mxu0 0
      %860 = vmatprep.subr.bf16.mxu0 0
      %861 = vmatpush1.bf16.msra.mxu0 0
      %862 = vmatprep.subr.bf16.mxu0 0
      %863 = vmatpush1.bf16.msra.mxu0 0
      %864 = vmatprep.subr.bf16.mxu0 0
      %865 = vmatpush1.bf16.msra.mxu0 0
      %866 = vmatprep.subr.bf16.mxu0 0
      %867 = vmatpush1.bf16.msra.mxu0 0
      %868 = vmatprep.mubr.bf16.mxu0 0
      %869 = vmatmul.mubr.bf16.gmra.mrb[0].mxu0 %v834
      %v870 = vpop.f32.mrb[0].mxu0
      %v871 = vadd.f32 0.0, %v870
      %v872 = vpop.f32.mrb[0].mxu0
      %v873 = vpop.f32.mrb[0].mxu0
      %v874 = vpop.f32.mrb[0].mxu0
      %875 = vdwg.mxu0
      %v876 = vadd.f32 %v797, %v871
      %v877 = vld [vmem:[%s2] sm:$0x1]
      %v879 = vlaneseq
      %v880 = vshrl.u32 %v879, 7
      %v881 = vsub.s32 0, %v880
      %v882 = vrot.slane %v877, %v881
      %v884 = vadd.f32 %v876, %v882
      %v885 = vmax.f32 %v884, 0.0
      %886 = vst [vmem:[#allocation2] sm:$0x3f] %v885
      %v887 = vld [vmem:[#allocation2] sm:$0x1]
      %v888 = vld [vmem:[#allocation2 + $0x1] sm:$0x1]
      %v889 = vmax.f32 %v887, %v888
      %v890 = vld [vmem:[#allocation2 + $0x4] sm:$0x1]
      %v891 = vld [vmem:[#allocation2 + $0x5] sm:$0x1]
      %v892 = vmax.f32 %v890, %v891
      %v893 = vmax.f32 %v889, %v892
      %894 = vst [vmem:[%s166] sm:$0x1] %v893
      %p895 = scmp.lt.s32.totalorder %s14, 7
      %s896 = scalar_select %p895, %s14, 7
      %s897 = scalar_lea.vmem %s3, %s896
      // Predicated region
      $region33: #{cnn_lstm_forward.7} parent=31 // pred_check
        %p898 = pneg %p100
      $region34: #{cnn_lstm_forward.7} parent=31 // pred_check_branch
        %900 = sbr.rel (%p898) target = $region36
      $region35: #{cnn_lstm_forward.7} parent=31 // pred_region
        _
      $region36: #{cnn_lstm_forward.7} parent=31 // pred_fallthru
        _
    $region32: #{cnn_lstm_forward.7} parent=5 // pred_fallthru
      _
    %p901 = scmp.le.s32.totalorder 2, %s9
    // Predicated region
    $region37: #{cnn_lstm_forward.7} parent=5 // pred_check
      %p902 = pneg %p901
    $region38: #{cnn_lstm_forward.7} parent=5 // pred_check_branch
      %904 = sbr.rel (%p902) target = $region40
    $region39: #{cnn_lstm_forward.7} parent=5 // pred_region
      %s905 = ssub.s32 %s9, 2
      // Predicated region
      $region41: #{cnn_lstm_forward.7} parent=39 // pred_check
        %p906 = pneg %p106
      $region42: #{cnn_lstm_forward.7} parent=39 // pred_check_branch
        %908 = sbr.rel (%p906) target = $region44
      $region43: #{cnn_lstm_forward.7} parent=39 // pred_region
        %p909 = scmp.lt.s32.totalorder %s15, 7
        %s910 = scalar_select %p909, %s15, 7
        %s911 = scalar_lea.vmem %s3, %s910
      $region44: #{cnn_lstm_forward.7} parent=39 // pred_fallthru
        _
    $region40: #{cnn_lstm_forward.7} parent=5 // pred_fallthru
      _
  $region6: #{cnn_lstm_forward.7} parent=0 // loop_footer
    %s13 = sadd.s32 1, %s9
  $region7: #{cnn_lstm_forward.7} parent=0 // loop_footer_branch
    %8 = sbr.rel target = $region3
  $region8: #{cnn_lstm_forward.7} parent=0 // loop_exit
    _

// kernel: cnn_lstm_forward.5
$region0: #{cnn_lstm_forward.5}
  #allocation0 [shape = 'u32[]', space=smem, size = 0x4, offset = 0x4, fixed_abs, tag = 'smem constant byte address 0x4 - core index']
  #allocation1 [shape = 'u32[144,128]{1,0:T(1,128)}', space=vmem, size = 0x12000, scoped, tag = 'internal scratch']
  #allocation2 [shape = 'f32[526,32]{1,0:T(8,128)}', space=vmem, size = 0x42000, scoped, tag = 'scratch operand']
  %s0 = inlined_call_operand.vmem [shape: f32[8,576,3], index: 0, kind: input, shape index: {}]
  %s1 = inlined_call_operand.vmem [shape: bf16[9,3,32], index: 1, kind: input, shape index: {}]
  %s2 = inlined_call_operand.vmem [shape: f32[1,32], index: 2, kind: input, shape index: {}]
  %s3 = inlined_call_operand.vmem [shape: f32[8,501,32], index: 3, kind: output, shape index: {}]
  %s4 = sld [smem:[#allocation0]]
  $region45: #{cnn_lstm_forward.5} parent=0
    _
  %s6 = ssub.s32 1, %s4
  %s7 = scalar_select 0, %s6, %s4
  loop: start=0, step=1, limit=10
  $region2: #{cnn_lstm_forward.5} parent=0 // loop_pre_header
    _
  $region3: #{cnn_lstm_forward.5} parent=0 // loop_header
    %s9 = sphi 0, %s13
    %p10 = scmp.ge.s32.totalorder %s9, 10
    %s19 = sphi 0, %s21
    %s22 = sphi 0, %s19
    %s23 = sphi 0, %s22
    %s39 = sphi 0, %s23
    %s43 = sphi 0, %s43
    %s45 = sphi 0, %s43
    %s46 = sphi 0, %s45
    %s60 = sphi 0, %s46
    %s64 = sphi 0, %s64
    %s66 = sphi 0, %s64
    %s67 = sphi 0, %s66
    %s81 = sphi 0, %s67
    %s87 = sphi 0, %s89
    %s90 = sphi 0, %s87
    %s91 = sphi 0, %s90
    %s107 = sphi 0, %s91
  $region4: #{cnn_lstm_forward.5} parent=0 // loop_header_branch
    %12 = sbr.rel (%p10) target = $region8
  $region5: #{cnn_lstm_forward.5} parent=0 // loop_body
    %s14 = ssub.s32 %s9, 1
    %s15 = ssub.s32 %s9, 2
    %s16 = sadd.s32 %s9, 1
    %s17 = ssub.s32 %s9, %s16
    %p18 = scmp.eq.s32.totalorder %s17, 0
    %s20 = sadd.s32 %s19, 1
    %s21 = scalar_select %p18, %s19, %s20
    %p24 = pneg %p18
    %p25 = scmp.eq.s32.totalorder %s9, 7
    %p26 = por %p24, %p25
    %p27 = scmp.ne.s32.totalorder %s19, %s22
    %p28 = scmp.eq.s32.totalorder %s9, 0
    %p29 = por %p27, %p28
    %p30 = scmp.ne.s32.totalorder %s19, %s22
    %p31 = scmp.eq.s32.totalorder %s14, 7
    %p32 = por %p30, %p31
    %p33 = scmp.ne.s32.totalorder %s22, %s23
    %p34 = scmp.eq.s32.totalorder %s14, 0
    %p35 = por %p33, %p34
    %p36 = scmp.ne.s32.totalorder %s22, %s23
    %p37 = scmp.eq.s32.totalorder %s15, 7
    %p38 = por %p36, %p37
    %p40 = scmp.ne.s32.totalorder %s23, %s39
    %p41 = scmp.eq.s32.totalorder %s15, 0
    %p42 = por %p40, %p41
    %s44 = sadd.s32 %s43, 1
    %p47 = scmp.eq.s32.totalorder %s9, 7
    %p48 = scmp.ne.s32.totalorder %s43, %s45
    %p49 = scmp.eq.s32.totalorder %s9, 0
    %p50 = por %p48, %p49
    %p51 = scmp.ne.s32.totalorder %s43, %s45
    %p52 = scmp.eq.s32.totalorder %s14, 7
    %p53 = por %p51, %p52
    %p54 = scmp.ne.s32.totalorder %s45, %s46
    %p55 = scmp.eq.s32.totalorder %s14, 0
    %p56 = por %p54, %p55
    %p57 = scmp.ne.s32.totalorder %s45, %s46
    %p58 = scmp.eq.s32.totalorder %s15, 7
    %p59 = por %p57, %p58
    %p61 = scmp.ne.s32.totalorder %s46, %s60
    %p62 = scmp.eq.s32.totalorder %s15, 0
    %p63 = por %p61, %p62
    %s65 = sadd.s32 %s64, 1
    %p68 = scmp.eq.s32.totalorder %s9, 7
    %p69 = scmp.ne.s32.totalorder %s64, %s66
    %p70 = scmp.eq.s32.totalorder %s9, 0
    %p71 = por %p69, %p70
    %p72 = scmp.ne.s32.totalorder %s64, %s66
    %p73 = scmp.eq.s32.totalorder %s14, 7
    %p74 = por %p72, %p73
    %p75 = scmp.ne.s32.totalorder %s66, %s67
    %p76 = scmp.eq.s32.totalorder %s14, 0
    %p77 = por %p75, %p76
    %p78 = scmp.ne.s32.totalorder %s66, %s67
    %p79 = scmp.eq.s32.totalorder %s15, 7
    %p80 = por %p78, %p79
    %p82 = scmp.ne.s32.totalorder %s67, %s81
    %p83 = scmp.eq.s32.totalorder %s15, 0
    %p84 = por %p82, %p83
    %s85 = ssub.s32 %s9, %s16
    %p86 = scmp.eq.s32.totalorder %s85, 0
    %s88 = sadd.s32 %s87, 1
    %s89 = scalar_select %p86, %s87, %s88
    %p92 = pneg %p86
    %p93 = scmp.eq.s32.totalorder %s9, 7
    %p94 = por %p92, %p93
    %p95 = scmp.ne.s32.totalorder %s87, %s90
    %p96 = scmp.eq.s32.totalorder %s9, 0
    %p97 = por %p95, %p96
    %p98 = scmp.ne.s32.totalorder %s87, %s90
    %p99 = scmp.eq.s32.totalorder %s14, 7
    %p100 = por %p98, %p99
    %p101 = scmp.ne.s32.totalorder %s90, %s91
    %p102 = scmp.eq.s32.totalorder %s14, 0
    %p103 = por %p101, %p102
    %p104 = scmp.ne.s32.totalorder %s90, %s91
    %p105 = scmp.eq.s32.totalorder %s15, 7
    %p106 = por %p104, %p105
    %p108 = scmp.ne.s32.totalorder %s91, %s107
    %p109 = scmp.eq.s32.totalorder %s15, 0
    %p110 = por %p108, %p109
    %p111 = scmp.le.s32.totalorder 1, %s9
    %p112 = scmp.lt.s32.totalorder %s9, 9
    %p113 = pnand %p111, %p112
    %p114 = pneg %p113
    // Predicated region
    $region9: #{cnn_lstm_forward.5} parent=5 // pred_check
      _
    $region10: #{cnn_lstm_forward.5} parent=5 // pred_check_branch
      %116 = sbr.rel (%p113) target = $region12
    $region11: #{cnn_lstm_forward.5} parent=5 // pred_region
      %s117 = ssub.s32 %s9, 1
      // Predicated region
      $region13: #{cnn_lstm_forward.5} parent=11 // pred_check
        %p118 = pneg %p56
      $region14: #{cnn_lstm_forward.5} parent=11 // pred_check_branch
        %120 = sbr.rel (%p118) target = $region16
      $region15: #{cnn_lstm_forward.5} parent=11 // pred_region
        _
      $region16: #{cnn_lstm_forward.5} parent=11 // pred_fallthru
        _
      // Predicated region
      $region17: #{cnn_lstm_forward.5} parent=11 // pred_check
        %p121 = pneg %p77
      $region18: #{cnn_lstm_forward.5} parent=11 // pred_check_branch
        %123 = sbr.rel (%p121) target = $region20
      $region19: #{cnn_lstm_forward.5} parent=11 // pred_region
        _
      $region20: #{cnn_lstm_forward.5} parent=11 // pred_fallthru
        _
    $region12: #{cnn_lstm_forward.5} parent=5 // pred_fallthru
      _
    %p124 = scmp.lt.s32.totalorder %s9, 8
    // Predicated region
    $region21: #{cnn_lstm_forward.5} parent=5 // pred_check
      %p125 = pneg %p124
    $region22: #{cnn_lstm_forward.5} parent=5 // pred_check_branch
      %127 = sbr.rel (%p125) target = $region24
    $region23: #{cnn_lstm_forward.5} parent=5 // pred_region
      // Predicated region
      $region25: #{cnn_lstm_forward.5} parent=23 // pred_check
        %p128 = pneg %p29
      $region26: #{cnn_lstm_forward.5} parent=23 // pred_check_branch
        %130 = sbr.rel (%p128) target = $region28
      $region27: #{cnn_lstm_forward.5} parent=23 // pred_region
        %p131 = scmp.lt.s32.totalorder %s9, 7
        %s132 = scalar_select %p131, %s9, 7
        %s133 = smul.addr %s132, 72
        %s134 = smul.addr %s133, 8
        %s135 = scalar_lea.vmem %s0, %s134
      $region28: #{cnn_lstm_forward.5} parent=23 // pred_fallthru
        _
    $region24: #{cnn_lstm_forward.5} parent=5 // pred_fallthru
      _
    %p136 = scmp.le.s32.totalorder 1, %s9
    %p137 = scmp.lt.s32.totalorder %s9, 9
    %p138 = pnand %p136, %p137
    %p139 = pneg %p138
    // Predicated region
    $region29: #{cnn_lstm_forward.5} parent=5 // pred_check
      _
    $region30: #{cnn_lstm_forward.5} parent=5 // pred_check_branch
      %141 = sbr.rel (%p138) target = $region32
    $region31: #{cnn_lstm_forward.5} parent=5 // pred_region
      %s142 = ssub.s32 %s9, 1
      %p143 = scmp.lt.s32.totalorder %s14, 7
      %s144 = scalar_select %p143, %s14, 7
      %s145 = smul.addr %s144, 72
      %s146 = smul.addr %s145, 8
      %s147 = scalar_lea.vmem %s0, %s146
      %p148 = pneg %p35
      %p149 = pneg %p32
      %p150 = pneg %p56
      %p151 = pneg %p53
      %p152 = pneg %p77
      %p153 = pneg %p74
      %p154 = pneg %p103
      %p155 = pneg %p100
      %p156 = scmp.lt.s32.totalorder %s14, 7
      %s157 = scalar_select %p156, %s14, 7
      %s158 = smul.addr %s157, 63
      %s159 = smul.addr %s158, 8
      %s160 = scalar_lea.vmem %s3, %s159
      %p161 = scmp.lt.s32.totalorder %s14, 7
      %s162 = scalar_select %p161, %s14, 7
      %s163 = smul.addr %s162, 72
      %s164 = smul.addr %s163, 8
      %s165 = scalar_lea.vmem %s0, %s164
      %p166 = scmp.lt.s32.totalorder %s14, 7
      %s167 = scalar_select %p166, %s14, 7
      %s168 = smul.addr %s167, 63
      %s169 = smul.addr %s168, 8
      %s170 = scalar_lea.vmem %s3, %s169
      %v172 = vld [vmem:[%s165] sm:$0xff]
      %v173 = vld [vmem:[%s165 + $0x8] sm:$0xff]
      %v174 = vld [vmem:[%s165 + $0x10] sm:$0xff]
      %v175 = vld [vmem:[%s165 + $0x18] sm:$0xff]
      %v176 = vld [vmem:[%s165 + $0x20] sm:$0xff]
      %v177 = vld [vmem:[%s165 + $0x28] sm:$0xff]
      %v178 = vld [vmem:[%s165 + $0x30] sm:$0xff]
      %v179 = vld [vmem:[%s165 + $0x38] sm:$0xff]
      %v180 = vld [vmem:[%s165 + $0x40] sm:$0xff]
      %v181 = vld [vmem:[%s165 + $0x48] sm:$0xff]
      %v182 = vld [vmem:[%s165 + $0x50] sm:$0xff]
      %v183 = vld [vmem:[%s165 + $0x58] sm:$0xff]
      %v184 = vld [vmem:[%s165 + $0x60] sm:$0xff]
      %v185 = vld [vmem:[%s165 + $0x68] sm:$0xff]
      %v186 = vld [vmem:[%s165 + $0x70] sm:$0xff]
      %v187 = vld [vmem:[%s165 + $0x78] sm:$0xff]
      %v188 = vld [vmem:[%s165 + $0x80] sm:$0xff]
      %v189 = vld [vmem:[%s165 + $0x88] sm:$0xff]
      %v190 = vld [vmem:[%s165 + $0x90] sm:$0xff]
      %v191 = vld [vmem:[%s165 + $0x98] sm:$0xff]
      %v192 = vld [vmem:[%s165 + $0xa0] sm:$0xff]
      %v193 = vld [vmem:[%s165 + $0xa8] sm:$0xff]
      %v194 = vld [vmem:[%s165 + $0xb0] sm:$0xff]
      %v195 = vld [vmem:[%s165 + $0xb8] sm:$0xff]
      %v196 = vld [vmem:[%s165 + $0xc0] sm:$0xff]
      %v197 = vld [vmem:[%s165 + $0xc8] sm:$0xff]
      %v198 = vld [vmem:[%s165 + $0xd0] sm:$0xff]
      %v199 = vld [vmem:[%s165 + $0xd8] sm:$0xff]
      %v200 = vld [vmem:[%s165 + $0xe0] sm:$0xff]
      %v201 = vld [vmem:[%s165 + $0xe8] sm:$0xff]
      %v202 = vld [vmem:[%s165 + $0xf0] sm:$0xff]
      %v203 = vld [vmem:[%s165 + $0xf8] sm:$0xff]
      %v204 = vld [vmem:[%s165 + $0x100] sm:$0xff]
      %v205 = vld [vmem:[%s165 + $0x108] sm:$0xff]
      %v206 = vld [vmem:[%s165 + $0x110] sm:$0xff]
      %v207 = vld [vmem:[%s165 + $0x118] sm:$0xff]
      %v208 = vld [vmem:[%s165 + $0x120] sm:$0xff]
      %v209 = vld [vmem:[%s165 + $0x128] sm:$0xff]
      %v210 = vld [vmem:[%s165 + $0x130] sm:$0xff]
      %v211 = vld [vmem:[%s165 + $0x138] sm:$0xff]
      %v212 = vld [vmem:[%s165 + $0x140] sm:$0xff]
      %v213 = vld [vmem:[%s165 + $0x148] sm:$0xff]
      %v214 = vld [vmem:[%s165 + $0x150] sm:$0xff]
      %v215 = vld [vmem:[%s165 + $0x158] sm:$0xff]
      %v216 = vld [vmem:[%s165 + $0x160] sm:$0xff]
      %v217 = vld [vmem:[%s165 + $0x168] sm:$0xff]
      %v218 = vld [vmem:[%s165 + $0x170] sm:$0xff]
      %v219 = vld [vmem:[%s165 + $0x178] sm:$0xff]
      %v220 = vld [vmem:[%s165 + $0x180] sm:$0xff]
      %v221 = vld [vmem:[%s165 + $0x188] sm:$0xff]
      %v222 = vld [vmem:[%s165 + $0x190] sm:$0xff]
      %v223 = vld [vmem:[%s165 + $0x198] sm:$0xff]
      %v224 = vld [vmem:[%s165 + $0x1a0] sm:$0xff]
      %v225 = vld [vmem:[%s165 + $0x1a8] sm:$0xff]
      %v226 = vld [vmem:[%s165 + $0x1b0] sm:$0xff]
      %v227 = vld [vmem:[%s165 + $0x1b8] sm:$0xff]
      %v228 = vld [vmem:[%s165 + $0x1c0] sm:$0xff]
      %v229 = vld [vmem:[%s165 + $0x1c8] sm:$0xff]
      %v230 = vld [vmem:[%s165 + $0x1d0] sm:$0xff]
      %v231 = vld [vmem:[%s165 + $0x1d8] sm:$0xff]
      %v232 = vld [vmem:[%s165 + $0x1e0] sm:$0xff]
      %v233 = vld [vmem:[%s165 + $0x1e8] sm:$0xff]
      %v234 = vld [vmem:[%s165 + $0x1f0] sm:$0xff]
      %v235 = vld [vmem:[%s165 + $0x1f8] sm:$0xff]
      %v236 = vld [vmem:[%s165 + $0x200] sm:$0xff]
      %v237 = vld [vmem:[%s165 + $0x208] sm:$0x3f]
      %v238 = vpack.c.bf16 %v173, %v172
      %v239 = vpack.c.bf16 %v175, %v174
      %v240 = vpack.c.bf16 %v177, %v176
      %v241 = vpack.c.bf16 %v179, %v178
      %v242 = vpack.c.bf16 %v181, %v180
      %v243 = vpack.c.bf16 %v183, %v182
      %v244 = vpack.c.bf16 %v185, %v184
      %v245 = vpack.c.bf16 %v187, %v186
      %v246 = vpack.c.bf16 %v189, %v188
      %v247 = vpack.c.bf16 %v191, %v190
      %v248 = vpack.c.bf16 %v193, %v192
      %v249 = vpack.c.bf16 %v195, %v194
      %v250 = vpack.c.bf16 %v197, %v196
      %v251 = vpack.c.bf16 %v199, %v198
      %v252 = vpack.c.bf16 %v201, %v200
      %v253 = vpack.c.bf16 %v203, %v202
      %v254 = vpack.c.bf16 %v205, %v204
      %v255 = vpack.c.bf16 %v207, %v206
      %v256 = vpack.c.bf16 %v209, %v208
      %v257 = vpack.c.bf16 %v211, %v210
      %v258 = vpack.c.bf16 %v213, %v212
      %v259 = vpack.c.bf16 %v215, %v214
      %v260 = vpack.c.bf16 %v217, %v216
      %v261 = vpack.c.bf16 %v219, %v218
      %v262 = vpack.c.bf16 %v221, %v220
      %v263 = vpack.c.bf16 %v223, %v222
      %v264 = vpack.c.bf16 %v225, %v224
      %v265 = vpack.c.bf16 %v227, %v226
      %v266 = vpack.c.bf16 %v229, %v228
      %v267 = vpack.c.bf16 %v231, %v230
      %v268 = vpack.c.bf16 %v233, %v232
      %v269 = vpack.c.bf16 %v235, %v234
      %v270 = vpack.c.bf16 %v237, %v236
      %v271 = vld [vmem:[%s1] sm:$0x3]
      %v272 = vld [vmem:[%s165 + $0x1] sm:$0xff]
      %v273 = vld [vmem:[%s165 + $0x9] sm:$0xff]
      %v274 = vld [vmem:[%s165 + $0x11] sm:$0xff]
      %v275 = vld [vmem:[%s165 + $0x19] sm:$0xff]
      %v276 = vld [vmem:[%s165 + $0x21] sm:$0xff]
      %v277 = vld [vmem:[%s165 + $0x29] sm:$0xff]
      %v278 = vld [vmem:[%s165 + $0x31] sm:$0xff]
      %v279 = vld [vmem:[%s165 + $0x39] sm:$0xff]
      %v280 = vld [vmem:[%s165 + $0x41] sm:$0xff]
      %v281 = vld [vmem:[%s165 + $0x49] sm:$0xff]
      %v282 = vld [vmem:[%s165 + $0x51] sm:$0xff]
      %v283 = vld [vmem:[%s165 + $0x59] sm:$0xff]
      %v284 = vld [vmem:[%s165 + $0x61] sm:$0xff]
      %v285 = vld [vmem:[%s165 + $0x69] sm:$0xff]
      %v286 = vld [vmem:[%s165 + $0x71] sm:$0xff]
      %v287 = vld [vmem:[%s165 + $0x79] sm:$0xff]
      %v288 = vld [vmem:[%s165 + $0x81] sm:$0xff]
      %v289 = vld [vmem:[%s165 + $0x89] sm:$0xff]
      %v290 = vld [vmem:[%s165 + $0x91] sm:$0xff]
      %v291 = vld [vmem:[%s165 + $0x99] sm:$0xff]
      %v292 = vld [vmem:[%s165 + $0xa1] sm:$0xff]
      %v293 = vld [vmem:[%s165 + $0xa9] sm:$0xff]
      %v294 = vld [vmem:[%s165 + $0xb1] sm:$0xff]
      %v295 = vld [vmem:[%s165 + $0xb9] sm:$0xff]
      %v296 = vld [vmem:[%s165 + $0xc1] sm:$0xff]
      %v297 = vld [vmem:[%s165 + $0xc9] sm:$0xff]
      %v298 = vld [vmem:[%s165 + $0xd1] sm:$0xff]
      %v299 = vld [vmem:[%s165 + $0xd9] sm:$0xff]
      %v300 = vld [vmem:[%s165 + $0xe1] sm:$0xff]
      %v301 = vld [vmem:[%s165 + $0xe9] sm:$0xff]
      %v302 = vld [vmem:[%s165 + $0xf1] sm:$0xff]
      %v303 = vld [vmem:[%s165 + $0xf9] sm:$0xff]
      %v304 = vld [vmem:[%s165 + $0x101] sm:$0xff]
      %v305 = vld [vmem:[%s165 + $0x109] sm:$0xff]
      %v306 = vld [vmem:[%s165 + $0x111] sm:$0xff]
      %v307 = vld [vmem:[%s165 + $0x119] sm:$0xff]
      %v308 = vld [vmem:[%s165 + $0x121] sm:$0xff]
      %v309 = vld [vmem:[%s165 + $0x129] sm:$0xff]
      %v310 = vld [vmem:[%s165 + $0x131] sm:$0xff]
      %v311 = vld [vmem:[%s165 + $0x139] sm:$0xff]
      %v312 = vld [vmem:[%s165 + $0x141] sm:$0xff]
      %v313 = vld [vmem:[%s165 + $0x149] sm:$0xff]
      %v314 = vld [vmem:[%s165 + $0x151] sm:$0xff]
      %v315 = vld [vmem:[%s165 + $0x159] sm:$0xff]
      %v316 = vld [vmem:[%s165 + $0x161] sm:$0xff]
      %v317 = vld [vmem:[%s165 + $0x169] sm:$0xff]
      %v318 = vld [vmem:[%s165 + $0x171] sm:$0xff]
      %v319 = vld [vmem:[%s165 + $0x179] sm:$0xff]
      %v320 = vld [vmem:[%s165 + $0x181] sm:$0xff]
      %v321 = vld [vmem:[%s165 + $0x189] sm:$0xff]
      %v322 = vld [vmem:[%s165 + $0x191] sm:$0xff]
      %v323 = vld [vmem:[%s165 + $0x199] sm:$0xff]
      %v324 = vld [vmem:[%s165 + $0x1a1] sm:$0xff]
      %v325 = vld [vmem:[%s165 + $0x1a9] sm:$0xff]
      %v326 = vld [vmem:[%s165 + $0x1b1] sm:$0xff]
      %v327 = vld [vmem:[%s165 + $0x1b9] sm:$0xff]
      %v328 = vld [vmem:[%s165 + $0x1c1] sm:$0xff]
      %v329 = vld [vmem:[%s165 + $0x1c9] sm:$0xff]
      %v330 = vld [vmem:[%s165 + $0x1d1] sm:$0xff]
      %v331 = vld [vmem:[%s165 + $0x1d9] sm:$0xff]
      %v332 = vld [vmem:[%s165 + $0x1e1] sm:$0xff]
      %v333 = vld [vmem:[%s165 + $0x1e9] sm:$0xff]
      %v334 = vld [vmem:[%s165 + $0x1f1] sm:$0xff]
      %v335 = vld [vmem:[%s165 + $0x1f9] sm:$0xff]
      %v336 = vld [vmem:[%s165 + $0x201] sm:$0xff]
      %v337 = vld [vmem:[%s165 + $0x209] sm:$0x3f]
      %v338 = vpack.c.bf16 %v273, %v272
      %v339 = vpack.c.bf16 %v275, %v274
      %v340 = vpack.c.bf16 %v277, %v276
      %v341 = vpack.c.bf16 %v279, %v278
      %v342 = vpack.c.bf16 %v281, %v280
      %v343 = vpack.c.bf16 %v283, %v282
      %v344 = vpack.c.bf16 %v285, %v284
      %v345 = vpack.c.bf16 %v287, %v286
      %v346 = vpack.c.bf16 %v289, %v288
      %v347 = vpack.c.bf16 %v291, %v290
      %v348 = vpack.c.bf16 %v293, %v292
      %v349 = vpack.c.bf16 %v295, %v294
      %v350 = vpack.c.bf16 %v297, %v296
      %v351 = vpack.c.bf16 %v299, %v298
      %v352 = vpack.c.bf16 %v301, %v300
      %v353 = vpack.c.bf16 %v303, %v302
      %v354 = vpack.c.bf16 %v305, %v304
      %v355 = vpack.c.bf16 %v307, %v306
      %v356 = vpack.c.bf16 %v309, %v308
      %v357 = vpack.c.bf16 %v311, %v310
      %v358 = vpack.c.bf16 %v313, %v312
      %v359 = vpack.c.bf16 %v315, %v314
      %v360 = vpack.c.bf16 %v317, %v316
      %v361 = vpack.c.bf16 %v319, %v318
      %v362 = vpack.c.bf16 %v321, %v320
      %v363 = vpack.c.bf16 %v323, %v322
      %v364 = vpack.c.bf16 %v325, %v324
      %v365 = vpack.c.bf16 %v327, %v326
      %v366 = vpack.c.bf16 %v329, %v328
      %v367 = vpack.c.bf16 %v331, %v330
      %v368 = vpack.c.bf16 %v333, %v332
      %v369 = vpack.c.bf16 %v335, %v334
      %v370 = vpack.c.bf16 %v337, %v336
      %s371 = scalar_lea.vmem %s1, 2
      %v372 = vld [vmem:[%s371] sm:$0x3]
      %vm373 = vcmask 23552
      %v375 = vsel %vm373, %v338, 0
      %v378 = vsel %vm373, %v339, 0
      %v381 = vsel %vm373, %v340, 0
      %v384 = vsel %vm373, %v341, 0
      %v387 = vsel %vm373, %v342, 0
      %v390 = vsel %vm373, %v343, 0
      %v393 = vsel %vm373, %v344, 0
      %v396 = vsel %vm373, %v345, 0
      %v399 = vsel %vm373, %v346, 0
      %v402 = vsel %vm373, %v347, 0
      %v405 = vsel %vm373, %v348, 0
      %v408 = vsel %vm373, %v349, 0
      %v411 = vsel %vm373, %v350, 0
      %v414 = vsel %vm373, %v351, 0
      %v417 = vsel %vm373, %v352, 0
      %v420 = vsel %vm373, %v353, 0
      %v423 = vsel %vm373, %v354, 0
      %v426 = vsel %vm373, %v355, 0
      %v429 = vsel %vm373, %v356, 0
      %v432 = vsel %vm373, %v357, 0
      %v435 = vsel %vm373, %v358, 0
      %v438 = vsel %vm373, %v359, 0
      %v441 = vsel %vm373, %v360, 0
      %v444 = vsel %vm373, %v361, 0
      %v447 = vsel %vm373, %v362, 0
      %v450 = vsel %vm373, %v363, 0
      %v453 = vsel %vm373, %v364, 0
      %v456 = vsel %vm373, %v365, 0
      %v459 = vsel %vm373, %v366, 0
      %v462 = vsel %vm373, %v367, 0
      %v465 = vsel %vm373, %v368, 0
      %v468 = vsel %vm373, %v369, 0
      %v471 = vsel %vm373, %v370, 0
      %vm473 = vcmask 1040384
      %vm474 = vcmask 1041408
      %v475 = vsel %vm473, 4294967295, 65535
      %v476 = vsel %vm474, %v475, 0
      %v478 = vand.u32 %v372, %v476
      %480 = vmatprep.subr.bf16.mxu0 0
      %481 = vmatpush1.bf16.msra.mxu0 %v478
      %482 = vmatprep.subr.bf16.mxu0 0
      %483 = vmatpush1.bf16.msra.mxu0 0
      %484 = vmatprep.subr.bf16.mxu0 0
      %485 = vmatpush1.bf16.msra.mxu0 0
      %486 = vmatprep.subr.bf16.mxu0 0
      %487 = vmatpush1.bf16.msra.mxu0 0
      %488 = vmatprep.subr.bf16.mxu0 0
      %489 = vmatpush1.bf16.msra.mxu0 0
      %490 = vmatprep.subr.bf16.mxu0 0
      %491 = vmatpush1.bf16.msra.mxu0 0
      %492 = vmatprep.subr.bf16.mxu0 0
      %493 = vmatpush1.bf16.msra.mxu0 0
      %494 = vmatprep.subr.bf16.mxu0 0
      %495 = vmatpush1.bf16.msra.mxu0 0
      %496 = vmatprep.subr.bf16.mxu0 0
      %497 = vmatpush1.bf16.msra.mxu0 0
      %498 = vmatprep.subr.bf16.mxu0 0
      %499 = vmatpush1.bf16.msra.mxu0 0
      %500 = vmatprep.subr.bf16.mxu0 0
      %501 = vmatpush1.bf16.msra.mxu0 0
      %502 = vmatprep.subr.bf16.mxu0 0
      %503 = vmatpush1.bf16.msra.mxu0 0
      %504 = vmatprep.subr.bf16.mxu0 0
      %505 = vmatpush1.bf16.msra.mxu0 0
      %506 = vmatprep.subr.bf16.mxu0 0
      %507 = vmatpush1.bf16.msra.mxu0 0
      %508 = vmatprep.subr.bf16.mxu0 0
      %509 = vmatpush1.bf16.msra.mxu0 0
      %510 = vmatprep.subr.bf16.mxu0 0
      %511 = vmatpush1.bf16.msra.mxu0 0
      %512 = vmatprep.mubr.bf16.mxu0 0
      %513 = vmatmul.mubr.bf16.gmra.mrb[0].mxu0 %v375
      %v514 = vpop.f32.mrb[0].mxu0
      %v515 = vadd.f32 0.0, %v514
      %v516 = vpop.f32.mrb[0].mxu0
      %v517 = vpop.f32.mrb[0].mxu0
      %v518 = vadd.f32 0.0, %v517
      %v519 = vpop.f32.mrb[0].mxu0
      %520 = vmatprep.mubr.bf16.mxu0 0
      %521 = vmatmul.mubr.bf16.gmra.mrb[0].mxu0 %v378
      %v522 = vpop.f32.mrb[0].mxu0
      %v523 = vadd.f32 0.0, %v522
      %v524 = vpop.f32.mrb[0].mxu0
      %v525 = vpop.f32.mrb[0].mxu0
      %v526 = vadd.f32 0.0, %v525
      %v527 = vpop.f32.mrb[0].mxu0
      %528 = vmatprep.mubr.bf16.mxu0 0
      %529 = vmatmul.mubr.bf16.gmra.mrb[0].mxu0 %v381
      %v530 = vpop.f32.mrb[0].mxu0
      %v531 = vadd.f32 0.0, %v530
      %v532 = vpop.f32.mrb[0].mxu0
      %v533 = vpop.f32.mrb[0].mxu0
      %v534 = vadd.f32 0.0, %v533
      %v535 = vpop.f32.mrb[0].mxu0
      %536 = vmatprep.mubr.bf16.mxu0 0
      %537 = vmatmul.mubr.bf16.gmra.mrb[0].mxu0 %v384
      %v538 = vpop.f32.mrb[0].mxu0
      %v539 = vadd.f32 0.0, %v538
      %v540 = vpop.f32.mrb[0].mxu0
      %v541 = vpop.f32.mrb[0].mxu0
      %v542 = vadd.f32 0.0, %v541
      %v543 = vpop.f32.mrb[0].mxu0
      %544 = vmatprep.mubr.bf16.mxu0 0
      %545 = vmatmul.mubr.bf16.gmra.mrb[0].mxu0 %v387
      %v546 = vpop.f32.mrb[0].mxu0
      %v547 = vadd.f32 0.0, %v546
      %v548 = vpop.f32.mrb[0].mxu0
      %v549 = vpop.f32.mrb[0].mxu0
      %v550 = vadd.f32 0.0, %v549
      %v551 = vpop.f32.mrb[0].mxu0
      %552 = vmatprep.mubr.bf16.mxu0 0
      %553 = vmatmul.mubr.bf16.gmra.mrb[0].mxu0 %v390
      %v554 = vpop.f32.mrb[0].mxu0
      %v555 = vadd.f32 0.0, %v554
      %v556 = vpop.f32.mrb[0].mxu0
      %v557 = vpop.f32.mrb[0].mxu0
      %v558 = vadd.f32 0.0, %v557
      %v559 = vpop.f32.mrb[0].mxu0
      %560 = vmatprep.mubr.bf16.mxu0 0
      %561 = vmatmul.mubr.bf16.gmra.mrb[0].mxu0 %v393
      %v562 = vpop.f32.mrb[0].mxu0
      %v563 = vadd.f32 0.0, %v562
      %v564 = vpop.f32.mrb[0].mxu0
      %v565 = vpop.f32.mrb[0].mxu0
      %v566 = vadd.f32 0.0, %v565
      %v567 = vpop.f32.mrb[0].mxu0
      %568 = vmatprep.mubr.bf16.mxu0 0
      %569 = vmatmul.mubr.bf16.gmra.mrb[0].mxu0 %v396
      %v570 = vpop.f32.mrb[0].mxu0
      %v571 = vadd.f32 0.0, %v570
      %v572 = vpop.f32.mrb[0].mxu0
      %v573 = vpop.f32.mrb[0].mxu0
      %v574 = vadd.f32 0.0, %v573
      %v575 = vpop.f32.mrb[0].mxu0
      %576 = vmatprep.mubr.bf16.mxu0 0
      %577 = vmatmul.mubr.bf16.gmra.mrb[0].mxu0 %v399
      %v578 = vpop.f32.mrb[0].mxu0
      %v579 = vadd.f32 0.0, %v578
      %v580 = vpop.f32.mrb[0].mxu0
      %v581 = vpop.f32.mrb[0].mxu0
      %v582 = vadd.f32 0.0, %v581
      %v583 = vpop.f32.mrb[0].mxu0
      %584 = vmatprep.mubr.bf16.mxu0 0
      %585 = vmatmul.mubr.bf16.gmra.mrb[0].mxu0 %v402
      %v586 = vpop.f32.mrb[0].mxu0
      %v587 = vadd.f32 0.0, %v586
      %v588 = vpop.f32.mrb[0].mxu0
      %v589 = vpop.f32.mrb[0].mxu0
      %v590 = vadd.f32 0.0, %v589
      %v591 = vpop.f32.mrb[0].mxu0
      %592 = vmatprep.mubr.bf16.mxu0 0
      %593 = vmatmul.mubr.bf16.gmra.mrb[0].mxu0 %v405
      %v594 = vpop.f32.mrb[0].mxu0
      %v595 = vadd.f32 0.0, %v594
      %v596 = vpop.f32.mrb[0].mxu0
      %v597 = vpop.f32.mrb[0].mxu0
      %v598 = vadd.f32 0.0, %v597
      %v599 = vpop.f32.mrb[0].mxu0
      %600 = vmatprep.mubr.bf16.mxu0 0
      %601 = vmatmul.mubr.bf16.gmra.mrb[0].mxu0 %v408
      %v602 = vpop.f32.mrb[0].mxu0
      %v603 = vadd.f32 0.0, %v602
      %v604 = vpop.f32.mrb[0].mxu0
      %v605 = vpop.f32.mrb[0].mxu0
      %v606 = vadd.f32 0.0, %v605
      %v607 = vpop.f32.mrb[0].mxu0
      %608 = vmatprep.mubr.bf16.mxu0 0
      %609 = vmatmul.mubr.bf16.gmra.mrb[0].mxu0 %v411
      %v610 = vpop.f32.mrb[0].mxu0
      %v611 = vadd.f32 0.0, %v610
      %v612 = vpop.f32.mrb[0].mxu0
      %v613 = vpop.f32.mrb[0].mxu0
      %v614 = vadd.f32 0.0, %v613
      %v615 = vpop.f32.mrb[0].mxu0
      %616 = vmatprep.mubr.bf16.mxu0 0
      %617 = vmatmul.mubr.bf16.gmra.mrb[0].mxu0 %v414
      %v618 = vpop.f32.mrb[0].mxu0
      %v619 = vadd.f32 0.0, %v618
      %v620 = vpop.f32.mrb[0].mxu0
      %v621 = vpop.f32.mrb[0].mxu0
      %v622 = vadd.f32 0.0, %v621
      %v623 = vpop.f32.mrb[0].mxu0
      %624 = vmatprep.mubr.bf16.mxu0 0
      %625 = vmatmul.mubr.bf16.gmra.mrb[0].mxu0 %v417
      %v626 = vpop.f32.mrb[0].mxu0
      %v627 = vadd.f32 0.0, %v626
      %v628 = vpop.f32.mrb[0].mxu0
      %v629 = vpop.f32.mrb[0].mxu0
      %v630 = vadd.f32 0.0, %v629
      %v631 = vpop.f32.mrb[0].mxu0
      %632 = vmatprep.mubr.bf16.mxu0 0
      %633 = vmatmul.mubr.bf16.gmra.mrb[0].mxu0 %v420
      %v634 = vpop.f32.mrb[0].mxu0
      %v635 = vadd.f32 0.0, %v634
      %v636 = vpop.f32.mrb[0].mxu0
      %v637 = vpop.f32.mrb[0].mxu0
      %v638 = vadd.f32 0.0, %v637
      %v639 = vpop.f32.mrb[0].mxu0
      %640 = vmatprep.mubr.bf16.mxu0 0
      %641 = vmatmul.mubr.bf16.gmra.mrb[0].mxu0 %v423
      %v642 = vpop.f32.mrb[0].mxu0
      %v643 = vadd.f32 0.0, %v642
      %v644 = vpop.f32.mrb[0].mxu0
      %v645 = vpop.f32.mrb[0].mxu0
      %v646 = vadd.f32 0.0, %v645
      %v647 = vpop.f32.mrb[0].mxu0
      %648 = vmatprep.mubr.bf16.mxu0 0
      %649 = vmatmul.mubr.bf16.gmra.mrb[0].mxu0 %v426
      %v650 = vpop.f32.mrb[0].mxu0
      %v651 = vadd.f32 0.0, %v650
      %v652 = vpop.f32.mrb[0].mxu0
      %v653 = vpop.f32.mrb[0].mxu0
      %v654 = vadd.f32 0.0, %v653
      %v655 = vpop.f32.mrb[0].mxu0
      %656 = vmatprep.mubr.bf16.mxu0 0
      %657 = vmatmul.mubr.bf16.gmra.mrb[0].mxu0 %v429
      %v658 = vpop.f32.mrb[0].mxu0
      %v659 = vadd.f32 0.0, %v658
      %v660 = vpop.f32.mrb[0].mxu0
      %v661 = vpop.f32.mrb[0].mxu0
      %v662 = vadd.f32 0.0, %v661
      %v663 = vpop.f32.mrb[0].mxu0
      %664 = vmatprep.mubr.bf16.mxu0 0
      %665 = vmatmul.mubr.bf16.gmra.mrb[0].mxu0 %v432
      %v666 = vpop.f32.mrb[0].mxu0
      %v667 = vadd.f32 0.0, %v666
      %v668 = vpop.f32.mrb[0].mxu0
      %v669 = vpop.f32.mrb[0].mxu0
      %v670 = vadd.f32 0.0, %v669
      %v671 = vpop.f32.mrb[0].mxu0
      %672 = vmatprep.mubr.bf16.mxu0 0
      %673 = vmatmul.mubr.bf16.gmra.mrb[0].mxu0 %v435
      %v674 = vpop.f32.mrb[0].mxu0
      %v675 = vadd.f32 0.0, %v674
      %v676 = vpop.f32.mrb[0].mxu0
      %v677 = vpop.f32.mrb[0].mxu0
      %v678 = vadd.f32 0.0, %v677
      %v679 = vpop.f32.mrb[0].mxu0
      %680 = vmatprep.mubr.bf16.mxu0 0
      %681 = vmatmul.mubr.bf16.gmra.mrb[0].mxu0 %v438
      %v682 = vpop.f32.mrb[0].mxu0
      %v683 = vadd.f32 0.0, %v682
      %v684 = vpop.f32.mrb[0].mxu0
      %v685 = vpop.f32.mrb[0].mxu0
      %v686 = vadd.f32 0.0, %v685
      %v687 = vpop.f32.mrb[0].mxu0
      %688 = vmatprep.mubr.bf16.mxu0 0
      %689 = vmatmul.mubr.bf16.gmra.mrb[0].mxu0 %v441
      %v690 = vpop.f32.mrb[0].mxu0
      %v691 = vadd.f32 0.0, %v690
      %v692 = vpop.f32.mrb[0].mxu0
      %v693 = vpop.f32.mrb[0].mxu0
      %v694 = vadd.f32 0.0, %v693
      %v695 = vpop.f32.mrb[0].mxu0
      %696 = vmatprep.mubr.bf16.mxu0 0
      %697 = vmatmul.mubr.bf16.gmra.mrb[0].mxu0 %v444
      %v698 = vpop.f32.mrb[0].mxu0
      %v699 = vadd.f32 0.0, %v698
      %v700 = vpop.f32.mrb[0].mxu0
      %v701 = vpop.f32.mrb[0].mxu0
      %v702 = vadd.f32 0.0, %v701
      %v703 = vpop.f32.mrb[0].mxu0
      %704 = vmatprep.mubr.bf16.mxu0 0
      %705 = vmatmul.mubr.bf16.gmra.mrb[0].mxu0 %v447
      %v706 = vpop.f32.mrb[0].mxu0
      %v707 = vadd.f32 0.0, %v706
      %v708 = vpop.f32.mrb[0].mxu0
      %v709 = vpop.f32.mrb[0].mxu0
      %v710 = vadd.f32 0.0, %v709
      %v711 = vpop.f32.mrb[0].mxu0
      %712 = vmatprep.mubr.bf16.mxu0 0
      %713 = vmatmul.mubr.bf16.gmra.mrb[0].mxu0 %v450
      %v714 = vpop.f32.mrb[0].mxu0
      %v715 = vadd.f32 0.0, %v714
      %v716 = vpop.f32.mrb[0].mxu0
      %v717 = vpop.f32.mrb[0].mxu0
      %v718 = vadd.f32 0.0, %v717
      %v719 = vpop.f32.mrb[0].mxu0
      %720 = vmatprep.mubr.bf16.mxu0 0
      %721 = vmatmul.mubr.bf16.gmra.mrb[0].mxu0 %v453
      %v722 = vpop.f32.mrb[0].mxu0
      %v723 = vadd.f32 0.0, %v722
      %v724 = vpop.f32.mrb[0].mxu0
      %v725 = vpop.f32.mrb[0].mxu0
      %v726 = vadd.f32 0.0, %v725
      %v727 = vpop.f32.mrb[0].mxu0
      %728 = vmatprep.mubr.bf16.mxu0 0
      %729 = vmatmul.mubr.bf16.gmra.mrb[0].mxu0 %v456
      %v730 = vpop.f32.mrb[0].mxu0
      %v731 = vadd.f32 0.0, %v730
      %v732 = vpop.f32.mrb[0].mxu0
      %v733 = vpop.f32.mrb[0].mxu0
      %v734 = vadd.f32 0.0, %v733
      %v735 = vpop.f32.mrb[0].mxu0
      %736 = vmatprep.mubr.bf16.mxu0 0
      %737 = vmatmul.mubr.bf16.gmra.mrb[0].mxu0 %v459
      %v738 = vpop.f32.mrb[0].mxu0
      %v739 = vadd.f32 0.0, %v738
      %v740 = vpop.f32.mrb[0].mxu0
      %v741 = vpop.f32.mrb[0].mxu0
      %v742 = vadd.f32 0.0, %v741
      %v743 = vpop.f32.mrb[0].mxu0
      %744 = vmatprep.mubr.bf16.mxu0 0
      %745 = vmatmul.mubr.bf16.gmra.mrb[0].mxu0 %v462
      %v746 = vpop.f32.mrb[0].mxu0
      %v747 = vadd.f32 0.0, %v746
      %v748 = vpop.f32.mrb[0].mxu0
      %v749 = vpop.f32.mrb[0].mxu0
      %v750 = vadd.f32 0.0, %v749
      %v751 = vpop.f32.mrb[0].mxu0
      %752 = vmatprep.mubr.bf16.mxu0 0
      %753 = vmatmul.mubr.bf16.gmra.mrb[0].mxu0 %v465
      %v754 = vpop.f32.mrb[0].mxu0
      %v755 = vadd.f32 0.0, %v754
      %v756 = vpop.f32.mrb[0].mxu0
      %v757 = vpop.f32.mrb[0].mxu0
      %v758 = vadd.f32 0.0, %v757
      %v759 = vpop.f32.mrb[0].mxu0
      %760 = vmatprep.mubr.bf16.mxu0 0
      %761 = vmatmul.mubr.bf16.gmra.mrb[0].mxu0 %v468
      %v762 = vpop.f32.mrb[0].mxu0
      %v763 = vadd.f32 0.0, %v762
      %v764 = vpop.f32.mrb[0].mxu0
      %v765 = vpop.f32.mrb[0].mxu0
      %v766 = vadd.f32 0.0, %v765
      %v767 = vpop.f32.mrb[0].mxu0
      %768 = vmatprep.mubr.bf16.mxu0 0
      %769 = vmatmul.mubr.bf16.gmra.mrb[0].mxu0 %v471
      %v770 = vpop.f32.mrb[0].mxu0
      %v771 = vadd.f32 0.0, %v770
      %v772 = vpop.f32.mrb[0].mxu0
      %v773 = vpop.f32.mrb[0].mxu0
      %v774 = vadd.f32 0.0, %v773
      %v775 = vpop.f32.mrb[0].mxu0
      %776 = vdwg.mxu0
      %v778 = vsel %vm373, %v238, 0
      %v781 = vsel %vm373, %v239, 0
      %v784 = vsel %vm373, %v240, 0
      %v787 = vsel %vm373, %v241, 0
      %v790 = vsel %vm373, %v242, 0
      %v793 = vsel %vm373, %v243, 0
      %v796 = vsel %vm373, %v244, 0
      %v799 = vsel %vm373, %v245, 0
      %v802 = vsel %vm373, %v246, 0
      %v805 = vsel %vm373, %v247, 0
      %v808 = vsel %vm373, %v248, 0
      %v811 = vsel %vm373, %v249, 0
      %v814 = vsel %vm373, %v250, 0
      %v817 = vsel %vm373, %v251, 0
      %v820 = vsel %vm373, %v252, 0
      %v823 = vsel %vm373, %v253, 0
      %v826 = vsel %vm373, %v254, 0
      %v829 = vsel %vm373, %v255, 0
      %v832 = vsel %vm373, %v256, 0
      %v835 = vsel %vm373, %v257, 0
      %v838 = vsel %vm373, %v258, 0
      %v841 = vsel %vm373, %v259, 0
      %v844 = vsel %vm373, %v260, 0
      %v847 = vsel %vm373, %v261, 0
      %v850 = vsel %vm373, %v262, 0
      %v853 = vsel %vm373, %v263, 0
      %v856 = vsel %vm373, %v264, 0
      %v859 = vsel %vm373, %v265, 0
      %v862 = vsel %vm373, %v266, 0
      %v865 = vsel %vm373, %v267, 0
      %v868 = vsel %vm373, %v268, 0
      %v871 = vsel %vm373, %v269, 0
      %v874 = vsel %vm373, %v270, 0
      %v877 = vand.u32 %v271, %v476
      %879 = vmatprep.subr.bf16.mxu0 0
      %880 = vmatpush1.bf16.msra.mxu0 %v877
      %881 = vmatprep.subr.bf16.mxu0 0
      %882 = vmatpush1.bf16.msra.mxu0 0
      %883 = vmatprep.subr.bf16.mxu0 0
      %884 = vmatpush1.bf16.msra.mxu0 0
      %885 = vmatprep.subr.bf16.mxu0 0
      %886 = vmatpush1.bf16.msra.mxu0 0
      %887 = vmatprep.subr.bf16.mxu0 0
      %888 = vmatpush1.bf16.msra.mxu0 0
      %889 = vmatprep.subr.bf16.mxu0 0
      %890 = vmatpush1.bf16.msra.mxu0 0
      %891 = vmatprep.subr.bf16.mxu0 0
      %892 = vmatpush1.bf16.msra.mxu0 0
      %893 = vmatprep.subr.bf16.mxu0 0
      %894 = vmatpush1.bf16.msra.mxu0 0
      %895 = vmatprep.subr.bf16.mxu0 0
      %896 = vmatpush1.bf16.msra.mxu0 0
      %897 = vmatprep.subr.bf16.mxu0 0
      %898 = vmatpush1.bf16.msra.mxu0 0
      %899 = vmatprep.subr.bf16.mxu0 0
      %900 = vmatpush1.bf16.msra.mxu0 0
      %901 = vmatprep.subr.bf16.mxu0 0
      %902 = vmatpush1.bf16.msra.mxu0 0
      %903 = vmatprep.subr.bf16.mxu0 0
      %904 = vmatpush1.bf16.msra.mxu0 0
      %905 = vmatprep.subr.bf16.mxu0 0
      %906 = vmatpush1.bf16.msra.mxu0 0
      %907 = vmatprep.subr.bf16.mxu0 0
      %908 = vmatpush1.bf16.msra.mxu0 0
      %909 = vmatprep.subr.bf16.mxu0 0
      %910 = vmatpush1.bf16.msra.mxu0 0
      %911 = vmatprep.mubr.bf16.mxu0 0
      %912 = vmatmul.mubr.bf16.gmra.mrb[0].mxu0 %v778
      %v913 = vpop.f32.mrb[0].mxu0
      %v914 = vadd.f32 %v515, %v913
      %v915 = vpop.f32.mrb[0].mxu0
      %v916 = vpop.f32.mrb[0].mxu0
      %v917 = vadd.f32 %v518, %v916
      %v918 = vpop.f32.mrb[0].mxu0
      %919 = vmatprep.mubr.bf16.mxu0 0
      %920 = vmatmul.mubr.bf16.gmra.mrb[0].mxu0 %v781
      %v921 = vpop.f32.mrb[0].mxu0
      %v922 = vadd.f32 %v523, %v921
      %v923 = vpop.f32.mrb[0].mxu0
      %v924 = vpop.f32.mrb[0].mxu0
      %v925 = vadd.f32 %v526, %v924
      %v926 = vpop.f32.mrb[0].mxu0
      %927 = vmatprep.mubr.bf16.mxu0 0
      %928 = vmatmul.mubr.bf16.gmra.mrb[0].mxu0 %v784
      %v929 = vpop.f32.mrb[0].mxu0
      %v930 = vadd.f32 %v531, %v929
      %v931 = vpop.f32.mrb[0].mxu0
      %v932 = vpop.f32.mrb[0].mxu0
      %v933 = vadd.f32 %v534, %v932
      %v934 = vpop.f32.mrb[0].mxu0
      %935 = vmatprep.mubr.bf16.mxu0 0
      %936 = vmatmul.mubr.bf16.gmra.mrb[0].mxu0 %v787
      %v937 = vpop.f32.mrb[0].mxu0
      %v938 = vadd.f32 %v539, %v937
      %v939 = vpop.f32.mrb[0].mxu0
      %v940 = vpop.f32.mrb[0].mxu0
      %v941 = vadd.f32 %v542, %v940
      %v942 = vpop.f32.mrb[0].mxu0
      %943 = vmatprep.mubr.bf16.mxu0 0
      %944 = vmatmul.mubr.bf16.gmra.mrb[0].mxu0 %v790
      %v945 = vpop.f32.mrb[0].mxu0
      %v946 = vadd.f32 %v547, %v945
      %v947 = vpop.f32.mrb[0].mxu0
      %v948 = vpop.f32.mrb[0].mxu0
      %v949 = vadd.f32 %v550, %v948
      %v950 = vpop.f32.mrb[0].mxu0
      %951 = vmatprep.mubr.bf16.mxu0 0
      %952 = vmatmul.mubr.bf16.gmra.mrb[0].mxu0 %v793
      %v953 = vpop.f32.mrb[0].mxu0
      %v954 = vadd.f32 %v555, %v953
      %v955 = vpop.f32.mrb[0].mxu0
      %v956 = vpop.f32.mrb[0].mxu0
      %v957 = vadd.f32 %v558, %v956
      %v958 = vpop.f32.mrb[0].mxu0
      %959 = vmatprep.mubr.bf16.mxu0 0
      %960 = vmatmul.mubr.bf16.gmra.mrb[0].mxu0 %v796
      %v961 = vpop.f32.mrb[0].mxu0
      %v962 = vadd.f32 %v563, %v961
      %v963 = vpop.f32.mrb[0].mxu0
      %v964 = vpop.f32.mrb[0].mxu0
      %v965 = vadd.f32 %v566, %v964
      %v966 = vpop.f32.mrb[0].mxu0
      %967 = vmatprep.mubr.bf16.mxu0 0
      %968 = vmatmul.mubr.bf16.gmra.mrb[0].mxu0 %v799
      %v969 = vpop.f32.mrb[0].mxu0
      %v970 = vadd.f32 %v571, %v969
      %v971 = vpop.f32.mrb[0].mxu0
      %v972 = vpop.f32.mrb[0].mxu0
      %v973 = vadd.f32 %v574, %v972
      %v974 = vpop.f32.mrb[0].mxu0
      %975 = vmatprep.mubr.bf16.mxu0 0
      %976 = vmatmul.mubr.bf16.gmra.mrb[0].mxu0 %v802
      %v977 = vpop.f32.mrb[0].mxu0
      %v978 = vadd.f32 %v579, %v977
      %v979 = vpop.f32.mrb[0].mxu0
      %v980 = vpop.f32.mrb[0].mxu0
      %v981 = vadd.f32 %v582, %v980
      %v982 = vpop.f32.mrb[0].mxu0
      %983 = vmatprep.mubr.bf16.mxu0 0
      %984 = vmatmul.mubr.bf16.gmra.mrb[0].mxu0 %v805
      %v985 = vpop.f32.mrb[0].mxu0
      %v986 = vadd.f32 %v587, %v985
      %v987 = vpop.f32.mrb[0].mxu0
      %v988 = vpop.f32.mrb[0].mxu0
      %v989 = vadd.f32 %v590, %v988
      %v990 = vpop.f32.mrb[0].mxu0
      %991 = vmatprep.mubr.bf16.mxu0 0
      %992 = vmatmul.mubr.bf16.gmra.mrb[0].mxu0 %v808
      %v993 = vpop.f32.mrb[0].mxu0
      %v994 = vadd.f32 %v595, %v993
      %v995 = vpop.f32.mrb[0].mxu0
      %v996 = vpop.f32.mrb[0].mxu0
      %v997 = vadd.f32 %v598, %v996
      %v998 = vpop.f32.mrb[0].mxu0
      %999 = vmatprep.mubr.bf16.mxu0 0
      %1000 = vmatmul.mubr.bf16.gmra.mrb[0].mxu0 %v811
      %v1001 = vpop.f32.mrb[0].mxu0
      %v1002 = vadd.f32 %v603, %v1001
      %v1003 = vpop.f32.mrb[0].mxu0
      %v1004 = vpop.f32.mrb[0].mxu0
      %v1005 = vadd.f32 %v606, %v1004
      %v1006 = vpop.f32.mrb[0].mxu0
      %1007 = vmatprep.mubr.bf16.mxu0 0
      %1008 = vmatmul.mubr.bf16.gmra.mrb[0].mxu0 %v814
      %v1009 = vpop.f32.mrb[0].mxu0
      %v1010 = vadd.f32 %v611, %v1009
      %v1011 = vpop.f32.mrb[0].mxu0
      %v1012 = vpop.f32.mrb[0].mxu0
      %v1013 = vadd.f32 %v614, %v1012
      %v1014 = vpop.f32.mrb[0].mxu0
      %1015 = vmatprep.mubr.bf16.mxu0 0
      %1016 = vmatmul.mubr.bf16.gmra.mrb[0].mxu0 %v817
      %v1017 = vpop.f32.mrb[0].mxu0
      %v1018 = vadd.f32 %v619, %v1017
      %v1019 = vpop.f32.mrb[0].mxu0
      %v1020 = vpop.f32.mrb[0].mxu0
      %v1021 = vadd.f32 %v622, %v1020
      %v1022 = vpop.f32.mrb[0].mxu0
      %1023 = vmatprep.mubr.bf16.mxu0 0
      %1024 = vmatmul.mubr.bf16.gmra.mrb[0].mxu0 %v820
      %v1025 = vpop.f32.mrb[0].mxu0
      %v1026 = vadd.f32 %v627, %v1025
      %v1027 = vpop.f32.mrb[0].mxu0
      %v1028 = vpop.f32.mrb[0].mxu0
      %v1029 = vadd.f32 %v630, %v1028
      %v1030 = vpop.f32.mrb[0].mxu0
      %1031 = vmatprep.mubr.bf16.mxu0 0
      %1032 = vmatmul.mubr.bf16.gmra.mrb[0].mxu0 %v823
      %v1033 = vpop.f32.mrb[0].mxu0
      %v1034 = vadd.f32 %v635, %v1033
      %v1035 = vpop.f32.mrb[0].mxu0
      %v1036 = vpop.f32.mrb[0].mxu0
      %v1037 = vadd.f32 %v638, %v1036
      %v1038 = vpop.f32.mrb[0].mxu0
      %1039 = vmatprep.mubr.bf16.mxu0 0
      %1040 = vmatmul.mubr.bf16.gmra.mrb[0].mxu0 %v826
      %v1041 = vpop.f32.mrb[0].mxu0
      %v1042 = vadd.f32 %v643, %v1041
      %v1043 = vpop.f32.mrb[0].mxu0
      %v1044 = vpop.f32.mrb[0].mxu0
      %v1045 = vadd.f32 %v646, %v1044
      %v1046 = vpop.f32.mrb[0].mxu0
      %1047 = vmatprep.mubr.bf16.mxu0 0
      %1048 = vmatmul.mubr.bf16.gmra.mrb[0].mxu0 %v829
      %v1049 = vpop.f32.mrb[0].mxu0
      %v1050 = vadd.f32 %v651, %v1049
      %v1051 = vpop.f32.mrb[0].mxu0
      %v1052 = vpop.f32.mrb[0].mxu0
      %v1053 = vadd.f32 %v654, %v1052
      %v1054 = vpop.f32.mrb[0].mxu0
      %1055 = vmatprep.mubr.bf16.mxu0 0
      %1056 = vmatmul.mubr.bf16.gmra.mrb[0].mxu0 %v832
      %v1057 = vpop.f32.mrb[0].mxu0
      %v1058 = vadd.f32 %v659, %v1057
      %v1059 = vpop.f32.mrb[0].mxu0
      %v1060 = vpop.f32.mrb[0].mxu0
      %v1061 = vadd.f32 %v662, %v1060
      %v1062 = vpop.f32.mrb[0].mxu0
      %1063 = vmatprep.mubr.bf16.mxu0 0
      %1064 = vmatmul.mubr.bf16.gmra.mrb[0].mxu0 %v835
      %v1065 = vpop.f32.mrb[0].mxu0
      %v1066 = vadd.f32 %v667, %v1065
      %v1067 = vpop.f32.mrb[0].mxu0
      %v1068 = vpop.f32.mrb[0].mxu0
      %v1069 = vadd.f32 %v670, %v1068
      %v1070 = vpop.f32.mrb[0].mxu0
      %1071 = vmatprep.mubr.bf16.mxu0 0
      %1072 = vmatmul.mubr.bf16.gmra.mrb[0].mxu0 %v838
      %v1073 = vpop.f32.mrb[0].mxu0
      %v1074 = vadd.f32 %v675, %v1073
      %v1075 = vpop.f32.mrb[0].mxu0
      %v1076 = vpop.f32.mrb[0].mxu0
      %v1077 = vadd.f32 %v678, %v1076
      %v1078 = vpop.f32.mrb[0].mxu0
      %1079 = vmatprep.mubr.bf16.mxu0 0
      %1080 = vmatmul.mubr.bf16.gmra.mrb[0].mxu0 %v841
      %v1081 = vpop.f32.mrb[0].mxu0
      %v1082 = vadd.f32 %v683, %v1081
      %v1083 = vpop.f32.mrb[0].mxu0
      %v1084 = vpop.f32.mrb[0].mxu0
      %v1085 = vadd.f32 %v686, %v1084
      %v1086 = vpop.f32.mrb[0].mxu0
      %1087 = vmatprep.mubr.bf16.mxu0 0
      %1088 = vmatmul.mubr.bf16.gmra.mrb[0].mxu0 %v844
      %v1089 = vpop.f32.mrb[0].mxu0
      %v1090 = vadd.f32 %v691, %v1089
      %v1091 = vpop.f32.mrb[0].mxu0
      %v1092 = vpop.f32.mrb[0].mxu0
      %v1093 = vadd.f32 %v694, %v1092
      %v1094 = vpop.f32.mrb[0].mxu0
      %1095 = vmatprep.mubr.bf16.mxu0 0
      %1096 = vmatmul.mubr.bf16.gmra.mrb[0].mxu0 %v847
      %v1097 = vpop.f32.mrb[0].mxu0
      %v1098 = vadd.f32 %v699, %v1097
      %v1099 = vpop.f32.mrb[0].mxu0
      %v1100 = vpop.f32.mrb[0].mxu0
      %v1101 = vadd.f32 %v702, %v1100
      %v1102 = vpop.f32.mrb[0].mxu0
      %1103 = vmatprep.mubr.bf16.mxu0 0
      %1104 = vmatmul.mubr.bf16.gmra.mrb[0].mxu0 %v850
      %v1105 = vpop.f32.mrb[0].mxu0
      %v1106 = vadd.f32 %v707, %v1105
      %v1107 = vpop.f32.mrb[0].mxu0
      %v1108 = vpop.f32.mrb[0].mxu0
      %v1109 = vadd.f32 %v710, %v1108
      %v1110 = vpop.f32.mrb[0].mxu0
      %1111 = vmatprep.mubr.bf16.mxu0 0
      %1112 = vmatmul.mubr.bf16.gmra.mrb[0].mxu0 %v853
      %v1113 = vpop.f32.mrb[0].mxu0
      %v1114 = vadd.f32 %v715, %v1113
      %v1115 = vpop.f32.mrb[0].mxu0
      %v1116 = vpop.f32.mrb[0].mxu0
      %v1117 = vadd.f32 %v718, %v1116
      %v1118 = vpop.f32.mrb[0].mxu0
      %1119 = vmatprep.mubr.bf16.mxu0 0
      %1120 = vmatmul.mubr.bf16.gmra.mrb[0].mxu0 %v856
      %v1121 = vpop.f32.mrb[0].mxu0
      %v1122 = vadd.f32 %v723, %v1121
      %v1123 = vpop.f32.mrb[0].mxu0
      %v1124 = vpop.f32.mrb[0].mxu0
      %v1125 = vadd.f32 %v726, %v1124
      %v1126 = vpop.f32.mrb[0].mxu0
      %1127 = vmatprep.mubr.bf16.mxu0 0
      %1128 = vmatmul.mubr.bf16.gmra.mrb[0].mxu0 %v859
      %v1129 = vpop.f32.mrb[0].mxu0
      %v1130 = vadd.f32 %v731, %v1129
      %v1131 = vpop.f32.mrb[0].mxu0
      %v1132 = vpop.f32.mrb[0].mxu0
      %v1133 = vadd.f32 %v734, %v1132
      %v1134 = vpop.f32.mrb[0].mxu0
      %1135 = vmatprep.mubr.bf16.mxu0 0
      %1136 = vmatmul.mubr.bf16.gmra.mrb[0].mxu0 %v862
      %v1137 = vpop.f32.mrb[0].mxu0
      %v1138 = vadd.f32 %v739, %v1137
      %v1139 = vpop.f32.mrb[0].mxu0
      %v1140 = vpop.f32.mrb[0].mxu0
      %v1141 = vadd.f32 %v742, %v1140
      %v1142 = vpop.f32.mrb[0].mxu0
      %1143 = vmatprep.mubr.bf16.mxu0 0
      %1144 = vmatmul.mubr.bf16.gmra.mrb[0].mxu0 %v865
      %v1145 = vpop.f32.mrb[0].mxu0
      %v1146 = vadd.f32 %v747, %v1145
      %v1147 = vpop.f32.mrb[0].mxu0
      %v1148 = vpop.f32.mrb[0].mxu0
      %v1149 = vadd.f32 %v750, %v1148
      %v1150 = vpop.f32.mrb[0].mxu0
      %1151 = vmatprep.mubr.bf16.mxu0 0
      %1152 = vmatmul.mubr.bf16.gmra.mrb[0].mxu0 %v868
      %v1153 = vpop.f32.mrb[0].mxu0
      %v1154 = vadd.f32 %v755, %v1153
      %v1155 = vpop.f32.mrb[0].mxu0
      %v1156 = vpop.f32.mrb[0].mxu0
      %v1157 = vadd.f32 %v758, %v1156
      %v1158 = vpop.f32.mrb[0].mxu0
      %1159 = vmatprep.mubr.bf16.mxu0 0
      %1160 = vmatmul.mubr.bf16.gmra.mrb[0].mxu0 %v871
      %v1161 = vpop.f32.mrb[0].mxu0
      %v1162 = vadd.f32 %v763, %v1161
      %v1163 = vpop.f32.mrb[0].mxu0
      %v1164 = vpop.f32.mrb[0].mxu0
      %v1165 = vadd.f32 %v766, %v1164
      %v1166 = vpop.f32.mrb[0].mxu0
      %1167 = vmatprep.mubr.bf16.mxu0 0
      %1168 = vmatmul.mubr.bf16.gmra.mrb[0].mxu0 %v874
      %v1169 = vpop.f32.mrb[0].mxu0
      %v1170 = vadd.f32 %v771, %v1169
      %v1171 = vpop.f32.mrb[0].mxu0
      %v1172 = vpop.f32.mrb[0].mxu0
      %v1173 = vadd.f32 %v774, %v1172
      %v1174 = vpop.f32.mrb[0].mxu0
      %1175 = vdwg.mxu0
      %v1176 = vld [vmem:[%s165 + $0x2] sm:$0xff]
      %v1177 = vld [vmem:[%s165 + $0xa] sm:$0xff]
      %v1178 = vld [vmem:[%s165 + $0x12] sm:$0xff]
      %v1179 = vld [vmem:[%s165 + $0x1a] sm:$0xff]
      %v1180 = vld [vmem:[%s165 + $0x22] sm:$0xff]
      %v1181 = vld [vmem:[%s165 + $0x2a] sm:$0xff]
      %v1182 = vld [vmem:[%s165 + $0x32] sm:$0xff]
      %v1183 = vld [vmem:[%s165 + $0x3a] sm:$0xff]
      %v1184 = vld [vmem:[%s165 + $0x42] sm:$0xff]
      %v1185 = vld [vmem:[%s165 + $0x4a] sm:$0xff]
      %v1186 = vld [vmem:[%s165 + $0x52] sm:$0xff]
      %v1187 = vld [vmem:[%s165 + $0x5a] sm:$0xff]
      %v1188 = vld [vmem:[%s165 + $0x62] sm:$0xff]
      %v1189 = vld [vmem:[%s165 + $0x6a] sm:$0xff]
      %v1190 = vld [vmem:[%s165 + $0x72] sm:$0xff]
      %v1191 = vld [vmem:[%s165 + $0x7a] sm:$0xff]
      %v1192 = vld [vmem:[%s165 + $0x82] sm:$0xff]
      %v1193 = vld [vmem:[%s165 + $0x8a] sm:$0xff]
      %v1194 = vld [vmem:[%s165 + $0x92] sm:$0xff]
      %v1195 = vld [vmem:[%s165 + $0x9a] sm:$0xff]
      %v1196 = vld [vmem:[%s165 + $0xa2] sm:$0xff]
      %v1197 = vld [vmem:[%s165 + $0xaa] sm:$0xff]
      %v1198 = vld [vmem:[%s165 + $0xb2] sm:$0xff]
      %v1199 = vld [vmem:[%s165 + $0xba] sm:$0xff]
      %v1200 = vld [vmem:[%s165 + $0xc2] sm:$0xff]
      %v1201 = vld [vmem:[%s165 + $0xca] sm:$0xff]
      %v1202 = vld [vmem:[%s165 + $0xd2] sm:$0xff]
      %v1203 = vld [vmem:[%s165 + $0xda] sm:$0xff]
      %v1204 = vld [vmem:[%s165 + $0xe2] sm:$0xff]
      %v1205 = vld [vmem:[%s165 + $0xea] sm:$0xff]
      %v1206 = vld [vmem:[%s165 + $0xf2] sm:$0xff]
      %v1207 = vld [vmem:[%s165 + $0xfa] sm:$0xff]
      %v1208 = vld [vmem:[%s165 + $0x102] sm:$0xff]
      %v1209 = vld [vmem:[%s165 + $0x10a] sm:$0xff]
      %v1210 = vld [vmem:[%s165 + $0x112] sm:$0xff]
      %v1211 = vld [vmem:[%s165 + $0x11a] sm:$0xff]
      %v1212 = vld [vmem:[%s165 + $0x122] sm:$0xff]
      %v1213 = vld [vmem:[%s165 + $0x12a] sm:$0xff]
      %v1214 = vld [vmem:[%s165 + $0x132] sm:$0xff]
      %v1215 = vld [vmem:[%s165 + $0x13a] sm:$0xff]
      %v1216 = vld [vmem:[%s165 + $0x142] sm:$0xff]
      %v1217 = vld [vmem:[%s165 + $0x14a] sm:$0xff]
      %v1218 = vld [vmem:[%s165 + $0x152] sm:$0xff]
      %v1219 = vld [vmem:[%s165 + $0x15a] sm:$0xff]
      %v1220 = vld [vmem:[%s165 + $0x162] sm:$0xff]
      %v1221 = vld [vmem:[%s165 + $0x16a] sm:$0xff]
      %v1222 = vld [vmem:[%s165 + $0x172] sm:$0xff]
      %v1223 = vld [vmem:[%s165 + $0x17a] sm:$0xff]
      %v1224 = vld [vmem:[%s165 + $0x182] sm:$0xff]
      %v1225 = vld [vmem:[%s165 + $0x18a] sm:$0xff]
      %v1226 = vld [vmem:[%s165 + $0x192] sm:$0xff]
      %v1227 = vld [vmem:[%s165 + $0x19a] sm:$0xff]
      %v1228 = vld [vmem:[%s165 + $0x1a2] sm:$0xff]
      %v1229 = vld [vmem:[%s165 + $0x1aa] sm:$0xff]
      %v1230 = vld [vmem:[%s165 + $0x1b2] sm:$0xff]
      %v1231 = vld [vmem:[%s165 + $0x1ba] sm:$0xff]
      %v1232 = vld [vmem:[%s165 + $0x1c2] sm:$0xff]
      %v1233 = vld [vmem:[%s165 + $0x1ca] sm:$0xff]
      %v1234 = vld [vmem:[%s165 + $0x1d2] sm:$0xff]
      %v1235 = vld [vmem:[%s165 + $0x1da] sm:$0xff]
      %v1236 = vld [vmem:[%s165 + $0x1e2] sm:$0xff]
      %v1237 = vld [vmem:[%s165 + $0x1ea] sm:$0xff]
      %v1238 = vld [vmem:[%s165 + $0x1f2] sm:$0xff]
      %v1239 = vld [vmem:[%s165 + $0x1fa] sm:$0xff]
      %v1240 = vld [vmem:[%s165 + $0x202] sm:$0xff]
      %v1241 = vld [vmem:[%s165 + $0x20a] sm:$0x3f]
      %v1242 = vpack.c.bf16 %v1177, %v1176
      %v1243 = vpack.c.bf16 %v1179, %v1178
      %v1244 = vpack.c.bf16 %v1181, %v1180
      %v1245 = vpack.c.bf16 %v1183, %v1182
      %v1246 = vpack.c.bf16 %v1185, %v1184
      %v1247 = vpack.c.bf16 %v1187, %v1186
      %v1248 = vpack.c.bf16 %v1189, %v1188
      %v1249 = vpack.c.bf16 %v1191, %v1190
      %v1250 = vpack.c.bf16 %v1193, %v1192
      %v1251 = vpack.c.bf16 %v1195, %v1194
      %v1252 = vpack.c.bf16 %v1197, %v1196
      %v1253 = vpack.c.bf16 %v1199, %v1198
      %v1254 = vpack.c.bf16 %v1201, %v1200
      %v1255 = vpack.c.bf16 %v1203, %v1202
      %v1256 = vpack.c.bf16 %v1205, %v1204
      %v1257 = vpack.c.bf16 %v1207, %v1206
      %v1258 = vpack.c.bf16 %v1209, %v1208
      %v1259 = vpack.c.bf16 %v1211, %v1210
      %v1260 = vpack.c.bf16 %v1213, %v1212
      %v1261 = vpack.c.bf16 %v1215, %v1214
      %v1262 = vpack.c.bf16 %v1217, %v1216
      %v1263 = vpack.c.bf16 %v1219, %v1218
      %v1264 = vpack.c.bf16 %v1221, %v1220
      %v1265 = vpack.c.bf16 %v1223, %v1222
      %v1266 = vpack.c.bf16 %v1225, %v1224
      %v1267 = vpack.c.bf16 %v1227, %v1226
      %v1268 = vpack.c.bf16 %v1229, %v1228
      %v1269 = vpack.c.bf16 %v1231, %v1230
      %v1270 = vpack.c.bf16 %v1233, %v1232
      %v1271 = vpack.c.bf16 %v1235, %v1234
      %v1272 = vpack.c.bf16 %v1237, %v1236
      %v1273 = vpack.c.bf16 %v1239, %v1238
      %v1274 = vpack.c.bf16 %v1241, %v1240
      %s1275 = scalar_lea.vmem %s1, 4
      %v1276 = vld [vmem:[%s1275] sm:$0x3]
      %v1278 = vsel %vm373, %v1242, 0
      %v1281 = vsel %vm373, %v1243, 0
      %v1284 = vsel %vm373, %v1244, 0
      %v1287 = vsel %vm373, %v1245, 0
      %v1290 = vsel %vm373, %v1246, 0
      %v1293 = vsel %vm373, %v1247, 0
      %v1296 = vsel %vm373, %v1248, 0
      %v1299 = vsel %vm373, %v1249, 0
      %v1302 = vsel %vm373, %v1250, 0
      %v1305 = vsel %vm373, %v1251, 0
      %v1308 = vsel %vm373, %v1252, 0
      %v1311 = vsel %vm373, %v1253, 0
      %v1314 = vsel %vm373, %v1254, 0
      %v1317 = vsel %vm373, %v1255, 0
      %v1320 = vsel %vm373, %v1256, 0
      %v1323 = vsel %vm373, %v1257, 0
      %v1326 = vsel %vm373, %v1258, 0
      %v1329 = vsel %vm373, %v1259, 0
      %v1332 = vsel %vm373, %v1260, 0
      %v1335 = vsel %vm373, %v1261, 0
      %v1338 = vsel %vm373, %v1262, 0
      %v1341 = vsel %vm373, %v1263, 0
      %v1344 = vsel %vm373, %v1264, 0
      %v1347 = vsel %vm373, %v1265, 0
      %v1350 = vsel %vm373, %v1266, 0
      %v1353 = vsel %vm373, %v1267, 0
      %v1356 = vsel %vm373, %v1268, 0
      %v1359 = vsel %vm373, %v1269, 0
      %v1362 = vsel %vm373, %v1270, 0
      %v1365 = vsel %vm373, %v1271, 0
      %v1368 = vsel %vm373, %v1272, 0
      %v1371 = vsel %vm373, %v1273, 0
      %v1374 = vsel %vm373, %v1274, 0
      %v1377 = vand.u32 %v1276, %v476
      %1379 = vmatprep.subr.bf16.mxu0 0
      %1380 = vmatpush1.bf16.msra.mxu0 %v1377
      %1381 = vmatprep.subr.bf16.mxu0 0
      %1382 = vmatpush1.bf16.msra.mxu0 0
      %1383 = vmatprep.subr.bf16.mxu0 0
      %1384 = vmatpush1.bf16.msra.mxu0 0
      %1385 = vmatprep.subr.bf16.mxu0 0
      %1386 = vmatpush1.bf16.msra.mxu0 0
      %1387 = vmatprep.subr.bf16.mxu0 0
      %1388 = vmatpush1.bf16.msra.mxu0 0
      %1389 = vmatprep.subr.bf16.mxu0 0
      %1390 = vmatpush1.bf16.msra.mxu0 0
      %1391 = vmatprep.subr.bf16.mxu0 0
      %1392 = vmatpush1.bf16.msra.mxu0 0
      %1393 = vmatprep.subr.bf16.mxu0 0
      %1394 = vmatpush1.bf16.msra.mxu0 0
      %1395 = vmatprep.subr.bf16.mxu0 0
      %1396 = vmatpush1.bf16.msra.mxu0 0
      %1397 = vmatprep.subr.bf16.mxu0 0
      %1398 = vmatpush1.bf16.msra.mxu0 0
      %1399 = vmatprep.subr.bf16.mxu0 0
      %1400 = vmatpush1.bf16.msra.mxu0 0
      %1401 = vmatprep.subr.bf16.mxu0 0
      %1402 = vmatpush1.bf16.msra.mxu0 0
      %1403 = vmatprep.subr.bf16.mxu0 0
      %1404 = vmatpush1.bf16.msra.mxu0 0
      %1405 = vmatprep.subr.bf16.mxu0 0
      %1406 = vmatpush1.bf16.msra.mxu0 0
      %1407 = vmatprep.subr.bf16.mxu0 0
      %1408 = vmatpush1.bf16.msra.mxu0 0
      %1409 = vmatprep.subr.bf16.mxu0 0
      %1410 = vmatpush1.bf16.msra.mxu0 0
      %1411 = vmatprep.mubr.bf16.mxu0 0
      %1412 = vmatmul.mubr.bf16.gmra.mrb[0].mxu0 %v1278
      %v1413 = vpop.f32.mrb[0].mxu0
      %v1414 = vadd.f32 0.0, %v1413
      %v1415 = vpop.f32.mrb[0].mxu0
      %v1416 = vpop.f32.mrb[0].mxu0
      %v1417 = vadd.f32 0.0, %v1416
      %v1418 = vpop.f32.mrb[0].mxu0
      %1419 = vmatprep.mubr.bf16.mxu0 0
      %1420 = vmatmul.mubr.bf16.gmra.mrb[0].mxu0 %v1281
      %v1421 = vpop.f32.mrb[0].mxu0
      %v1422 = vadd.f32 0.0, %v1421
      %v1423 = vpop.f32.mrb[0].mxu0
      %v1424 = vpop.f32.mrb[0].mxu0
      %v1425 = vadd.f32 0.0, %v1424
      %v1426 = vpop.f32.mrb[0].mxu0
      %1427 = vmatprep.mubr.bf16.mxu0 0
      %1428 = vmatmul.mubr.bf16.gmra.mrb[0].mxu0 %v1284
      %v1429 = vpop.f32.mrb[0].mxu0
      %v1430 = vadd.f32 0.0, %v1429
      %v1431 = vpop.f32.mrb[0].mxu0
      %v1432 = vpop.f32.mrb[0].mxu0
      %v1433 = vadd.f32 0.0, %v1432
      %v1434 = vpop.f32.mrb[0].mxu0
      %1435 = vmatprep.mubr.bf16.mxu0 0
      %1436 = vmatmul.mubr.bf16.gmra.mrb[0].mxu0 %v1287
      %v1437 = vpop.f32.mrb[0].mxu0
      %v1438 = vadd.f32 0.0, %v1437
      %v1439 = vpop.f32.mrb[0].mxu0
      %v1440 = vpop.f32.mrb[0].mxu0
      %v1441 = vadd.f32 0.0, %v1440
      %v1442 = vpop.f32.mrb[0].mxu0
      %1443 = vmatprep.mubr.bf16.mxu0 0
      %1444 = vmatmul.mubr.bf16.gmra.mrb[0].mxu0 %v1290
      %v1445 = vpop.f32.mrb[0].mxu0
      %v1446 = vadd.f32 0.0, %v1445
      %v1447 = vpop.f32.mrb[0].mxu0
      %v1448 = vpop.f32.mrb[0].mxu0
      %v1449 = vadd.f32 0.0, %v1448
      %v1450 = vpop.f32.mrb[0].mxu0
      %1451 = vmatprep.mubr.bf16.mxu0 0
      %1452 = vmatmul.mubr.bf16.gmra.mrb[0].mxu0 %v1293
      %v1453 = vpop.f32.mrb[0].mxu0
      %v1454 = vadd.f32 0.0, %v1453
      %v1455 = vpop.f32.mrb[0].mxu0
      %v1456 = vpop.f32.mrb[0].mxu0
      %v1457 = vadd.f32 0.0, %v1456
      %v1458 = vpop.f32.mrb[0].mxu0
      %1459 = vmatprep.mubr.bf16.mxu0 0
      %1460 = vmatmul.mubr.bf16.gmra.mrb[0].mxu0 %v1296
      %v1461 = vpop.f32.mrb[0].mxu0
      %v1462 = vadd.f32 0.0, %v1461
      %v1463 = vpop.f32.mrb[0].mxu0
      %v1464 = vpop.f32.mrb[0].mxu0
      %v1465 = vadd.f32 0.0, %v1464
      %v1466 = vpop.f32.mrb[0].mxu0
      %1467 = vmatprep.mubr.bf16.mxu0 0
      %1468 = vmatmul.mubr.bf16.gmra.mrb[0].mxu0 %v1299
      %v1469 = vpop.f32.mrb[0].mxu0
      %v1470 = vadd.f32 0.0, %v1469
      %v1471 = vpop.f32.mrb[0].mxu0
      %v1472 = vpop.f32.mrb[0].mxu0
      %v1473 = vadd.f32 0.0, %v1472
      %v1474 = vpop.f32.mrb[0].mxu0
      %1475 = vmatprep.mubr.bf16.mxu0 0
      %1476 = vmatmul.mubr.bf16.gmra.mrb[0].mxu0 %v1302
      %v1477 = vpop.f32.mrb[0].mxu0
      %v1478 = vadd.f32 0.0, %v1477
      %v1479 = vpop.f32.mrb[0].mxu0
      %v1480 = vpop.f32.mrb[0].mxu0
      %v1481 = vadd.f32 0.0, %v1480
      %v1482 = vpop.f32.mrb[0].mxu0
      %1483 = vmatprep.mubr.bf16.mxu0 0
      %1484 = vmatmul.mubr.bf16.gmra.mrb[0].mxu0 %v1305
      %v1485 = vpop.f32.mrb[0].mxu0
      %v1486 = vadd.f32 0.0, %v1485
      %v1487 = vpop.f32.mrb[0].mxu0
      %v1488 = vpop.f32.mrb[0].mxu0
      %v1489 = vadd.f32 0.0, %v1488
      %v1490 = vpop.f32.mrb[0].mxu0
      %1491 = vmatprep.mubr.bf16.mxu0 0
      %1492 = vmatmul.mubr.bf16.gmra.mrb[0].mxu0 %v1308
      %v1493 = vpop.f32.mrb[0].mxu0
      %v1494 = vadd.f32 0.0, %v1493
      %v1495 = vpop.f32.mrb[0].mxu0
      %v1496 = vpop.f32.mrb[0].mxu0
      %v1497 = vadd.f32 0.0, %v1496
      %v1498 = vpop.f32.mrb[0].mxu0
      %1499 = vmatprep.mubr.bf16.mxu0 0
      %1500 = vmatmul.mubr.bf16.gmra.mrb[0].mxu0 %v1311
      %v1501 = vpop.f32.mrb[0].mxu0
      %v1502 = vadd.f32 0.0, %v1501
      %v1503 = vpop.f32.mrb[0].mxu0
      %v1504 = vpop.f32.mrb[0].mxu0
      %v1505 = vadd.f32 0.0, %v1504
      %v1506 = vpop.f32.mrb[0].mxu0
      %1507 = vmatprep.mubr.bf16.mxu0 0
      %1508 = vmatmul.mubr.bf16.gmra.mrb[0].mxu0 %v1314
      %v1509 = vpop.f32.mrb[0].mxu0
      %v1510 = vadd.f32 0.0, %v1509
      %v1511 = vpop.f32.mrb[0].mxu0
      %v1512 = vpop.f32.mrb[0].mxu0
      %v1513 = vadd.f32 0.0, %v1512
      %v1514 = vpop.f32.mrb[0].mxu0
      %1515 = vmatprep.mubr.bf16.mxu0 0
      %1516 = vmatmul.mubr.bf16.gmra.mrb[0].mxu0 %v1317
      %v1517 = vpop.f32.mrb[0].mxu0
      %v1518 = vadd.f32 0.0, %v1517
      %v1519 = vpop.f32.mrb[0].mxu0
      %v1520 = vpop.f32.mrb[0].mxu0
      %v1521 = vadd.f32 0.0, %v1520
      %v1522 = vpop.f32.mrb[0].mxu0
      %1523 = vmatprep.mubr.bf16.mxu0 0
      %1524 = vmatmul.mubr.bf16.gmra.mrb[0].mxu0 %v1320
      %v1525 = vpop.f32.mrb[0].mxu0
      %v1526 = vadd.f32 0.0, %v1525
      %v1527 = vpop.f32.mrb[0].mxu0
      %v1528 = vpop.f32.mrb[0].mxu0
      %v1529 = vadd.f32 0.0, %v1528
      %v1530 = vpop.f32.mrb[0].mxu0
      %1531 = vmatprep.mubr.bf16.mxu0 0
      %1532 = vmatmul.mubr.bf16.gmra.mrb[0].mxu0 %v1323
      %v1533 = vpop.f32.mrb[0].mxu0
      %v1534 = vadd.f32 0.0, %v1533
      %v1535 = vpop.f32.mrb[0].mxu0
      %v1536 = vpop.f32.mrb[0].mxu0
      %v1537 = vadd.f32 0.0, %v1536
      %v1538 = vpop.f32.mrb[0].mxu0
      %1539 = vmatprep.mubr.bf16.mxu0 0
      %1540 = vmatmul.mubr.bf16.gmra.mrb[0].mxu0 %v1326
      %v1541 = vpop.f32.mrb[0].mxu0
      %v1542 = vadd.f32 0.0, %v1541
      %v1543 = vpop.f32.mrb[0].mxu0
      %v1544 = vpop.f32.mrb[0].mxu0
      %v1545 = vadd.f32 0.0, %v1544
      %v1546 = vpop.f32.mrb[0].mxu0
      %1547 = vmatprep.mubr.bf16.mxu0 0
      %1548 = vmatmul.mubr.bf16.gmra.mrb[0].mxu0 %v1329
      %v1549 = vpop.f32.mrb[0].mxu0
      %v1550 = vadd.f32 0.0, %v1549
      %v1551 = vpop.f32.mrb[0].mxu0
      %v1552 = vpop.f32.mrb[0].mxu0
      %v1553 = vadd.f32 0.0, %v1552
      %v1554 = vpop.f32.mrb[0].mxu0
      %1555 = vmatprep.mubr.bf16.mxu0 0
      %1556 = vmatmul.mubr.bf16.gmra.mrb[0].mxu0 %v1332
      %v1557 = vpop.f32.mrb[0].mxu0
      %v1558 = vadd.f32 0.0, %v1557
      %v1559 = vpop.f32.mrb[0].mxu0
      %v1560 = vpop.f32.mrb[0].mxu0
      %v1561 = vadd.f32 0.0, %v1560
      %v1562 = vpop.f32.mrb[0].mxu0
      %1563 = vmatprep.mubr.bf16.mxu0 0
      %1564 = vmatmul.mubr.bf16.gmra.mrb[0].mxu0 %v1335
      %v1565 = vpop.f32.mrb[0].mxu0
      %v1566 = vadd.f32 0.0, %v1565
      %v1567 = vpop.f32.mrb[0].mxu0
      %v1568 = vpop.f32.mrb[0].mxu0
      %v1569 = vadd.f32 0.0, %v1568
      %v1570 = vpop.f32.mrb[0].mxu0
      %1571 = vmatprep.mubr.bf16.mxu0 0
      %1572 = vmatmul.mubr.bf16.gmra.mrb[0].mxu0 %v1338
      %v1573 = vpop.f32.mrb[0].mxu0
      %v1574 = vadd.f32 0.0, %v1573
      %v1575 = vpop.f32.mrb[0].mxu0
      %v1576 = vpop.f32.mrb[0].mxu0
      %v1577 = vadd.f32 0.0, %v1576
      %v1578 = vpop.f32.mrb[0].mxu0
      %1579 = vmatprep.mubr.bf16.mxu0 0
      %1580 = vmatmul.mubr.bf16.gmra.mrb[0].mxu0 %v1341
      %v1581 = vpop.f32.mrb[0].mxu0
      %v1582 = vadd.f32 0.0, %v1581
      %v1583 = vpop.f32.mrb[0].mxu0
      %v1584 = vpop.f32.mrb[0].mxu0
      %v1585 = vadd.f32 0.0, %v1584
      %v1586 = vpop.f32.mrb[0].mxu0
      %1587 = vmatprep.mubr.bf16.mxu0 0
      %1588 = vmatmul.mubr.bf16.gmra.mrb[0].mxu0 %v1344
      %v1589 = vpop.f32.mrb[0].mxu0
      %v1590 = vadd.f32 0.0, %v1589
      %v1591 = vpop.f32.mrb[0].mxu0
      %v1592 = vpop.f32.mrb[0].mxu0
      %v1593 = vadd.f32 0.0, %v1592
      %v1594 = vpop.f32.mrb[0].mxu0
      %1595 = vmatprep.mubr.bf16.mxu0 0
      %1596 = vmatmul.mubr.bf16.gmra.mrb[0].mxu0 %v1347
      %v1597 = vpop.f32.mrb[0].mxu0
      %v1598 = vadd.f32 0.0, %v1597
      %v1599 = vpop.f32.mrb[0].mxu0
      %v1600 = vpop.f32.mrb[0].mxu0
      %v1601 = vadd.f32 0.0, %v1600
      %v1602 = vpop.f32.mrb[0].mxu0
      %1603 = vmatprep.mubr.bf16.mxu0 0
      %1604 = vmatmul.mubr.bf16.gmra.mrb[0].mxu0 %v1350
      %v1605 = vpop.f32.mrb[0].mxu0
      %v1606 = vadd.f32 0.0, %v1605
      %v1607 = vpop.f32.mrb[0].mxu0
      %v1608 = vpop.f32.mrb[0].mxu0
      %v1609 = vadd.f32 0.0, %v1608
      %v1610 = vpop.f32.mrb[0].mxu0
      %1611 = vmatprep.mubr.bf16.mxu0 0
      %1612 = vmatmul.mubr.bf16.gmra.mrb[0].mxu0 %v1353
      %v1613 = vpop.f32.mrb[0].mxu0
      %v1614 = vadd.f32 0.0, %v1613
      %v1615 = vpop.f32.mrb[0].mxu0
      %v1616 = vpop.f32.mrb[0].mxu0
      %v1617 = vadd.f32 0.0, %v1616
      %v1618 = vpop.f32.mrb[0].mxu0
      %1619 = vmatprep.mubr.bf16.mxu0 0
      %1620 = vmatmul.mubr.bf16.gmra.mrb[0].mxu0 %v1356
      %v1621 = vpop.f32.mrb[0].mxu0
      %v1622 = vadd.f32 0.0, %v1621
      %v1623 = vpop.f32.mrb[0].mxu0
      %v1624 = vpop.f32.mrb[0].mxu0
      %v1625 = vadd.f32 0.0, %v1624
      %v1626 = vpop.f32.mrb[0].mxu0
      %1627 = vmatprep.mubr.bf16.mxu0 0
      %1628 = vmatmul.mubr.bf16.gmra.mrb[0].mxu0 %v1359
      %v1629 = vpop.f32.mrb[0].mxu0
      %v1630 = vadd.f32 0.0, %v1629
      %v1631 = vpop.f32.mrb[0].mxu0
      %v1632 = vpop.f32.mrb[0].mxu0
      %v1633 = vadd.f32 0.0, %v1632
      %v1634 = vpop.f32.mrb[0].mxu0
      %1635 = vmatprep.mubr.bf16.mxu0 0
      %1636 = vmatmul.mubr.bf16.gmra.mrb[0].mxu0 %v1362
      %v1637 = vpop.f32.mrb[0].mxu0
      %v1638 = vadd.f32 0.0, %v1637
      %v1639 = vpop.f32.mrb[0].mxu0
      %v1640 = vpop.f32.mrb[0].mxu0
      %v1641 = vadd.f32 0.0, %v1640
      %v1642 = vpop.f32.mrb[0].mxu0
      %1643 = vmatprep.mubr.bf16.mxu0 0
      %1644 = vmatmul.mubr.bf16.gmra.mrb[0].mxu0 %v1365
      %v1645 = vpop.f32.mrb[0].mxu0
      %v1646 = vadd.f32 0.0, %v1645
      %v1647 = vpop.f32.mrb[0].mxu0
      %v1648 = vpop.f32.mrb[0].mxu0
      %v1649 = vadd.f32 0.0, %v1648
      %v1650 = vpop.f32.mrb[0].mxu0
      %1651 = vmatprep.mubr.bf16.mxu0 0
      %1652 = vmatmul.mubr.bf16.gmra.mrb[0].mxu0 %v1368
      %v1653 = vpop.f32.mrb[0].mxu0
      %v1654 = vadd.f32 0.0, %v1653
      %v1655 = vpop.f32.mrb[0].mxu0
      %v1656 = vpop.f32.mrb[0].mxu0
      %v1657 = vadd.f32 0.0, %v1656
      %v1658 = vpop.f32.mrb[0].mxu0
      %1659 = vmatprep.mubr.bf16.mxu0 0
      %1660 = vmatmul.mubr.bf16.gmra.mrb[0].mxu0 %v1371
      %v1661 = vpop.f32.mrb[0].mxu0
      %v1662 = vadd.f32 0.0, %v1661
      %v1663 = vpop.f32.mrb[0].mxu0
      %v1664 = vpop.f32.mrb[0].mxu0
      %v1665 = vadd.f32 0.0, %v1664
      %v1666 = vpop.f32.mrb[0].mxu0
      %1667 = vmatprep.mubr.bf16.mxu0 0
      %1668 = vmatmul.mubr.bf16.gmra.mrb[0].mxu0 %v1374
      %v1669 = vpop.f32.mrb[0].mxu0
      %v1670 = vadd.f32 0.0, %v1669
      %v1671 = vpop.f32.mrb[0].mxu0
      %v1672 = vpop.f32.mrb[0].mxu0
      %v1673 = vadd.f32 0.0, %v1672
      %v1674 = vpop.f32.mrb[0].mxu0
      %1675 = vdwg.mxu0
      %v1676 = vadd.f32 %v914, %v1414
      %v1677 = vadd.f32 %v917, %v1417
      %v1678 = vadd.f32 %v922, %v1422
      %v1679 = vadd.f32 %v925, %v1425
      %v1680 = vadd.f32 %v930, %v1430
      %v1681 = vadd.f32 %v933, %v1433
      %v1682 = vadd.f32 %v938, %v1438
      %v1683 = vadd.f32 %v941, %v1441
      %v1684 = vadd.f32 %v946, %v1446
      %v1685 = vadd.f32 %v949, %v1449
      %v1686 = vadd.f32 %v954, %v1454
      %v1687 = vadd.f32 %v957, %v1457
      %v1688 = vadd.f32 %v962, %v1462
      %v1689 = vadd.f32 %v965, %v1465
      %v1690 = vadd.f32 %v970, %v1470
      %v1691 = vadd.f32 %v973, %v1473
      %v1692 = vadd.f32 %v978, %v1478
      %v1693 = vadd.f32 %v981, %v1481
      %v1694 = vadd.f32 %v986, %v1486
      %v1695 = vadd.f32 %v989, %v1489
      %v1696 = vadd.f32 %v994, %v1494
      %v1697 = vadd.f32 %v997, %v1497
      %v1698 = vadd.f32 %v1002, %v1502
      %v1699 = vadd.f32 %v1005, %v1505
      %v1700 = vadd.f32 %v1010, %v1510
      %v1701 = vadd.f32 %v1013, %v1513
      %v1702 = vadd.f32 %v1018, %v1518
      %v1703 = vadd.f32 %v1021, %v1521
      %v1704 = vadd.f32 %v1026, %v1526
      %v1705 = vadd.f32 %v1029, %v1529
      %v1706 = vadd.f32 %v1034, %v1534
      %v1707 = vadd.f32 %v1037, %v1537
      %v1708 = vadd.f32 %v1042, %v1542
      %v1709 = vadd.f32 %v1045, %v1545
      %v1710 = vadd.f32 %v1050, %v1550
      %v1711 = vadd.f32 %v1053, %v1553
      %v1712 = vadd.f32 %v1058, %v1558
      %v1713 = vadd.f32 %v1061, %v1561
      %v1714 = vadd.f32 %v1066, %v1566
      %v1715 = vadd.f32 %v1069, %v1569
      %v1716 = vadd.f32 %v1074, %v1574
      %v1717 = vadd.f32 %v1077, %v1577
      %v1718 = vadd.f32 %v1082, %v1582
      %v1719 = vadd.f32 %v1085, %v1585
      %v1720 = vadd.f32 %v1090, %v1590
      %v1721 = vadd.f32 %v1093, %v1593
      %v1722 = vadd.f32 %v1098, %v1598
      %v1723 = vadd.f32 %v1101, %v1601
      %v1724 = vadd.f32 %v1106, %v1606
      %v1725 = vadd.f32 %v1109, %v1609
      %v1726 = vadd.f32 %v1114, %v1614
      %v1727 = vadd.f32 %v1117, %v1617
      %v1728 = vadd.f32 %v1122, %v1622
      %v1729 = vadd.f32 %v1125, %v1625
      %v1730 = vadd.f32 %v1130, %v1630
      %v1731 = vadd.f32 %v1133, %v1633
      %v1732 = vadd.f32 %v1138, %v1638
      %v1733 = vadd.f32 %v1141, %v1641
      %v1734 = vadd.f32 %v1146, %v1646
      %v1735 = vadd.f32 %v1149, %v1649
      %v1736 = vadd.f32 %v1154, %v1654
      %v1737 = vadd.f32 %v1157, %v1657
      %v1738 = vadd.f32 %v1162, %v1662
      %v1739 = vadd.f32 %v1165, %v1665
      %v1740 = vadd.f32 %v1170, %v1670
      %v1741 = vadd.f32 %v1173, %v1673
      %v1742 = vld [vmem:[%s165 + $0x18] sm:$0xff]
      %v1743 = vld [vmem:[%s165 + $0x20] sm:$0xff]
      %v1744 = vld [vmem:[%s165 + $0x28] sm:$0xff]
      %v1745 = vld [vmem:[%s165 + $0x30] sm:$0xff]
      %v1746 = vld [vmem:[%s165 + $0x38] sm:$0xff]
      %v1747 = vld [vmem:[%s165 + $0x40] sm:$0xff]
      %v1748 = vld [vmem:[%s165 + $0x48] sm:$0xff]
      %v1749 = vld [vmem:[%s165 + $0x50] sm:$0xff]
      %v1750 = vld [vmem:[%s165 + $0x58] sm:$0xff]
      %v1751 = vld [vmem:[%s165 + $0x60] sm:$0xff]
      %v1752 = vld [vmem:[%s165 + $0x68] sm:$0xff]
      %v1753 = vld [vmem:[%s165 + $0x70] sm:$0xff]
      %v1754 = vld [vmem:[%s165 + $0x78] sm:$0xff]
      %v1755 = vld [vmem:[%s165 + $0x80] sm:$0xff]
      %v1756 = vld [vmem:[%s165 + $0x88] sm:$0xff]
      %v1757 = vld [vmem:[%s165 + $0x90] sm:$0xff]
      %v1758 = vld [vmem:[%s165 + $0x98] sm:$0xff]
      %v1759 = vld [vmem:[%s165 + $0xa0] sm:$0xff]
      %v1760 = vld [vmem:[%s165 + $0xa8] sm:$0xff]
      %v1761 = vld [vmem:[%s165 + $0xb0] sm:$0xff]
      %v1762 = vld [vmem:[%s165 + $0xb8] sm:$0xff]
      %v1763 = vld [vmem:[%s165 + $0xc0] sm:$0xff]
      %v1764 = vld [vmem:[%s165 + $0xc8] sm:$0xff]
      %v1765 = vld [vmem:[%s165 + $0xd0] sm:$0xff]
      %v1766 = vld [vmem:[%s165 + $0xd8] sm:$0xff]
      %v1767 = vld [vmem:[%s165 + $0xe0] sm:$0xff]
      %v1768 = vld [vmem:[%s165 + $0xe8] sm:$0xff]
      %v1769 = vld [vmem:[%s165 + $0xf0] sm:$0xff]
      %v1770 = vld [vmem:[%s165 + $0xf8] sm:$0xff]
      %v1771 = vld [vmem:[%s165 + $0x100] sm:$0xff]
      %v1772 = vld [vmem:[%s165 + $0x108] sm:$0xff]
      %v1773 = vld [vmem:[%s165 + $0x110] sm:$0xff]
      %v1774 = vld [vmem:[%s165 + $0x118] sm:$0xff]
      %v1775 = vld [vmem:[%s165 + $0x120] sm:$0xff]
      %v1776 = vld [vmem:[%s165 + $0x128] sm:$0xff]
      %v1777 = vld [vmem:[%s165 + $0x130] sm:$0xff]
      %v1778 = vld [vmem:[%s165 + $0x138] sm:$0xff]
      %v1779 = vld [vmem:[%s165 + $0x140] sm:$0xff]
      %v1780 = vld [vmem:[%s165 + $0x148] sm:$0xff]
      %v1781 = vld [vmem:[%s165 + $0x150] sm:$0xff]
      %v1782 = vld [vmem:[%s165 + $0x158] sm:$0xff]
      %v1783 = vld [vmem:[%s165 + $0x160] sm:$0xff]
      %v1784 = vld [vmem:[%s165 + $0x168] sm:$0xff]
      %v1785 = vld [vmem:[%s165 + $0x170] sm:$0xff]
      %v1786 = vld [vmem:[%s165 + $0x178] sm:$0xff]
      %v1787 = vld [vmem:[%s165 + $0x180] sm:$0xff]
      %v1788 = vld [vmem:[%s165 + $0x188] sm:$0xff]
      %v1789 = vld [vmem:[%s165 + $0x190] sm:$0xff]
      %v1790 = vld [vmem:[%s165 + $0x198] sm:$0xff]
      %v1791 = vld [vmem:[%s165 + $0x1a0] sm:$0xff]
      %v1792 = vld [vmem:[%s165 + $0x1a8] sm:$0xff]
      %v1793 = vld [vmem:[%s165 + $0x1b0] sm:$0xff]
      %v1794 = vld [vmem:[%s165 + $0x1b8] sm:$0xff]
      %v1795 = vld [vmem:[%s165 + $0x1c0] sm:$0xff]
      %v1796 = vld [vmem:[%s165 + $0x1c8] sm:$0xff]
      %v1797 = vld [vmem:[%s165 + $0x1d0] sm:$0xff]
      %v1798 = vld [vmem:[%s165 + $0x1d8] sm:$0xff]
      %v1799 = vld [vmem:[%s165 + $0x1e0] sm:$0xff]
      %v1800 = vld [vmem:[%s165 + $0x1e8] sm:$0xff]
      %v1801 = vld [vmem:[%s165 + $0x1f0] sm:$0xff]
      %v1802 = vld [vmem:[%s165 + $0x1f8] sm:$0xff]
      %v1803 = vld [vmem:[%s165 + $0x200] sm:$0xff]
      %v1804 = vld [vmem:[%s165 + $0x208] sm:$0xff]
      %v1805 = vld [vmem:[%s165 + $0x210] sm:$0xff]
      %v1806 = vld [vmem:[%s165 + $0x218] sm:$0xff]
      %v1807 = vld [vmem:[%s165 + $0x220] sm:$0x3f]
      %v1808 = vpack.c.bf16 %v1743, %v1742
      %v1809 = vpack.c.bf16 %v1745, %v1744
      %v1810 = vpack.c.bf16 %v1747, %v1746
      %v1811 = vpack.c.bf16 %v1749, %v1748
      %v1812 = vpack.c.bf16 %v1751, %v1750
      %v1813 = vpack.c.bf16 %v1753, %v1752
      %v1814 = vpack.c.bf16 %v1755, %v1754
      %v1815 = vpack.c.bf16 %v1757, %v1756
      %v1816 = vpack.c.bf16 %v1759, %v1758
      %v1817 = vpack.c.bf16 %v1761, %v1760
      %v1818 = vpack.c.bf16 %v1763, %v1762
      %v1819 = vpack.c.bf16 %v1765, %v1764
      %v1820 = vpack.c.bf16 %v1767, %v1766
      %v1821 = vpack.c.bf16 %v1769, %v1768
      %v1822 = vpack.c.bf16 %v1771, %v1770
      %v1823 = vpack.c.bf16 %v1773, %v1772
      %v1824 = vpack.c.bf16 %v1775, %v1774
      %v1825 = vpack.c.bf16 %v1777, %v1776
      %v1826 = vpack.c.bf16 %v1779, %v1778
      %v1827 = vpack.c.bf16 %v1781, %v1780
      %v1828 = vpack.c.bf16 %v1783, %v1782
      %v1829 = vpack.c.bf16 %v1785, %v1784
      %v1830 = vpack.c.bf16 %v1787, %v1786
      %v1831 = vpack.c.bf16 %v1789, %v1788
      %v1832 = vpack.c.bf16 %v1791, %v1790
      %v1833 = vpack.c.bf16 %v1793, %v1792
      %v1834 = vpack.c.bf16 %v1795, %v1794
      %v1835 = vpack.c.bf16 %v1797, %v1796
      %v1836 = vpack.c.bf16 %v1799, %v1798
      %v1837 = vpack.c.bf16 %v1801, %v1800
      %v1838 = vpack.c.bf16 %v1803, %v1802
      %v1839 = vpack.c.bf16 %v1805, %v1804
      %v1840 = vpack.c.bf16 %v1807, %v1806
      %s1841 = scalar_lea.vmem %s1, 6
      %v1842 = vld [vmem:[%s1841] sm:$0x3]
      %v1844 = vsel %vm373, %v1808, 0
      %v1847 = vsel %vm373, %v1809, 0
      %v1850 = vsel %vm373, %v1810, 0
      %v1853 = vsel %vm373, %v1811, 0
      %v1856 = vsel %vm373, %v1812, 0
      %v1859 = vsel %vm373, %v1813, 0
      %v1862 = vsel %vm373, %v1814, 0
      %v1865 = vsel %vm373, %v1815, 0
      %v1868 = vsel %vm373, %v1816, 0
      %v1871 = vsel %vm373, %v1817, 0
      %v1874 = vsel %vm373, %v1818, 0
      %v1877 = vsel %vm373, %v1819, 0
      %v1880 = vsel %vm373, %v1820, 0
      %v1883 = vsel %vm373, %v1821, 0
      %v1886 = vsel %vm373, %v1822, 0
      %v1889 = vsel %vm373, %v1823, 0
      %v1892 = vsel %vm373, %v1824, 0
      %v1895 = vsel %vm373, %v1825, 0
      %v1898 = vsel %vm373, %v1826, 0
      %v1901 = vsel %vm373, %v1827, 0
      %v1904 = vsel %vm373, %v1828, 0
      %v1907 = vsel %vm373, %v1829, 0
      %v1910 = vsel %vm373, %v1830, 0
      %v1913 = vsel %vm373, %v1831, 0
      %v1916 = vsel %vm373, %v1832, 0
      %v1919 = vsel %vm373, %v1833, 0
      %v1922 = vsel %vm373, %v1834, 0
      %v1925 = vsel %vm373, %v1835, 0
      %v1928 = vsel %vm373, %v1836, 0
      %v1931 = vsel %vm373, %v1837, 0
      %v1934 = vsel %vm373, %v1838, 0
      %v1937 = vsel %vm373, %v1839, 0
      %v1940 = vsel %vm373, %v1840, 0
      %v1943 = vand.u32 %v1842, %v476
      %1945 = vmatprep.subr.bf16.mxu0 0
      %1946 = vmatpush1.bf16.msra.mxu0 %v1943
      %1947 = vmatprep.subr.bf16.mxu0 0
      %1948 = vmatpush1.bf16.msra.mxu0 0
      %1949 = vmatprep.subr.bf16.mxu0 0
      %1950 = vmatpush1.bf16.msra.mxu0 0
      %1951 = vmatprep.subr.bf16.mxu0 0
      %1952 = vmatpush1.bf16.msra.mxu0 0
      %1953 = vmatprep.subr.bf16.mxu0 0
      %1954 = vmatpush1.bf16.msra.mxu0 0
      %1955 = vmatprep.subr.bf16.mxu0 0
      %1956 = vmatpush1.bf16.msra.mxu0 0
      %1957 = vmatprep.subr.bf16.mxu0 0
      %1958 = vmatpush1.bf16.msra.mxu0 0
      %1959 = vmatprep.subr.bf16.mxu0 0
      %1960 = vmatpush1.bf16.msra.mxu0 0
      %1961 = vmatprep.subr.bf16.mxu0 0
      %1962 = vmatpush1.bf16.msra.mxu0 0
      %1963 = vmatprep.subr.bf16.mxu0 0
      %1964 = vmatpush1.bf16.msra.mxu0 0
      %1965 = vmatprep.subr.bf16.mxu0 0
      %1966 = vmatpush1.bf16.msra.mxu0 0
      %1967 = vmatprep.subr.bf16.mxu0 0
      %1968 = vmatpush1.bf16.msra.mxu0 0
      %1969 = vmatprep.subr.bf16.mxu0 0
      %1970 = vmatpush1.bf16.msra.mxu0 0
      %1971 = vmatprep.subr.bf16.mxu0 0
      %1972 = vmatpush1.bf16.msra.mxu0 0
      %1973 = vmatprep.subr.bf16.mxu0 0
      %1974 = vmatpush1.bf16.msra.mxu0 0
      %1975 = vmatprep.subr.bf16.mxu0 0
      %1976 = vmatpush1.bf16.msra.mxu0 0
      %1977 = vmatprep.mubr.bf16.mxu0 0
      %1978 = vmatmul.mubr.bf16.gmra.mrb[0].mxu0 %v1844
      %v1979 = vpop.f32.mrb[0].mxu0
      %v1980 = vadd.f32 0.0, %v1979
      %v1981 = vpop.f32.mrb[0].mxu0
      %v1982 = vpop.f32.mrb[0].mxu0
      %v1983 = vadd.f32 0.0, %v1982
      %v1984 = vpop.f32.mrb[0].mxu0
      %1985 = vmatprep.mubr.bf16.mxu0 0
      %1986 = vmatmul.mubr.bf16.gmra.mrb[0].mxu0 %v1847
      %v1987 = vpop.f32.mrb[0].mxu0
      %v1988 = vadd.f32 0.0, %v1987
      %v1989 = vpop.f32.mrb[0].mxu0
      %v1990 = vpop.f32.mrb[0].mxu0
      %v1991 = vadd.f32 0.0, %v1990
      %v1992 = vpop.f32.mrb[0].mxu0
      %1993 = vmatprep.mubr.bf16.mxu0 0
      %1994 = vmatmul.mubr.bf16.gmra.mrb[0].mxu0 %v1850
      %v1995 = vpop.f32.mrb[0].mxu0
      %v1996 = vadd.f32 0.0, %v1995
      %v1997 = vpop.f32.mrb[0].mxu0
      %v1998 = vpop.f32.mrb[0].mxu0
      %v1999 = vadd.f32 0.0, %v1998
      %v2000 = vpop.f32.mrb[0].mxu0
      %2001 = vmatprep.mubr.bf16.mxu0 0
      %2002 = vmatmul.mubr.bf16.gmra.mrb[0].mxu0 %v1853
      %v2003 = vpop.f32.mrb[0].mxu0
      %v2004 = vadd.f32 0.0, %v2003
      %v2005 = vpop.f32.mrb[0].mxu0
      %v2006 = vpop.f32.mrb[0].mxu0
      %v2007 = vadd.f32 0.0, %v2006
      %v2008 = vpop.f32.mrb[0].mxu0
      %2009 = vmatprep.mubr.bf16.mxu0 0
      %2010 = vmatmul.mubr.bf16.gmra.mrb[0].mxu0 %v1856
      %v2011 = vpop.f32.mrb[0].mxu0
      %v2012 = vadd.f32 0.0, %v2011
      %v2013 = vpop.f32.mrb[0].mxu0
      %v2014 = vpop.f32.mrb[0].mxu0
      %v2015 = vadd.f32 0.0, %v2014
      %v2016 = vpop.f32.mrb[0].mxu0
      %2017 = vmatprep.mubr.bf16.mxu0 0
      %2018 = vmatmul.mubr.bf16.gmra.mrb[0].mxu0 %v1859
      %v2019 = vpop.f32.mrb[0].mxu0
      %v2020 = vadd.f32 0.0, %v2019
      %v2021 = vpop.f32.mrb[0].mxu0
      %v2022 = vpop.f32.mrb[0].mxu0
      %v2023 = vadd.f32 0.0, %v2022
      %v2024 = vpop.f32.mrb[0].mxu0
      %2025 = vmatprep.mubr.bf16.mxu0 0
      %2026 = vmatmul.mubr.bf16.gmra.mrb[0].mxu0 %v1862
      %v2027 = vpop.f32.mrb[0].mxu0
      %v2028 = vadd.f32 0.0, %v2027
      %v2029 = vpop.f32.mrb[0].mxu0
      %v2030 = vpop.f32.mrb[0].mxu0
      %v2031 = vadd.f32 0.0, %v2030
      %v2032 = vpop.f32.mrb[0].mxu0
      %2033 = vmatprep.mubr.bf16.mxu0 0
      %2034 = vmatmul.mubr.bf16.gmra.mrb[0].mxu0 %v1865
      %v2035 = vpop.f32.mrb[0].mxu0
      %v2036 = vadd.f32 0.0, %v2035
      %v2037 = vpop.f32.mrb[0].mxu0
      %v2038 = vpop.f32.mrb[0].mxu0
      %v2039 = vadd.f32 0.0, %v2038
      %v2040 = vpop.f32.mrb[0].mxu0
      %2041 = vmatprep.mubr.bf16.mxu0 0
      %2042 = vmatmul.mubr.bf16.gmra.mrb[0].mxu0 %v1868
      %v2043 = vpop.f32.mrb[0].mxu0
      %v2044 = vadd.f32 0.0, %v2043
      %v2045 = vpop.f32.mrb[0].mxu0
      %v2046 = vpop.f32.mrb[0].mxu0
      %v2047 = vadd.f32 0.0, %v2046
      %v2048 = vpop.f32.mrb[0].mxu0
      %2049 = vmatprep.mubr.bf16.mxu0 0
      %2050 = vmatmul.mubr.bf16.gmra.mrb[0].mxu0 %v1871
      %v2051 = vpop.f32.mrb[0].mxu0
      %v2052 = vadd.f32 0.0, %v2051
      %v2053 = vpop.f32.mrb[0].mxu0
      %v2054 = vpop.f32.mrb[0].mxu0
      %v2055 = vadd.f32 0.0, %v2054
      %v2056 = vpop.f32.mrb[0].mxu0
      %2057 = vmatprep.mubr.bf16.mxu0 0
      %2058 = vmatmul.mubr.bf16.gmra.mrb[0].mxu0 %v1874
      %v2059 = vpop.f32.mrb[0].mxu0
      %v2060 = vadd.f32 0.0, %v2059
      %v2061 = vpop.f32.mrb[0].mxu0
      %v2062 = vpop.f32.mrb[0].mxu0
      %v2063 = vadd.f32 0.0, %v2062
      %v2064 = vpop.f32.mrb[0].mxu0
      %2065 = vmatprep.mubr.bf16.mxu0 0
      %2066 = vmatmul.mubr.bf16.gmra.mrb[0].mxu0 %v1877
      %v2067 = vpop.f32.mrb[0].mxu0
      %v2068 = vadd.f32 0.0, %v2067
      %v2069 = vpop.f32.mrb[0].mxu0
      %v2070 = vpop.f32.mrb[0].mxu0
      %v2071 = vadd.f32 0.0, %v2070
      %v2072 = vpop.f32.mrb[0].mxu0
      %2073 = vmatprep.mubr.bf16.mxu0 0
      %2074 = vmatmul.mubr.bf16.gmra.mrb[0].mxu0 %v1880
      %v2075 = vpop.f32.mrb[0].mxu0
      %v2076 = vadd.f32 0.0, %v2075
      %v2077 = vpop.f32.mrb[0].mxu0
      %v2078 = vpop.f32.mrb[0].mxu0
      %v2079 = vadd.f32 0.0, %v2078
      %v2080 = vpop.f32.mrb[0].mxu0
      %2081 = vmatprep.mubr.bf16.mxu0 0
      %2082 = vmatmul.mubr.bf16.gmra.mrb[0].mxu0 %v1883
      %v2083 = vpop.f32.mrb[0].mxu0
      %v2084 = vadd.f32 0.0, %v2083
      %v2085 = vpop.f32.mrb[0].mxu0
      %v2086 = vpop.f32.mrb[0].mxu0
      %v2087 = vadd.f32 0.0, %v2086
      %v2088 = vpop.f32.mrb[0].mxu0
      %2089 = vmatprep.mubr.bf16.mxu0 0
      %2090 = vmatmul.mubr.bf16.gmra.mrb[0].mxu0 %v1886
      %v2091 = vpop.f32.mrb[0].mxu0
      %v2092 = vadd.f32 0.0, %v2091
      %v2093 = vpop.f32.mrb[0].mxu0
      %v2094 = vpop.f32.mrb[0].mxu0
      %v2095 = vadd.f32 0.0, %v2094
      %v2096 = vpop.f32.mrb[0].mxu0
      %2097 = vmatprep.mubr.bf16.mxu0 0
      %2098 = vmatmul.mubr.bf16.gmra.mrb[0].mxu0 %v1889
      %v2099 = vpop.f32.mrb[0].mxu0
      %v2100 = vadd.f32 0.0, %v2099
      %v2101 = vpop.f32.mrb[0].mxu0
      %v2102 = vpop.f32.mrb[0].mxu0
      %v2103 = vadd.f32 0.0, %v2102
      %v2104 = vpop.f32.mrb[0].mxu0
      %2105 = vmatprep.mubr.bf16.mxu0 0
      %2106 = vmatmul.mubr.bf16.gmra.mrb[0].mxu0 %v1892
      %v2107 = vpop.f32.mrb[0].mxu0
      %v2108 = vadd.f32 0.0, %v2107
      %v2109 = vpop.f32.mrb[0].mxu0
      %v2110 = vpop.f32.mrb[0].mxu0
      %v2111 = vadd.f32 0.0, %v2110
      %v2112 = vpop.f32.mrb[0].mxu0
      %2113 = vmatprep.mubr.bf16.mxu0 0
      %2114 = vmatmul.mubr.bf16.gmra.mrb[0].mxu0 %v1895
      %v2115 = vpop.f32.mrb[0].mxu0
      %v2116 = vadd.f32 0.0, %v2115
      %v2117 = vpop.f32.mrb[0].mxu0
      %v2118 = vpop.f32.mrb[0].mxu0
      %v2119 = vadd.f32 0.0, %v2118
      %v2120 = vpop.f32.mrb[0].mxu0
      %2121 = vmatprep.mubr.bf16.mxu0 0
      %2122 = vmatmul.mubr.bf16.gmra.mrb[0].mxu0 %v1898
      %v2123 = vpop.f32.mrb[0].mxu0
      %v2124 = vadd.f32 0.0, %v2123
      %v2125 = vpop.f32.mrb[0].mxu0
      %v2126 = vpop.f32.mrb[0].mxu0
      %v2127 = vadd.f32 0.0, %v2126
      %v2128 = vpop.f32.mrb[0].mxu0
      %2129 = vmatprep.mubr.bf16.mxu0 0
      %2130 = vmatmul.mubr.bf16.gmra.mrb[0].mxu0 %v1901
      %v2131 = vpop.f32.mrb[0].mxu0
      %v2132 = vadd.f32 0.0, %v2131
      %v2133 = vpop.f32.mrb[0].mxu0
      %v2134 = vpop.f32.mrb[0].mxu0
      %v2135 = vadd.f32 0.0, %v2134
      %v2136 = vpop.f32.mrb[0].mxu0
      %2137 = vmatprep.mubr.bf16.mxu0 0
      %2138 = vmatmul.mubr.bf16.gmra.mrb[0].mxu0 %v1904
      %v2139 = vpop.f32.mrb[0].mxu0
      %v2140 = vadd.f32 0.0, %v2139
      %v2141 = vpop.f32.mrb[0].mxu0
      %v2142 = vpop.f32.mrb[0].mxu0
      %v2143 = vadd.f32 0.0, %v2142
      %v2144 = vpop.f32.mrb[0].mxu0
      %2145 = vmatprep.mubr.bf16.mxu0 0
      %2146 = vmatmul.mubr.bf16.gmra.mrb[0].mxu0 %v1907
      %v2147 = vpop.f32.mrb[0].mxu0
      %v2148 = vadd.f32 0.0, %v2147
      %v2149 = vpop.f32.mrb[0].mxu0
      %v2150 = vpop.f32.mrb[0].mxu0
      %v2151 = vadd.f32 0.0, %v2150
      %v2152 = vpop.f32.mrb[0].mxu0
      %2153 = vmatprep.mubr.bf16.mxu0 0
      %2154 = vmatmul.mubr.bf16.gmra.mrb[0].mxu0 %v1910
      %v2155 = vpop.f32.mrb[0].mxu0
      %v2156 = vadd.f32 0.0, %v2155
      %v2157 = vpop.f32.mrb[0].mxu0
      %v2158 = vpop.f32.mrb[0].mxu0
      %v2159 = vadd.f32 0.0, %v2158
      %v2160 = vpop.f32.mrb[0].mxu0
      %2161 = vmatprep.mubr.bf16.mxu0 0
      %2162 = vmatmul.mubr.bf16.gmra.mrb[0].mxu0 %v1913
      %v2163 = vpop.f32.mrb[0].mxu0
      %v2164 = vadd.f32 0.0, %v2163
      %v2165 = vpop.f32.mrb[0].mxu0
      %v2166 = vpop.f32.mrb[0].mxu0
      %v2167 = vadd.f32 0.0, %v2166
      %v2168 = vpop.f32.mrb[0].mxu0
      %2169 = vmatprep.mubr.bf16.mxu0 0
      %2170 = vmatmul.mubr.bf16.gmra.mrb[0].mxu0 %v1916
      %v2171 = vpop.f32.mrb[0].mxu0
      %v2172 = vadd.f32 0.0, %v2171
      %v2173 = vpop.f32.mrb[0].mxu0
      %v2174 = vpop.f32.mrb[0].mxu0
      %v2175 = vadd.f32 0.0, %v2174
      %v2176 = vpop.f32.mrb[0].mxu0
      %2177 = vmatprep.mubr.bf16.mxu0 0
      %2178 = vmatmul.mubr.bf16.gmra.mrb[0].mxu0 %v1919
      %v2179 = vpop.f32.mrb[0].mxu0
      %v2180 = vadd.f32 0.0, %v2179
      %v2181 = vpop.f32.mrb[0].mxu0
      %v2182 = vpop.f32.mrb[0].mxu0
      %v2183 = vadd.f32 0.0, %v2182
      %v2184 = vpop.f32.mrb[0].mxu0
      %2185 = vmatprep.mubr.bf16.mxu0 0
      %2186 = vmatmul.mubr.bf16.gmra.mrb[0].mxu0 %v1922
      %v2187 = vpop.f32.mrb[0].mxu0
      %v2188 = vadd.f32 0.0, %v2187
      %v2189 = vpop.f32.mrb[0].mxu0
      %v2190 = vpop.f32.mrb[0].mxu0
      %v2191 = vadd.f32 0.0, %v2190
      %v2192 = vpop.f32.mrb[0].mxu0
      %2193 = vmatprep.mubr.bf16.mxu0 0
      %2194 = vmatmul.mubr.bf16.gmra.mrb[0].mxu0 %v1925
      %v2195 = vpop.f32.mrb[0].mxu0
      %v2196 = vadd.f32 0.0, %v2195
      %v2197 = vpop.f32.mrb[0].mxu0
      %v2198 = vpop.f32.mrb[0].mxu0
      %v2199 = vadd.f32 0.0, %v2198
      %v2200 = vpop.f32.mrb[0].mxu0
      %2201 = vmatprep.mubr.bf16.mxu0 0
      %2202 = vmatmul.mubr.bf16.gmra.mrb[0].mxu0 %v1928
      %v2203 = vpop.f32.mrb[0].mxu0
      %v2204 = vadd.f32 0.0, %v2203
      %v2205 = vpop.f32.mrb[0].mxu0
      %v2206 = vpop.f32.mrb[0].mxu0
      %v2207 = vadd.f32 0.0, %v2206
      %v2208 = vpop.f32.mrb[0].mxu0
      %2209 = vmatprep.mubr.bf16.mxu0 0
      %2210 = vmatmul.mubr.bf16.gmra.mrb[0].mxu0 %v1931
      %v2211 = vpop.f32.mrb[0].mxu0
      %v2212 = vadd.f32 0.0, %v2211
      %v2213 = vpop.f32.mrb[0].mxu0
      %v2214 = vpop.f32.mrb[0].mxu0
      %v2215 = vadd.f32 0.0, %v2214
      %v2216 = vpop.f32.mrb[0].mxu0
      %2217 = vmatprep.mubr.bf16.mxu0 0
      %2218 = vmatmul.mubr.bf16.gmra.mrb[0].mxu0 %v1934
      %v2219 = vpop.f32.mrb[0].mxu0
      %v2220 = vadd.f32 0.0, %v2219
      %v2221 = vpop.f32.mrb[0].mxu0
      %v2222 = vpop.f32.mrb[0].mxu0
      %v2223 = vadd.f32 0.0, %v2222
      %v2224 = vpop.f32.mrb[0].mxu0
      %2225 = vmatprep.mubr.bf16.mxu0 0
      %2226 = vmatmul.mubr.bf16.gmra.mrb[0].mxu0 %v1937
      %v2227 = vpop.f32.mrb[0].mxu0
      %v2228 = vadd.f32 0.0, %v2227
      %v2229 = vpop.f32.mrb[0].mxu0
      %v2230 = vpop.f32.mrb[0].mxu0
      %v2231 = vadd.f32 0.0, %v2230
      %v2232 = vpop.f32.mrb[0].mxu0
      %2233 = vmatprep.mubr.bf16.mxu0 0
      %2234 = vmatmul.mubr.bf16.gmra.mrb[0].mxu0 %v1940
      %v2235 = vpop.f32.mrb[0].mxu0
      %v2236 = vadd.f32 0.0, %v2235
      %v2237 = vpop.f32.mrb[0].mxu0
      %v2238 = vpop.f32.mrb[0].mxu0
      %v2239 = vadd.f32 0.0, %v2238
      %v2240 = vpop.f32.mrb[0].mxu0
      %2241 = vdwg.mxu0
      %v2242 = vadd.f32 %v1676, %v1980
      %v2243 = vadd.f32 %v1677, %v1983
      %v2244 = vadd.f32 %v1678, %v1988
      %v2245 = vadd.f32 %v1679, %v1991
      %v2246 = vadd.f32 %v1680, %v1996
      %v2247 = vadd.f32 %v1681, %v1999
      %v2248 = vadd.f32 %v1682, %v2004
      %v2249 = vadd.f32 %v1683, %v2007
      %v2250 = vadd.f32 %v1684, %v2012
      %v2251 = vadd.f32 %v1685, %v2015
      %v2252 = vadd.f32 %v1686, %v2020
      %v2253 = vadd.f32 %v1687, %v2023
      %v2254 = vadd.f32 %v1688, %v2028
      %v2255 = vadd.f32 %v1689, %v2031
      %v2256 = vadd.f32 %v1690, %v2036
      %v2257 = vadd.f32 %v1691, %v2039
      %v2258 = vadd.f32 %v1692, %v2044
      %v2259 = vadd.f32 %v1693, %v2047
      %v2260 = vadd.f32 %v1694, %v2052
      %v2261 = vadd.f32 %v1695, %v2055
      %v2262 = vadd.f32 %v1696, %v2060
      %v2263 = vadd.f32 %v1697, %v2063
      %v2264 = vadd.f32 %v1698, %v2068
      %v2265 = vadd.f32 %v1699, %v2071
      %v2266 = vadd.f32 %v1700, %v2076
      %v2267 = vadd.f32 %v1701, %v2079
      %v2268 = vadd.f32 %v1702, %v2084
      %v2269 = vadd.f32 %v1703, %v2087
      %v2270 = vadd.f32 %v1704, %v2092
      %v2271 = vadd.f32 %v1705, %v2095
      %v2272 = vadd.f32 %v1706, %v2100
      %v2273 = vadd.f32 %v1707, %v2103
      %v2274 = vadd.f32 %v1708, %v2108
      %v2275 = vadd.f32 %v1709, %v2111
      %v2276 = vadd.f32 %v1710, %v2116
      %v2277 = vadd.f32 %v1711, %v2119
      %v2278 = vadd.f32 %v1712, %v2124
      %v2279 = vadd.f32 %v1713, %v2127
      %v2280 = vadd.f32 %v1714, %v2132
      %v2281 = vadd.f32 %v1715, %v2135
      %v2282 = vadd.f32 %v1716, %v2140
      %v2283 = vadd.f32 %v1717, %v2143
      %v2284 = vadd.f32 %v1718, %v2148
      %v2285 = vadd.f32 %v1719, %v2151
      %v2286 = vadd.f32 %v1720, %v2156
      %v2287 = vadd.f32 %v1721, %v2159
      %v2288 = vadd.f32 %v1722, %v2164
      %v2289 = vadd.f32 %v1723, %v2167
      %v2290 = vadd.f32 %v1724, %v2172
      %v2291 = vadd.f32 %v1725, %v2175
      %v2292 = vadd.f32 %v1726, %v2180
      %v2293 = vadd.f32 %v1727, %v2183
      %v2294 = vadd.f32 %v1728, %v2188
      %v2295 = vadd.f32 %v1729, %v2191
      %v2296 = vadd.f32 %v1730, %v2196
      %v2297 = vadd.f32 %v1731, %v2199
      %v2298 = vadd.f32 %v1732, %v2204
      %v2299 = vadd.f32 %v1733, %v2207
      %v2300 = vadd.f32 %v1734, %v2212
      %v2301 = vadd.f32 %v1735, %v2215
      %v2302 = vadd.f32 %v1736, %v2220
      %v2303 = vadd.f32 %v1737, %v2223
      %v2304 = vadd.f32 %v1738, %v2228
      %v2305 = vadd.f32 %v1739, %v2231
      %v2306 = vadd.f32 %v1740, %v2236
      %v2307 = vadd.f32 %v1741, %v2239
      %v2308 = vld [vmem:[%s165 + $0x19] sm:$0xff]
      %v2309 = vld [vmem:[%s165 + $0x21] sm:$0xff]
      %v2310 = vld [vmem:[%s165 + $0x29] sm:$0xff]
      %v2311 = vld [vmem:[%s165 + $0x31] sm:$0xff]
      %v2312 = vld [vmem:[%s165 + $0x39] sm:$0xff]
      %v2313 = vld [vmem:[%s165 + $0x41] sm:$0xff]
      %v2314 = vld [vmem:[%s165 + $0x49] sm:$0xff]
      %v2315 = vld [vmem:[%s165 + $0x51] sm:$0xff]
      %v2316 = vld [vmem:[%s165 + $0x59] sm:$0xff]
      %v2317 = vld [vmem:[%s165 + $0x61] sm:$0xff]
      %v2318 = vld [vmem:[%s165 + $0x69] sm:$0xff]
      %v2319 = vld [vmem:[%s165 + $0x71] sm:$0xff]
      %v2320 = vld [vmem:[%s165 + $0x79] sm:$0xff]
      %v2321 = vld [vmem:[%s165 + $0x81] sm:$0xff]
      %v2322 = vld [vmem:[%s165 + $0x89] sm:$0xff]
      %v2323 = vld [vmem:[%s165 + $0x91] sm:$0xff]
      %v2324 = vld [vmem:[%s165 + $0x99] sm:$0xff]
      %v2325 = vld [vmem:[%s165 + $0xa1] sm:$0xff]
      %v2326 = vld [vmem:[%s165 + $0xa9] sm:$0xff]
      %v2327 = vld [vmem:[%s165 + $0xb1] sm:$0xff]
      %v2328 = vld [vmem:[%s165 + $0xb9] sm:$0xff]
      %v2329 = vld [vmem:[%s165 + $0xc1] sm:$0xff]
      %v2330 = vld [vmem:[%s165 + $0xc9] sm:$0xff]
      %v2331 = vld [vmem:[%s165 + $0xd1] sm:$0xff]
      %v2332 = vld [vmem:[%s165 + $0xd9] sm:$0xff]
      %v2333 = vld [vmem:[%s165 + $0xe1] sm:$0xff]
      %v2334 = vld [vmem:[%s165 + $0xe9] sm:$0xff]
      %v2335 = vld [vmem:[%s165 + $0xf1] sm:$0xff]
      %v2336 = vld [vmem:[%s165 + $0xf9] sm:$0xff]
      %v2337 = vld [vmem:[%s165 + $0x101] sm:$0xff]
      %v2338 = vld [vmem:[%s165 + $0x109] sm:$0xff]
      %v2339 = vld [vmem:[%s165 + $0x111] sm:$0xff]
      %v2340 = vld [vmem:[%s165 + $0x119] sm:$0xff]
      %v2341 = vld [vmem:[%s165 + $0x121] sm:$0xff]
      %v2342 = vld [vmem:[%s165 + $0x129] sm:$0xff]
      %v2343 = vld [vmem:[%s165 + $0x131] sm:$0xff]
      %v2344 = vld [vmem:[%s165 + $0x139] sm:$0xff]
      %v2345 = vld [vmem:[%s165 + $0x141] sm:$0xff]
      %v2346 = vld [vmem:[%s165 + $0x149] sm:$0xff]
      %v2347 = vld [vmem:[%s165 + $0x151] sm:$0xff]
      %v2348 = vld [vmem:[%s165 + $0x159] sm:$0xff]
      %v2349 = vld [vmem:[%s165 + $0x161] sm:$0xff]
      %v2350 = vld [vmem:[%s165 + $0x169] sm:$0xff]
      %v2351 = vld [vmem:[%s165 + $0x171] sm:$0xff]
      %v2352 = vld [vmem:[%s165 + $0x179] sm:$0xff]
      %v2353 = vld [vmem:[%s165 + $0x181] sm:$0xff]
      %v2354 = vld [vmem:[%s165 + $0x189] sm:$0xff]
      %v2355 = vld [vmem:[%s165 + $0x191] sm:$0xff]
      %v2356 = vld [vmem:[%s165 + $0x199] sm:$0xff]
      %v2357 = vld [vmem:[%s165 + $0x1a1] sm:$0xff]
      %v2358 = vld [vmem:[%s165 + $0x1a9] sm:$0xff]
      %v2359 = vld [vmem:[%s165 + $0x1b1] sm:$0xff]
      %v2360 = vld [vmem:[%s165 + $0x1b9] sm:$0xff]
      %v2361 = vld [vmem:[%s165 + $0x1c1] sm:$0xff]
      %v2362 = vld [vmem:[%s165 + $0x1c9] sm:$0xff]
      %v2363 = vld [vmem:[%s165 + $0x1d1] sm:$0xff]
      %v2364 = vld [vmem:[%s165 + $0x1d9] sm:$0xff]
      %v2365 = vld [vmem:[%s165 + $0x1e1] sm:$0xff]
      %v2366 = vld [vmem:[%s165 + $0x1e9] sm:$0xff]
      %v2367 = vld [vmem:[%s165 + $0x1f1] sm:$0xff]
      %v2368 = vld [vmem:[%s165 + $0x1f9] sm:$0xff]
      %v2369 = vld [vmem:[%s165 + $0x201] sm:$0xff]
      %v2370 = vld [vmem:[%s165 + $0x209] sm:$0xff]
      %v2371 = vld [vmem:[%s165 + $0x211] sm:$0xff]
      %v2372 = vld [vmem:[%s165 + $0x219] sm:$0xff]
      %v2373 = vld [vmem:[%s165 + $0x221] sm:$0x3f]
      %v2374 = vpack.c.bf16 %v2309, %v2308
      %v2375 = vpack.c.bf16 %v2311, %v2310
      %v2376 = vpack.c.bf16 %v2313, %v2312
      %v2377 = vpack.c.bf16 %v2315, %v2314
      %v2378 = vpack.c.bf16 %v2317, %v2316
      %v2379 = vpack.c.bf16 %v2319, %v2318
      %v2380 = vpack.c.bf16 %v2321, %v2320
      %v2381 = vpack.c.bf16 %v2323, %v2322
      %v2382 = vpack.c.bf16 %v2325, %v2324
      %v2383 = vpack.c.bf16 %v2327, %v2326
      %v2384 = vpack.c.bf16 %v2329, %v2328
      %v2385 = vpack.c.bf16 %v2331, %v2330
      %v2386 = vpack.c.bf16 %v2333, %v2332
      %v2387 = vpack.c.bf16 %v2335, %v2334
      %v2388 = vpack.c.bf16 %v2337, %v2336
      %v2389 = vpack.c.bf16 %v2339, %v2338
      %v2390 = vpack.c.bf16 %v2341, %v2340
      %v2391 = vpack.c.bf16 %v2343, %v2342
      %v2392 = vpack.c.bf16 %v2345, %v2344
      %v2393 = vpack.c.bf16 %v2347, %v2346
      %v2394 = vpack.c.bf16 %v2349, %v2348
      %v2395 = vpack.c.bf16 %v2351, %v2350
      %v2396 = vpack.c.bf16 %v2353, %v2352
      %v2397 = vpack.c.bf16 %v2355, %v2354
      %v2398 = vpack.c.bf16 %v2357, %v2356
      %v2399 = vpack.c.bf16 %v2359, %v2358
      %v2400 = vpack.c.bf16 %v2361, %v2360
      %v2401 = vpack.c.bf16 %v2363, %v2362
      %v2402 = vpack.c.bf16 %v2365, %v2364
      %v2403 = vpack.c.bf16 %v2367, %v2366
      %v2404 = vpack.c.bf16 %v2369, %v2368
      %v2405 = vpack.c.bf16 %v2371, %v2370
      %v2406 = vpack.c.bf16 %v2373, %v2372
      %s2407 = scalar_lea.vmem %s1, 8
      %v2408 = vld [vmem:[%s2407] sm:$0x3]
      %v2410 = vsel %vm373, %v2374, 0
      %v2413 = vsel %vm373, %v2375, 0
      %v2416 = vsel %vm373, %v2376, 0
      %v2419 = vsel %vm373, %v2377, 0
      %v2422 = vsel %vm373, %v2378, 0
      %v2425 = vsel %vm373, %v2379, 0
      %v2428 = vsel %vm373, %v2380, 0
      %v2431 = vsel %vm373, %v2381, 0
      %v2434 = vsel %vm373, %v2382, 0
      %v2437 = vsel %vm373, %v2383, 0
      %v2440 = vsel %vm373, %v2384, 0
      %v2443 = vsel %vm373, %v2385, 0
      %v2446 = vsel %vm373, %v2386, 0
      %v2449 = vsel %vm373, %v2387, 0
      %v2452 = vsel %vm373, %v2388, 0
      %v2455 = vsel %vm373, %v2389, 0
      %v2458 = vsel %vm373, %v2390, 0
      %v2461 = vsel %vm373, %v2391, 0
      %v2464 = vsel %vm373, %v2392, 0
      %v2467 = vsel %vm373, %v2393, 0
      %v2470 = vsel %vm373, %v2394, 0
      %v2473 = vsel %vm373, %v2395, 0
      %v2476 = vsel %vm373, %v2396, 0
      %v2479 = vsel %vm373, %v2397, 0
      %v2482 = vsel %vm373, %v2398, 0
      %v2485 = vsel %vm373, %v2399, 0
      %v2488 = vsel %vm373, %v2400, 0
      %v2491 = vsel %vm373, %v2401, 0
      %v2494 = vsel %vm373, %v2402, 0
      %v2497 = vsel %vm373, %v2403, 0
      %v2500 = vsel %vm373, %v2404, 0
      %v2503 = vsel %vm373, %v2405, 0
      %v2506 = vsel %vm373, %v2406, 0
      %v2509 = vand.u32 %v2408, %v476
      %2511 = vmatprep.subr.bf16.mxu0 0
      %2512 = vmatpush1.bf16.msra.mxu0 %v2509
      %2513 = vmatprep.subr.bf16.mxu0 0
      %2514 = vmatpush1.bf16.msra.mxu0 0
      %2515 = vmatprep.subr.bf16.mxu0 0
      %2516 = vmatpush1.bf16.msra.mxu0 0
      %2517 = vmatprep.subr.bf16.mxu0 0
      %2518 = vmatpush1.bf16.msra.mxu0 0
      %2519 = vmatprep.subr.bf16.mxu0 0
      %2520 = vmatpush1.bf16.msra.mxu0 0
      %2521 = vmatprep.subr.bf16.mxu0 0
      %2522 = vmatpush1.bf16.msra.mxu0 0
      %2523 = vmatprep.subr.bf16.mxu0 0
      %2524 = vmatpush1.bf16.msra.mxu0 0
      %2525 = vmatprep.subr.bf16.mxu0 0
      %2526 = vmatpush1.bf16.msra.mxu0 0
      %2527 = vmatprep.subr.bf16.mxu0 0
      %2528 = vmatpush1.bf16.msra.mxu0 0
      %2529 = vmatprep.subr.bf16.mxu0 0
      %2530 = vmatpush1.bf16.msra.mxu0 0
      %2531 = vmatprep.subr.bf16.mxu0 0
      %2532 = vmatpush1.bf16.msra.mxu0 0
      %2533 = vmatprep.subr.bf16.mxu0 0
      %2534 = vmatpush1.bf16.msra.mxu0 0
      %2535 = vmatprep.subr.bf16.mxu0 0
      %2536 = vmatpush1.bf16.msra.mxu0 0
      %2537 = vmatprep.subr.bf16.mxu0 0
      %2538 = vmatpush1.bf16.msra.mxu0 0
      %2539 = vmatprep.subr.bf16.mxu0 0
      %2540 = vmatpush1.bf16.msra.mxu0 0
      %2541 = vmatprep.subr.bf16.mxu0 0
      %2542 = vmatpush1.bf16.msra.mxu0 0
      %2543 = vmatprep.mubr.bf16.mxu0 0
      %2544 = vmatmul.mubr.bf16.gmra.mrb[0].mxu0 %v2410
      %v2545 = vpop.f32.mrb[0].mxu0
      %v2546 = vadd.f32 0.0, %v2545
      %v2547 = vpop.f32.mrb[0].mxu0
      %v2548 = vpop.f32.mrb[0].mxu0
      %v2549 = vadd.f32 0.0, %v2548
      %v2550 = vpop.f32.mrb[0].mxu0
      %2551 = vmatprep.mubr.bf16.mxu0 0
      %2552 = vmatmul.mubr.bf16.gmra.mrb[0].mxu0 %v2413
      %v2553 = vpop.f32.mrb[0].mxu0
      %v2554 = vadd.f32 0.0, %v2553
      %v2555 = vpop.f32.mrb[0].mxu0
      %v2556 = vpop.f32.mrb[0].mxu0
      %v2557 = vadd.f32 0.0, %v2556
      %v2558 = vpop.f32.mrb[0].mxu0
      %2559 = vmatprep.mubr.bf16.mxu0 0
      %2560 = vmatmul.mubr.bf16.gmra.mrb[0].mxu0 %v2416
      %v2561 = vpop.f32.mrb[0].mxu0
      %v2562 = vadd.f32 0.0, %v2561
      %v2563 = vpop.f32.mrb[0].mxu0
      %v2564 = vpop.f32.mrb[0].mxu0
      %v2565 = vadd.f32 0.0, %v2564
      %v2566 = vpop.f32.mrb[0].mxu0
      %2567 = vmatprep.mubr.bf16.mxu0 0
      %2568 = vmatmul.mubr.bf16.gmra.mrb[0].mxu0 %v2419
      %v2569 = vpop.f32.mrb[0].mxu0
      %v2570 = vadd.f32 0.0, %v2569
      %v2571 = vpop.f32.mrb[0].mxu0
      %v2572 = vpop.f32.mrb[0].mxu0
      %v2573 = vadd.f32 0.0, %v2572
      %v2574 = vpop.f32.mrb[0].mxu0
      %2575 = vmatprep.mubr.bf16.mxu0 0
      %2576 = vmatmul.mubr.bf16.gmra.mrb[0].mxu0 %v2422
      %v2577 = vpop.f32.mrb[0].mxu0
      %v2578 = vadd.f32 0.0, %v2577
      %v2579 = vpop.f32.mrb[0].mxu0
      %v2580 = vpop.f32.mrb[0].mxu0
      %v2581 = vadd.f32 0.0, %v2580
      %v2582 = vpop.f32.mrb[0].mxu0
      %2583 = vmatprep.mubr.bf16.mxu0 0
      %2584 = vmatmul.mubr.bf16.gmra.mrb[0].mxu0 %v2425
      %v2585 = vpop.f32.mrb[0].mxu0
      %v2586 = vadd.f32 0.0, %v2585
      %v2587 = vpop.f32.mrb[0].mxu0
      %v2588 = vpop.f32.mrb[0].mxu0
      %v2589 = vadd.f32 0.0, %v2588
      %v2590 = vpop.f32.mrb[0].mxu0
      %2591 = vmatprep.mubr.bf16.mxu0 0
      %2592 = vmatmul.mubr.bf16.gmra.mrb[0].mxu0 %v2428
      %v2593 = vpop.f32.mrb[0].mxu0
      %v2594 = vadd.f32 0.0, %v2593
      %v2595 = vpop.f32.mrb[0].mxu0
      %v2596 = vpop.f32.mrb[0].mxu0
      %v2597 = vadd.f32 0.0, %v2596
      %v2598 = vpop.f32.mrb[0].mxu0
      %2599 = vmatprep.mubr.bf16.mxu0 0
      %2600 = vmatmul.mubr.bf16.gmra.mrb[0].mxu0 %v2431
      %v2601 = vpop.f32.mrb[0].mxu0
      %v2602 = vadd.f32 0.0, %v2601
      %v2603 = vpop.f32.mrb[0].mxu0
      %v2604 = vpop.f32.mrb[0].mxu0
      %v2605 = vadd.f32 0.0, %v2604
      %v2606 = vpop.f32.mrb[0].mxu0
      %2607 = vmatprep.mubr.bf16.mxu0 0
      %2608 = vmatmul.mubr.bf16.gmra.mrb[0].mxu0 %v2434
      %v2609 = vpop.f32.mrb[0].mxu0
      %v2610 = vadd.f32 0.0, %v2609
      %v2611 = vpop.f32.mrb[0].mxu0
      %v2612 = vpop.f32.mrb[0].mxu0
      %v2613 = vadd.f32 0.0, %v2612
      %v2614 = vpop.f32.mrb[0].mxu0
      %2615 = vmatprep.mubr.bf16.mxu0 0
      %2616 = vmatmul.mubr.bf16.gmra.mrb[0].mxu0 %v2437
      %v2617 = vpop.f32.mrb[0].mxu0
      %v2618 = vadd.f32 0.0, %v2617
      %v2619 = vpop.f32.mrb[0].mxu0
      %v2620 = vpop.f32.mrb[0].mxu0
      %v2621 = vadd.f32 0.0, %v2620
      %v2622 = vpop.f32.mrb[0].mxu0
      %2623 = vmatprep.mubr.bf16.mxu0 0
      %2624 = vmatmul.mubr.bf16.gmra.mrb[0].mxu0 %v2440
      %v2625 = vpop.f32.mrb[0].mxu0
      %v2626 = vadd.f32 0.0, %v2625
      %v2627 = vpop.f32.mrb[0].mxu0
      %v2628 = vpop.f32.mrb[0].mxu0
      %v2629 = vadd.f32 0.0, %v2628
      %v2630 = vpop.f32.mrb[0].mxu0
      %2631 = vmatprep.mubr.bf16.mxu0 0
      %2632 = vmatmul.mubr.bf16.gmra.mrb[0].mxu0 %v2443
      %v2633 = vpop.f32.mrb[0].mxu0
      %v2634 = vadd.f32 0.0, %v2633
      %v2635 = vpop.f32.mrb[0].mxu0
      %v2636 = vpop.f32.mrb[0].mxu0
      %v2637 = vadd.f32 0.0, %v2636
      %v2638 = vpop.f32.mrb[0].mxu0
      %2639 = vmatprep.mubr.bf16.mxu0 0
      %2640 = vmatmul.mubr.bf16.gmra.mrb[0].mxu0 %v2446
      %v2641 = vpop.f32.mrb[0].mxu0
      %v2642 = vadd.f32 0.0, %v2641
      %v2643 = vpop.f32.mrb[0].mxu0
      %v2644 = vpop.f32.mrb[0].mxu0
      %v2645 = vadd.f32 0.0, %v2644
      %v2646 = vpop.f32.mrb[0].mxu0
      %2647 = vmatprep.mubr.bf16.mxu0 0
      %2648 = vmatmul.mubr.bf16.gmra.mrb[0].mxu0 %v2449
      %v2649 = vpop.f32.mrb[0].mxu0
      %v2650 = vadd.f32 0.0, %v2649
      %v2651 = vpop.f32.mrb[0].mxu0
      %v2652 = vpop.f32.mrb[0].mxu0
      %v2653 = vadd.f32 0.0, %v2652
      %v2654 = vpop.f32.mrb[0].mxu0
      %2655 = vmatprep.mubr.bf16.mxu0 0
      %2656 = vmatmul.mubr.bf16.gmra.mrb[0].mxu0 %v2452
      %v2657 = vpop.f32.mrb[0].mxu0
      %v2658 = vadd.f32 0.0, %v2657
      %v2659 = vpop.f32.mrb[0].mxu0
      %v2660 = vpop.f32.mrb[0].mxu0
      %v2661 = vadd.f32 0.0, %v2660
      %v2662 = vpop.f32.mrb[0].mxu0
      %2663 = vmatprep.mubr.bf16.mxu0 0
      %2664 = vmatmul.mubr.bf16.gmra.mrb[0].mxu0 %v2455
      %v2665 = vpop.f32.mrb[0].mxu0
      %v2666 = vadd.f32 0.0, %v2665
      %v2667 = vpop.f32.mrb[0].mxu0
      %v2668 = vpop.f32.mrb[0].mxu0
      %v2669 = vadd.f32 0.0, %v2668
      %v2670 = vpop.f32.mrb[0].mxu0
      %2671 = vmatprep.mubr.bf16.mxu0 0
      %2672 = vmatmul.mubr.bf16.gmra.mrb[0].mxu0 %v2458
      %v2673 = vpop.f32.mrb[0].mxu0
      %v2674 = vadd.f32 0.0, %v2673
      %v2675 = vpop.f32.mrb[0].mxu0
      %v2676 = vpop.f32.mrb[0].mxu0
      %v2677 = vadd.f32 0.0, %v2676
      %v2678 = vpop.f32.mrb[0].mxu0
      %2679 = vmatprep.mubr.bf16.mxu0 0
      %2680 = vmatmul.mubr.bf16.gmra.mrb[0].mxu0 %v2461
      %v2681 = vpop.f32.mrb[0].mxu0
      %v2682 = vadd.f32 0.0, %v2681
      %v2683 = vpop.f32.mrb[0].mxu0
      %v2684 = vpop.f32.mrb[0].mxu0
      %v2685 = vadd.f32 0.0, %v2684
      %v2686 = vpop.f32.mrb[0].mxu0
      %2687 = vmatprep.mubr.bf16.mxu0 0
      %2688 = vmatmul.mubr.bf16.gmra.mrb[0].mxu0 %v2464
      %v2689 = vpop.f32.mrb[0].mxu0
      %v2690 = vadd.f32 0.0, %v2689
      %v2691 = vpop.f32.mrb[0].mxu0
      %v2692 = vpop.f32.mrb[0].mxu0
      %v2693 = vadd.f32 0.0, %v2692
      %v2694 = vpop.f32.mrb[0].mxu0
      %2695 = vmatprep.mubr.bf16.mxu0 0
      %2696 = vmatmul.mubr.bf16.gmra.mrb[0].mxu0 %v2467
      %v2697 = vpop.f32.mrb[0].mxu0
      %v2698 = vadd.f32 0.0, %v2697
      %v2699 = vpop.f32.mrb[0].mxu0
      %v2700 = vpop.f32.mrb[0].mxu0
      %v2701 = vadd.f32 0.0, %v2700
      %v2702 = vpop.f32.mrb[0].mxu0
      %2703 = vmatprep.mubr.bf16.mxu0 0
      %2704 = vmatmul.mubr.bf16.gmra.mrb[0].mxu0 %v2470
      %v2705 = vpop.f32.mrb[0].mxu0
      %v2706 = vadd.f32 0.0, %v2705
      %v2707 = vpop.f32.mrb[0].mxu0
      %v2708 = vpop.f32.mrb[0].mxu0
      %v2709 = vadd.f32 0.0, %v2708
      %v2710 = vpop.f32.mrb[0].mxu0
      %2711 = vmatprep.mubr.bf16.mxu0 0
      %2712 = vmatmul.mubr.bf16.gmra.mrb[0].mxu0 %v2473
      %v2713 = vpop.f32.mrb[0].mxu0
      %v2714 = vadd.f32 0.0, %v2713
      %v2715 = vpop.f32.mrb[0].mxu0
      %v2716 = vpop.f32.mrb[0].mxu0
      %v2717 = vadd.f32 0.0, %v2716
      %v2718 = vpop.f32.mrb[0].mxu0
      %2719 = vmatprep.mubr.bf16.mxu0 0
      %2720 = vmatmul.mubr.bf16.gmra.mrb[0].mxu0 %v2476
      %v2721 = vpop.f32.mrb[0].mxu0
      %v2722 = vadd.f32 0.0, %v2721
      %v2723 = vpop.f32.mrb[0].mxu0
      %v2724 = vpop.f32.mrb[0].mxu0
      %v2725 = vadd.f32 0.0, %v2724
      %v2726 = vpop.f32.mrb[0].mxu0
      %2727 = vmatprep.mubr.bf16.mxu0 0
      %2728 = vmatmul.mubr.bf16.gmra.mrb[0].mxu0 %v2479
      %v2729 = vpop.f32.mrb[0].mxu0
      %v2730 = vadd.f32 0.0, %v2729
      %v2731 = vpop.f32.mrb[0].mxu0
      %v2732 = vpop.f32.mrb[0].mxu0
      %v2733 = vadd.f32 0.0, %v2732
      %v2734 = vpop.f32.mrb[0].mxu0
      %2735 = vmatprep.mubr.bf16.mxu0 0
      %2736 = vmatmul.mubr.bf16.gmra.mrb[0].mxu0 %v2482
      %v2737 = vpop.f32.mrb[0].mxu0
      %v2738 = vadd.f32 0.0, %v2737
      %v2739 = vpop.f32.mrb[0].mxu0
      %v2740 = vpop.f32.mrb[0].mxu0
      %v2741 = vadd.f32 0.0, %v2740
      %v2742 = vpop.f32.mrb[0].mxu0
      %2743 = vmatprep.mubr.bf16.mxu0 0
      %2744 = vmatmul.mubr.bf16.gmra.mrb[0].mxu0 %v2485
      %v2745 = vpop.f32.mrb[0].mxu0
      %v2746 = vadd.f32 0.0, %v2745
      %v2747 = vpop.f32.mrb[0].mxu0
      %v2748 = vpop.f32.mrb[0].mxu0
      %v2749 = vadd.f32 0.0, %v2748
      %v2750 = vpop.f32.mrb[0].mxu0
      %2751 = vmatprep.mubr.bf16.mxu0 0
      %2752 = vmatmul.mubr.bf16.gmra.mrb[0].mxu0 %v2488
      %v2753 = vpop.f32.mrb[0].mxu0
      %v2754 = vadd.f32 0.0, %v2753
      %v2755 = vpop.f32.mrb[0].mxu0
      %v2756 = vpop.f32.mrb[0].mxu0
      %v2757 = vadd.f32 0.0, %v2756
      %v2758 = vpop.f32.mrb[0].mxu0
      %2759 = vmatprep.mubr.bf16.mxu0 0
      %2760 = vmatmul.mubr.bf16.gmra.mrb[0].mxu0 %v2491
      %v2761 = vpop.f32.mrb[0].mxu0
      %v2762 = vadd.f32 0.0, %v2761
      %v2763 = vpop.f32.mrb[0].mxu0
      %v2764 = vpop.f32.mrb[0].mxu0
      %v2765 = vadd.f32 0.0, %v2764
      %v2766 = vpop.f32.mrb[0].mxu0
      %2767 = vmatprep.mubr.bf16.mxu0 0
      %2768 = vmatmul.mubr.bf16.gmra.mrb[0].mxu0 %v2494
      %v2769 = vpop.f32.mrb[0].mxu0
      %v2770 = vadd.f32 0.0, %v2769
      %v2771 = vpop.f32.mrb[0].mxu0
      %v2772 = vpop.f32.mrb[0].mxu0
      %v2773 = vadd.f32 0.0, %v2772
      %v2774 = vpop.f32.mrb[0].mxu0
      %2775 = vmatprep.mubr.bf16.mxu0 0
      %2776 = vmatmul.mubr.bf16.gmra.mrb[0].mxu0 %v2497
      %v2777 = vpop.f32.mrb[0].mxu0
      %v2778 = vadd.f32 0.0, %v2777
      %v2779 = vpop.f32.mrb[0].mxu0
      %v2780 = vpop.f32.mrb[0].mxu0
      %v2781 = vadd.f32 0.0, %v2780
      %v2782 = vpop.f32.mrb[0].mxu0
      %2783 = vmatprep.mubr.bf16.mxu0 0
      %2784 = vmatmul.mubr.bf16.gmra.mrb[0].mxu0 %v2500
      %v2785 = vpop.f32.mrb[0].mxu0
      %v2786 = vadd.f32 0.0, %v2785
      %v2787 = vpop.f32.mrb[0].mxu0
      %v2788 = vpop.f32.mrb[0].mxu0
      %v2789 = vadd.f32 0.0, %v2788
      %v2790 = vpop.f32.mrb[0].mxu0
      %2791 = vmatprep.mubr.bf16.mxu0 0
      %2792 = vmatmul.mubr.bf16.gmra.mrb[0].mxu0 %v2503
      %v2793 = vpop.f32.mrb[0].mxu0
      %v2794 = vadd.f32 0.0, %v2793
      %v2795 = vpop.f32.mrb[0].mxu0
      %v2796 = vpop.f32.mrb[0].mxu0
      %v2797 = vadd.f32 0.0, %v2796
      %v2798 = vpop.f32.mrb[0].mxu0
      %2799 = vmatprep.mubr.bf16.mxu0 0
      %2800 = vmatmul.mubr.bf16.gmra.mrb[0].mxu0 %v2506
      %v2801 = vpop.f32.mrb[0].mxu0
      %v2802 = vadd.f32 0.0, %v2801
      %v2803 = vpop.f32.mrb[0].mxu0
      %v2804 = vpop.f32.mrb[0].mxu0
      %v2805 = vadd.f32 0.0, %v2804
      %v2806 = vpop.f32.mrb[0].mxu0
      %2807 = vdwg.mxu0
      %v2808 = vadd.f32 %v2242, %v2546
      %v2809 = vadd.f32 %v2243, %v2549
      %v2810 = vadd.f32 %v2244, %v2554
      %v2811 = vadd.f32 %v2245, %v2557
      %v2812 = vadd.f32 %v2246, %v2562
      %v2813 = vadd.f32 %v2247, %v2565
      %v2814 = vadd.f32 %v2248, %v2570
      %v2815 = vadd.f32 %v2249, %v2573
      %v2816 = vadd.f32 %v2250, %v2578
      %v2817 = vadd.f32 %v2251, %v2581
      %v2818 = vadd.f32 %v2252, %v2586
      %v2819 = vadd.f32 %v2253, %v2589
      %v2820 = vadd.f32 %v2254, %v2594
      %v2821 = vadd.f32 %v2255, %v2597
      %v2822 = vadd.f32 %v2256, %v2602
      %v2823 = vadd.f32 %v2257, %v2605
      %v2824 = vadd.f32 %v2258, %v2610
      %v2825 = vadd.f32 %v2259, %v2613
      %v2826 = vadd.f32 %v2260, %v2618
      %v2827 = vadd.f32 %v2261, %v2621
      %v2828 = vadd.f32 %v2262, %v2626
      %v2829 = vadd.f32 %v2263, %v2629
      %v2830 = vadd.f32 %v2264, %v2634
      %v2831 = vadd.f32 %v2265, %v2637
      %v2832 = vadd.f32 %v2266, %v2642
      %v2833 = vadd.f32 %v2267, %v2645
      %v2834 = vadd.f32 %v2268, %v2650
      %v2835 = vadd.f32 %v2269, %v2653
      %v2836 = vadd.f32 %v2270, %v2658
      %v2837 = vadd.f32 %v2271, %v2661
      %v2838 = vadd.f32 %v2272, %v2666
      %v2839 = vadd.f32 %v2273, %v2669
      %v2840 = vadd.f32 %v2274, %v2674
      %v2841 = vadd.f32 %v2275, %v2677
      %v2842 = vadd.f32 %v2276, %v2682
      %v2843 = vadd.f32 %v2277, %v2685
      %v2844 = vadd.f32 %v2278, %v2690
      %v2845 = vadd.f32 %v2279, %v2693
      %v2846 = vadd.f32 %v2280, %v2698
      %v2847 = vadd.f32 %v2281, %v2701
      %v2848 = vadd.f32 %v2282, %v2706
      %v2849 = vadd.f32 %v2283, %v2709
      %v2850 = vadd.f32 %v2284, %v2714
      %v2851 = vadd.f32 %v2285, %v2717
      %v2852 = vadd.f32 %v2286, %v2722
      %v2853 = vadd.f32 %v2287, %v2725
      %v2854 = vadd.f32 %v2288, %v2730
      %v2855 = vadd.f32 %v2289, %v2733
      %v2856 = vadd.f32 %v2290, %v2738
      %v2857 = vadd.f32 %v2291, %v2741
      %v2858 = vadd.f32 %v2292, %v2746
      %v2859 = vadd.f32 %v2293, %v2749
      %v2860 = vadd.f32 %v2294, %v2754
      %v2861 = vadd.f32 %v2295, %v2757
      %v2862 = vadd.f32 %v2296, %v2762
      %v2863 = vadd.f32 %v2297, %v2765
      %v2864 = vadd.f32 %v2298, %v2770
      %v2865 = vadd.f32 %v2299, %v2773
      %v2866 = vadd.f32 %v2300, %v2778
      %v2867 = vadd.f32 %v2301, %v2781
      %v2868 = vadd.f32 %v2302, %v2786
      %v2869 = vadd.f32 %v2303, %v2789
      %v2870 = vadd.f32 %v2304, %v2794
      %v2871 = vadd.f32 %v2305, %v2797
      %v2872 = vadd.f32 %v2306, %v2802
      %v2873 = vadd.f32 %v2307, %v2805
      %v2874 = vld [vmem:[%s165 + $0x1a] sm:$0xff]
      %v2875 = vld [vmem:[%s165 + $0x22] sm:$0xff]
      %v2876 = vld [vmem:[%s165 + $0x2a] sm:$0xff]
      %v2877 = vld [vmem:[%s165 + $0x32] sm:$0xff]
      %v2878 = vld [vmem:[%s165 + $0x3a] sm:$0xff]
      %v2879 = vld [vmem:[%s165 + $0x42] sm:$0xff]
      %v2880 = vld [vmem:[%s165 + $0x4a] sm:$0xff]
      %v2881 = vld [vmem:[%s165 + $0x52] sm:$0xff]
      %v2882 = vld [vmem:[%s165 + $0x5a] sm:$0xff]
      %v2883 = vld [vmem:[%s165 + $0x62] sm:$0xff]
      %v2884 = vld [vmem:[%s165 + $0x6a] sm:$0xff]
      %v2885 = vld [vmem:[%s165 + $0x72] sm:$0xff]
      %v2886 = vld [vmem:[%s165 + $0x7a] sm:$0xff]
      %v2887 = vld [vmem:[%s165 + $0x82] sm:$0xff]
      %v2888 = vld [vmem:[%s165 + $0x8a] sm:$0xff]
      %v2889 = vld [vmem:[%s165 + $0x92] sm:$0xff]
      %v2890 = vld [vmem:[%s165 + $0x9a] sm:$0xff]
      %v2891 = vld [vmem:[%s165 + $0xa2] sm:$0xff]
      %v2892 = vld [vmem:[%s165 + $0xaa] sm:$0xff]
      %v2893 = vld [vmem:[%s165 + $0xb2] sm:$0xff]
      %v2894 = vld [vmem:[%s165 + $0xba] sm:$0xff]
      %v2895 = vld [vmem:[%s165 + $0xc2] sm:$0xff]
      %v2896 = vld [vmem:[%s165 + $0xca] sm:$0xff]
      %v2897 = vld [vmem:[%s165 + $0xd2] sm:$0xff]
      %v2898 = vld [vmem:[%s165 + $0xda] sm:$0xff]
      %v2899 = vld [vmem:[%s165 + $0xe2] sm:$0xff]
      %v2900 = vld [vmem:[%s165 + $0xea] sm:$0xff]
      %v2901 = vld [vmem:[%s165 + $0xf2] sm:$0xff]
      %v2902 = vld [vmem:[%s165 + $0xfa] sm:$0xff]
      %v2903 = vld [vmem:[%s165 + $0x102] sm:$0xff]
      %v2904 = vld [vmem:[%s165 + $0x10a] sm:$0xff]
      %v2905 = vld [vmem:[%s165 + $0x112] sm:$0xff]
      %v2906 = vld [vmem:[%s165 + $0x11a] sm:$0xff]
      %v2907 = vld [vmem:[%s165 + $0x122] sm:$0xff]
      %v2908 = vld [vmem:[%s165 + $0x12a] sm:$0xff]
      %v2909 = vld [vmem:[%s165 + $0x132] sm:$0xff]
      %v2910 = vld [vmem:[%s165 + $0x13a] sm:$0xff]
      %v2911 = vld [vmem:[%s165 + $0x142] sm:$0xff]
      %v2912 = vld [vmem:[%s165 + $0x14a] sm:$0xff]
      %v2913 = vld [vmem:[%s165 + $0x152] sm:$0xff]
      %v2914 = vld [vmem:[%s165 + $0x15a] sm:$0xff]
      %v2915 = vld [vmem:[%s165 + $0x162] sm:$0xff]
      %v2916 = vld [vmem:[%s165 + $0x16a] sm:$0xff]
      %v2917 = vld [vmem:[%s165 + $0x172] sm:$0xff]
      %v2918 = vld [vmem:[%s165 + $0x17a] sm:$0xff]
      %v2919 = vld [vmem:[%s165 + $0x182] sm:$0xff]
      %v2920 = vld [vmem:[%s165 + $0x18a] sm:$0xff]
      %v2921 = vld [vmem:[%s165 + $0x192] sm:$0xff]
      %v2922 = vld [vmem:[%s165 + $0x19a] sm:$0xff]
      %v2923 = vld [vmem:[%s165 + $0x1a2] sm:$0xff]
      %v2924 = vld [vmem:[%s165 + $0x1aa] sm:$0xff]
      %v2925 = vld [vmem:[%s165 + $0x1b2] sm:$0xff]
      %v2926 = vld [vmem:[%s165 + $0x1ba] sm:$0xff]
      %v2927 = vld [vmem:[%s165 + $0x1c2] sm:$0xff]
      %v2928 = vld [vmem:[%s165 + $0x1ca] sm:$0xff]
      %v2929 = vld [vmem:[%s165 + $0x1d2] sm:$0xff]
      %v2930 = vld [vmem:[%s165 + $0x1da] sm:$0xff]
      %v2931 = vld [vmem:[%s165 + $0x1e2] sm:$0xff]
      %v2932 = vld [vmem:[%s165 + $0x1ea] sm:$0xff]
      %v2933 = vld [vmem:[%s165 + $0x1f2] sm:$0xff]
      %v2934 = vld [vmem:[%s165 + $0x1fa] sm:$0xff]
      %v2935 = vld [vmem:[%s165 + $0x202] sm:$0xff]
      %v2936 = vld [vmem:[%s165 + $0x20a] sm:$0xff]
      %v2937 = vld [vmem:[%s165 + $0x212] sm:$0xff]
      %v2938 = vld [vmem:[%s165 + $0x21a] sm:$0xff]
      %v2939 = vld [vmem:[%s165 + $0x222] sm:$0x3f]
      %v2940 = vpack.c.bf16 %v2875, %v2874
      %v2941 = vpack.c.bf16 %v2877, %v2876
      %v2942 = vpack.c.bf16 %v2879, %v2878
      %v2943 = vpack.c.bf16 %v2881, %v2880
      %v2944 = vpack.c.bf16 %v2883, %v2882
      %v2945 = vpack.c.bf16 %v2885, %v2884
      %v2946 = vpack.c.bf16 %v2887, %v2886
      %v2947 = vpack.c.bf16 %v2889, %v2888
      %v2948 = vpack.c.bf16 %v2891, %v2890
      %v2949 = vpack.c.bf16 %v2893, %v2892
      %v2950 = vpack.c.bf16 %v2895, %v2894
      %v2951 = vpack.c.bf16 %v2897, %v2896
      %v2952 = vpack.c.bf16 %v2899, %v2898
      %v2953 = vpack.c.bf16 %v2901, %v2900
      %v2954 = vpack.c.bf16 %v2903, %v2902
      %v2955 = vpack.c.bf16 %v2905, %v2904
      %v2956 = vpack.c.bf16 %v2907, %v2906
      %v2957 = vpack.c.bf16 %v2909, %v2908
      %v2958 = vpack.c.bf16 %v2911, %v2910
      %v2959 = vpack.c.bf16 %v2913, %v2912
      %v2960 = vpack.c.bf16 %v2915, %v2914
      %v2961 = vpack.c.bf16 %v2917, %v2916
      %v2962 = vpack.c.bf16 %v2919, %v2918
      %v2963 = vpack.c.bf16 %v2921, %v2920
      %v2964 = vpack.c.bf16 %v2923, %v2922
      %v2965 = vpack.c.bf16 %v2925, %v2924
      %v2966 = vpack.c.bf16 %v2927, %v2926
      %v2967 = vpack.c.bf16 %v2929, %v2928
      %v2968 = vpack.c.bf16 %v2931, %v2930
      %v2969 = vpack.c.bf16 %v2933, %v2932
      %v2970 = vpack.c.bf16 %v2935, %v2934
      %v2971 = vpack.c.bf16 %v2937, %v2936
      %v2972 = vpack.c.bf16 %v2939, %v2938
      %s2973 = scalar_lea.vmem %s1, 10
      %v2974 = vld [vmem:[%s2973] sm:$0x3]
      %v2976 = vsel %vm373, %v2940, 0
      %v2979 = vsel %vm373, %v2941, 0
      %v2982 = vsel %vm373, %v2942, 0
      %v2985 = vsel %vm373, %v2943, 0
      %v2988 = vsel %vm373, %v2944, 0
      %v2991 = vsel %vm373, %v2945, 0
      %v2994 = vsel %vm373, %v2946, 0
      %v2997 = vsel %vm373, %v2947, 0
      %v3000 = vsel %vm373, %v2948, 0
      %v3003 = vsel %vm373, %v2949, 0
      %v3006 = vsel %vm373, %v2950, 0
      %v3009 = vsel %vm373, %v2951, 0
      %v3012 = vsel %vm373, %v2952, 0
      %v3015 = vsel %vm373, %v2953, 0
      %v3018 = vsel %vm373, %v2954, 0
      %v3021 = vsel %vm373, %v2955, 0
      %v3024 = vsel %vm373, %v2956, 0
      %v3027 = vsel %vm373, %v2957, 0
      %v3030 = vsel %vm373, %v2958, 0
      %v3033 = vsel %vm373, %v2959, 0
      %v3036 = vsel %vm373, %v2960, 0
      %v3039 = vsel %vm373, %v2961, 0
      %v3042 = vsel %vm373, %v2962, 0
      %v3045 = vsel %vm373, %v2963, 0
      %v3048 = vsel %vm373, %v2964, 0
      %v3051 = vsel %vm373, %v2965, 0
      %v3054 = vsel %vm373, %v2966, 0
      %v3057 = vsel %vm373, %v2967, 0
      %v3060 = vsel %vm373, %v2968, 0
      %v3063 = vsel %vm373, %v2969, 0
      %v3066 = vsel %vm373, %v2970, 0
      %v3069 = vsel %vm373, %v2971, 0
      %v3072 = vsel %vm373, %v2972, 0
      %v3075 = vand.u32 %v2974, %v476
      %3077 = vmatprep.subr.bf16.mxu0 0
      %3078 = vmatpush1.bf16.msra.mxu0 %v3075
      %3079 = vmatprep.subr.bf16.mxu0 0
      %3080 = vmatpush1.bf16.msra.mxu0 0
      %3081 = vmatprep.subr.bf16.mxu0 0
      %3082 = vmatpush1.bf16.msra.mxu0 0
      %3083 = vmatprep.subr.bf16.mxu0 0
      %3084 = vmatpush1.bf16.msra.mxu0 0
      %3085 = vmatprep.subr.bf16.mxu0 0
      %3086 = vmatpush1.bf16.msra.mxu0 0
      %3087 = vmatprep.subr.bf16.mxu0 0
      %3088 = vmatpush1.bf16.msra.mxu0 0
      %3089 = vmatprep.subr.bf16.mxu0 0
      %3090 = vmatpush1.bf16.msra.mxu0 0
      %3091 = vmatprep.subr.bf16.mxu0 0
      %3092 = vmatpush1.bf16.msra.mxu0 0
      %3093 = vmatprep.subr.bf16.mxu0 0
      %3094 = vmatpush1.bf16.msra.mxu0 0
      %3095 = vmatprep.subr.bf16.mxu0 0
      %3096 = vmatpush1.bf16.msra.mxu0 0
      %3097 = vmatprep.subr.bf16.mxu0 0
      %3098 = vmatpush1.bf16.msra.mxu0 0
      %3099 = vmatprep.subr.bf16.mxu0 0
      %3100 = vmatpush1.bf16.msra.mxu0 0
      %3101 = vmatprep.subr.bf16.mxu0 0
      %3102 = vmatpush1.bf16.msra.mxu0 0
      %3103 = vmatprep.subr.bf16.mxu0 0
      %3104 = vmatpush1.bf16.msra.mxu0 0
      %3105 = vmatprep.subr.bf16.mxu0 0
      %3106 = vmatpush1.bf16.msra.mxu0 0
      %3107 = vmatprep.subr.bf16.mxu0 0
      %3108 = vmatpush1.bf16.msra.mxu0 0
      %3109 = vmatprep.mubr.bf16.mxu0 0
      %3110 = vmatmul.mubr.bf16.gmra.mrb[0].mxu0 %v2976
      %v3111 = vpop.f32.mrb[0].mxu0
      %v3112 = vadd.f32 0.0, %v3111
      %v3113 = vpop.f32.mrb[0].mxu0
      %v3114 = vpop.f32.mrb[0].mxu0
      %v3115 = vadd.f32 0.0, %v3114
      %v3116 = vpop.f32.mrb[0].mxu0
      %3117 = vmatprep.mubr.bf16.mxu0 0
      %3118 = vmatmul.mubr.bf16.gmra.mrb[0].mxu0 %v2979
      %v3119 = vpop.f32.mrb[0].mxu0
      %v3120 = vadd.f32 0.0, %v3119
      %v3121 = vpop.f32.mrb[0].mxu0
      %v3122 = vpop.f32.mrb[0].mxu0
      %v3123 = vadd.f32 0.0, %v3122
      %v3124 = vpop.f32.mrb[0].mxu0
      %3125 = vmatprep.mubr.bf16.mxu0 0
      %3126 = vmatmul.mubr.bf16.gmra.mrb[0].mxu0 %v2982
      %v3127 = vpop.f32.mrb[0].mxu0
      %v3128 = vadd.f32 0.0, %v3127
      %v3129 = vpop.f32.mrb[0].mxu0
      %v3130 = vpop.f32.mrb[0].mxu0
      %v3131 = vadd.f32 0.0, %v3130
      %v3132 = vpop.f32.mrb[0].mxu0
      %3133 = vmatprep.mubr.bf16.mxu0 0
      %3134 = vmatmul.mubr.bf16.gmra.mrb[0].mxu0 %v2985
      %v3135 = vpop.f32.mrb[0].mxu0
      %v3136 = vadd.f32 0.0, %v3135
      %v3137 = vpop.f32.mrb[0].mxu0
      %v3138 = vpop.f32.mrb[0].mxu0
      %v3139 = vadd.f32 0.0, %v3138
      %v3140 = vpop.f32.mrb[0].mxu0
      %3141 = vmatprep.mubr.bf16.mxu0 0
      %3142 = vmatmul.mubr.bf16.gmra.mrb[0].mxu0 %v2988
      %v3143 = vpop.f32.mrb[0].mxu0
      %v3144 = vadd.f32 0.0, %v3143
      %v3145 = vpop.f32.mrb[0].mxu0
      %v3146 = vpop.f32.mrb[0].mxu0
      %v3147 = vadd.f32 0.0, %v3146
      %v3148 = vpop.f32.mrb[0].mxu0
      %3149 = vmatprep.mubr.bf16.mxu0 0
      %3150 = vmatmul.mubr.bf16.gmra.mrb[0].mxu0 %v2991
      %v3151 = vpop.f32.mrb[0].mxu0
      %v3152 = vadd.f32 0.0, %v3151
      %v3153 = vpop.f32.mrb[0].mxu0
      %v3154 = vpop.f32.mrb[0].mxu0
      %v3155 = vadd.f32 0.0, %v3154
      %v3156 = vpop.f32.mrb[0].mxu0
      %3157 = vmatprep.mubr.bf16.mxu0 0
      %3158 = vmatmul.mubr.bf16.gmra.mrb[0].mxu0 %v2994
      %v3159 = vpop.f32.mrb[0].mxu0
      %v3160 = vadd.f32 0.0, %v3159
      %v3161 = vpop.f32.mrb[0].mxu0
      %v3162 = vpop.f32.mrb[0].mxu0
      %v3163 = vadd.f32 0.0, %v3162
      %v3164 = vpop.f32.mrb[0].mxu0
      %3165 = vmatprep.mubr.bf16.mxu0 0
      %3166 = vmatmul.mubr.bf16.gmra.mrb[0].mxu0 %v2997
      %v3167 = vpop.f32.mrb[0].mxu0
      %v3168 = vadd.f32 0.0, %v3167
      %v3169 = vpop.f32.mrb[0].mxu0
      %v3170 = vpop.f32.mrb[0].mxu0
      %v3171 = vadd.f32 0.0, %v3170
      %v3172 = vpop.f32.mrb[0].mxu0
      %3173 = vmatprep.mubr.bf16.mxu0 0
      %3174 = vmatmul.mubr.bf16.gmra.mrb[0].mxu0 %v3000
      %v3175 = vpop.f32.mrb[0].mxu0
      %v3176 = vadd.f32 0.0, %v3175
      %v3177 = vpop.f32.mrb[0].mxu0
      %v3178 = vpop.f32.mrb[0].mxu0
      %v3179 = vadd.f32 0.0, %v3178
      %v3180 = vpop.f32.mrb[0].mxu0
      %3181 = vmatprep.mubr.bf16.mxu0 0
      %3182 = vmatmul.mubr.bf16.gmra.mrb[0].mxu0 %v3003
      %v3183 = vpop.f32.mrb[0].mxu0
      %v3184 = vadd.f32 0.0, %v3183
      %v3185 = vpop.f32.mrb[0].mxu0
      %v3186 = vpop.f32.mrb[0].mxu0
      %v3187 = vadd.f32 0.0, %v3186
      %v3188 = vpop.f32.mrb[0].mxu0
      %3189 = vmatprep.mubr.bf16.mxu0 0
      %3190 = vmatmul.mubr.bf16.gmra.mrb[0].mxu0 %v3006
      %v3191 = vpop.f32.mrb[0].mxu0
      %v3192 = vadd.f32 0.0, %v3191
      %v3193 = vpop.f32.mrb[0].mxu0
      %v3194 = vpop.f32.mrb[0].mxu0
      %v3195 = vadd.f32 0.0, %v3194
      %v3196 = vpop.f32.mrb[0].mxu0
      %3197 = vmatprep.mubr.bf16.mxu0 0
      %3198 = vmatmul.mubr.bf16.gmra.mrb[0].mxu0 %v3009
      %v3199 = vpop.f32.mrb[0].mxu0
      %v3200 = vadd.f32 0.0, %v3199
      %v3201 = vpop.f32.mrb[0].mxu0
      %v3202 = vpop.f32.mrb[0].mxu0
      %v3203 = vadd.f32 0.0, %v3202
      %v3204 = vpop.f32.mrb[0].mxu0
      %3205 = vmatprep.mubr.bf16.mxu0 0
      %3206 = vmatmul.mubr.bf16.gmra.mrb[0].mxu0 %v3012
      %v3207 = vpop.f32.mrb[0].mxu0
      %v3208 = vadd.f32 0.0, %v3207
      %v3209 = vpop.f32.mrb[0].mxu0
      %v3210 = vpop.f32.mrb[0].mxu0
      %v3211 = vadd.f32 0.0, %v3210
      %v3212 = vpop.f32.mrb[0].mxu0
      %3213 = vmatprep.mubr.bf16.mxu0 0
      %3214 = vmatmul.mubr.bf16.gmra.mrb[0].mxu0 %v3015
      %v3215 = vpop.f32.mrb[0].mxu0
      %v3216 = vadd.f32 0.0, %v3215
      %v3217 = vpop.f32.mrb[0].mxu0
      %v3218 = vpop.f32.mrb[0].mxu0
      %v3219 = vadd.f32 0.0, %v3218
      %v3220 = vpop.f32.mrb[0].mxu0
      %3221 = vmatprep.mubr.bf16.mxu0 0
      %3222 = vmatmul.mubr.bf16.gmra.mrb[0].mxu0 %v3018
      %v3223 = vpop.f32.mrb[0].mxu0
      %v3224 = vadd.f32 0.0, %v3223
      %v3225 = vpop.f32.mrb[0].mxu0
      %v3226 = vpop.f32.mrb[0].mxu0
      %v3227 = vadd.f32 0.0, %v3226
      %v3228 = vpop.f32.mrb[0].mxu0
      %3229 = vmatprep.mubr.bf16.mxu0 0
      %3230 = vmatmul.mubr.bf16.gmra.mrb[0].mxu0 %v3021
      %v3231 = vpop.f32.mrb[0].mxu0
      %v3232 = vadd.f32 0.0, %v3231
      %v3233 = vpop.f32.mrb[0].mxu0
      %v3234 = vpop.f32.mrb[0].mxu0
      %v3235 = vadd.f32 0.0, %v3234
      %v3236 = vpop.f32.mrb[0].mxu0
      %3237 = vmatprep.mubr.bf16.mxu0 0
      %3238 = vmatmul.mubr.bf16.gmra.mrb[0].mxu0 %v3024
      %v3239 = vpop.f32.mrb[0].mxu0
      %v3240 = vadd.f32 0.0, %v3239
      %v3241 = vpop.f32.mrb[0].mxu0
      %v3242 = vpop.f32.mrb[0].mxu0
      %v3243 = vadd.f32 0.0, %v3242
      %v3244 = vpop.f32.mrb[0].mxu0
      %3245 = vmatprep.mubr.bf16.mxu0 0
      %3246 = vmatmul.mubr.bf16.gmra.mrb[0].mxu0 %v3027
      %v3247 = vpop.f32.mrb[0].mxu0
      %v3248 = vadd.f32 0.0, %v3247
      %v3249 = vpop.f32.mrb[0].mxu0
      %v3250 = vpop.f32.mrb[0].mxu0
      %v3251 = vadd.f32 0.0, %v3250
      %v3252 = vpop.f32.mrb[0].mxu0
      %3253 = vmatprep.mubr.bf16.mxu0 0
      %3254 = vmatmul.mubr.bf16.gmra.mrb[0].mxu0 %v3030
      %v3255 = vpop.f32.mrb[0].mxu0
      %v3256 = vadd.f32 0.0, %v3255
      %v3257 = vpop.f32.mrb[0].mxu0
      %v3258 = vpop.f32.mrb[0].mxu0
      %v3259 = vadd.f32 0.0, %v3258
      %v3260 = vpop.f32.mrb[0].mxu0
      %3261 = vmatprep.mubr.bf16.mxu0 0
      %3262 = vmatmul.mubr.bf16.gmra.mrb[0].mxu0 %v3033
      %v3263 = vpop.f32.mrb[0].mxu0
      %v3264 = vadd.f32 0.0, %v3263
      %v3265 = vpop.f32.mrb[0].mxu0
      %v3266 = vpop.f32.mrb[0].mxu0
      %v3267 = vadd.f32 0.0, %v3266
      %v3268 = vpop.f32.mrb[0].mxu0
      %3269 = vmatprep.mubr.bf16.mxu0 0
      %3270 = vmatmul.mubr.bf16.gmra.mrb[0].mxu0 %v3036
      %v3271 = vpop.f32.mrb[0].mxu0
      %v3272 = vadd.f32 0.0, %v3271
      %v3273 = vpop.f32.mrb[0].mxu0
      %v3274 = vpop.f32.mrb[0].mxu0
      %v3275 = vadd.f32 0.0, %v3274
      %v3276 = vpop.f32.mrb[0].mxu0
      %3277 = vmatprep.mubr.bf16.mxu0 0
      %3278 = vmatmul.mubr.bf16.gmra.mrb[0].mxu0 %v3039
      %v3279 = vpop.f32.mrb[0].mxu0
      %v3280 = vadd.f32 0.0, %v3279
      %v3281 = vpop.f32.mrb[0].mxu0
      %v3282 = vpop.f32.mrb[0].mxu0
      %v3283 = vadd.f32 0.0, %v3282
      %v3284 = vpop.f32.mrb[0].mxu0
      %3285 = vmatprep.mubr.bf16.mxu0 0
      %3286 = vmatmul.mubr.bf16.gmra.mrb[0].mxu0 %v3042
      %v3287 = vpop.f32.mrb[0].mxu0
      %v3288 = vadd.f32 0.0, %v3287
      %v3289 = vpop.f32.mrb[0].mxu0
      %v3290 = vpop.f32.mrb[0].mxu0
      %v3291 = vadd.f32 0.0, %v3290
      %v3292 = vpop.f32.mrb[0].mxu0
      %3293 = vmatprep.mubr.bf16.mxu0 0
      %3294 = vmatmul.mubr.bf16.gmra.mrb[0].mxu0 %v3045
      %v3295 = vpop.f32.mrb[0].mxu0
      %v3296 = vadd.f32 0.0, %v3295
      %v3297 = vpop.f32.mrb[0].mxu0
      %v3298 = vpop.f32.mrb[0].mxu0
      %v3299 = vadd.f32 0.0, %v3298
      %v3300 = vpop.f32.mrb[0].mxu0
      %3301 = vmatprep.mubr.bf16.mxu0 0
      %3302 = vmatmul.mubr.bf16.gmra.mrb[0].mxu0 %v3048
      %v3303 = vpop.f32.mrb[0].mxu0
      %v3304 = vadd.f32 0.0, %v3303
      %v3305 = vpop.f32.mrb[0].mxu0
      %v3306 = vpop.f32.mrb[0].mxu0
      %v3307 = vadd.f32 0.0, %v3306
      %v3308 = vpop.f32.mrb[0].mxu0
      %3309 = vmatprep.mubr.bf16.mxu0 0
      %3310 = vmatmul.mubr.bf16.gmra.mrb[0].mxu0 %v3051
      %v3311 = vpop.f32.mrb[0].mxu0
      %v3312 = vadd.f32 0.0, %v3311
      %v3313 = vpop.f32.mrb[0].mxu0
      %v3314 = vpop.f32.mrb[0].mxu0
      %v3315 = vadd.f32 0.0, %v3314
      %v3316 = vpop.f32.mrb[0].mxu0
      %3317 = vmatprep.mubr.bf16.mxu0 0
      %3318 = vmatmul.mubr.bf16.gmra.mrb[0].mxu0 %v3054
      %v3319 = vpop.f32.mrb[0].mxu0
      %v3320 = vadd.f32 0.0, %v3319
      %v3321 = vpop.f32.mrb[0].mxu0
      %v3322 = vpop.f32.mrb[0].mxu0
      %v3323 = vadd.f32 0.0, %v3322
      %v3324 = vpop.f32.mrb[0].mxu0
      %3325 = vmatprep.mubr.bf16.mxu0 0
      %3326 = vmatmul.mubr.bf16.gmra.mrb[0].mxu0 %v3057
      %v3327 = vpop.f32.mrb[0].mxu0
      %v3328 = vadd.f32 0.0, %v3327
      %v3329 = vpop.f32.mrb[0].mxu0
      %v3330 = vpop.f32.mrb[0].mxu0
      %v3331 = vadd.f32 0.0, %v3330
      %v3332 = vpop.f32.mrb[0].mxu0
      %3333 = vmatprep.mubr.bf16.mxu0 0
      %3334 = vmatmul.mubr.bf16.gmra.mrb[0].mxu0 %v3060
      %v3335 = vpop.f32.mrb[0].mxu0
      %v3336 = vadd.f32 0.0, %v3335
      %v3337 = vpop.f32.mrb[0].mxu0
      %v3338 = vpop.f32.mrb[0].mxu0
      %v3339 = vadd.f32 0.0, %v3338
      %v3340 = vpop.f32.mrb[0].mxu0
      %3341 = vmatprep.mubr.bf16.mxu0 0
      %3342 = vmatmul.mubr.bf16.gmra.mrb[0].mxu0 %v3063
      %v3343 = vpop.f32.mrb[0].mxu0
      %v3344 = vadd.f32 0.0, %v3343
      %v3345 = vpop.f32.mrb[0].mxu0
      %v3346 = vpop.f32.mrb[0].mxu0
      %v3347 = vadd.f32 0.0, %v3346
      %v3348 = vpop.f32.mrb[0].mxu0
      %3349 = vmatprep.mubr.bf16.mxu0 0
      %3350 = vmatmul.mubr.bf16.gmra.mrb[0].mxu0 %v3066
      %v3351 = vpop.f32.mrb[0].mxu0
      %v3352 = vadd.f32 0.0, %v3351
      %v3353 = vpop.f32.mrb[0].mxu0
      %v3354 = vpop.f32.mrb[0].mxu0
      %v3355 = vadd.f32 0.0, %v3354
      %v3356 = vpop.f32.mrb[0].mxu0
      %3357 = vmatprep.mubr.bf16.mxu0 0
      %3358 = vmatmul.mubr.bf16.gmra.mrb[0].mxu0 %v3069
      %v3359 = vpop.f32.mrb[0].mxu0
      %v3360 = vadd.f32 0.0, %v3359
      %v3361 = vpop.f32.mrb[0].mxu0
      %v3362 = vpop.f32.mrb[0].mxu0
      %v3363 = vadd.f32 0.0, %v3362
      %v3364 = vpop.f32.mrb[0].mxu0
      %3365 = vmatprep.mubr.bf16.mxu0 0
      %3366 = vmatmul.mubr.bf16.gmra.mrb[0].mxu0 %v3072
      %v3367 = vpop.f32.mrb[0].mxu0
      %v3368 = vadd.f32 0.0, %v3367
      %v3369 = vpop.f32.mrb[0].mxu0
      %v3370 = vpop.f32.mrb[0].mxu0
      %v3371 = vadd.f32 0.0, %v3370
      %v3372 = vpop.f32.mrb[0].mxu0
      %3373 = vdwg.mxu0
      %v3374 = vadd.f32 %v2808, %v3112
      %v3375 = vadd.f32 %v2809, %v3115
      %v3376 = vadd.f32 %v2810, %v3120
      %v3377 = vadd.f32 %v2811, %v3123
      %v3378 = vadd.f32 %v2812, %v3128
      %v3379 = vadd.f32 %v2813, %v3131
      %v3380 = vadd.f32 %v2814, %v3136
      %v3381 = vadd.f32 %v2815, %v3139
      %v3382 = vadd.f32 %v2816, %v3144
      %v3383 = vadd.f32 %v2817, %v3147
      %v3384 = vadd.f32 %v2818, %v3152
      %v3385 = vadd.f32 %v2819, %v3155
      %v3386 = vadd.f32 %v2820, %v3160
      %v3387 = vadd.f32 %v2821, %v3163
      %v3388 = vadd.f32 %v2822, %v3168
      %v3389 = vadd.f32 %v2823, %v3171
      %v3390 = vadd.f32 %v2824, %v3176
      %v3391 = vadd.f32 %v2825, %v3179
      %v3392 = vadd.f32 %v2826, %v3184
      %v3393 = vadd.f32 %v2827, %v3187
      %v3394 = vadd.f32 %v2828, %v3192
      %v3395 = vadd.f32 %v2829, %v3195
      %v3396 = vadd.f32 %v2830, %v3200
      %v3397 = vadd.f32 %v2831, %v3203
      %v3398 = vadd.f32 %v2832, %v3208
      %v3399 = vadd.f32 %v2833, %v3211
      %v3400 = vadd.f32 %v2834, %v3216
      %v3401 = vadd.f32 %v2835, %v3219
      %v3402 = vadd.f32 %v2836, %v3224
      %v3403 = vadd.f32 %v2837, %v3227
      %v3404 = vadd.f32 %v2838, %v3232
      %v3405 = vadd.f32 %v2839, %v3235
      %v3406 = vadd.f32 %v2840, %v3240
      %v3407 = vadd.f32 %v2841, %v3243
      %v3408 = vadd.f32 %v2842, %v3248
      %v3409 = vadd.f32 %v2843, %v3251
      %v3410 = vadd.f32 %v2844, %v3256
      %v3411 = vadd.f32 %v2845, %v3259
      %v3412 = vadd.f32 %v2846, %v3264
      %v3413 = vadd.f32 %v2847, %v3267
      %v3414 = vadd.f32 %v2848, %v3272
      %v3415 = vadd.f32 %v2849, %v3275
      %v3416 = vadd.f32 %v2850, %v3280
      %v3417 = vadd.f32 %v2851, %v3283
      %v3418 = vadd.f32 %v2852, %v3288
      %v3419 = vadd.f32 %v2853, %v3291
      %v3420 = vadd.f32 %v2854, %v3296
      %v3421 = vadd.f32 %v2855, %v3299
      %v3422 = vadd.f32 %v2856, %v3304
      %v3423 = vadd.f32 %v2857, %v3307
      %v3424 = vadd.f32 %v2858, %v3312
      %v3425 = vadd.f32 %v2859, %v3315
      %v3426 = vadd.f32 %v2860, %v3320
      %v3427 = vadd.f32 %v2861, %v3323
      %v3428 = vadd.f32 %v2862, %v3328
      %v3429 = vadd.f32 %v2863, %v3331
      %v3430 = vadd.f32 %v2864, %v3336
      %v3431 = vadd.f32 %v2865, %v3339
      %v3432 = vadd.f32 %v2866, %v3344
      %v3433 = vadd.f32 %v2867, %v3347
      %v3434 = vadd.f32 %v2868, %v3352
      %v3435 = vadd.f32 %v2869, %v3355
      %v3436 = vadd.f32 %v2870, %v3360
      %v3437 = vadd.f32 %v2871, %v3363
      %v3438 = vadd.f32 %v2872, %v3368
      %v3439 = vadd.f32 %v2873, %v3371
      %v3440 = vld [vmem:[%s165 + $0x30] sm:$0xff]
      %v3441 = vld [vmem:[%s165 + $0x38] sm:$0xff]
      %v3442 = vld [vmem:[%s165 + $0x40] sm:$0xff]
      %v3443 = vld [vmem:[%s165 + $0x48] sm:$0xff]
      %v3444 = vld [vmem:[%s165 + $0x50] sm:$0xff]
      %v3445 = vld [vmem:[%s165 + $0x58] sm:$0xff]
      %v3446 = vld [vmem:[%s165 + $0x60] sm:$0xff]
      %v3447 = vld [vmem:[%s165 + $0x68] sm:$0xff]
      %v3448 = vld [vmem:[%s165 + $0x70] sm:$0xff]
      %v3449 = vld [vmem:[%s165 + $0x78] sm:$0xff]
      %v3450 = vld [vmem:[%s165 + $0x80] sm:$0xff]
      %v3451 = vld [vmem:[%s165 + $0x88] sm:$0xff]
      %v3452 = vld [vmem:[%s165 + $0x90] sm:$0xff]
      %v3453 = vld [vmem:[%s165 + $0x98] sm:$0xff]
      %v3454 = vld [vmem:[%s165 + $0xa0] sm:$0xff]
      %v3455 = vld [vmem:[%s165 + $0xa8] sm:$0xff]
      %v3456 = vld [vmem:[%s165 + $0xb0] sm:$0xff]
      %v3457 = vld [vmem:[%s165 + $0xb8] sm:$0xff]
      %v3458 = vld [vmem:[%s165 + $0xc0] sm:$0xff]
      %v3459 = vld [vmem:[%s165 + $0xc8] sm:$0xff]
      %v3460 = vld [vmem:[%s165 + $0xd0] sm:$0xff]
      %v3461 = vld [vmem:[%s165 + $0xd8] sm:$0xff]
      %v3462 = vld [vmem:[%s165 + $0xe0] sm:$0xff]
      %v3463 = vld [vmem:[%s165 + $0xe8] sm:$0xff]
      %v3464 = vld [vmem:[%s165 + $0xf0] sm:$0xff]
      %v3465 = vld [vmem:[%s165 + $0xf8] sm:$0xff]
      %v3466 = vld [vmem:[%s165 + $0x100] sm:$0xff]
      %v3467 = vld [vmem:[%s165 + $0x108] sm:$0xff]
      %v3468 = vld [vmem:[%s165 + $0x110] sm:$0xff]
      %v3469 = vld [vmem:[%s165 + $0x118] sm:$0xff]
      %v3470 = vld [vmem:[%s165 + $0x120] sm:$0xff]
      %v3471 = vld [vmem:[%s165 + $0x128] sm:$0xff]
      %v3472 = vld [vmem:[%s165 + $0x130] sm:$0xff]
      %v3473 = vld [vmem:[%s165 + $0x138] sm:$0xff]
      %v3474 = vld [vmem:[%s165 + $0x140] sm:$0xff]
      %v3475 = vld [vmem:[%s165 + $0x148] sm:$0xff]
      %v3476 = vld [vmem:[%s165 + $0x150] sm:$0xff]
      %v3477 = vld [vmem:[%s165 + $0x158] sm:$0xff]
      %v3478 = vld [vmem:[%s165 + $0x160] sm:$0xff]
      %v3479 = vld [vmem:[%s165 + $0x168] sm:$0xff]
      %v3480 = vld [vmem:[%s165 + $0x170] sm:$0xff]
      %v3481 = vld [vmem:[%s165 + $0x178] sm:$0xff]
      %v3482 = vld [vmem:[%s165 + $0x180] sm:$0xff]
      %v3483 = vld [vmem:[%s165 + $0x188] sm:$0xff]
      %v3484 = vld [vmem:[%s165 + $0x190] sm:$0xff]
      %v3485 = vld [vmem:[%s165 + $0x198] sm:$0xff]
      %v3486 = vld [vmem:[%s165 + $0x1a0] sm:$0xff]
      %v3487 = vld [vmem:[%s165 + $0x1a8] sm:$0xff]
      %v3488 = vld [vmem:[%s165 + $0x1b0] sm:$0xff]
      %v3489 = vld [vmem:[%s165 + $0x1b8] sm:$0xff]
      %v3490 = vld [vmem:[%s165 + $0x1c0] sm:$0xff]
      %v3491 = vld [vmem:[%s165 + $0x1c8] sm:$0xff]
      %v3492 = vld [vmem:[%s165 + $0x1d0] sm:$0xff]
      %v3493 = vld [vmem:[%s165 + $0x1d8] sm:$0xff]
      %v3494 = vld [vmem:[%s165 + $0x1e0] sm:$0xff]
      %v3495 = vld [vmem:[%s165 + $0x1e8] sm:$0xff]
      %v3496 = vld [vmem:[%s165 + $0x1f0] sm:$0xff]
      %v3497 = vld [vmem:[%s165 + $0x1f8] sm:$0xff]
      %v3498 = vld [vmem:[%s165 + $0x200] sm:$0xff]
      %v3499 = vld [vmem:[%s165 + $0x208] sm:$0xff]
      %v3500 = vld [vmem:[%s165 + $0x210] sm:$0xff]
      %v3501 = vld [vmem:[%s165 + $0x218] sm:$0xff]
      %v3502 = vld [vmem:[%s165 + $0x220] sm:$0xff]
      %v3503 = vld [vmem:[%s165 + $0x228] sm:$0xff]
      %v3504 = vld [vmem:[%s165 + $0x230] sm:$0xff]
      %v3505 = vld [vmem:[%s165 + $0x238] sm:$0x3f]
      %v3506 = vpack.c.bf16 %v3441, %v3440
      %v3507 = vpack.c.bf16 %v3443, %v3442
      %v3508 = vpack.c.bf16 %v3445, %v3444
      %v3509 = vpack.c.bf16 %v3447, %v3446
      %v3510 = vpack.c.bf16 %v3449, %v3448
      %v3511 = vpack.c.bf16 %v3451, %v3450
      %v3512 = vpack.c.bf16 %v3453, %v3452
      %v3513 = vpack.c.bf16 %v3455, %v3454
      %v3514 = vpack.c.bf16 %v3457, %v3456
      %v3515 = vpack.c.bf16 %v3459, %v3458
      %v3516 = vpack.c.bf16 %v3461, %v3460
      %v3517 = vpack.c.bf16 %v3463, %v3462
      %v3518 = vpack.c.bf16 %v3465, %v3464
      %v3519 = vpack.c.bf16 %v3467, %v3466
      %v3520 = vpack.c.bf16 %v3469, %v3468
      %v3521 = vpack.c.bf16 %v3471, %v3470
      %v3522 = vpack.c.bf16 %v3473, %v3472
      %v3523 = vpack.c.bf16 %v3475, %v3474
      %v3524 = vpack.c.bf16 %v3477, %v3476
      %v3525 = vpack.c.bf16 %v3479, %v3478
      %v3526 = vpack.c.bf16 %v3481, %v3480
      %v3527 = vpack.c.bf16 %v3483, %v3482
      %v3528 = vpack.c.bf16 %v3485, %v3484
      %v3529 = vpack.c.bf16 %v3487, %v3486
      %v3530 = vpack.c.bf16 %v3489, %v3488
      %v3531 = vpack.c.bf16 %v3491, %v3490
      %v3532 = vpack.c.bf16 %v3493, %v3492
      %v3533 = vpack.c.bf16 %v3495, %v3494
      %v3534 = vpack.c.bf16 %v3497, %v3496
      %v3535 = vpack.c.bf16 %v3499, %v3498
      %v3536 = vpack.c.bf16 %v3501, %v3500
      %v3537 = vpack.c.bf16 %v3503, %v3502
      %v3538 = vpack.c.bf16 %v3505, %v3504
      %s3539 = scalar_lea.vmem %s1, 12
      %v3540 = vld [vmem:[%s3539] sm:$0x3]
      %v3542 = vsel %vm373, %v3506, 0
      %v3545 = vsel %vm373, %v3507, 0
      %v3548 = vsel %vm373, %v3508, 0
      %v3551 = vsel %vm373, %v3509, 0
      %v3554 = vsel %vm373, %v3510, 0
      %v3557 = vsel %vm373, %v3511, 0
      %v3560 = vsel %vm373, %v3512, 0
      %v3563 = vsel %vm373, %v3513, 0
      %v3566 = vsel %vm373, %v3514, 0
      %v3569 = vsel %vm373, %v3515, 0
      %v3572 = vsel %vm373, %v3516, 0
      %v3575 = vsel %vm373, %v3517, 0
      %v3578 = vsel %vm373, %v3518, 0
      %v3581 = vsel %vm373, %v3519, 0
      %v3584 = vsel %vm373, %v3520, 0
      %v3587 = vsel %vm373, %v3521, 0
      %v3590 = vsel %vm373, %v3522, 0
      %v3593 = vsel %vm373, %v3523, 0
      %v3596 = vsel %vm373, %v3524, 0
      %v3599 = vsel %vm373, %v3525, 0
      %v3602 = vsel %vm373, %v3526, 0
      %v3605 = vsel %vm373, %v3527, 0
      %v3608 = vsel %vm373, %v3528, 0
      %v3611 = vsel %vm373, %v3529, 0
      %v3614 = vsel %vm373, %v3530, 0
      %v3617 = vsel %vm373, %v3531, 0
      %v3620 = vsel %vm373, %v3532, 0
      %v3623 = vsel %vm373, %v3533, 0
      %v3626 = vsel %vm373, %v3534, 0
      %v3629 = vsel %vm373, %v3535, 0
      %v3632 = vsel %vm373, %v3536, 0
      %v3635 = vsel %vm373, %v3537, 0
      %v3638 = vsel %vm373, %v3538, 0
      %v3641 = vand.u32 %v3540, %v476
      %3643 = vmatprep.subr.bf16.mxu0 0
      %3644 = vmatpush1.bf16.msra.mxu0 %v3641
      %3645 = vmatprep.subr.bf16.mxu0 0
      %3646 = vmatpush1.bf16.msra.mxu0 0
      %3647 = vmatprep.subr.bf16.mxu0 0
      %3648 = vmatpush1.bf16.msra.mxu0 0
      %3649 = vmatprep.subr.bf16.mxu0 0
      %3650 = vmatpush1.bf16.msra.mxu0 0
      %3651 = vmatprep.subr.bf16.mxu0 0
      %3652 = vmatpush1.bf16.msra.mxu0 0
      %3653 = vmatprep.subr.bf16.mxu0 0
      %3654 = vmatpush1.bf16.msra.mxu0 0
      %3655 = vmatprep.subr.bf16.mxu0 0
      %3656 = vmatpush1.bf16.msra.mxu0 0
      %3657 = vmatprep.subr.bf16.mxu0 0
      %3658 = vmatpush1.bf16.msra.mxu0 0
      %3659 = vmatprep.subr.bf16.mxu0 0
      %3660 = vmatpush1.bf16.msra.mxu0 0
      %3661 = vmatprep.subr.bf16.mxu0 0
      %3662 = vmatpush1.bf16.msra.mxu0 0
      %3663 = vmatprep.subr.bf16.mxu0 0
      %3664 = vmatpush1.bf16.msra.mxu0 0
      %3665 = vmatprep.subr.bf16.mxu0 0
      %3666 = vmatpush1.bf16.msra.mxu0 0
      %3667 = vmatprep.subr.bf16.mxu0 0
      %3668 = vmatpush1.bf16.msra.mxu0 0
      %3669 = vmatprep.subr.bf16.mxu0 0
      %3670 = vmatpush1.bf16.msra.mxu0 0
      %3671 = vmatprep.subr.bf16.mxu0 0
      %3672 = vmatpush1.bf16.msra.mxu0 0
      %3673 = vmatprep.subr.bf16.mxu0 0
      %3674 = vmatpush1.bf16.msra.mxu0 0
      %3675 = vmatprep.mubr.bf16.mxu0 0
      %3676 = vmatmul.mubr.bf16.gmra.mrb[0].mxu0 %v3542
      %v3677 = vpop.f32.mrb[0].mxu0
      %v3678 = vadd.f32 0.0, %v3677
      %v3679 = vpop.f32.mrb[0].mxu0
      %v3680 = vpop.f32.mrb[0].mxu0
      %v3681 = vadd.f32 0.0, %v3680
      %v3682 = vpop.f32.mrb[0].mxu0
      %3683 = vmatprep.mubr.bf16.mxu0 0
      %3684 = vmatmul.mubr.bf16.gmra.mrb[0].mxu0 %v3545
      %v3685 = vpop.f32.mrb[0].mxu0
      %v3686 = vadd.f32 0.0, %v3685
      %v3687 = vpop.f32.mrb[0].mxu0
      %v3688 = vpop.f32.mrb[0].mxu0
      %v3689 = vadd.f32 0.0, %v3688
      %v3690 = vpop.f32.mrb[0].mxu0
      %3691 = vmatprep.mubr.bf16.mxu0 0
      %3692 = vmatmul.mubr.bf16.gmra.mrb[0].mxu0 %v3548
      %v3693 = vpop.f32.mrb[0].mxu0
      %v3694 = vadd.f32 0.0, %v3693
      %v3695 = vpop.f32.mrb[0].mxu0
      %v3696 = vpop.f32.mrb[0].mxu0
      %v3697 = vadd.f32 0.0, %v3696
      %v3698 = vpop.f32.mrb[0].mxu0
      %3699 = vmatprep.mubr.bf16.mxu0 0
      %3700 = vmatmul.mubr.bf16.gmra.mrb[0].mxu0 %v3551
      %v3701 = vpop.f32.mrb[0].mxu0
      %v3702 = vadd.f32 0.0, %v3701
      %v3703 = vpop.f32.mrb[0].mxu0
      %v3704 = vpop.f32.mrb[0].mxu0
      %v3705 = vadd.f32 0.0, %v3704
      %v3706 = vpop.f32.mrb[0].mxu0
      %3707 = vmatprep.mubr.bf16.mxu0 0
      %3708 = vmatmul.mubr.bf16.gmra.mrb[0].mxu0 %v3554
      %v3709 = vpop.f32.mrb[0].mxu0
      %v3710 = vadd.f32 0.0, %v3709
      %v3711 = vpop.f32.mrb[0].mxu0
      %v3712 = vpop.f32.mrb[0].mxu0
      %v3713 = vadd.f32 0.0, %v3712
      %v3714 = vpop.f32.mrb[0].mxu0
      %3715 = vmatprep.mubr.bf16.mxu0 0
      %3716 = vmatmul.mubr.bf16.gmra.mrb[0].mxu0 %v3557
      %v3717 = vpop.f32.mrb[0].mxu0
      %v3718 = vadd.f32 0.0, %v3717
      %v3719 = vpop.f32.mrb[0].mxu0
      %v3720 = vpop.f32.mrb[0].mxu0
      %v3721 = vadd.f32 0.0, %v3720
      %v3722 = vpop.f32.mrb[0].mxu0
      %3723 = vmatprep.mubr.bf16.mxu0 0
      %3724 = vmatmul.mubr.bf16.gmra.mrb[0].mxu0 %v3560
      %v3725 = vpop.f32.mrb[0].mxu0
      %v3726 = vadd.f32 0.0, %v3725
      %v3727 = vpop.f32.mrb[0].mxu0
      %v3728 = vpop.f32.mrb[0].mxu0
      %v3729 = vadd.f32 0.0, %v3728
      %v3730 = vpop.f32.mrb[0].mxu0
      %3731 = vmatprep.mubr.bf16.mxu0 0
      %3732 = vmatmul.mubr.bf16.gmra.mrb[0].mxu0 %v3563
      %v3733 = vpop.f32.mrb[0].mxu0
      %v3734 = vadd.f32 0.0, %v3733
      %v3735 = vpop.f32.mrb[0].mxu0
      %v3736 = vpop.f32.mrb[0].mxu0
      %v3737 = vadd.f32 0.0, %v3736
      %v3738 = vpop.f32.mrb[0].mxu0
      %3739 = vmatprep.mubr.bf16.mxu0 0
      %3740 = vmatmul.mubr.bf16.gmra.mrb[0].mxu0 %v3566
      %v3741 = vpop.f32.mrb[0].mxu0
      %v3742 = vadd.f32 0.0, %v3741
      %v3743 = vpop.f32.mrb[0].mxu0
      %v3744 = vpop.f32.mrb[0].mxu0
      %v3745 = vadd.f32 0.0, %v3744
      %v3746 = vpop.f32.mrb[0].mxu0
      %3747 = vmatprep.mubr.bf16.mxu0 0
      %3748 = vmatmul.mubr.bf16.gmra.mrb[0].mxu0 %v3569
      %v3749 = vpop.f32.mrb[0].mxu0
      %v3750 = vadd.f32 0.0, %v3749
      %v3751 = vpop.f32.mrb[0].mxu0
      %v3752 = vpop.f32.mrb[0].mxu0
      %v3753 = vadd.f32 0.0, %v3752
      %v3754 = vpop.f32.mrb[0].mxu0
      %3755 = vmatprep.mubr.bf16.mxu0 0
      %3756 = vmatmul.mubr.bf16.gmra.mrb[0].mxu0 %v3572
      %v3757 = vpop.f32.mrb[0].mxu0
      %v3758 = vadd.f32 0.0, %v3757
      %v3759 = vpop.f32.mrb[0].mxu0
      %v3760 = vpop.f32.mrb[0].mxu0
      %v3761 = vadd.f32 0.0, %v3760
      %v3762 = vpop.f32.mrb[0].mxu0
      %3763 = vmatprep.mubr.bf16.mxu0 0
      %3764 = vmatmul.mubr.bf16.gmra.mrb[0].mxu0 %v3575
      %v3765 = vpop.f32.mrb[0].mxu0
      %v3766 = vadd.f32 0.0, %v3765
      %v3767 = vpop.f32.mrb[0].mxu0
      %v3768 = vpop.f32.mrb[0].mxu0
      %v3769 = vadd.f32 0.0, %v3768
      %v3770 = vpop.f32.mrb[0].mxu0
      %3771 = vmatprep.mubr.bf16.mxu0 0
      %3772 = vmatmul.mubr.bf16.gmra.mrb[0].mxu0 %v3578
      %v3773 = vpop.f32.mrb[0].mxu0
      %v3774 = vadd.f32 0.0, %v3773
      %v3775 = vpop.f32.mrb[0].mxu0
      %v3776 = vpop.f32.mrb[0].mxu0
      %v3777 = vadd.f32 0.0, %v3776
      %v3778 = vpop.f32.mrb[0].mxu0
      %3779 = vmatprep.mubr.bf16.mxu0 0
      %3780 = vmatmul.mubr.bf16.gmra.mrb[0].mxu0 %v3581
      %v3781 = vpop.f32.mrb[0].mxu0
      %v3782 = vadd.f32 0.0, %v3781
      %v3783 = vpop.f32.mrb[0].mxu0
      %v3784 = vpop.f32.mrb[0].mxu0
      %v3785 = vadd.f32 0.0, %v3784
      %v3786 = vpop.f32.mrb[0].mxu0
      %3787 = vmatprep.mubr.bf16.mxu0 0
      %3788 = vmatmul.mubr.bf16.gmra.mrb[0].mxu0 %v3584
      %v3789 = vpop.f32.mrb[0].mxu0
      %v3790 = vadd.f32 0.0, %v3789
      %v3791 = vpop.f32.mrb[0].mxu0
      %v3792 = vpop.f32.mrb[0].mxu0
      %v3793 = vadd.f32 0.0, %v3792
      %v3794 = vpop.f32.mrb[0].mxu0
      %3795 = vmatprep.mubr.bf16.mxu0 0
      %3796 = vmatmul.mubr.bf16.gmra.mrb[0].mxu0 %v3587
      %v3797 = vpop.f32.mrb[0].mxu0
      %v3798 = vadd.f32 0.0, %v3797
      %v3799 = vpop.f32.mrb[0].mxu0
      %v3800 = vpop.f32.mrb[0].mxu0
      %v3801 = vadd.f32 0.0, %v3800
      %v3802 = vpop.f32.mrb[0].mxu0
      %3803 = vmatprep.mubr.bf16.mxu0 0
      %3804 = vmatmul.mubr.bf16.gmra.mrb[0].mxu0 %v3590
      %v3805 = vpop.f32.mrb[0].mxu0
      %v3806 = vadd.f32 0.0, %v3805
      %v3807 = vpop.f32.mrb[0].mxu0
      %v3808 = vpop.f32.mrb[0].mxu0
      %v3809 = vadd.f32 0.0, %v3808
      %v3810 = vpop.f32.mrb[0].mxu0
      %3811 = vmatprep.mubr.bf16.mxu0 0
      %3812 = vmatmul.mubr.bf16.gmra.mrb[0].mxu0 %v3593
      %v3813 = vpop.f32.mrb[0].mxu0
      %v3814 = vadd.f32 0.0, %v3813
      %v3815 = vpop.f32.mrb[0].mxu0
      %v3816 = vpop.f32.mrb[0].mxu0
      %v3817 = vadd.f32 0.0, %v3816
      %v3818 = vpop.f32.mrb[0].mxu0
      %3819 = vmatprep.mubr.bf16.mxu0 0
      %3820 = vmatmul.mubr.bf16.gmra.mrb[0].mxu0 %v3596
      %v3821 = vpop.f32.mrb[0].mxu0
      %v3822 = vadd.f32 0.0, %v3821
      %v3823 = vpop.f32.mrb[0].mxu0
      %v3824 = vpop.f32.mrb[0].mxu0
      %v3825 = vadd.f32 0.0, %v3824
      %v3826 = vpop.f32.mrb[0].mxu0
      %3827 = vmatprep.mubr.bf16.mxu0 0
      %3828 = vmatmul.mubr.bf16.gmra.mrb[0].mxu0 %v3599
      %v3829 = vpop.f32.mrb[0].mxu0
      %v3830 = vadd.f32 0.0, %v3829
      %v3831 = vpop.f32.mrb[0].mxu0
      %v3832 = vpop.f32.mrb[0].mxu0
      %v3833 = vadd.f32 0.0, %v3832
      %v3834 = vpop.f32.mrb[0].mxu0
      %3835 = vmatprep.mubr.bf16.mxu0 0
      %3836 = vmatmul.mubr.bf16.gmra.mrb[0].mxu0 %v3602
      %v3837 = vpop.f32.mrb[0].mxu0
      %v3838 = vadd.f32 0.0, %v3837
      %v3839 = vpop.f32.mrb[0].mxu0
      %v3840 = vpop.f32.mrb[0].mxu0
      %v3841 = vadd.f32 0.0, %v3840
      %v3842 = vpop.f32.mrb[0].mxu0
      %3843 = vmatprep.mubr.bf16.mxu0 0
      %3844 = vmatmul.mubr.bf16.gmra.mrb[0].mxu0 %v3605
      %v3845 = vpop.f32.mrb[0].mxu0
      %v3846 = vadd.f32 0.0, %v3845
      %v3847 = vpop.f32.mrb[0].mxu0
      %v3848 = vpop.f32.mrb[0].mxu0
      %v3849 = vadd.f32 0.0, %v3848
      %v3850 = vpop.f32.mrb[0].mxu0
      %3851 = vmatprep.mubr.bf16.mxu0 0
      %3852 = vmatmul.mubr.bf16.gmra.mrb[0].mxu0 %v3608
      %v3853 = vpop.f32.mrb[0].mxu0
      %v3854 = vadd.f32 0.0, %v3853
      %v3855 = vpop.f32.mrb[0].mxu0
      %v3856 = vpop.f32.mrb[0].mxu0
      %v3857 = vadd.f32 0.0, %v3856
      %v3858 = vpop.f32.mrb[0].mxu0
      %3859 = vmatprep.mubr.bf16.mxu0 0
      %3860 = vmatmul.mubr.bf16.gmra.mrb[0].mxu0 %v3611
      %v3861 = vpop.f32.mrb[0].mxu0
      %v3862 = vadd.f32 0.0, %v3861
      %v3863 = vpop.f32.mrb[0].mxu0
      %v3864 = vpop.f32.mrb[0].mxu0
      %v3865 = vadd.f32 0.0, %v3864
      %v3866 = vpop.f32.mrb[0].mxu0
      %3867 = vmatprep.mubr.bf16.mxu0 0
      %3868 = vmatmul.mubr.bf16.gmra.mrb[0].mxu0 %v3614
      %v3869 = vpop.f32.mrb[0].mxu0
      %v3870 = vadd.f32 0.0, %v3869
      %v3871 = vpop.f32.mrb[0].mxu0
      %v3872 = vpop.f32.mrb[0].mxu0
      %v3873 = vadd.f32 0.0, %v3872
      %v3874 = vpop.f32.mrb[0].mxu0
      %3875 = vmatprep.mubr.bf16.mxu0 0
      %3876 = vmatmul.mubr.bf16.gmra.mrb[0].mxu0 %v3617
      %v3877 = vpop.f32.mrb[0].mxu0
      %v3878 = vadd.f32 0.0, %v3877
      %v3879 = vpop.f32.mrb[0].mxu0
      %v3880 = vpop.f32.mrb[0].mxu0
      %v3881 = vadd.f32 0.0, %v3880
      %v3882 = vpop.f32.mrb[0].mxu0
      %3883 = vmatprep.mubr.bf16.mxu0 0
      %3884 = vmatmul.mubr.bf16.gmra.mrb[0].mxu0 %v3620
      %v3885 = vpop.f32.mrb[0].mxu0
      %v3886 = vadd.f32 0.0, %v3885
      %v3887 = vpop.f32.mrb[0].mxu0
      %v3888 = vpop.f32.mrb[0].mxu0
      %v3889 = vadd.f32 0.0, %v3888
      %v3890 = vpop.f32.mrb[0].mxu0
      %3891 = vmatprep.mubr.bf16.mxu0 0
      %3892 = vmatmul.mubr.bf16.gmra.mrb[0].mxu0 %v3623
      %v3893 = vpop.f32.mrb[0].mxu0
      %v3894 = vadd.f32 0.0, %v3893
      %v3895 = vpop.f32.mrb[0].mxu0
      %v3896 = vpop.f32.mrb[0].mxu0
      %v3897 = vadd.f32 0.0, %v3896
      %v3898 = vpop.f32.mrb[0].mxu0
      %3899 = vmatprep.mubr.bf16.mxu0 0
      %3900 = vmatmul.mubr.bf16.gmra.mrb[0].mxu0 %v3626
      %v3901 = vpop.f32.mrb[0].mxu0
      %v3902 = vadd.f32 0.0, %v3901
      %v3903 = vpop.f32.mrb[0].mxu0
      %v3904 = vpop.f32.mrb[0].mxu0
      %v3905 = vadd.f32 0.0, %v3904
      %v3906 = vpop.f32.mrb[0].mxu0
      %3907 = vmatprep.mubr.bf16.mxu0 0
      %3908 = vmatmul.mubr.bf16.gmra.mrb[0].mxu0 %v3629
      %v3909 = vpop.f32.mrb[0].mxu0
      %v3910 = vadd.f32 0.0, %v3909
      %v3911 = vpop.f32.mrb[0].mxu0
      %v3912 = vpop.f32.mrb[0].mxu0
      %v3913 = vadd.f32 0.0, %v3912
      %v3914 = vpop.f32.mrb[0].mxu0
      %3915 = vmatprep.mubr.bf16.mxu0 0
      %3916 = vmatmul.mubr.bf16.gmra.mrb[0].mxu0 %v3632
      %v3917 = vpop.f32.mrb[0].mxu0
      %v3918 = vadd.f32 0.0, %v3917
      %v3919 = vpop.f32.mrb[0].mxu0
      %v3920 = vpop.f32.mrb[0].mxu0
      %v3921 = vadd.f32 0.0, %v3920
      %v3922 = vpop.f32.mrb[0].mxu0
      %3923 = vmatprep.mubr.bf16.mxu0 0
      %3924 = vmatmul.mubr.bf16.gmra.mrb[0].mxu0 %v3635
      %v3925 = vpop.f32.mrb[0].mxu0
      %v3926 = vadd.f32 0.0, %v3925
      %v3927 = vpop.f32.mrb[0].mxu0
      %v3928 = vpop.f32.mrb[0].mxu0
      %v3929 = vadd.f32 0.0, %v3928
      %v3930 = vpop.f32.mrb[0].mxu0
      %3931 = vmatprep.mubr.bf16.mxu0 0
      %3932 = vmatmul.mubr.bf16.gmra.mrb[0].mxu0 %v3638
      %v3933 = vpop.f32.mrb[0].mxu0
      %v3934 = vadd.f32 0.0, %v3933
      %v3935 = vpop.f32.mrb[0].mxu0
      %v3936 = vpop.f32.mrb[0].mxu0
      %v3937 = vadd.f32 0.0, %v3936
      %v3938 = vpop.f32.mrb[0].mxu0
      %3939 = vdwg.mxu0
      %v3940 = vadd.f32 %v3374, %v3678
      %v3941 = vadd.f32 %v3375, %v3681
      %v3942 = vadd.f32 %v3376, %v3686
      %v3943 = vadd.f32 %v3377, %v3689
      %v3944 = vadd.f32 %v3378, %v3694
      %v3945 = vadd.f32 %v3379, %v3697
      %v3946 = vadd.f32 %v3380, %v3702
      %v3947 = vadd.f32 %v3381, %v3705
      %v3948 = vadd.f32 %v3382, %v3710
      %v3949 = vadd.f32 %v3383, %v3713
      %v3950 = vadd.f32 %v3384, %v3718
      %v3951 = vadd.f32 %v3385, %v3721
      %v3952 = vadd.f32 %v3386, %v3726
      %v3953 = vadd.f32 %v3387, %v3729
      %v3954 = vadd.f32 %v3388, %v3734
      %v3955 = vadd.f32 %v3389, %v3737
      %v3956 = vadd.f32 %v3390, %v3742
      %v3957 = vadd.f32 %v3391, %v3745
      %v3958 = vadd.f32 %v3392, %v3750
      %v3959 = vadd.f32 %v3393, %v3753
      %v3960 = vadd.f32 %v3394, %v3758
      %v3961 = vadd.f32 %v3395, %v3761
      %v3962 = vadd.f32 %v3396, %v3766
      %v3963 = vadd.f32 %v3397, %v3769
      %v3964 = vadd.f32 %v3398, %v3774
      %v3965 = vadd.f32 %v3399, %v3777
      %v3966 = vadd.f32 %v3400, %v3782
      %v3967 = vadd.f32 %v3401, %v3785
      %v3968 = vadd.f32 %v3402, %v3790
      %v3969 = vadd.f32 %v3403, %v3793
      %v3970 = vadd.f32 %v3404, %v3798
      %v3971 = vadd.f32 %v3405, %v3801
      %v3972 = vadd.f32 %v3406, %v3806
      %v3973 = vadd.f32 %v3407, %v3809
      %v3974 = vadd.f32 %v3408, %v3814
      %v3975 = vadd.f32 %v3409, %v3817
      %v3976 = vadd.f32 %v3410, %v3822
      %v3977 = vadd.f32 %v3411, %v3825
      %v3978 = vadd.f32 %v3412, %v3830
      %v3979 = vadd.f32 %v3413, %v3833
      %v3980 = vadd.f32 %v3414, %v3838
      %v3981 = vadd.f32 %v3415, %v3841
      %v3982 = vadd.f32 %v3416, %v3846
      %v3983 = vadd.f32 %v3417, %v3849
      %v3984 = vadd.f32 %v3418, %v3854
      %v3985 = vadd.f32 %v3419, %v3857
      %v3986 = vadd.f32 %v3420, %v3862
      %v3987 = vadd.f32 %v3421, %v3865
      %v3988 = vadd.f32 %v3422, %v3870
      %v3989 = vadd.f32 %v3423, %v3873
      %v3990 = vadd.f32 %v3424, %v3878
      %v3991 = vadd.f32 %v3425, %v3881
      %v3992 = vadd.f32 %v3426, %v3886
      %v3993 = vadd.f32 %v3427, %v3889
      %v3994 = vadd.f32 %v3428, %v3894
      %v3995 = vadd.f32 %v3429, %v3897
      %v3996 = vadd.f32 %v3430, %v3902
      %v3997 = vadd.f32 %v3431, %v3905
      %v3998 = vadd.f32 %v3432, %v3910
      %v3999 = vadd.f32 %v3433, %v3913
      %v4000 = vadd.f32 %v3434, %v3918
      %v4001 = vadd.f32 %v3435, %v3921
      %v4002 = vadd.f32 %v3436, %v3926
      %v4003 = vadd.f32 %v3437, %v3929
      %v4004 = vadd.f32 %v3438, %v3934
      %v4005 = vadd.f32 %v3439, %v3937
      %v4006 = vld [vmem:[%s165 + $0x31] sm:$0xff]
      %v4007 = vld [vmem:[%s165 + $0x39] sm:$0xff]
      %v4008 = vld [vmem:[%s165 + $0x41] sm:$0xff]
      %v4009 = vld [vmem:[%s165 + $0x49] sm:$0xff]
      %v4010 = vld [vmem:[%s165 + $0x51] sm:$0xff]
      %v4011 = vld [vmem:[%s165 + $0x59] sm:$0xff]
      %v4012 = vld [vmem:[%s165 + $0x61] sm:$0xff]
      %v4013 = vld [vmem:[%s165 + $0x69] sm:$0xff]
      %v4014 = vld [vmem:[%s165 + $0x71] sm:$0xff]
      %v4015 = vld [vmem:[%s165 + $0x79] sm:$0xff]
      %v4016 = vld [vmem:[%s165 + $0x81] sm:$0xff]
      %v4017 = vld [vmem:[%s165 + $0x89] sm:$0xff]
      %v4018 = vld [vmem:[%s165 + $0x91] sm:$0xff]
      %v4019 = vld [vmem:[%s165 + $0x99] sm:$0xff]
      %v4020 = vld [vmem:[%s165 + $0xa1] sm:$0xff]
      %v4021 = vld [vmem:[%s165 + $0xa9] sm:$0xff]
      %v4022 = vld [vmem:[%s165 + $0xb1] sm:$0xff]
      %v4023 = vld [vmem:[%s165 + $0xb9] sm:$0xff]
      %v4024 = vld [vmem:[%s165 + $0xc1] sm:$0xff]
      %v4025 = vld [vmem:[%s165 + $0xc9] sm:$0xff]
      %v4026 = vld [vmem:[%s165 + $0xd1] sm:$0xff]
      %v4027 = vld [vmem:[%s165 + $0xd9] sm:$0xff]
      %v4028 = vld [vmem:[%s165 + $0xe1] sm:$0xff]
      %v4029 = vld [vmem:[%s165 + $0xe9] sm:$0xff]
      %v4030 = vld [vmem:[%s165 + $0xf1] sm:$0xff]
      %v4031 = vld [vmem:[%s165 + $0xf9] sm:$0xff]
      %v4032 = vld [vmem:[%s165 + $0x101] sm:$0xff]
      %v4033 = vld [vmem:[%s165 + $0x109] sm:$0xff]
      %v4034 = vld [vmem:[%s165 + $0x111] sm:$0xff]
      %v4035 = vld [vmem:[%s165 + $0x119] sm:$0xff]
      %v4036 = vld [vmem:[%s165 + $0x121] sm:$0xff]
      %v4037 = vld [vmem:[%s165 + $0x129] sm:$0xff]
      %v4038 = vld [vmem:[%s165 + $0x131] sm:$0xff]
      %v4039 = vld [vmem:[%s165 + $0x139] sm:$0xff]
      %v4040 = vld [vmem:[%s165 + $0x141] sm:$0xff]
      %v4041 = vld [vmem:[%s165 + $0x149] sm:$0xff]
      %v4042 = vld [vmem:[%s165 + $0x151] sm:$0xff]
      %v4043 = vld [vmem:[%s165 + $0x159] sm:$0xff]
      %v4044 = vld [vmem:[%s165 + $0x161] sm:$0xff]
      %v4045 = vld [vmem:[%s165 + $0x169] sm:$0xff]
      %v4046 = vld [vmem:[%s165 + $0x171] sm:$0xff]
      %v4047 = vld [vmem:[%s165 + $0x179] sm:$0xff]
      %v4048 = vld [vmem:[%s165 + $0x181] sm:$0xff]
      %v4049 = vld [vmem:[%s165 + $0x189] sm:$0xff]
      %v4050 = vld [vmem:[%s165 + $0x191] sm:$0xff]
      %v4051 = vld [vmem:[%s165 + $0x199] sm:$0xff]
      %v4052 = vld [vmem:[%s165 + $0x1a1] sm:$0xff]
      %v4053 = vld [vmem:[%s165 + $0x1a9] sm:$0xff]
      %v4054 = vld [vmem:[%s165 + $0x1b1] sm:$0xff]
      %v4055 = vld [vmem:[%s165 + $0x1b9] sm:$0xff]
      %v4056 = vld [vmem:[%s165 + $0x1c1] sm:$0xff]
      %v4057 = vld [vmem:[%s165 + $0x1c9] sm:$0xff]
      %v4058 = vld [vmem:[%s165 + $0x1d1] sm:$0xff]
      %v4059 = vld [vmem:[%s165 + $0x1d9] sm:$0xff]
      %v4060 = vld [vmem:[%s165 + $0x1e1] sm:$0xff]
      %v4061 = vld [vmem:[%s165 + $0x1e9] sm:$0xff]
      %v4062 = vld [vmem:[%s165 + $0x1f1] sm:$0xff]
      %v4063 = vld [vmem:[%s165 + $0x1f9] sm:$0xff]
      %v4064 = vld [vmem:[%s165 + $0x201] sm:$0xff]
      %v4065 = vld [vmem:[%s165 + $0x209] sm:$0xff]
      %v4066 = vld [vmem:[%s165 + $0x211] sm:$0xff]
      %v4067 = vld [vmem:[%s165 + $0x219] sm:$0xff]
      %v4068 = vld [vmem:[%s165 + $0x221] sm:$0xff]
      %v4069 = vld [vmem:[%s165 + $0x229] sm:$0xff]
      %v4070 = vld [vmem:[%s165 + $0x231] sm:$0xff]
      %v4071 = vld [vmem:[%s165 + $0x239] sm:$0x3f]
      %v4072 = vpack.c.bf16 %v4007, %v4006
      %v4073 = vpack.c.bf16 %v4009, %v4008
      %v4074 = vpack.c.bf16 %v4011, %v4010
      %v4075 = vpack.c.bf16 %v4013, %v4012
      %v4076 = vpack.c.bf16 %v4015, %v4014
      %v4077 = vpack.c.bf16 %v4017, %v4016
      %v4078 = vpack.c.bf16 %v4019, %v4018
      %v4079 = vpack.c.bf16 %v4021, %v4020
      %v4080 = vpack.c.bf16 %v4023, %v4022
      %v4081 = vpack.c.bf16 %v4025, %v4024
      %v4082 = vpack.c.bf16 %v4027, %v4026
      %v4083 = vpack.c.bf16 %v4029, %v4028
      %v4084 = vpack.c.bf16 %v4031, %v4030
      %v4085 = vpack.c.bf16 %v4033, %v4032
      %v4086 = vpack.c.bf16 %v4035, %v4034
      %v4087 = vpack.c.bf16 %v4037, %v4036
      %v4088 = vpack.c.bf16 %v4039, %v4038
      %v4089 = vpack.c.bf16 %v4041, %v4040
      %v4090 = vpack.c.bf16 %v4043, %v4042
      %v4091 = vpack.c.bf16 %v4045, %v4044
      %v4092 = vpack.c.bf16 %v4047, %v4046
      %v4093 = vpack.c.bf16 %v4049, %v4048
      %v4094 = vpack.c.bf16 %v4051, %v4050
      %v4095 = vpack.c.bf16 %v4053, %v4052
      %v4096 = vpack.c.bf16 %v4055, %v4054
      %v4097 = vpack.c.bf16 %v4057, %v4056
      %v4098 = vpack.c.bf16 %v4059, %v4058
      %v4099 = vpack.c.bf16 %v4061, %v4060
      %v4100 = vpack.c.bf16 %v4063, %v4062
      %v4101 = vpack.c.bf16 %v4065, %v4064
      %v4102 = vpack.c.bf16 %v4067, %v4066
      %v4103 = vpack.c.bf16 %v4069, %v4068
      %v4104 = vpack.c.bf16 %v4071, %v4070
      %s4105 = scalar_lea.vmem %s1, 14
      %v4106 = vld [vmem:[%s4105] sm:$0x3]
      %v4108 = vsel %vm373, %v4072, 0
      %v4111 = vsel %vm373, %v4073, 0
      %v4114 = vsel %vm373, %v4074, 0
      %v4117 = vsel %vm373, %v4075, 0
      %v4120 = vsel %vm373, %v4076, 0
      %v4123 = vsel %vm373, %v4077, 0
      %v4126 = vsel %vm373, %v4078, 0
      %v4129 = vsel %vm373, %v4079, 0
      %v4132 = vsel %vm373, %v4080, 0
      %v4135 = vsel %vm373, %v4081, 0
      %v4138 = vsel %vm373, %v4082, 0
      %v4141 = vsel %vm373, %v4083, 0
      %v4144 = vsel %vm373, %v4084, 0
      %v4147 = vsel %vm373, %v4085, 0
      %v4150 = vsel %vm373, %v4086, 0
      %v4153 = vsel %vm373, %v4087, 0
      %v4156 = vsel %vm373, %v4088, 0
      %v4159 = vsel %vm373, %v4089, 0
      %v4162 = vsel %vm373, %v4090, 0
      %v4165 = vsel %vm373, %v4091, 0
      %v4168 = vsel %vm373, %v4092, 0
      %v4171 = vsel %vm373, %v4093, 0
      %v4174 = vsel %vm373, %v4094, 0
      %v4177 = vsel %vm373, %v4095, 0
      %v4180 = vsel %vm373, %v4096, 0
      %v4183 = vsel %vm373, %v4097, 0
      %v4186 = vsel %vm373, %v4098, 0
      %v4189 = vsel %vm373, %v4099, 0
      %v4192 = vsel %vm373, %v4100, 0
      %v4195 = vsel %vm373, %v4101, 0
      %v4198 = vsel %vm373, %v4102, 0
      %v4201 = vsel %vm373, %v4103, 0
      %v4204 = vsel %vm373, %v4104, 0
      %v4207 = vand.u32 %v4106, %v476
      %4209 = vmatprep.subr.bf16.mxu0 0
      %4210 = vmatpush1.bf16.msra.mxu0 %v4207
      %4211 = vmatprep.subr.bf16.mxu0 0
      %4212 = vmatpush1.bf16.msra.mxu0 0
      %4213 = vmatprep.subr.bf16.mxu0 0
      %4214 = vmatpush1.bf16.msra.mxu0 0
      %4215 = vmatprep.subr.bf16.mxu0 0
      %4216 = vmatpush1.bf16.msra.mxu0 0
      %4217 = vmatprep.subr.bf16.mxu0 0
      %4218 = vmatpush1.bf16.msra.mxu0 0
      %4219 = vmatprep.subr.bf16.mxu0 0
      %4220 = vmatpush1.bf16.msra.mxu0 0
      %4221 = vmatprep.subr.bf16.mxu0 0
      %4222 = vmatpush1.bf16.msra.mxu0 0
      %4223 = vmatprep.subr.bf16.mxu0 0
      %4224 = vmatpush1.bf16.msra.mxu0 0
      %4225 = vmatprep.subr.bf16.mxu0 0
      %4226 = vmatpush1.bf16.msra.mxu0 0
      %4227 = vmatprep.subr.bf16.mxu0 0
      %4228 = vmatpush1.bf16.msra.mxu0 0
      %4229 = vmatprep.subr.bf16.mxu0 0
      %4230 = vmatpush1.bf16.msra.mxu0 0
      %4231 = vmatprep.subr.bf16.mxu0 0
      %4232 = vmatpush1.bf16.msra.mxu0 0
      %4233 = vmatprep.subr.bf16.mxu0 0
      %4234 = vmatpush1.bf16.msra.mxu0 0
      %4235 = vmatprep.subr.bf16.mxu0 0
      %4236 = vmatpush1.bf16.msra.mxu0 0
      %4237 = vmatprep.subr.bf16.mxu0 0
      %4238 = vmatpush1.bf16.msra.mxu0 0
      %4239 = vmatprep.subr.bf16.mxu0 0
      %4240 = vmatpush1.bf16.msra.mxu0 0
      %4241 = vmatprep.mubr.bf16.mxu0 0
      %4242 = vmatmul.mubr.bf16.gmra.mrb[0].mxu0 %v4108
      %v4243 = vpop.f32.mrb[0].mxu0
      %v4244 = vadd.f32 0.0, %v4243
      %v4245 = vpop.f32.mrb[0].mxu0
      %v4246 = vpop.f32.mrb[0].mxu0
      %v4247 = vadd.f32 0.0, %v4246
      %v4248 = vpop.f32.mrb[0].mxu0
      %4249 = vmatprep.mubr.bf16.mxu0 0
      %4250 = vmatmul.mubr.bf16.gmra.mrb[0].mxu0 %v4111
      %v4251 = vpop.f32.mrb[0].mxu0
      %v4252 = vadd.f32 0.0, %v4251
      %v4253 = vpop.f32.mrb[0].mxu0
      %v4254 = vpop.f32.mrb[0].mxu0
      %v4255 = vadd.f32 0.0, %v4254
      %v4256 = vpop.f32.mrb[0].mxu0
      %4257 = vmatprep.mubr.bf16.mxu0 0
      %4258 = vmatmul.mubr.bf16.gmra.mrb[0].mxu0 %v4114
      %v4259 = vpop.f32.mrb[0].mxu0
      %v4260 = vadd.f32 0.0, %v4259
      %v4261 = vpop.f32.mrb[0].mxu0
      %v4262 = vpop.f32.mrb[0].mxu0
      %v4263 = vadd.f32 0.0, %v4262
      %v4264 = vpop.f32.mrb[0].mxu0
      %4265 = vmatprep.mubr.bf16.mxu0 0
      %4266 = vmatmul.mubr.bf16.gmra.mrb[0].mxu0 %v4117
      %v4267 = vpop.f32.mrb[0].mxu0
      %v4268 = vadd.f32 0.0, %v4267
      %v4269 = vpop.f32.mrb[0].mxu0
      %v4270 = vpop.f32.mrb[0].mxu0
      %v4271 = vadd.f32 0.0, %v4270
      %v4272 = vpop.f32.mrb[0].mxu0
      %4273 = vmatprep.mubr.bf16.mxu0 0
      %4274 = vmatmul.mubr.bf16.gmra.mrb[0].mxu0 %v4120
      %v4275 = vpop.f32.mrb[0].mxu0
      %v4276 = vadd.f32 0.0, %v4275
      %v4277 = vpop.f32.mrb[0].mxu0
      %v4278 = vpop.f32.mrb[0].mxu0
      %v4279 = vadd.f32 0.0, %v4278
      %v4280 = vpop.f32.mrb[0].mxu0
      %4281 = vmatprep.mubr.bf16.mxu0 0
      %4282 = vmatmul.mubr.bf16.gmra.mrb[0].mxu0 %v4123
      %v4283 = vpop.f32.mrb[0].mxu0
      %v4284 = vadd.f32 0.0, %v4283
      %v4285 = vpop.f32.mrb[0].mxu0
      %v4286 = vpop.f32.mrb[0].mxu0
      %v4287 = vadd.f32 0.0, %v4286
      %v4288 = vpop.f32.mrb[0].mxu0
      %4289 = vmatprep.mubr.bf16.mxu0 0
      %4290 = vmatmul.mubr.bf16.gmra.mrb[0].mxu0 %v4126
      %v4291 = vpop.f32.mrb[0].mxu0
      %v4292 = vadd.f32 0.0, %v4291
      %v4293 = vpop.f32.mrb[0].mxu0
      %v4294 = vpop.f32.mrb[0].mxu0
      %v4295 = vadd.f32 0.0, %v4294
      %v4296 = vpop.f32.mrb[0].mxu0
      %4297 = vmatprep.mubr.bf16.mxu0 0
      %4298 = vmatmul.mubr.bf16.gmra.mrb[0].mxu0 %v4129
      %v4299 = vpop.f32.mrb[0].mxu0
      %v4300 = vadd.f32 0.0, %v4299
      %v4301 = vpop.f32.mrb[0].mxu0
      %v4302 = vpop.f32.mrb[0].mxu0
      %v4303 = vadd.f32 0.0, %v4302
      %v4304 = vpop.f32.mrb[0].mxu0
      %4305 = vmatprep.mubr.bf16.mxu0 0
      %4306 = vmatmul.mubr.bf16.gmra.mrb[0].mxu0 %v4132
      %v4307 = vpop.f32.mrb[0].mxu0
      %v4308 = vadd.f32 0.0, %v4307
      %v4309 = vpop.f32.mrb[0].mxu0
      %v4310 = vpop.f32.mrb[0].mxu0
      %v4311 = vadd.f32 0.0, %v4310
      %v4312 = vpop.f32.mrb[0].mxu0
      %4313 = vmatprep.mubr.bf16.mxu0 0
      %4314 = vmatmul.mubr.bf16.gmra.mrb[0].mxu0 %v4135
      %v4315 = vpop.f32.mrb[0].mxu0
      %v4316 = vadd.f32 0.0, %v4315
      %v4317 = vpop.f32.mrb[0].mxu0
      %v4318 = vpop.f32.mrb[0].mxu0
      %v4319 = vadd.f32 0.0, %v4318
      %v4320 = vpop.f32.mrb[0].mxu0
      %4321 = vmatprep.mubr.bf16.mxu0 0
      %4322 = vmatmul.mubr.bf16.gmra.mrb[0].mxu0 %v4138
      %v4323 = vpop.f32.mrb[0].mxu0
      %v4324 = vadd.f32 0.0, %v4323
      %v4325 = vpop.f32.mrb[0].mxu0
      %v4326 = vpop.f32.mrb[0].mxu0
      %v4327 = vadd.f32 0.0, %v4326
      %v4328 = vpop.f32.mrb[0].mxu0
      %4329 = vmatprep.mubr.bf16.mxu0 0
      %4330 = vmatmul.mubr.bf16.gmra.mrb[0].mxu0 %v4141
      %v4331 = vpop.f32.mrb[0].mxu0
      %v4332 = vadd.f32 0.0, %v4331
      %v4333 = vpop.f32.mrb[0].mxu0
      %v4334 = vpop.f32.mrb[0].mxu0
      %v4335 = vadd.f32 0.0, %v4334
      %v4336 = vpop.f32.mrb[0].mxu0
      %4337 = vmatprep.mubr.bf16.mxu0 0
      %4338 = vmatmul.mubr.bf16.gmra.mrb[0].mxu0 %v4144
      %v4339 = vpop.f32.mrb[0].mxu0
      %v4340 = vadd.f32 0.0, %v4339
      %v4341 = vpop.f32.mrb[0].mxu0
      %v4342 = vpop.f32.mrb[0].mxu0
      %v4343 = vadd.f32 0.0, %v4342
      %v4344 = vpop.f32.mrb[0].mxu0
      %4345 = vmatprep.mubr.bf16.mxu0 0
      %4346 = vmatmul.mubr.bf16.gmra.mrb[0].mxu0 %v4147
      %v4347 = vpop.f32.mrb[0].mxu0
      %v4348 = vadd.f32 0.0, %v4347
      %v4349 = vpop.f32.mrb[0].mxu0
      %v4350 = vpop.f32.mrb[0].mxu0
      %v4351 = vadd.f32 0.0, %v4350
      %v4352 = vpop.f32.mrb[0].mxu0
      %4353 = vmatprep.mubr.bf16.mxu0 0
      %4354 = vmatmul.mubr.bf16.gmra.mrb[0].mxu0 %v4150
      %v4355 = vpop.f32.mrb[0].mxu0
      %v4356 = vadd.f32 0.0, %v4355
      %v4357 = vpop.f32.mrb[0].mxu0
      %v4358 = vpop.f32.mrb[0].mxu0
      %v4359 = vadd.f32 0.0, %v4358
      %v4360 = vpop.f32.mrb[0].mxu0
      %4361 = vmatprep.mubr.bf16.mxu0 0
      %4362 = vmatmul.mubr.bf16.gmra.mrb[0].mxu0 %v4153
      %v4363 = vpop.f32.mrb[0].mxu0
      %v4364 = vadd.f32 0.0, %v4363
      %v4365 = vpop.f32.mrb[0].mxu0
      %v4366 = vpop.f32.mrb[0].mxu0
      %v4367 = vadd.f32 0.0, %v4366
      %v4368 = vpop.f32.mrb[0].mxu0
      %4369 = vmatprep.mubr.bf16.mxu0 0
      %4370 = vmatmul.mubr.bf16.gmra.mrb[0].mxu0 %v4156
      %v4371 = vpop.f32.mrb[0].mxu0
      %v4372 = vadd.f32 0.0, %v4371
      %v4373 = vpop.f32.mrb[0].mxu0
      %v4374 = vpop.f32.mrb[0].mxu0
      %v4375 = vadd.f32 0.0, %v4374
      %v4376 = vpop.f32.mrb[0].mxu0
      %4377 = vmatprep.mubr.bf16.mxu0 0
      %4378 = vmatmul.mubr.bf16.gmra.mrb[0].mxu0 %v4159
      %v4379 = vpop.f32.mrb[0].mxu0
      %v4380 = vadd.f32 0.0, %v4379
      %v4381 = vpop.f32.mrb[0].mxu0
      %v4382 = vpop.f32.mrb[0].mxu0
      %v4383 = vadd.f32 0.0, %v4382
      %v4384 = vpop.f32.mrb[0].mxu0
      %4385 = vmatprep.mubr.bf16.mxu0 0
      %4386 = vmatmul.mubr.bf16.gmra.mrb[0].mxu0 %v4162
      %v4387 = vpop.f32.mrb[0].mxu0
      %v4388 = vadd.f32 0.0, %v4387
      %v4389 = vpop.f32.mrb[0].mxu0
      %v4390 = vpop.f32.mrb[0].mxu0
      %v4391 = vadd.f32 0.0, %v4390
      %v4392 = vpop.f32.mrb[0].mxu0
      %4393 = vmatprep.mubr.bf16.mxu0 0
      %4394 = vmatmul.mubr.bf16.gmra.mrb[0].mxu0 %v4165
      %v4395 = vpop.f32.mrb[0].mxu0
      %v4396 = vadd.f32 0.0, %v4395
      %v4397 = vpop.f32.mrb[0].mxu0
      %v4398 = vpop.f32.mrb[0].mxu0
      %v4399 = vadd.f32 0.0, %v4398
      %v4400 = vpop.f32.mrb[0].mxu0
      %4401 = vmatprep.mubr.bf16.mxu0 0
      %4402 = vmatmul.mubr.bf16.gmra.mrb[0].mxu0 %v4168
      %v4403 = vpop.f32.mrb[0].mxu0
      %v4404 = vadd.f32 0.0, %v4403
      %v4405 = vpop.f32.mrb[0].mxu0
      %v4406 = vpop.f32.mrb[0].mxu0
      %v4407 = vadd.f32 0.0, %v4406
      %v4408 = vpop.f32.mrb[0].mxu0
      %4409 = vmatprep.mubr.bf16.mxu0 0
      %4410 = vmatmul.mubr.bf16.gmra.mrb[0].mxu0 %v4171
      %v4411 = vpop.f32.mrb[0].mxu0
      %v4412 = vadd.f32 0.0, %v4411
      %v4413 = vpop.f32.mrb[0].mxu0
      %v4414 = vpop.f32.mrb[0].mxu0
      %v4415 = vadd.f32 0.0, %v4414
      %v4416 = vpop.f32.mrb[0].mxu0
      %4417 = vmatprep.mubr.bf16.mxu0 0
      %4418 = vmatmul.mubr.bf16.gmra.mrb[0].mxu0 %v4174
      %v4419 = vpop.f32.mrb[0].mxu0
      %v4420 = vadd.f32 0.0, %v4419
      %v4421 = vpop.f32.mrb[0].mxu0
      %v4422 = vpop.f32.mrb[0].mxu0
      %v4423 = vadd.f32 0.0, %v4422
      %v4424 = vpop.f32.mrb[0].mxu0
      %4425 = vmatprep.mubr.bf16.mxu0 0
      %4426 = vmatmul.mubr.bf16.gmra.mrb[0].mxu0 %v4177
      %v4427 = vpop.f32.mrb[0].mxu0
      %v4428 = vadd.f32 0.0, %v4427
      %v4429 = vpop.f32.mrb[0].mxu0
      %v4430 = vpop.f32.mrb[0].mxu0
      %v4431 = vadd.f32 0.0, %v4430
      %v4432 = vpop.f32.mrb[0].mxu0
      %4433 = vmatprep.mubr.bf16.mxu0 0
      %4434 = vmatmul.mubr.bf16.gmra.mrb[0].mxu0 %v4180
      %v4435 = vpop.f32.mrb[0].mxu0
      %v4436 = vadd.f32 0.0, %v4435
      %v4437 = vpop.f32.mrb[0].mxu0
      %v4438 = vpop.f32.mrb[0].mxu0
      %v4439 = vadd.f32 0.0, %v4438
      %v4440 = vpop.f32.mrb[0].mxu0
      %4441 = vmatprep.mubr.bf16.mxu0 0
      %4442 = vmatmul.mubr.bf16.gmra.mrb[0].mxu0 %v4183
      %v4443 = vpop.f32.mrb[0].mxu0
      %v4444 = vadd.f32 0.0, %v4443
      %v4445 = vpop.f32.mrb[0].mxu0
      %v4446 = vpop.f32.mrb[0].mxu0
      %v4447 = vadd.f32 0.0, %v4446
      %v4448 = vpop.f32.mrb[0].mxu0
      %4449 = vmatprep.mubr.bf16.mxu0 0
      %4450 = vmatmul.mubr.bf16.gmra.mrb[0].mxu0 %v4186
      %v4451 = vpop.f32.mrb[0].mxu0
      %v4452 = vadd.f32 0.0, %v4451
      %v4453 = vpop.f32.mrb[0].mxu0
      %v4454 = vpop.f32.mrb[0].mxu0
      %v4455 = vadd.f32 0.0, %v4454
      %v4456 = vpop.f32.mrb[0].mxu0
      %4457 = vmatprep.mubr.bf16.mxu0 0
      %4458 = vmatmul.mubr.bf16.gmra.mrb[0].mxu0 %v4189
      %v4459 = vpop.f32.mrb[0].mxu0
      %v4460 = vadd.f32 0.0, %v4459
      %v4461 = vpop.f32.mrb[0].mxu0
      %v4462 = vpop.f32.mrb[0].mxu0
      %v4463 = vadd.f32 0.0, %v4462
      %v4464 = vpop.f32.mrb[0].mxu0
      %4465 = vmatprep.mubr.bf16.mxu0 0
      %4466 = vmatmul.mubr.bf16.gmra.mrb[0].mxu0 %v4192
      %v4467 = vpop.f32.mrb[0].mxu0
      %v4468 = vadd.f32 0.0, %v4467
      %v4469 = vpop.f32.mrb[0].mxu0
      %v4470 = vpop.f32.mrb[0].mxu0
      %v4471 = vadd.f32 0.0, %v4470
      %v4472 = vpop.f32.mrb[0].mxu0
      %4473 = vmatprep.mubr.bf16.mxu0 0
      %4474 = vmatmul.mubr.bf16.gmra.mrb[0].mxu0 %v4195
      %v4475 = vpop.f32.mrb[0].mxu0
      %v4476 = vadd.f32 0.0, %v4475
      %v4477 = vpop.f32.mrb[0].mxu0
      %v4478 = vpop.f32.mrb[0].mxu0
      %v4479 = vadd.f32 0.0, %v4478
      %v4480 = vpop.f32.mrb[0].mxu0
      %4481 = vmatprep.mubr.bf16.mxu0 0
      %4482 = vmatmul.mubr.bf16.gmra.mrb[0].mxu0 %v4198
      %v4483 = vpop.f32.mrb[0].mxu0
      %v4484 = vadd.f32 0.0, %v4483
      %v4485 = vpop.f32.mrb[0].mxu0
      %v4486 = vpop.f32.mrb[0].mxu0
      %v4487 = vadd.f32 0.0, %v4486
      %v4488 = vpop.f32.mrb[0].mxu0
      %4489 = vmatprep.mubr.bf16.mxu0 0
      %4490 = vmatmul.mubr.bf16.gmra.mrb[0].mxu0 %v4201
      %v4491 = vpop.f32.mrb[0].mxu0
      %v4492 = vadd.f32 0.0, %v4491
      %v4493 = vpop.f32.mrb[0].mxu0
      %v4494 = vpop.f32.mrb[0].mxu0
      %v4495 = vadd.f32 0.0, %v4494
      %v4496 = vpop.f32.mrb[0].mxu0
      %4497 = vmatprep.mubr.bf16.mxu0 0
      %4498 = vmatmul.mubr.bf16.gmra.mrb[0].mxu0 %v4204
      %v4499 = vpop.f32.mrb[0].mxu0
      %v4500 = vadd.f32 0.0, %v4499
      %v4501 = vpop.f32.mrb[0].mxu0
      %v4502 = vpop.f32.mrb[0].mxu0
      %v4503 = vadd.f32 0.0, %v4502
      %v4504 = vpop.f32.mrb[0].mxu0
      %4505 = vdwg.mxu0
      %v4506 = vadd.f32 %v3940, %v4244
      %v4507 = vadd.f32 %v3941, %v4247
      %v4508 = vadd.f32 %v3942, %v4252
      %v4509 = vadd.f32 %v3943, %v4255
      %v4510 = vadd.f32 %v3944, %v4260
      %v4511 = vadd.f32 %v3945, %v4263
      %v4512 = vadd.f32 %v3946, %v4268
      %v4513 = vadd.f32 %v3947, %v4271
      %v4514 = vadd.f32 %v3948, %v4276
      %v4515 = vadd.f32 %v3949, %v4279
      %v4516 = vadd.f32 %v3950, %v4284
      %v4517 = vadd.f32 %v3951, %v4287
      %v4518 = vadd.f32 %v3952, %v4292
      %v4519 = vadd.f32 %v3953, %v4295
      %v4520 = vadd.f32 %v3954, %v4300
      %v4521 = vadd.f32 %v3955, %v4303
      %v4522 = vadd.f32 %v3956, %v4308
      %v4523 = vadd.f32 %v3957, %v4311
      %v4524 = vadd.f32 %v3958, %v4316
      %v4525 = vadd.f32 %v3959, %v4319
      %v4526 = vadd.f32 %v3960, %v4324
      %v4527 = vadd.f32 %v3961, %v4327
      %v4528 = vadd.f32 %v3962, %v4332
      %v4529 = vadd.f32 %v3963, %v4335
      %v4530 = vadd.f32 %v3964, %v4340
      %v4531 = vadd.f32 %v3965, %v4343
      %v4532 = vadd.f32 %v3966, %v4348
      %v4533 = vadd.f32 %v3967, %v4351
      %v4534 = vadd.f32 %v3968, %v4356
      %v4535 = vadd.f32 %v3969, %v4359
      %v4536 = vadd.f32 %v3970, %v4364
      %v4537 = vadd.f32 %v3971, %v4367
      %v4538 = vadd.f32 %v3972, %v4372
      %v4539 = vadd.f32 %v3973, %v4375
      %v4540 = vadd.f32 %v3974, %v4380
      %v4541 = vadd.f32 %v3975, %v4383
      %v4542 = vadd.f32 %v3976, %v4388
      %v4543 = vadd.f32 %v3977, %v4391
      %v4544 = vadd.f32 %v3978, %v4396
      %v4545 = vadd.f32 %v3979, %v4399
      %v4546 = vadd.f32 %v3980, %v4404
      %v4547 = vadd.f32 %v3981, %v4407
      %v4548 = vadd.f32 %v3982, %v4412
      %v4549 = vadd.f32 %v3983, %v4415
      %v4550 = vadd.f32 %v3984, %v4420
      %v4551 = vadd.f32 %v3985, %v4423
      %v4552 = vadd.f32 %v3986, %v4428
      %v4553 = vadd.f32 %v3987, %v4431
      %v4554 = vadd.f32 %v3988, %v4436
      %v4555 = vadd.f32 %v3989, %v4439
      %v4556 = vadd.f32 %v3990, %v4444
      %v4557 = vadd.f32 %v3991, %v4447
      %v4558 = vadd.f32 %v3992, %v4452
      %v4559 = vadd.f32 %v3993, %v4455
      %v4560 = vadd.f32 %v3994, %v4460
      %v4561 = vadd.f32 %v3995, %v4463
      %v4562 = vadd.f32 %v3996, %v4468
      %v4563 = vadd.f32 %v3997, %v4471
      %v4564 = vadd.f32 %v3998, %v4476
      %v4565 = vadd.f32 %v3999, %v4479
      %v4566 = vadd.f32 %v4000, %v4484
      %v4567 = vadd.f32 %v4001, %v4487
      %v4568 = vadd.f32 %v4002, %v4492
      %v4569 = vadd.f32 %v4003, %v4495
      %v4570 = vadd.f32 %v4004, %v4500
      %v4571 = vadd.f32 %v4005, %v4503
      %v4572 = vld [vmem:[%s165 + $0x32] sm:$0xff]
      %v4573 = vld [vmem:[%s165 + $0x3a] sm:$0xff]
      %v4574 = vld [vmem:[%s165 + $0x42] sm:$0xff]
      %v4575 = vld [vmem:[%s165 + $0x4a] sm:$0xff]
      %v4576 = vld [vmem:[%s165 + $0x52] sm:$0xff]
      %v4577 = vld [vmem:[%s165 + $0x5a] sm:$0xff]
      %v4578 = vld [vmem:[%s165 + $0x62] sm:$0xff]
      %v4579 = vld [vmem:[%s165 + $0x6a] sm:$0xff]
      %v4580 = vld [vmem:[%s165 + $0x72] sm:$0xff]
      %v4581 = vld [vmem:[%s165 + $0x7a] sm:$0xff]
      %v4582 = vld [vmem:[%s165 + $0x82] sm:$0xff]
      %v4583 = vld [vmem:[%s165 + $0x8a] sm:$0xff]
      %v4584 = vld [vmem:[%s165 + $0x92] sm:$0xff]
      %v4585 = vld [vmem:[%s165 + $0x9a] sm:$0xff]
      %v4586 = vld [vmem:[%s165 + $0xa2] sm:$0xff]
      %v4587 = vld [vmem:[%s165 + $0xaa] sm:$0xff]
      %v4588 = vld [vmem:[%s165 + $0xb2] sm:$0xff]
      %v4589 = vld [vmem:[%s165 + $0xba] sm:$0xff]
      %v4590 = vld [vmem:[%s165 + $0xc2] sm:$0xff]
      %v4591 = vld [vmem:[%s165 + $0xca] sm:$0xff]
      %v4592 = vld [vmem:[%s165 + $0xd2] sm:$0xff]
      %v4593 = vld [vmem:[%s165 + $0xda] sm:$0xff]
      %v4594 = vld [vmem:[%s165 + $0xe2] sm:$0xff]
      %v4595 = vld [vmem:[%s165 + $0xea] sm:$0xff]
      %v4596 = vld [vmem:[%s165 + $0xf2] sm:$0xff]
      %v4597 = vld [vmem:[%s165 + $0xfa] sm:$0xff]
      %v4598 = vld [vmem:[%s165 + $0x102] sm:$0xff]
      %v4599 = vld [vmem:[%s165 + $0x10a] sm:$0xff]
      %v4600 = vld [vmem:[%s165 + $0x112] sm:$0xff]
      %v4601 = vld [vmem:[%s165 + $0x11a] sm:$0xff]
      %v4602 = vld [vmem:[%s165 + $0x122] sm:$0xff]
      %v4603 = vld [vmem:[%s165 + $0x12a] sm:$0xff]
      %v4604 = vld [vmem:[%s165 + $0x132] sm:$0xff]
      %v4605 = vld [vmem:[%s165 + $0x13a] sm:$0xff]
      %v4606 = vld [vmem:[%s165 + $0x142] sm:$0xff]
      %v4607 = vld [vmem:[%s165 + $0x14a] sm:$0xff]
      %v4608 = vld [vmem:[%s165 + $0x152] sm:$0xff]
      %v4609 = vld [vmem:[%s165 + $0x15a] sm:$0xff]
      %v4610 = vld [vmem:[%s165 + $0x162] sm:$0xff]
      %v4611 = vld [vmem:[%s165 + $0x16a] sm:$0xff]
      %v4612 = vld [vmem:[%s165 + $0x172] sm:$0xff]
      %v4613 = vld [vmem:[%s165 + $0x17a] sm:$0xff]
      %v4614 = vld [vmem:[%s165 + $0x182] sm:$0xff]
      %v4615 = vld [vmem:[%s165 + $0x18a] sm:$0xff]
      %v4616 = vld [vmem:[%s165 + $0x192] sm:$0xff]
      %v4617 = vld [vmem:[%s165 + $0x19a] sm:$0xff]
      %v4618 = vld [vmem:[%s165 + $0x1a2] sm:$0xff]
      %v4619 = vld [vmem:[%s165 + $0x1aa] sm:$0xff]
      %v4620 = vld [vmem:[%s165 + $0x1b2] sm:$0xff]
      %v4621 = vld [vmem:[%s165 + $0x1ba] sm:$0xff]
      %v4622 = vld [vmem:[%s165 + $0x1c2] sm:$0xff]
      %v4623 = vld [vmem:[%s165 + $0x1ca] sm:$0xff]
      %v4624 = vld [vmem:[%s165 + $0x1d2] sm:$0xff]
      %v4625 = vld [vmem:[%s165 + $0x1da] sm:$0xff]
      %v4626 = vld [vmem:[%s165 + $0x1e2] sm:$0xff]
      %v4627 = vld [vmem:[%s165 + $0x1ea] sm:$0xff]
      %v4628 = vld [vmem:[%s165 + $0x1f2] sm:$0xff]
      %v4629 = vld [vmem:[%s165 + $0x1fa] sm:$0xff]
      %v4630 = vld [vmem:[%s165 + $0x202] sm:$0xff]
      %v4631 = vld [vmem:[%s165 + $0x20a] sm:$0xff]
      %v4632 = vld [vmem:[%s165 + $0x212] sm:$0xff]
      %v4633 = vld [vmem:[%s165 + $0x21a] sm:$0xff]
      %v4634 = vld [vmem:[%s165 + $0x222] sm:$0xff]
      %v4635 = vld [vmem:[%s165 + $0x22a] sm:$0xff]
      %v4636 = vld [vmem:[%s165 + $0x232] sm:$0xff]
      %v4637 = vld [vmem:[%s165 + $0x23a] sm:$0x3f]
      %v4638 = vpack.c.bf16 %v4573, %v4572
      %v4639 = vpack.c.bf16 %v4575, %v4574
      %v4640 = vpack.c.bf16 %v4577, %v4576
      %v4641 = vpack.c.bf16 %v4579, %v4578
      %v4642 = vpack.c.bf16 %v4581, %v4580
      %v4643 = vpack.c.bf16 %v4583, %v4582
      %v4644 = vpack.c.bf16 %v4585, %v4584
      %v4645 = vpack.c.bf16 %v4587, %v4586
      %v4646 = vpack.c.bf16 %v4589, %v4588
      %v4647 = vpack.c.bf16 %v4591, %v4590
      %v4648 = vpack.c.bf16 %v4593, %v4592
      %v4649 = vpack.c.bf16 %v4595, %v4594
      %v4650 = vpack.c.bf16 %v4597, %v4596
      %v4651 = vpack.c.bf16 %v4599, %v4598
      %v4652 = vpack.c.bf16 %v4601, %v4600
      %v4653 = vpack.c.bf16 %v4603, %v4602
      %v4654 = vpack.c.bf16 %v4605, %v4604
      %v4655 = vpack.c.bf16 %v4607, %v4606
      %v4656 = vpack.c.bf16 %v4609, %v4608
      %v4657 = vpack.c.bf16 %v4611, %v4610
      %v4658 = vpack.c.bf16 %v4613, %v4612
      %v4659 = vpack.c.bf16 %v4615, %v4614
      %v4660 = vpack.c.bf16 %v4617, %v4616
      %v4661 = vpack.c.bf16 %v4619, %v4618
      %v4662 = vpack.c.bf16 %v4621, %v4620
      %v4663 = vpack.c.bf16 %v4623, %v4622
      %v4664 = vpack.c.bf16 %v4625, %v4624
      %v4665 = vpack.c.bf16 %v4627, %v4626
      %v4666 = vpack.c.bf16 %v4629, %v4628
      %v4667 = vpack.c.bf16 %v4631, %v4630
      %v4668 = vpack.c.bf16 %v4633, %v4632
      %v4669 = vpack.c.bf16 %v4635, %v4634
      %v4670 = vpack.c.bf16 %v4637, %v4636
      %s4671 = scalar_lea.vmem %s1, 16
      %v4672 = vld [vmem:[%s4671] sm:$0x3]
      %v4674 = vsel %vm373, %v4638, 0
      %v4677 = vsel %vm373, %v4639, 0
      %v4680 = vsel %vm373, %v4640, 0
      %v4683 = vsel %vm373, %v4641, 0
      %v4686 = vsel %vm373, %v4642, 0
      %v4689 = vsel %vm373, %v4643, 0
      %v4692 = vsel %vm373, %v4644, 0
      %v4695 = vsel %vm373, %v4645, 0
      %v4698 = vsel %vm373, %v4646, 0
      %v4701 = vsel %vm373, %v4647, 0
      %v4704 = vsel %vm373, %v4648, 0
      %v4707 = vsel %vm373, %v4649, 0
      %v4710 = vsel %vm373, %v4650, 0
      %v4713 = vsel %vm373, %v4651, 0
      %v4716 = vsel %vm373, %v4652, 0
      %v4719 = vsel %vm373, %v4653, 0
      %v4722 = vsel %vm373, %v4654, 0
      %v4725 = vsel %vm373, %v4655, 0
      %v4728 = vsel %vm373, %v4656, 0
      %v4731 = vsel %vm373, %v4657, 0
      %v4734 = vsel %vm373, %v4658, 0
      %v4737 = vsel %vm373, %v4659, 0
      %v4740 = vsel %vm373, %v4660, 0
      %v4743 = vsel %vm373, %v4661, 0
      %v4746 = vsel %vm373, %v4662, 0
      %v4749 = vsel %vm373, %v4663, 0
      %v4752 = vsel %vm373, %v4664, 0
      %v4755 = vsel %vm373, %v4665, 0
      %v4758 = vsel %vm373, %v4666, 0
      %v4761 = vsel %vm373, %v4667, 0
      %v4764 = vsel %vm373, %v4668, 0
      %v4767 = vsel %vm373, %v4669, 0
      %v4770 = vsel %vm373, %v4670, 0
      %v4773 = vand.u32 %v4672, %v476
      %4775 = vmatprep.subr.bf16.mxu0 0
      %4776 = vmatpush1.bf16.msra.mxu0 %v4773
      %4777 = vmatprep.subr.bf16.mxu0 0
      %4778 = vmatpush1.bf16.msra.mxu0 0
      %4779 = vmatprep.subr.bf16.mxu0 0
      %4780 = vmatpush1.bf16.msra.mxu0 0
      %4781 = vmatprep.subr.bf16.mxu0 0
      %4782 = vmatpush1.bf16.msra.mxu0 0
      %4783 = vmatprep.subr.bf16.mxu0 0
      %4784 = vmatpush1.bf16.msra.mxu0 0
      %4785 = vmatprep.subr.bf16.mxu0 0
      %4786 = vmatpush1.bf16.msra.mxu0 0
      %4787 = vmatprep.subr.bf16.mxu0 0
      %4788 = vmatpush1.bf16.msra.mxu0 0
      %4789 = vmatprep.subr.bf16.mxu0 0
      %4790 = vmatpush1.bf16.msra.mxu0 0
      %4791 = vmatprep.subr.bf16.mxu0 0
      %4792 = vmatpush1.bf16.msra.mxu0 0
      %4793 = vmatprep.subr.bf16.mxu0 0
      %4794 = vmatpush1.bf16.msra.mxu0 0
      %4795 = vmatprep.subr.bf16.mxu0 0
      %4796 = vmatpush1.bf16.msra.mxu0 0
      %4797 = vmatprep.subr.bf16.mxu0 0
      %4798 = vmatpush1.bf16.msra.mxu0 0
      %4799 = vmatprep.subr.bf16.mxu0 0
      %4800 = vmatpush1.bf16.msra.mxu0 0
      %4801 = vmatprep.subr.bf16.mxu0 0
      %4802 = vmatpush1.bf16.msra.mxu0 0
      %4803 = vmatprep.subr.bf16.mxu0 0
      %4804 = vmatpush1.bf16.msra.mxu0 0
      %4805 = vmatprep.subr.bf16.mxu0 0
      %4806 = vmatpush1.bf16.msra.mxu0 0
      %4807 = vmatprep.mubr.bf16.mxu0 0
      %4808 = vmatmul.mubr.bf16.gmra.mrb[0].mxu0 %v4674
      %v4809 = vpop.f32.mrb[0].mxu0
      %v4810 = vadd.f32 0.0, %v4809
      %v4811 = vpop.f32.mrb[0].mxu0
      %v4812 = vpop.f32.mrb[0].mxu0
      %v4813 = vadd.f32 0.0, %v4812
      %v4814 = vpop.f32.mrb[0].mxu0
      %4815 = vmatprep.mubr.bf16.mxu0 0
      %4816 = vmatmul.mubr.bf16.gmra.mrb[0].mxu0 %v4677
      %v4817 = vpop.f32.mrb[0].mxu0
      %v4818 = vadd.f32 0.0, %v4817
      %v4819 = vpop.f32.mrb[0].mxu0
      %v4820 = vpop.f32.mrb[0].mxu0
      %v4821 = vadd.f32 0.0, %v4820
      %v4822 = vpop.f32.mrb[0].mxu0
      %4823 = vmatprep.mubr.bf16.mxu0 0
      %4824 = vmatmul.mubr.bf16.gmra.mrb[0].mxu0 %v4680
      %v4825 = vpop.f32.mrb[0].mxu0
      %v4826 = vadd.f32 0.0, %v4825
      %v4827 = vpop.f32.mrb[0].mxu0
      %v4828 = vpop.f32.mrb[0].mxu0
      %v4829 = vadd.f32 0.0, %v4828
      %v4830 = vpop.f32.mrb[0].mxu0
      %4831 = vmatprep.mubr.bf16.mxu0 0
      %4832 = vmatmul.mubr.bf16.gmra.mrb[0].mxu0 %v4683
      %v4833 = vpop.f32.mrb[0].mxu0
      %v4834 = vadd.f32 0.0, %v4833
      %v4835 = vpop.f32.mrb[0].mxu0
      %v4836 = vpop.f32.mrb[0].mxu0
      %v4837 = vadd.f32 0.0, %v4836
      %v4838 = vpop.f32.mrb[0].mxu0
      %4839 = vmatprep.mubr.bf16.mxu0 0
      %4840 = vmatmul.mubr.bf16.gmra.mrb[0].mxu0 %v4686
      %v4841 = vpop.f32.mrb[0].mxu0
      %v4842 = vadd.f32 0.0, %v4841
      %v4843 = vpop.f32.mrb[0].mxu0
      %v4844 = vpop.f32.mrb[0].mxu0
      %v4845 = vadd.f32 0.0, %v4844
      %v4846 = vpop.f32.mrb[0].mxu0
      %4847 = vmatprep.mubr.bf16.mxu0 0
      %4848 = vmatmul.mubr.bf16.gmra.mrb[0].mxu0 %v4689
      %v4849 = vpop.f32.mrb[0].mxu0
      %v4850 = vadd.f32 0.0, %v4849
      %v4851 = vpop.f32.mrb[0].mxu0
      %v4852 = vpop.f32.mrb[0].mxu0
      %v4853 = vadd.f32 0.0, %v4852
      %v4854 = vpop.f32.mrb[0].mxu0
      %4855 = vmatprep.mubr.bf16.mxu0 0
      %4856 = vmatmul.mubr.bf16.gmra.mrb[0].mxu0 %v4692
      %v4857 = vpop.f32.mrb[0].mxu0
      %v4858 = vadd.f32 0.0, %v4857
      %v4859 = vpop.f32.mrb[0].mxu0
      %v4860 = vpop.f32.mrb[0].mxu0
      %v4861 = vadd.f32 0.0, %v4860
      %v4862 = vpop.f32.mrb[0].mxu0
      %4863 = vmatprep.mubr.bf16.mxu0 0
      %4864 = vmatmul.mubr.bf16.gmra.mrb[0].mxu0 %v4695
      %v4865 = vpop.f32.mrb[0].mxu0
      %v4866 = vadd.f32 0.0, %v4865
      %v4867 = vpop.f32.mrb[0].mxu0
      %v4868 = vpop.f32.mrb[0].mxu0
      %v4869 = vadd.f32 0.0, %v4868
      %v4870 = vpop.f32.mrb[0].mxu0
      %4871 = vmatprep.mubr.bf16.mxu0 0
      %4872 = vmatmul.mubr.bf16.gmra.mrb[0].mxu0 %v4698
      %v4873 = vpop.f32.mrb[0].mxu0
      %v4874 = vadd.f32 0.0, %v4873
      %v4875 = vpop.f32.mrb[0].mxu0
      %v4876 = vpop.f32.mrb[0].mxu0
      %v4877 = vadd.f32 0.0, %v4876
      %v4878 = vpop.f32.mrb[0].mxu0
      %4879 = vmatprep.mubr.bf16.mxu0 0
      %4880 = vmatmul.mubr.bf16.gmra.mrb[0].mxu0 %v4701
      %v4881 = vpop.f32.mrb[0].mxu0
      %v4882 = vadd.f32 0.0, %v4881
      %v4883 = vpop.f32.mrb[0].mxu0
      %v4884 = vpop.f32.mrb[0].mxu0
      %v4885 = vadd.f32 0.0, %v4884
      %v4886 = vpop.f32.mrb[0].mxu0
      %4887 = vmatprep.mubr.bf16.mxu0 0
      %4888 = vmatmul.mubr.bf16.gmra.mrb[0].mxu0 %v4704
      %v4889 = vpop.f32.mrb[0].mxu0
      %v4890 = vadd.f32 0.0, %v4889
      %v4891 = vpop.f32.mrb[0].mxu0
      %v4892 = vpop.f32.mrb[0].mxu0
      %v4893 = vadd.f32 0.0, %v4892
      %v4894 = vpop.f32.mrb[0].mxu0
      %4895 = vmatprep.mubr.bf16.mxu0 0
      %4896 = vmatmul.mubr.bf16.gmra.mrb[0].mxu0 %v4707
      %v4897 = vpop.f32.mrb[0].mxu0
      %v4898 = vadd.f32 0.0, %v4897
      %v4899 = vpop.f32.mrb[0].mxu0
      %v4900 = vpop.f32.mrb[0].mxu0
      %v4901 = vadd.f32 0.0, %v4900
      %v4902 = vpop.f32.mrb[0].mxu0
      %4903 = vmatprep.mubr.bf16.mxu0 0
      %4904 = vmatmul.mubr.bf16.gmra.mrb[0].mxu0 %v4710
      %v4905 = vpop.f32.mrb[0].mxu0
      %v4906 = vadd.f32 0.0, %v4905
      %v4907 = vpop.f32.mrb[0].mxu0
      %v4908 = vpop.f32.mrb[0].mxu0
      %v4909 = vadd.f32 0.0, %v4908
      %v4910 = vpop.f32.mrb[0].mxu0
      %4911 = vmatprep.mubr.bf16.mxu0 0
      %4912 = vmatmul.mubr.bf16.gmra.mrb[0].mxu0 %v4713
      %v4913 = vpop.f32.mrb[0].mxu0
      %v4914 = vadd.f32 0.0, %v4913
      %v4915 = vpop.f32.mrb[0].mxu0
      %v4916 = vpop.f32.mrb[0].mxu0
      %v4917 = vadd.f32 0.0, %v4916
      %v4918 = vpop.f32.mrb[0].mxu0
      %4919 = vmatprep.mubr.bf16.mxu0 0
      %4920 = vmatmul.mubr.bf16.gmra.mrb[0].mxu0 %v4716
      %v4921 = vpop.f32.mrb[0].mxu0
      %v4922 = vadd.f32 0.0, %v4921
      %v4923 = vpop.f32.mrb[0].mxu0
      %v4924 = vpop.f32.mrb[0].mxu0
      %v4925 = vadd.f32 0.0, %v4924
      %v4926 = vpop.f32.mrb[0].mxu0
      %4927 = vmatprep.mubr.bf16.mxu0 0
      %4928 = vmatmul.mubr.bf16.gmra.mrb[0].mxu0 %v4719
      %v4929 = vpop.f32.mrb[0].mxu0
      %v4930 = vadd.f32 0.0, %v4929
      %v4931 = vpop.f32.mrb[0].mxu0
      %v4932 = vpop.f32.mrb[0].mxu0
      %v4933 = vadd.f32 0.0, %v4932
      %v4934 = vpop.f32.mrb[0].mxu0
      %4935 = vmatprep.mubr.bf16.mxu0 0
      %4936 = vmatmul.mubr.bf16.gmra.mrb[0].mxu0 %v4722
      %v4937 = vpop.f32.mrb[0].mxu0
      %v4938 = vadd.f32 0.0, %v4937
      %v4939 = vpop.f32.mrb[0].mxu0
      %v4940 = vpop.f32.mrb[0].mxu0
      %v4941 = vadd.f32 0.0, %v4940
      %v4942 = vpop.f32.mrb[0].mxu0
      %4943 = vmatprep.mubr.bf16.mxu0 0
      %4944 = vmatmul.mubr.bf16.gmra.mrb[0].mxu0 %v4725
      %v4945 = vpop.f32.mrb[0].mxu0
      %v4946 = vadd.f32 0.0, %v4945
      %v4947 = vpop.f32.mrb[0].mxu0
      %v4948 = vpop.f32.mrb[0].mxu0
      %v4949 = vadd.f32 0.0, %v4948
      %v4950 = vpop.f32.mrb[0].mxu0
      %4951 = vmatprep.mubr.bf16.mxu0 0
      %4952 = vmatmul.mubr.bf16.gmra.mrb[0].mxu0 %v4728
      %v4953 = vpop.f32.mrb[0].mxu0
      %v4954 = vadd.f32 0.0, %v4953
      %v4955 = vpop.f32.mrb[0].mxu0
      %v4956 = vpop.f32.mrb[0].mxu0
      %v4957 = vadd.f32 0.0, %v4956
      %v4958 = vpop.f32.mrb[0].mxu0
      %4959 = vmatprep.mubr.bf16.mxu0 0
      %4960 = vmatmul.mubr.bf16.gmra.mrb[0].mxu0 %v4731
      %v4961 = vpop.f32.mrb[0].mxu0
      %v4962 = vadd.f32 0.0, %v4961
      %v4963 = vpop.f32.mrb[0].mxu0
      %v4964 = vpop.f32.mrb[0].mxu0
      %v4965 = vadd.f32 0.0, %v4964
      %v4966 = vpop.f32.mrb[0].mxu0
      %4967 = vmatprep.mubr.bf16.mxu0 0
      %4968 = vmatmul.mubr.bf16.gmra.mrb[0].mxu0 %v4734
      %v4969 = vpop.f32.mrb[0].mxu0
      %v4970 = vadd.f32 0.0, %v4969
      %v4971 = vpop.f32.mrb[0].mxu0
      %v4972 = vpop.f32.mrb[0].mxu0
      %v4973 = vadd.f32 0.0, %v4972
      %v4974 = vpop.f32.mrb[0].mxu0
      %4975 = vmatprep.mubr.bf16.mxu0 0
      %4976 = vmatmul.mubr.bf16.gmra.mrb[0].mxu0 %v4737
      %v4977 = vpop.f32.mrb[0].mxu0
      %v4978 = vadd.f32 0.0, %v4977
      %v4979 = vpop.f32.mrb[0].mxu0
      %v4980 = vpop.f32.mrb[0].mxu0
      %v4981 = vadd.f32 0.0, %v4980
      %v4982 = vpop.f32.mrb[0].mxu0
      %4983 = vmatprep.mubr.bf16.mxu0 0
      %4984 = vmatmul.mubr.bf16.gmra.mrb[0].mxu0 %v4740
      %v4985 = vpop.f32.mrb[0].mxu0
      %v4986 = vadd.f32 0.0, %v4985
      %v4987 = vpop.f32.mrb[0].mxu0
      %v4988 = vpop.f32.mrb[0].mxu0
      %v4989 = vadd.f32 0.0, %v4988
      %v4990 = vpop.f32.mrb[0].mxu0
      %4991 = vmatprep.mubr.bf16.mxu0 0
      %4992 = vmatmul.mubr.bf16.gmra.mrb[0].mxu0 %v4743
      %v4993 = vpop.f32.mrb[0].mxu0
      %v4994 = vadd.f32 0.0, %v4993
      %v4995 = vpop.f32.mrb[0].mxu0
      %v4996 = vpop.f32.mrb[0].mxu0
      %v4997 = vadd.f32 0.0, %v4996
      %v4998 = vpop.f32.mrb[0].mxu0
      %4999 = vmatprep.mubr.bf16.mxu0 0
      %5000 = vmatmul.mubr.bf16.gmra.mrb[0].mxu0 %v4746
      %v5001 = vpop.f32.mrb[0].mxu0
      %v5002 = vadd.f32 0.0, %v5001
      %v5003 = vpop.f32.mrb[0].mxu0
      %v5004 = vpop.f32.mrb[0].mxu0
      %v5005 = vadd.f32 0.0, %v5004
      %v5006 = vpop.f32.mrb[0].mxu0
      %5007 = vmatprep.mubr.bf16.mxu0 0
      %5008 = vmatmul.mubr.bf16.gmra.mrb[0].mxu0 %v4749
      %v5009 = vpop.f32.mrb[0].mxu0
      %v5010 = vadd.f32 0.0, %v5009
      %v5011 = vpop.f32.mrb[0].mxu0
      %v5012 = vpop.f32.mrb[0].mxu0
      %v5013 = vadd.f32 0.0, %v5012
      %v5014 = vpop.f32.mrb[0].mxu0
      %5015 = vmatprep.mubr.bf16.mxu0 0
      %5016 = vmatmul.mubr.bf16.gmra.mrb[0].mxu0 %v4752
      %v5017 = vpop.f32.mrb[0].mxu0
      %v5018 = vadd.f32 0.0, %v5017
      %v5019 = vpop.f32.mrb[0].mxu0
      %v5020 = vpop.f32.mrb[0].mxu0
      %v5021 = vadd.f32 0.0, %v5020
      %v5022 = vpop.f32.mrb[0].mxu0
      %5023 = vmatprep.mubr.bf16.mxu0 0
      %5024 = vmatmul.mubr.bf16.gmra.mrb[0].mxu0 %v4755
      %v5025 = vpop.f32.mrb[0].mxu0
      %v5026 = vadd.f32 0.0, %v5025
      %v5027 = vpop.f32.mrb[0].mxu0
      %v5028 = vpop.f32.mrb[0].mxu0
      %v5029 = vadd.f32 0.0, %v5028
      %v5030 = vpop.f32.mrb[0].mxu0
      %5031 = vmatprep.mubr.bf16.mxu0 0
      %5032 = vmatmul.mubr.bf16.gmra.mrb[0].mxu0 %v4758
      %v5033 = vpop.f32.mrb[0].mxu0
      %v5034 = vadd.f32 0.0, %v5033
      %v5035 = vpop.f32.mrb[0].mxu0
      %v5036 = vpop.f32.mrb[0].mxu0
      %v5037 = vadd.f32 0.0, %v5036
      %v5038 = vpop.f32.mrb[0].mxu0
      %5039 = vmatprep.mubr.bf16.mxu0 0
      %5040 = vmatmul.mubr.bf16.gmra.mrb[0].mxu0 %v4761
      %v5041 = vpop.f32.mrb[0].mxu0
      %v5042 = vadd.f32 0.0, %v5041
      %v5043 = vpop.f32.mrb[0].mxu0
      %v5044 = vpop.f32.mrb[0].mxu0
      %v5045 = vadd.f32 0.0, %v5044
      %v5046 = vpop.f32.mrb[0].mxu0
      %5047 = vmatprep.mubr.bf16.mxu0 0
      %5048 = vmatmul.mubr.bf16.gmra.mrb[0].mxu0 %v4764
      %v5049 = vpop.f32.mrb[0].mxu0
      %v5050 = vadd.f32 0.0, %v5049
      %v5051 = vpop.f32.mrb[0].mxu0
      %v5052 = vpop.f32.mrb[0].mxu0
      %v5053 = vadd.f32 0.0, %v5052
      %v5054 = vpop.f32.mrb[0].mxu0
      %5055 = vmatprep.mubr.bf16.mxu0 0
      %5056 = vmatmul.mubr.bf16.gmra.mrb[0].mxu0 %v4767
      %v5057 = vpop.f32.mrb[0].mxu0
      %v5058 = vadd.f32 0.0, %v5057
      %v5059 = vpop.f32.mrb[0].mxu0
      %v5060 = vpop.f32.mrb[0].mxu0
      %v5061 = vadd.f32 0.0, %v5060
      %v5062 = vpop.f32.mrb[0].mxu0
      %5063 = vmatprep.mubr.bf16.mxu0 0
      %5064 = vmatmul.mubr.bf16.gmra.mrb[0].mxu0 %v4770
      %v5065 = vpop.f32.mrb[0].mxu0
      %v5066 = vadd.f32 0.0, %v5065
      %v5067 = vpop.f32.mrb[0].mxu0
      %v5068 = vpop.f32.mrb[0].mxu0
      %v5069 = vadd.f32 0.0, %v5068
      %v5070 = vpop.f32.mrb[0].mxu0
      %5071 = vdwg.mxu0
      %v5072 = vadd.f32 %v4506, %v4810
      %v5073 = vadd.f32 %v4507, %v4813
      %v5074 = vadd.f32 %v4508, %v4818
      %v5075 = vadd.f32 %v4509, %v4821
      %v5076 = vadd.f32 %v4510, %v4826
      %v5077 = vadd.f32 %v4511, %v4829
      %v5078 = vadd.f32 %v4512, %v4834
      %v5079 = vadd.f32 %v4513, %v4837
      %v5080 = vadd.f32 %v4514, %v4842
      %v5081 = vadd.f32 %v4515, %v4845
      %v5082 = vadd.f32 %v4516, %v4850
      %v5083 = vadd.f32 %v4517, %v4853
      %v5084 = vadd.f32 %v4518, %v4858
      %v5085 = vadd.f32 %v4519, %v4861
      %v5086 = vadd.f32 %v4520, %v4866
      %v5087 = vadd.f32 %v4521, %v4869
      %v5088 = vadd.f32 %v4522, %v4874
      %v5089 = vadd.f32 %v4523, %v4877
      %v5090 = vadd.f32 %v4524, %v4882
      %v5091 = vadd.f32 %v4525, %v4885
      %v5092 = vadd.f32 %v4526, %v4890
      %v5093 = vadd.f32 %v4527, %v4893
      %v5094 = vadd.f32 %v4528, %v4898
      %v5095 = vadd.f32 %v4529, %v4901
      %v5096 = vadd.f32 %v4530, %v4906
      %v5097 = vadd.f32 %v4531, %v4909
      %v5098 = vadd.f32 %v4532, %v4914
      %v5099 = vadd.f32 %v4533, %v4917
      %v5100 = vadd.f32 %v4534, %v4922
      %v5101 = vadd.f32 %v4535, %v4925
      %v5102 = vadd.f32 %v4536, %v4930
      %v5103 = vadd.f32 %v4537, %v4933
      %v5104 = vadd.f32 %v4538, %v4938
      %v5105 = vadd.f32 %v4539, %v4941
      %v5106 = vadd.f32 %v4540, %v4946
      %v5107 = vadd.f32 %v4541, %v4949
      %v5108 = vadd.f32 %v4542, %v4954
      %v5109 = vadd.f32 %v4543, %v4957
      %v5110 = vadd.f32 %v4544, %v4962
      %v5111 = vadd.f32 %v4545, %v4965
      %v5112 = vadd.f32 %v4546, %v4970
      %v5113 = vadd.f32 %v4547, %v4973
      %v5114 = vadd.f32 %v4548, %v4978
      %v5115 = vadd.f32 %v4549, %v4981
      %v5116 = vadd.f32 %v4550, %v4986
      %v5117 = vadd.f32 %v4551, %v4989
      %v5118 = vadd.f32 %v4552, %v4994
      %v5119 = vadd.f32 %v4553, %v4997
      %v5120 = vadd.f32 %v4554, %v5002
      %v5121 = vadd.f32 %v4555, %v5005
      %v5122 = vadd.f32 %v4556, %v5010
      %v5123 = vadd.f32 %v4557, %v5013
      %v5124 = vadd.f32 %v4558, %v5018
      %v5125 = vadd.f32 %v4559, %v5021
      %v5126 = vadd.f32 %v4560, %v5026
      %v5127 = vadd.f32 %v4561, %v5029
      %v5128 = vadd.f32 %v4562, %v5034
      %v5129 = vadd.f32 %v4563, %v5037
      %v5130 = vadd.f32 %v4564, %v5042
      %v5131 = vadd.f32 %v4565, %v5045
      %v5132 = vadd.f32 %v4566, %v5050
      %v5133 = vadd.f32 %v4567, %v5053
      %v5134 = vadd.f32 %v4568, %v5058
      %v5135 = vadd.f32 %v4569, %v5061
      %v5136 = vadd.f32 %v4570, %v5066
      %v5137 = vadd.f32 %v4571, %v5069
      %v5138 = vld [vmem:[%s2] sm:$0x1]
      %v5140 = vlaneseq
      %v5141 = vshrl.u32 %v5140, 7
      %v5142 = vsub.s32 0, %v5141
      %v5143 = vrot.slane %v5138, %v5142
      %v5145 = vadd.f32 %v5072, %v5143
      %v5146 = vadd.f32 %v5073, %v5143
      %v5147 = vadd.f32 %v5074, %v5143
      %v5148 = vadd.f32 %v5075, %v5143
      %v5149 = vadd.f32 %v5076, %v5143
      %v5150 = vadd.f32 %v5077, %v5143
      %v5151 = vadd.f32 %v5078, %v5143
      %v5152 = vadd.f32 %v5079, %v5143
      %v5153 = vadd.f32 %v5080, %v5143
      %v5154 = vadd.f32 %v5081, %v5143
      %v5155 = vadd.f32 %v5082, %v5143
      %v5156 = vadd.f32 %v5083, %v5143
      %v5157 = vadd.f32 %v5084, %v5143
      %v5158 = vadd.f32 %v5085, %v5143
      %v5159 = vadd.f32 %v5086, %v5143
      %v5160 = vadd.f32 %v5087, %v5143
      %v5161 = vadd.f32 %v5088, %v5143
      %v5162 = vadd.f32 %v5089, %v5143
      %v5163 = vadd.f32 %v5090, %v5143
      %v5164 = vadd.f32 %v5091, %v5143
      %v5165 = vadd.f32 %v5092, %v5143
      %v5166 = vadd.f32 %v5093, %v5143
      %v5167 = vadd.f32 %v5094, %v5143
      %v5168 = vadd.f32 %v5095, %v5143
      %v5169 = vadd.f32 %v5096, %v5143
      %v5170 = vadd.f32 %v5097, %v5143
      %v5171 = vadd.f32 %v5098, %v5143
      %v5172 = vadd.f32 %v5099, %v5143
      %v5173 = vadd.f32 %v5100, %v5143
      %v5174 = vadd.f32 %v5101, %v5143
      %v5175 = vadd.f32 %v5102, %v5143
      %v5176 = vadd.f32 %v5103, %v5143
      %v5177 = vadd.f32 %v5104, %v5143
      %v5178 = vadd.f32 %v5105, %v5143
      %v5179 = vadd.f32 %v5106, %v5143
      %v5180 = vadd.f32 %v5107, %v5143
      %v5181 = vadd.f32 %v5108, %v5143
      %v5182 = vadd.f32 %v5109, %v5143
      %v5183 = vadd.f32 %v5110, %v5143
      %v5184 = vadd.f32 %v5111, %v5143
      %v5185 = vadd.f32 %v5112, %v5143
      %v5186 = vadd.f32 %v5113, %v5143
      %v5187 = vadd.f32 %v5114, %v5143
      %v5188 = vadd.f32 %v5115, %v5143
      %v5189 = vadd.f32 %v5116, %v5143
      %v5190 = vadd.f32 %v5117, %v5143
      %v5191 = vadd.f32 %v5118, %v5143
      %v5192 = vadd.f32 %v5119, %v5143
      %v5193 = vadd.f32 %v5120, %v5143
      %v5194 = vadd.f32 %v5121, %v5143
      %v5195 = vadd.f32 %v5122, %v5143
      %v5196 = vadd.f32 %v5123, %v5143
      %v5197 = vadd.f32 %v5124, %v5143
      %v5198 = vadd.f32 %v5125, %v5143
      %v5199 = vadd.f32 %v5126, %v5143
      %v5200 = vadd.f32 %v5127, %v5143
      %v5201 = vadd.f32 %v5128, %v5143
      %v5202 = vadd.f32 %v5129, %v5143
      %v5203 = vadd.f32 %v5130, %v5143
      %v5204 = vadd.f32 %v5131, %v5143
      %v5205 = vadd.f32 %v5132, %v5143
      %v5206 = vadd.f32 %v5133, %v5143
      %v5207 = vadd.f32 %v5134, %v5143
      %v5208 = vadd.f32 %v5135, %v5143
      %v5209 = vadd.f32 %v5136, %v5143
      %v5210 = vadd.f32 %v5137, %v5143
      %v5211 = vmax.f32 %v5145, 0.0
      %v5212 = vmax.f32 %v5146, 0.0
      %v5213 = vmax.f32 %v5147, 0.0
      %v5214 = vmax.f32 %v5148, 0.0
      %v5215 = vmax.f32 %v5149, 0.0
      %v5216 = vmax.f32 %v5150, 0.0
      %v5217 = vmax.f32 %v5151, 0.0
      %v5218 = vmax.f32 %v5152, 0.0
      %v5219 = vmax.f32 %v5153, 0.0
      %v5220 = vmax.f32 %v5154, 0.0
      %v5221 = vmax.f32 %v5155, 0.0
      %v5222 = vmax.f32 %v5156, 0.0
      %v5223 = vmax.f32 %v5157, 0.0
      %v5224 = vmax.f32 %v5158, 0.0
      %v5225 = vmax.f32 %v5159, 0.0
      %v5226 = vmax.f32 %v5160, 0.0
      %v5227 = vmax.f32 %v5161, 0.0
      %v5228 = vmax.f32 %v5162, 0.0
      %v5229 = vmax.f32 %v5163, 0.0
      %v5230 = vmax.f32 %v5164, 0.0
      %v5231 = vmax.f32 %v5165, 0.0
      %v5232 = vmax.f32 %v5166, 0.0
      %v5233 = vmax.f32 %v5167, 0.0
      %v5234 = vmax.f32 %v5168, 0.0
      %v5235 = vmax.f32 %v5169, 0.0
      %v5236 = vmax.f32 %v5170, 0.0
      %v5237 = vmax.f32 %v5171, 0.0
      %v5238 = vmax.f32 %v5172, 0.0
      %v5239 = vmax.f32 %v5173, 0.0
      %v5240 = vmax.f32 %v5174, 0.0
      %v5241 = vmax.f32 %v5175, 0.0
      %v5242 = vmax.f32 %v5176, 0.0
      %v5243 = vmax.f32 %v5177, 0.0
      %v5244 = vmax.f32 %v5178, 0.0
      %v5245 = vmax.f32 %v5179, 0.0
      %v5246 = vmax.f32 %v5180, 0.0
      %v5247 = vmax.f32 %v5181, 0.0
      %v5248 = vmax.f32 %v5182, 0.0
      %v5249 = vmax.f32 %v5183, 0.0
      %v5250 = vmax.f32 %v5184, 0.0
      %v5251 = vmax.f32 %v5185, 0.0
      %v5252 = vmax.f32 %v5186, 0.0
      %v5253 = vmax.f32 %v5187, 0.0
      %v5254 = vmax.f32 %v5188, 0.0
      %v5255 = vmax.f32 %v5189, 0.0
      %v5256 = vmax.f32 %v5190, 0.0
      %v5257 = vmax.f32 %v5191, 0.0
      %v5258 = vmax.f32 %v5192, 0.0
      %v5259 = vmax.f32 %v5193, 0.0
      %v5260 = vmax.f32 %v5194, 0.0
      %v5261 = vmax.f32 %v5195, 0.0
      %v5262 = vmax.f32 %v5196, 0.0
      %v5263 = vmax.f32 %v5197, 0.0
      %v5264 = vmax.f32 %v5198, 0.0
      %v5265 = vmax.f32 %v5199, 0.0
      %v5266 = vmax.f32 %v5200, 0.0
      %v5267 = vmax.f32 %v5201, 0.0
      %v5268 = vmax.f32 %v5202, 0.0
      %v5269 = vmax.f32 %v5203, 0.0
      %v5270 = vmax.f32 %v5204, 0.0
      %v5271 = vmax.f32 %v5205, 0.0
      %v5272 = vmax.f32 %v5206, 0.0
      %v5273 = vmax.f32 %v5207, 0.0
      %v5274 = vmax.f32 %v5208, 0.0
      %v5275 = vmax.f32 %v5209, 0.0
      %v5276 = vmax.f32 %v5210, 0.0
      %vm5277 = vcmask 261120
      %5278 = vst.msk [vmem:[#allocation2] sm:$0xff] %vm5277, %v5211
      %5279 = vst.msk [vmem:[#allocation2 + $0x8] sm:$0xff] %vm5277, %v5212
      %5280 = vst.msk [vmem:[#allocation2 + $0x10] sm:$0xff] %vm5277, %v5213
      %5281 = vst.msk [vmem:[#allocation2 + $0x18] sm:$0xff] %vm5277, %v5214
      %5282 = vst.msk [vmem:[#allocation2 + $0x20] sm:$0xff] %vm5277, %v5215
      %5283 = vst.msk [vmem:[#allocation2 + $0x28] sm:$0xff] %vm5277, %v5216
      %5284 = vst.msk [vmem:[#allocation2 + $0x30] sm:$0xff] %vm5277, %v5217
      %5285 = vst.msk [vmem:[#allocation2 + $0x38] sm:$0xff] %vm5277, %v5218
      %5286 = vst.msk [vmem:[#allocation2 + $0x40] sm:$0xff] %vm5277, %v5219
      %5287 = vst.msk [vmem:[#allocation2 + $0x48] sm:$0xff] %vm5277, %v5220
      %5288 = vst.msk [vmem:[#allocation2 + $0x50] sm:$0xff] %vm5277, %v5221
      %5289 = vst.msk [vmem:[#allocation2 + $0x58] sm:$0xff] %vm5277, %v5222
      %5290 = vst.msk [vmem:[#allocation2 + $0x60] sm:$0xff] %vm5277, %v5223
      %5291 = vst.msk [vmem:[#allocation2 + $0x68] sm:$0xff] %vm5277, %v5224
      %5292 = vst.msk [vmem:[#allocation2 + $0x70] sm:$0xff] %vm5277, %v5225
      %5293 = vst.msk [vmem:[#allocation2 + $0x78] sm:$0xff] %vm5277, %v5226
      %5294 = vst.msk [vmem:[#allocation2 + $0x80] sm:$0xff] %vm5277, %v5227
      %5295 = vst.msk [vmem:[#allocation2 + $0x88] sm:$0xff] %vm5277, %v5228
      %5296 = vst.msk [vmem:[#allocation2 + $0x90] sm:$0xff] %vm5277, %v5229
      %5297 = vst.msk [vmem:[#allocation2 + $0x98] sm:$0xff] %vm5277, %v5230
      %5298 = vst.msk [vmem:[#allocation2 + $0xa0] sm:$0xff] %vm5277, %v5231
      %5299 = vst.msk [vmem:[#allocation2 + $0xa8] sm:$0xff] %vm5277, %v5232
      %5300 = vst.msk [vmem:[#allocation2 + $0xb0] sm:$0xff] %vm5277, %v5233
      %5301 = vst.msk [vmem:[#allocation2 + $0xb8] sm:$0xff] %vm5277, %v5234
      %5302 = vst.msk [vmem:[#allocation2 + $0xc0] sm:$0xff] %vm5277, %v5235
      %5303 = vst.msk [vmem:[#allocation2 + $0xc8] sm:$0xff] %vm5277, %v5236
      %5304 = vst.msk [vmem:[#allocation2 + $0xd0] sm:$0xff] %vm5277, %v5237
      %5305 = vst.msk [vmem:[#allocation2 + $0xd8] sm:$0xff] %vm5277, %v5238
      %5306 = vst.msk [vmem:[#allocation2 + $0xe0] sm:$0xff] %vm5277, %v5239
      %5307 = vst.msk [vmem:[#allocation2 + $0xe8] sm:$0xff] %vm5277, %v5240
      %5308 = vst.msk [vmem:[#allocation2 + $0xf0] sm:$0xff] %vm5277, %v5241
      %5309 = vst.msk [vmem:[#allocation2 + $0xf8] sm:$0xff] %vm5277, %v5242
      %5310 = vst.msk [vmem:[#allocation2 + $0x100] sm:$0xff] %vm5277, %v5243
      %5311 = vst.msk [vmem:[#allocation2 + $0x108] sm:$0xff] %vm5277, %v5244
      %5312 = vst.msk [vmem:[#allocation2 + $0x110] sm:$0xff] %vm5277, %v5245
      %5313 = vst.msk [vmem:[#allocation2 + $0x118] sm:$0xff] %vm5277, %v5246
      %5314 = vst.msk [vmem:[#allocation2 + $0x120] sm:$0xff] %vm5277, %v5247
      %5315 = vst.msk [vmem:[#allocation2 + $0x128] sm:$0xff] %vm5277, %v5248
      %5316 = vst.msk [vmem:[#allocation2 + $0x130] sm:$0xff] %vm5277, %v5249
      %5317 = vst.msk [vmem:[#allocation2 + $0x138] sm:$0xff] %vm5277, %v5250
      %5318 = vst.msk [vmem:[#allocation2 + $0x140] sm:$0xff] %vm5277, %v5251
      %5319 = vst.msk [vmem:[#allocation2 + $0x148] sm:$0xff] %vm5277, %v5252
      %5320 = vst.msk [vmem:[#allocation2 + $0x150] sm:$0xff] %vm5277, %v5253
      %5321 = vst.msk [vmem:[#allocation2 + $0x158] sm:$0xff] %vm5277, %v5254
      %5322 = vst.msk [vmem:[#allocation2 + $0x160] sm:$0xff] %vm5277, %v5255
      %5323 = vst.msk [vmem:[#allocation2 + $0x168] sm:$0xff] %vm5277, %v5256
      %5324 = vst.msk [vmem:[#allocation2 + $0x170] sm:$0xff] %vm5277, %v5257
      %5325 = vst.msk [vmem:[#allocation2 + $0x178] sm:$0xff] %vm5277, %v5258
      %5326 = vst.msk [vmem:[#allocation2 + $0x180] sm:$0xff] %vm5277, %v5259
      %5327 = vst.msk [vmem:[#allocation2 + $0x188] sm:$0xff] %vm5277, %v5260
      %5328 = vst.msk [vmem:[#allocation2 + $0x190] sm:$0xff] %vm5277, %v5261
      %5329 = vst.msk [vmem:[#allocation2 + $0x198] sm:$0xff] %vm5277, %v5262
      %5330 = vst.msk [vmem:[#allocation2 + $0x1a0] sm:$0xff] %vm5277, %v5263
      %5331 = vst.msk [vmem:[#allocation2 + $0x1a8] sm:$0xff] %vm5277, %v5264
      %5332 = vst.msk [vmem:[#allocation2 + $0x1b0] sm:$0xff] %vm5277, %v5265
      %5333 = vst.msk [vmem:[#allocation2 + $0x1b8] sm:$0xff] %vm5277, %v5266
      %5334 = vst.msk [vmem:[#allocation2 + $0x1c0] sm:$0xff] %vm5277, %v5267
      %5335 = vst.msk [vmem:[#allocation2 + $0x1c8] sm:$0xff] %vm5277, %v5268
      %5336 = vst.msk [vmem:[#allocation2 + $0x1d0] sm:$0xff] %vm5277, %v5269
      %5337 = vst.msk [vmem:[#allocation2 + $0x1d8] sm:$0xff] %vm5277, %v5270
      %5338 = vst.msk [vmem:[#allocation2 + $0x1e0] sm:$0xff] %vm5277, %v5271
      %5339 = vst.msk [vmem:[#allocation2 + $0x1e8] sm:$0xff] %vm5277, %v5272
      %5340 = vst.msk [vmem:[#allocation2 + $0x1f0] sm:$0xff] %vm5277, %v5273
      %5341 = vst.msk [vmem:[#allocation2 + $0x1f8] sm:$0xff] %vm5277, %v5274
      %5342 = vst.msk [vmem:[#allocation2 + $0x200] sm:$0xff] %vm5277, %v5275
      %vm5343 = vcmask 259072
      %5344 = vst.msk [vmem:[#allocation2 + $0x208] sm:$0x3f] %vm5343, %v5276
      %v5345 = vld [vmem:[#allocation2] sm:$0xff]
      %v5346 = vld [vmem:[#allocation2 + $0x8] sm:$0xff]
      %v5347 = vld [vmem:[#allocation2 + $0x10] sm:$0xff]
      %v5348 = vld [vmem:[#allocation2 + $0x18] sm:$0xff]
      %v5349 = vld [vmem:[#allocation2 + $0x20] sm:$0xff]
      %v5350 = vld [vmem:[#allocation2 + $0x28] sm:$0xff]
      %v5351 = vld [vmem:[#allocation2 + $0x30] sm:$0xff]
      %v5352 = vld [vmem:[#allocation2 + $0x38] sm:$0xff]
      %v5353 = vld [vmem:[#allocation2 + $0x40] sm:$0xff]
      %v5354 = vld [vmem:[#allocation2 + $0x48] sm:$0xff]
      %v5355 = vld [vmem:[#allocation2 + $0x50] sm:$0xff]
      %v5356 = vld [vmem:[#allocation2 + $0x58] sm:$0xff]
      %v5357 = vld [vmem:[#allocation2 + $0x60] sm:$0xff]
      %v5358 = vld [vmem:[#allocation2 + $0x68] sm:$0xff]
      %v5359 = vld [vmem:[#allocation2 + $0x70] sm:$0xff]
      %v5360 = vld [vmem:[#allocation2 + $0x78] sm:$0xff]
      %v5361 = vld [vmem:[#allocation2 + $0x80] sm:$0xff]
      %v5362 = vld [vmem:[#allocation2 + $0x88] sm:$0xff]
      %v5363 = vld [vmem:[#allocation2 + $0x90] sm:$0xff]
      %v5364 = vld [vmem:[#allocation2 + $0x98] sm:$0xff]
      %v5365 = vld [vmem:[#allocation2 + $0xa0] sm:$0xff]
      %v5366 = vld [vmem:[#allocation2 + $0xa8] sm:$0xff]
      %v5367 = vld [vmem:[#allocation2 + $0xb0] sm:$0xff]
      %v5368 = vld [vmem:[#allocation2 + $0xb8] sm:$0xff]
      %v5369 = vld [vmem:[#allocation2 + $0xc0] sm:$0xff]
      %v5370 = vld [vmem:[#allocation2 + $0xc8] sm:$0xff]
      %v5371 = vld [vmem:[#allocation2 + $0xd0] sm:$0xff]
      %v5372 = vld [vmem:[#allocation2 + $0xd8] sm:$0xff]
      %v5373 = vld [vmem:[#allocation2 + $0xe0] sm:$0xff]
      %v5374 = vld [vmem:[#allocation2 + $0xe8] sm:$0xff]
      %v5375 = vld [vmem:[#allocation2 + $0xf0] sm:$0xff]
      %v5376 = vld [vmem:[#allocation2 + $0xf8] sm:$0xff]
      %v5377 = vld [vmem:[#allocation2 + $0x100] sm:$0xff]
      %v5378 = vld [vmem:[#allocation2 + $0x108] sm:$0xff]
      %v5379 = vld [vmem:[#allocation2 + $0x110] sm:$0xff]
      %v5380 = vld [vmem:[#allocation2 + $0x118] sm:$0xff]
      %v5381 = vld [vmem:[#allocation2 + $0x120] sm:$0xff]
      %v5382 = vld [vmem:[#allocation2 + $0x128] sm:$0xff]
      %v5383 = vld [vmem:[#allocation2 + $0x130] sm:$0xff]
      %v5384 = vld [vmem:[#allocation2 + $0x138] sm:$0xff]
      %v5385 = vld [vmem:[#allocation2 + $0x140] sm:$0xff]
      %v5386 = vld [vmem:[#allocation2 + $0x148] sm:$0xff]
      %v5387 = vld [vmem:[#allocation2 + $0x150] sm:$0xff]
      %v5388 = vld [vmem:[#allocation2 + $0x158] sm:$0xff]
      %v5389 = vld [vmem:[#allocation2 + $0x160] sm:$0xff]
      %v5390 = vld [vmem:[#allocation2 + $0x168] sm:$0xff]
      %v5391 = vld [vmem:[#allocation2 + $0x170] sm:$0xff]
      %v5392 = vld [vmem:[#allocation2 + $0x178] sm:$0xff]
      %v5393 = vld [vmem:[#allocation2 + $0x180] sm:$0xff]
      %v5394 = vld [vmem:[#allocation2 + $0x188] sm:$0xff]
      %v5395 = vld [vmem:[#allocation2 + $0x190] sm:$0xff]
      %v5396 = vld [vmem:[#allocation2 + $0x198] sm:$0xff]
      %v5397 = vld [vmem:[#allocation2 + $0x1a0] sm:$0xff]
      %v5398 = vld [vmem:[#allocation2 + $0x1a8] sm:$0xff]
      %v5399 = vld [vmem:[#allocation2 + $0x1b0] sm:$0xff]
      %v5400 = vld [vmem:[#allocation2 + $0x1b8] sm:$0xff]
      %v5401 = vld [vmem:[#allocation2 + $0x1c0] sm:$0xff]
      %v5402 = vld [vmem:[#allocation2 + $0x1c8] sm:$0xff]
      %v5403 = vld [vmem:[#allocation2 + $0x1d0] sm:$0xff]
      %v5404 = vld [vmem:[#allocation2 + $0x1d8] sm:$0xff]
      %v5405 = vld [vmem:[#allocation2 + $0x1e0] sm:$0xff]
      %v5406 = vld [vmem:[#allocation2 + $0x1e8] sm:$0xff]
      %v5407 = vld [vmem:[#allocation2 + $0x1f0] sm:$0x1f]
      %v5408 = vld [vmem:[#allocation2 + $0x1] sm:$0xff]
      %v5409 = vld [vmem:[#allocation2 + $0x9] sm:$0xff]
      %v5410 = vld [vmem:[#allocation2 + $0x11] sm:$0xff]
      %v5411 = vld [vmem:[#allocation2 + $0x19] sm:$0xff]
      %v5412 = vld [vmem:[#allocation2 + $0x21] sm:$0xff]
      %v5413 = vld [vmem:[#allocation2 + $0x29] sm:$0xff]
      %v5414 = vld [vmem:[#allocation2 + $0x31] sm:$0xff]
      %v5415 = vld [vmem:[#allocation2 + $0x39] sm:$0xff]
      %v5416 = vld [vmem:[#allocation2 + $0x41] sm:$0xff]
      %v5417 = vld [vmem:[#allocation2 + $0x49] sm:$0xff]
      %v5418 = vld [vmem:[#allocation2 + $0x51] sm:$0xff]
      %v5419 = vld [vmem:[#allocation2 + $0x59] sm:$0xff]
      %v5420 = vld [vmem:[#allocation2 + $0x61] sm:$0xff]
      %v5421 = vld [vmem:[#allocation2 + $0x69] sm:$0xff]
      %v5422 = vld [vmem:[#allocation2 + $0x71] sm:$0xff]
      %v5423 = vld [vmem:[#allocation2 + $0x79] sm:$0xff]
      %v5424 = vld [vmem:[#allocation2 + $0x81] sm:$0xff]
      %v5425 = vld [vmem:[#allocation2 + $0x89] sm:$0xff]
      %v5426 = vld [vmem:[#allocation2 + $0x91] sm:$0xff]
      %v5427 = vld [vmem:[#allocation2 + $0x99] sm:$0xff]
      %v5428 = vld [vmem:[#allocation2 + $0xa1] sm:$0xff]
      %v5429 = vld [vmem:[#allocation2 + $0xa9] sm:$0xff]
      %v5430 = vld [vmem:[#allocation2 + $0xb1] sm:$0xff]
      %v5431 = vld [vmem:[#allocation2 + $0xb9] sm:$0xff]
      %v5432 = vld [vmem:[#allocation2 + $0xc1] sm:$0xff]
      %v5433 = vld [vmem:[#allocation2 + $0xc9] sm:$0xff]
      %v5434 = vld [vmem:[#allocation2 + $0xd1] sm:$0xff]
      %v5435 = vld [vmem:[#allocation2 + $0xd9] sm:$0xff]
      %v5436 = vld [vmem:[#allocation2 + $0xe1] sm:$0xff]
      %v5437 = vld [vmem:[#allocation2 + $0xe9] sm:$0xff]
      %v5438 = vld [vmem:[#allocation2 + $0xf1] sm:$0xff]
      %v5439 = vld [vmem:[#allocation2 + $0xf9] sm:$0xff]
      %v5440 = vld [vmem:[#allocation2 + $0x101] sm:$0xff]
      %v5441 = vld [vmem:[#allocation2 + $0x109] sm:$0xff]
      %v5442 = vld [vmem:[#allocation2 + $0x111] sm:$0xff]
      %v5443 = vld [vmem:[#allocation2 + $0x119] sm:$0xff]
      %v5444 = vld [vmem:[#allocation2 + $0x121] sm:$0xff]
      %v5445 = vld [vmem:[#allocation2 + $0x129] sm:$0xff]
      %v5446 = vld [vmem:[#allocation2 + $0x131] sm:$0xff]
      %v5447 = vld [vmem:[#allocation2 + $0x139] sm:$0xff]
      %v5448 = vld [vmem:[#allocation2 + $0x141] sm:$0xff]
      %v5449 = vld [vmem:[#allocation2 + $0x149] sm:$0xff]
      %v5450 = vld [vmem:[#allocation2 + $0x151] sm:$0xff]
      %v5451 = vld [vmem:[#allocation2 + $0x159] sm:$0xff]
      %v5452 = vld [vmem:[#allocation2 + $0x161] sm:$0xff]
      %v5453 = vld [vmem:[#allocation2 + $0x169] sm:$0xff]
      %v5454 = vld [vmem:[#allocation2 + $0x171] sm:$0xff]
      %v5455 = vld [vmem:[#allocation2 + $0x179] sm:$0xff]
      %v5456 = vld [vmem:[#allocation2 + $0x181] sm:$0xff]
      %v5457 = vld [vmem:[#allocation2 + $0x189] sm:$0xff]
      %v5458 = vld [vmem:[#allocation2 + $0x191] sm:$0xff]
      %v5459 = vld [vmem:[#allocation2 + $0x199] sm:$0xff]
      %v5460 = vld [vmem:[#allocation2 + $0x1a1] sm:$0xff]
      %v5461 = vld [vmem:[#allocation2 + $0x1a9] sm:$0xff]
      %v5462 = vld [vmem:[#allocation2 + $0x1b1] sm:$0xff]
      %v5463 = vld [vmem:[#allocation2 + $0x1b9] sm:$0xff]
      %v5464 = vld [vmem:[#allocation2 + $0x1c1] sm:$0xff]
      %v5465 = vld [vmem:[#allocation2 + $0x1c9] sm:$0xff]
      %v5466 = vld [vmem:[#allocation2 + $0x1d1] sm:$0xff]
      %v5467 = vld [vmem:[#allocation2 + $0x1d9] sm:$0xff]
      %v5468 = vld [vmem:[#allocation2 + $0x1e1] sm:$0xff]
      %v5469 = vld [vmem:[#allocation2 + $0x1e9] sm:$0xff]
      %v5470 = vld [vmem:[#allocation2 + $0x1f1] sm:$0x1f]
      %v5471 = vmax.f32 %v5345, %v5408
      %v5472 = vmax.f32 %v5346, %v5409
      %v5473 = vmax.f32 %v5347, %v5410
      %v5474 = vmax.f32 %v5348, %v5411
      %v5475 = vmax.f32 %v5349, %v5412
      %v5476 = vmax.f32 %v5350, %v5413
      %v5477 = vmax.f32 %v5351, %v5414
      %v5478 = vmax.f32 %v5352, %v5415
      %v5479 = vmax.f32 %v5353, %v5416
      %v5480 = vmax.f32 %v5354, %v5417
      %v5481 = vmax.f32 %v5355, %v5418
      %v5482 = vmax.f32 %v5356, %v5419
      %v5483 = vmax.f32 %v5357, %v5420
      %v5484 = vmax.f32 %v5358, %v5421
      %v5485 = vmax.f32 %v5359, %v5422
      %v5486 = vmax.f32 %v5360, %v5423
      %v5487 = vmax.f32 %v5361, %v5424
      %v5488 = vmax.f32 %v5362, %v5425
      %v5489 = vmax.f32 %v5363, %v5426
      %v5490 = vmax.f32 %v5364, %v5427
      %v5491 = vmax.f32 %v5365, %v5428
      %v5492 = vmax.f32 %v5366, %v5429
      %v5493 = vmax.f32 %v5367, %v5430
      %v5494 = vmax.f32 %v5368, %v5431
      %v5495 = vmax.f32 %v5369, %v5432
      %v5496 = vmax.f32 %v5370, %v5433
      %v5497 = vmax.f32 %v5371, %v5434
      %v5498 = vmax.f32 %v5372, %v5435
      %v5499 = vmax.f32 %v5373, %v5436
      %v5500 = vmax.f32 %v5374, %v5437
      %v5501 = vmax.f32 %v5375, %v5438
      %v5502 = vmax.f32 %v5376, %v5439
      %v5503 = vmax.f32 %v5377, %v5440
      %v5504 = vmax.f32 %v5378, %v5441
      %v5505 = vmax.f32 %v5379, %v5442
      %v5506 = vmax.f32 %v5380, %v5443
      %v5507 = vmax.f32 %v5381, %v5444
      %v5508 = vmax.f32 %v5382, %v5445
      %v5509 = vmax.f32 %v5383, %v5446
      %v5510 = vmax.f32 %v5384, %v5447
      %v5511 = vmax.f32 %v5385, %v5448
      %v5512 = vmax.f32 %v5386, %v5449
      %v5513 = vmax.f32 %v5387, %v5450
      %v5514 = vmax.f32 %v5388, %v5451
      %v5515 = vmax.f32 %v5389, %v5452
      %v5516 = vmax.f32 %v5390, %v5453
      %v5517 = vmax.f32 %v5391, %v5454
      %v5518 = vmax.f32 %v5392, %v5455
      %v5519 = vmax.f32 %v5393, %v5456
      %v5520 = vmax.f32 %v5394, %v5457
      %v5521 = vmax.f32 %v5395, %v5458
      %v5522 = vmax.f32 %v5396, %v5459
      %v5523 = vmax.f32 %v5397, %v5460
      %v5524 = vmax.f32 %v5398, %v5461
      %v5525 = vmax.f32 %v5399, %v5462
      %v5526 = vmax.f32 %v5400, %v5463
      %v5527 = vmax.f32 %v5401, %v5464
      %v5528 = vmax.f32 %v5402, %v5465
      %v5529 = vmax.f32 %v5403, %v5466
      %v5530 = vmax.f32 %v5404, %v5467
      %v5531 = vmax.f32 %v5405, %v5468
      %v5532 = vmax.f32 %v5406, %v5469
      %v5533 = vmax.f32 %v5407, %v5470
      %v5534 = vld [vmem:[#allocation2 + $0x1f0] sm:$0xff]
      %v5535 = vld [vmem:[#allocation2 + $0x1f8] sm:$0xff]
      %v5536 = vld [vmem:[#allocation2 + $0x200] sm:$0xff]
      %v5537 = vld [vmem:[#allocation2 + $0x208] sm:$0x1f]
      %v5538 = vld [vmem:[#allocation2 + $0x1f1] sm:$0xff]
      %v5539 = vld [vmem:[#allocation2 + $0x1f9] sm:$0xff]
      %v5540 = vld [vmem:[#allocation2 + $0x201] sm:$0xff]
      %v5541 = vld [vmem:[#allocation2 + $0x209] sm:$0x1f]
      %v5542 = vmax.f32 %v5534, %v5538
      %v5543 = vmax.f32 %v5535, %v5539
      %v5544 = vmax.f32 %v5536, %v5540
      %v5545 = vmax.f32 %v5537, %v5541
      %v5546 = vmax.f32 %v5471, %v5474
      %v5547 = vmax.f32 %v5472, %v5475
      %v5548 = vmax.f32 %v5473, %v5476
      %v5549 = vmax.f32 %v5474, %v5477
      %v5550 = vmax.f32 %v5475, %v5478
      %v5551 = vmax.f32 %v5476, %v5479
      %v5552 = vmax.f32 %v5477, %v5480
      %v5553 = vmax.f32 %v5478, %v5481
      %v5554 = vmax.f32 %v5479, %v5482
      %v5555 = vmax.f32 %v5480, %v5483
      %v5556 = vmax.f32 %v5481, %v5484
      %v5557 = vmax.f32 %v5482, %v5485
      %v5558 = vmax.f32 %v5483, %v5486
      %v5559 = vmax.f32 %v5484, %v5487
      %v5560 = vmax.f32 %v5485, %v5488
      %v5561 = vmax.f32 %v5486, %v5489
      %v5562 = vmax.f32 %v5487, %v5490
      %v5563 = vmax.f32 %v5488, %v5491
      %v5564 = vmax.f32 %v5489, %v5492
      %v5565 = vmax.f32 %v5490, %v5493
      %v5566 = vmax.f32 %v5491, %v5494
      %v5567 = vmax.f32 %v5492, %v5495
      %v5568 = vmax.f32 %v5493, %v5496
      %v5569 = vmax.f32 %v5494, %v5497
      %v5570 = vmax.f32 %v5495, %v5498
      %v5571 = vmax.f32 %v5496, %v5499
      %v5572 = vmax.f32 %v5497, %v5500
      %v5573 = vmax.f32 %v5498, %v5501
      %v5574 = vmax.f32 %v5499, %v5502
      %v5575 = vmax.f32 %v5500, %v5503
      %v5576 = vmax.f32 %v5501, %v5504
      %v5577 = vmax.f32 %v5502, %v5505
      %v5578 = vmax.f32 %v5503, %v5506
      %v5579 = vmax.f32 %v5504, %v5507
      %v5580 = vmax.f32 %v5505, %v5508
      %v5581 = vmax.f32 %v5506, %v5509
      %v5582 = vmax.f32 %v5507, %v5510
      %v5583 = vmax.f32 %v5508, %v5511
      %v5584 = vmax.f32 %v5509, %v5512
      %v5585 = vmax.f32 %v5510, %v5513
      %v5586 = vmax.f32 %v5511, %v5514
      %v5587 = vmax.f32 %v5512, %v5515
      %v5588 = vmax.f32 %v5513, %v5516
      %v5589 = vmax.f32 %v5514, %v5517
      %v5590 = vmax.f32 %v5515, %v5518
      %v5591 = vmax.f32 %v5516, %v5519
      %v5592 = vmax.f32 %v5517, %v5520
      %v5593 = vmax.f32 %v5518, %v5521
      %v5594 = vmax.f32 %v5519, %v5522
      %v5595 = vmax.f32 %v5520, %v5523
      %v5596 = vmax.f32 %v5521, %v5524
      %v5597 = vmax.f32 %v5522, %v5525
      %v5598 = vmax.f32 %v5523, %v5526
      %v5599 = vmax.f32 %v5524, %v5527
      %v5600 = vmax.f32 %v5525, %v5528
      %v5601 = vmax.f32 %v5526, %v5529
      %v5602 = vmax.f32 %v5527, %v5530
      %v5603 = vmax.f32 %v5528, %v5531
      %v5604 = vmax.f32 %v5529, %v5532
      %v5605 = vmax.f32 %v5530, %v5542
      %v5606 = vmax.f32 %v5531, %v5543
      %v5607 = vmax.f32 %v5532, %v5544
      %v5608 = vmax.f32 %v5533, %v5545
      %5609 = vst.msk [vmem:[%s170] sm:$0xff] %vm5277, %v5546
      %5610 = vst.msk [vmem:[%s170 + $0x8] sm:$0xff] %vm5277, %v5547
      %5611 = vst.msk [vmem:[%s170 + $0x10] sm:$0xff] %vm5277, %v5548
      %5612 = vst.msk [vmem:[%s170 + $0x18] sm:$0xff] %vm5277, %v5549
      %5613 = vst.msk [vmem:[%s170 + $0x20] sm:$0xff] %vm5277, %v5550
      %5614 = vst.msk [vmem:[%s170 + $0x28] sm:$0xff] %vm5277, %v5551
      %5615 = vst.msk [vmem:[%s170 + $0x30] sm:$0xff] %vm5277, %v5552
      %5616 = vst.msk [vmem:[%s170 + $0x38] sm:$0xff] %vm5277, %v5553
      %5617 = vst.msk [vmem:[%s170 + $0x40] sm:$0xff] %vm5277, %v5554
      %5618 = vst.msk [vmem:[%s170 + $0x48] sm:$0xff] %vm5277, %v5555
      %5619 = vst.msk [vmem:[%s170 + $0x50] sm:$0xff] %vm5277, %v5556
      %5620 = vst.msk [vmem:[%s170 + $0x58] sm:$0xff] %vm5277, %v5557
      %5621 = vst.msk [vmem:[%s170 + $0x60] sm:$0xff] %vm5277, %v5558
      %5622 = vst.msk [vmem:[%s170 + $0x68] sm:$0xff] %vm5277, %v5559
      %5623 = vst.msk [vmem:[%s170 + $0x70] sm:$0xff] %vm5277, %v5560
      %5624 = vst.msk [vmem:[%s170 + $0x78] sm:$0xff] %vm5277, %v5561
      %5625 = vst.msk [vmem:[%s170 + $0x80] sm:$0xff] %vm5277, %v5562
      %5626 = vst.msk [vmem:[%s170 + $0x88] sm:$0xff] %vm5277, %v5563
      %5627 = vst.msk [vmem:[%s170 + $0x90] sm:$0xff] %vm5277, %v5564
      %5628 = vst.msk [vmem:[%s170 + $0x98] sm:$0xff] %vm5277, %v5565
      %5629 = vst.msk [vmem:[%s170 + $0xa0] sm:$0xff] %vm5277, %v5566
      %5630 = vst.msk [vmem:[%s170 + $0xa8] sm:$0xff] %vm5277, %v5567
      %5631 = vst.msk [vmem:[%s170 + $0xb0] sm:$0xff] %vm5277, %v5568
      %5632 = vst.msk [vmem:[%s170 + $0xb8] sm:$0xff] %vm5277, %v5569
      %5633 = vst.msk [vmem:[%s170 + $0xc0] sm:$0xff] %vm5277, %v5570
      %5634 = vst.msk [vmem:[%s170 + $0xc8] sm:$0xff] %vm5277, %v5571
      %5635 = vst.msk [vmem:[%s170 + $0xd0] sm:$0xff] %vm5277, %v5572
      %5636 = vst.msk [vmem:[%s170 + $0xd8] sm:$0xff] %vm5277, %v5573
      %5637 = vst.msk [vmem:[%s170 + $0xe0] sm:$0xff] %vm5277, %v5574
      %5638 = vst.msk [vmem:[%s170 + $0xe8] sm:$0xff] %vm5277, %v5575
      %5639 = vst.msk [vmem:[%s170 + $0xf0] sm:$0xff] %vm5277, %v5576
      %5640 = vst.msk [vmem:[%s170 + $0xf8] sm:$0xff] %vm5277, %v5577
      %5641 = vst.msk [vmem:[%s170 + $0x100] sm:$0xff] %vm5277, %v5578
      %5642 = vst.msk [vmem:[%s170 + $0x108] sm:$0xff] %vm5277, %v5579
      %5643 = vst.msk [vmem:[%s170 + $0x110] sm:$0xff] %vm5277, %v5580
      %5644 = vst.msk [vmem:[%s170 + $0x118] sm:$0xff] %vm5277, %v5581
      %5645 = vst.msk [vmem:[%s170 + $0x120] sm:$0xff] %vm5277, %v5582
      %5646 = vst.msk [vmem:[%s170 + $0x128] sm:$0xff] %vm5277, %v5583
      %5647 = vst.msk [vmem:[%s170 + $0x130] sm:$0xff] %vm5277, %v5584
      %5648 = vst.msk [vmem:[%s170 + $0x138] sm:$0xff] %vm5277, %v5585
      %5649 = vst.msk [vmem:[%s170 + $0x140] sm:$0xff] %vm5277, %v5586
      %5650 = vst.msk [vmem:[%s170 + $0x148] sm:$0xff] %vm5277, %v5587
      %5651 = vst.msk [vmem:[%s170 + $0x150] sm:$0xff] %vm5277, %v5588
      %5652 = vst.msk [vmem:[%s170 + $0x158] sm:$0xff] %vm5277, %v5589
      %5653 = vst.msk [vmem:[%s170 + $0x160] sm:$0xff] %vm5277, %v5590
      %5654 = vst.msk [vmem:[%s170 + $0x168] sm:$0xff] %vm5277, %v5591
      %5655 = vst.msk [vmem:[%s170 + $0x170] sm:$0xff] %vm5277, %v5592
      %5656 = vst.msk [vmem:[%s170 + $0x178] sm:$0xff] %vm5277, %v5593
      %5657 = vst.msk [vmem:[%s170 + $0x180] sm:$0xff] %vm5277, %v5594
      %5658 = vst.msk [vmem:[%s170 + $0x188] sm:$0xff] %vm5277, %v5595
      %5659 = vst.msk [vmem:[%s170 + $0x190] sm:$0xff] %vm5277, %v5596
      %5660 = vst.msk [vmem:[%s170 + $0x198] sm:$0xff] %vm5277, %v5597
      %5661 = vst.msk [vmem:[%s170 + $0x1a0] sm:$0xff] %vm5277, %v5598
      %5662 = vst.msk [vmem:[%s170 + $0x1a8] sm:$0xff] %vm5277, %v5599
      %5663 = vst.msk [vmem:[%s170 + $0x1b0] sm:$0xff] %vm5277, %v5600
      %5664 = vst.msk [vmem:[%s170 + $0x1b8] sm:$0xff] %vm5277, %v5601
      %5665 = vst.msk [vmem:[%s170 + $0x1c0] sm:$0xff] %vm5277, %v5602
      %5666 = vst.msk [vmem:[%s170 + $0x1c8] sm:$0xff] %vm5277, %v5603
      %5667 = vst.msk [vmem:[%s170 + $0x1d0] sm:$0xff] %vm5277, %v5604
      %5668 = vst.msk [vmem:[%s170 + $0x1d8] sm:$0xff] %vm5277, %v5605
      %5669 = vst.msk [vmem:[%s170 + $0x1e0] sm:$0xff] %vm5277, %v5606
      %5670 = vst.msk [vmem:[%s170 + $0x1e8] sm:$0xff] %vm5277, %v5607
      %vm5671 = vcmask 258048
      %5672 = vst.msk [vmem:[%s170 + $0x1f0] sm:$0x1f] %vm5671, %v5608
      %p5673 = scmp.lt.s32.totalorder %s14, 7
      %s5674 = scalar_select %p5673, %s14, 7
      %s5675 = smul.addr %s5674, 63
      %s5676 = smul.addr %s5675, 8
      %s5677 = scalar_lea.vmem %s3, %s5676
      // Predicated region
      $region33: #{cnn_lstm_forward.5} parent=31 // pred_check
        %p5678 = pneg %p100
      $region34: #{cnn_lstm_forward.5} parent=31 // pred_check_branch
        %5680 = sbr.rel (%p5678) target = $region36
      $region35: #{cnn_lstm_forward.5} parent=31 // pred_region
        _
      $region36: #{cnn_lstm_forward.5} parent=31 // pred_fallthru
        _
    $region32: #{cnn_lstm_forward.5} parent=5 // pred_fallthru
      _
    %p5681 = scmp.le.s32.totalorder 2, %s9
    // Predicated region
    $region37: #{cnn_lstm_forward.5} parent=5 // pred_check
      %p5682 = pneg %p5681
    $region38: #{cnn_lstm_forward.5} parent=5 // pred_check_branch
      %5684 = sbr.rel (%p5682) target = $region40
    $region39: #{cnn_lstm_forward.5} parent=5 // pred_region
      %s5685 = ssub.s32 %s9, 2
      // Predicated region
      $region41: #{cnn_lstm_forward.5} parent=39 // pred_check
        %p5686 = pneg %p106
      $region42: #{cnn_lstm_forward.5} parent=39 // pred_check_branch
        %5688 = sbr.rel (%p5686) target = $region44
      $region43: #{cnn_lstm_forward.5} parent=39 // pred_region
        %p5689 = scmp.lt.s32.totalorder %s15, 7
        %s5690 = scalar_select %p5689, %s15, 7
        %s5691 = smul.addr %s5690, 63
        %s5692 = smul.addr %s5691, 8
        %s5693 = scalar_lea.vmem %s3, %s5692
      $region44: #{cnn_lstm_forward.5} parent=39 // pred_fallthru
        _
    $region40: #{cnn_lstm_forward.5} parent=5 // pred_fallthru
      _
  $region6: #{cnn_lstm_forward.5} parent=0 // loop_footer
    %s13 = sadd.s32 1, %s9
  $region7: #{cnn_lstm_forward.5} parent=0 // loop_footer_branch
    %8 = sbr.rel target = $region3
  $region8: #{cnn_lstm_forward.5} parent=0 // loop_exit
    _

// kernel: cnn_lstm_forward.9
$region0: #{cnn_lstm_forward.9}
  #allocation0 [shape = 'u32[]', space=smem, size = 0x4, offset = 0x4, fixed_abs, tag = 'smem constant byte address 0x4 - core index']
  #allocation1 [shape = 'u32[144,128]{1,0:T(1,128)}', space=vmem, size = 0x12000, scoped, tag = 'internal scratch']
  #allocation2 [shape = 'f32[2,128]{1,0:T(2,128)}', space=vmem, size = 0x400, scoped, tag = 'scratch operand']
  #allocation3 [shape = 'f32[2,128]{1,0:T(2,128)}', space=vmem, size = 0x400, scoped, tag = 'scratch operand']
  #allocation4 [shape = 'f32[1,1]{1,0:T(1,128)S(1)}', space=vmem, size = 0x200, scoped, tag = 'scoped memory for cnn_lstm_forward.9']
  %s0 = inlined_call_operand.vmem [shape: f32[4,2,512], index: 0, kind: input, shape index: {}]
  %s1 = inlined_call_operand.vmem [shape: bf16[128,512], index: 1, kind: input, shape index: {}]
  %s2 = inlined_call_operand.vmem [shape: bf16[128,64], index: 2, kind: input, shape index: {}]
  %s3 = inlined_call_operand.vmem [shape: f32[1,64], index: 3, kind: input, shape index: {}]
  %s4 = inlined_call_operand.vmem [shape: f32[1,64], index: 4, kind: input, shape index: {}]
  %s5 = inlined_call_operand.<no memory space> [shape: f32[1,1], index: 5, kind: input, shape index: {}]
  %s6 = inlined_call_operand.vmem [shape: f32[2,1], index: 6, kind: output, shape index: {}]
  %s7 = sld [smem:[#allocation0]]
  $region65: #{cnn_lstm_forward.9} parent=0
    _
  %s9 = ssub.s32 1, %s7
  %s10 = scalar_select 0, %s9, %s7
  %v11 = vstv %s5
  %12 = vst [vmem:[#allocation4] sm:$0x1] %v11
  loop: start=0, step=1, limit=6
  $region2: #{cnn_lstm_forward.9} parent=0 // loop_pre_header
    _
  $region3: #{cnn_lstm_forward.9} parent=0 // loop_header
    %s14 = sphi 0, %s18
    %p15 = scmp.ge.s32.totalorder %s14, 6
    %s24 = sphi 0, %s26
    %s27 = sphi 0, %s24
    %s28 = sphi 0, %s27
    %s44 = sphi 0, %s28
    %s48 = sphi 0, %s48
    %s50 = sphi 0, %s48
    %s51 = sphi 0, %s50
    %s65 = sphi 0, %s51
    %s69 = sphi 0, %s69
    %s71 = sphi 0, %s69
    %s72 = sphi 0, %s71
    %s86 = sphi 0, %s72
    %s90 = sphi 0, %s90
    %s92 = sphi 0, %s90
    %s93 = sphi 0, %s92
    %s107 = sphi 0, %s93
    %s111 = sphi 0, %s111
    %s113 = sphi 0, %s111
    %s114 = sphi 0, %s113
    %s128 = sphi 0, %s114
    %s132 = sphi 0, %s132
    %s134 = sphi 0, %s132
    %s135 = sphi 0, %s134
    %s149 = sphi 0, %s135
    %s153 = sphi 0, %s153
    %s155 = sphi 0, %s153
    %s156 = sphi 0, %s155
    %s170 = sphi 0, %s156
  $region4: #{cnn_lstm_forward.9} parent=0 // loop_header_branch
    %17 = sbr.rel (%p15) target = $region8
  $region5: #{cnn_lstm_forward.9} parent=0 // loop_body
    %s19 = ssub.s32 %s14, 1
    %s20 = ssub.s32 %s14, 2
    %s21 = sadd.s32 %s14, 1
    %s22 = ssub.s32 %s14, %s21
    %p23 = scmp.eq.s32.totalorder %s22, 0
    %s25 = sadd.s32 %s24, 1
    %s26 = scalar_select %p23, %s24, %s25
    %p29 = pneg %p23
    %p30 = scmp.eq.s32.totalorder %s14, 3
    %p31 = por %p29, %p30
    %p32 = scmp.ne.s32.totalorder %s24, %s27
    %p33 = scmp.eq.s32.totalorder %s14, 0
    %p34 = por %p32, %p33
    %p35 = scmp.ne.s32.totalorder %s24, %s27
    %p36 = scmp.eq.s32.totalorder %s19, 3
    %p37 = por %p35, %p36
    %p38 = scmp.ne.s32.totalorder %s27, %s28
    %p39 = scmp.eq.s32.totalorder %s19, 0
    %p40 = por %p38, %p39
    %p41 = scmp.ne.s32.totalorder %s27, %s28
    %p42 = scmp.eq.s32.totalorder %s20, 3
    %p43 = por %p41, %p42
    %p45 = scmp.ne.s32.totalorder %s28, %s44
    %p46 = scmp.eq.s32.totalorder %s20, 0
    %p47 = por %p45, %p46
    %s49 = sadd.s32 %s48, 1
    %p52 = scmp.eq.s32.totalorder %s14, 3
    %p53 = scmp.ne.s32.totalorder %s48, %s50
    %p54 = scmp.eq.s32.totalorder %s14, 0
    %p55 = por %p53, %p54
    %p56 = scmp.ne.s32.totalorder %s48, %s50
    %p57 = scmp.eq.s32.totalorder %s19, 3
    %p58 = por %p56, %p57
    %p59 = scmp.ne.s32.totalorder %s50, %s51
    %p60 = scmp.eq.s32.totalorder %s19, 0
    %p61 = por %p59, %p60
    %p62 = scmp.ne.s32.totalorder %s50, %s51
    %p63 = scmp.eq.s32.totalorder %s20, 3
    %p64 = por %p62, %p63
    %p66 = scmp.ne.s32.totalorder %s51, %s65
    %p67 = scmp.eq.s32.totalorder %s20, 0
    %p68 = por %p66, %p67
    %s70 = sadd.s32 %s69, 1
    %p73 = scmp.eq.s32.totalorder %s14, 3
    %p74 = scmp.ne.s32.totalorder %s69, %s71
    %p75 = scmp.eq.s32.totalorder %s14, 0
    %p76 = por %p74, %p75
    %p77 = scmp.ne.s32.totalorder %s69, %s71
    %p78 = scmp.eq.s32.totalorder %s19, 3
    %p79 = por %p77, %p78
    %p80 = scmp.ne.s32.totalorder %s71, %s72
    %p81 = scmp.eq.s32.totalorder %s19, 0
    %p82 = por %p80, %p81
    %p83 = scmp.ne.s32.totalorder %s71, %s72
    %p84 = scmp.eq.s32.totalorder %s20, 3
    %p85 = por %p83, %p84
    %p87 = scmp.ne.s32.totalorder %s72, %s86
    %p88 = scmp.eq.s32.totalorder %s20, 0
    %p89 = por %p87, %p88
    %s91 = sadd.s32 %s90, 1
    %p94 = scmp.eq.s32.totalorder %s14, 3
    %p95 = scmp.ne.s32.totalorder %s90, %s92
    %p96 = scmp.eq.s32.totalorder %s14, 0
    %p97 = por %p95, %p96
    %p98 = scmp.ne.s32.totalorder %s90, %s92
    %p99 = scmp.eq.s32.totalorder %s19, 3
    %p100 = por %p98, %p99
    %p101 = scmp.ne.s32.totalorder %s92, %s93
    %p102 = scmp.eq.s32.totalorder %s19, 0
    %p103 = por %p101, %p102
    %p104 = scmp.ne.s32.totalorder %s92, %s93
    %p105 = scmp.eq.s32.totalorder %s20, 3
    %p106 = por %p104, %p105
    %p108 = scmp.ne.s32.totalorder %s93, %s107
    %p109 = scmp.eq.s32.totalorder %s20, 0
    %p110 = por %p108, %p109
    %s112 = sadd.s32 %s111, 1
    %p115 = scmp.eq.s32.totalorder %s14, 3
    %p116 = scmp.ne.s32.totalorder %s111, %s113
    %p117 = scmp.eq.s32.totalorder %s14, 0
    %p118 = por %p116, %p117
    %p119 = scmp.ne.s32.totalorder %s111, %s113
    %p120 = scmp.eq.s32.totalorder %s19, 3
    %p121 = por %p119, %p120
    %p122 = scmp.ne.s32.totalorder %s113, %s114
    %p123 = scmp.eq.s32.totalorder %s19, 0
    %p124 = por %p122, %p123
    %p125 = scmp.ne.s32.totalorder %s113, %s114
    %p126 = scmp.eq.s32.totalorder %s20, 3
    %p127 = por %p125, %p126
    %p129 = scmp.ne.s32.totalorder %s114, %s128
    %p130 = scmp.eq.s32.totalorder %s20, 0
    %p131 = por %p129, %p130
    %s133 = sadd.s32 %s132, 1
    %p136 = scmp.eq.s32.totalorder %s14, 3
    %p137 = scmp.ne.s32.totalorder %s132, %s134
    %p138 = scmp.eq.s32.totalorder %s14, 0
    %p139 = por %p137, %p138
    %p140 = scmp.ne.s32.totalorder %s132, %s134
    %p141 = scmp.eq.s32.totalorder %s19, 3
    %p142 = por %p140, %p141
    %p143 = scmp.ne.s32.totalorder %s134, %s135
    %p144 = scmp.eq.s32.totalorder %s19, 0
    %p145 = por %p143, %p144
    %p146 = scmp.ne.s32.totalorder %s134, %s135
    %p147 = scmp.eq.s32.totalorder %s20, 3
    %p148 = por %p146, %p147
    %p150 = scmp.ne.s32.totalorder %s135, %s149
    %p151 = scmp.eq.s32.totalorder %s20, 0
    %p152 = por %p150, %p151
    %s154 = sadd.s32 %s153, 1
    %p157 = scmp.eq.s32.totalorder %s14, 3
    %p158 = scmp.ne.s32.totalorder %s153, %s155
    %p159 = scmp.eq.s32.totalorder %s14, 0
    %p160 = por %p158, %p159
    %p161 = scmp.ne.s32.totalorder %s153, %s155
    %p162 = scmp.eq.s32.totalorder %s19, 3
    %p163 = por %p161, %p162
    %p164 = scmp.ne.s32.totalorder %s155, %s156
    %p165 = scmp.eq.s32.totalorder %s19, 0
    %p166 = por %p164, %p165
    %p167 = scmp.ne.s32.totalorder %s155, %s156
    %p168 = scmp.eq.s32.totalorder %s20, 3
    %p169 = por %p167, %p168
    %p171 = scmp.ne.s32.totalorder %s156, %s170
    %p172 = scmp.eq.s32.totalorder %s20, 0
    %p173 = por %p171, %p172
    %p174 = scmp.le.s32.totalorder 1, %s14
    %p175 = scmp.lt.s32.totalorder %s14, 5
    %p176 = pnand %p174, %p175
    %p177 = pneg %p176
    // Predicated region
    $region9: #{cnn_lstm_forward.9} parent=5 // pred_check
      _
    $region10: #{cnn_lstm_forward.9} parent=5 // pred_check_branch
      %179 = sbr.rel (%p176) target = $region12
    $region11: #{cnn_lstm_forward.9} parent=5 // pred_region
      %s180 = ssub.s32 %s14, 1
      // Predicated region
      $region13: #{cnn_lstm_forward.9} parent=11 // pred_check
        %p181 = pneg %p61
      $region14: #{cnn_lstm_forward.9} parent=11 // pred_check_branch
        %183 = sbr.rel (%p181) target = $region16
      $region15: #{cnn_lstm_forward.9} parent=11 // pred_region
        _
      $region16: #{cnn_lstm_forward.9} parent=11 // pred_fallthru
        _
      // Predicated region
      $region17: #{cnn_lstm_forward.9} parent=11 // pred_check
        %p184 = pneg %p82
      $region18: #{cnn_lstm_forward.9} parent=11 // pred_check_branch
        %186 = sbr.rel (%p184) target = $region20
      $region19: #{cnn_lstm_forward.9} parent=11 // pred_region
        _
      $region20: #{cnn_lstm_forward.9} parent=11 // pred_fallthru
        _
      // Predicated region
      $region21: #{cnn_lstm_forward.9} parent=11 // pred_check
        %p187 = pneg %p103
      $region22: #{cnn_lstm_forward.9} parent=11 // pred_check_branch
        %189 = sbr.rel (%p187) target = $region24
      $region23: #{cnn_lstm_forward.9} parent=11 // pred_region
        _
      $region24: #{cnn_lstm_forward.9} parent=11 // pred_fallthru
        _
      // Predicated region
      $region25: #{cnn_lstm_forward.9} parent=11 // pred_check
        %p190 = pneg %p124
      $region26: #{cnn_lstm_forward.9} parent=11 // pred_check_branch
        %192 = sbr.rel (%p190) target = $region28
      $region27: #{cnn_lstm_forward.9} parent=11 // pred_region
        _
      $region28: #{cnn_lstm_forward.9} parent=11 // pred_fallthru
        _
      // Predicated region
      $region29: #{cnn_lstm_forward.9} parent=11 // pred_check
        %p193 = pneg %p145
      $region30: #{cnn_lstm_forward.9} parent=11 // pred_check_branch
        %195 = sbr.rel (%p193) target = $region32
      $region31: #{cnn_lstm_forward.9} parent=11 // pred_region
        _
      $region32: #{cnn_lstm_forward.9} parent=11 // pred_fallthru
        _
    $region12: #{cnn_lstm_forward.9} parent=5 // pred_fallthru
      _
    %p196 = scmp.lt.s32.totalorder %s14, 4
    // Predicated region
    $region33: #{cnn_lstm_forward.9} parent=5 // pred_check
      %p197 = pneg %p196
    $region34: #{cnn_lstm_forward.9} parent=5 // pred_check_branch
      %199 = sbr.rel (%p197) target = $region36
    $region35: #{cnn_lstm_forward.9} parent=5 // pred_region
      // Predicated region
      $region37: #{cnn_lstm_forward.9} parent=35 // pred_check
        %p200 = pneg %p34
      $region38: #{cnn_lstm_forward.9} parent=35 // pred_check_branch
        %202 = sbr.rel (%p200) target = $region40
      $region39: #{cnn_lstm_forward.9} parent=35 // pred_region
        %p203 = scmp.lt.s32.totalorder %s14, 3
        %s204 = scalar_select %p203, %s14, 3
        %s205 = smul.addr %s204, 4
        %s206 = smul.addr %s205, 2
        %s207 = scalar_lea.vmem %s0, %s206
      $region40: #{cnn_lstm_forward.9} parent=35 // pred_fallthru
        _
    $region36: #{cnn_lstm_forward.9} parent=5 // pred_fallthru
      _
    %p208 = scmp.le.s32.totalorder 1, %s14
    %p209 = scmp.lt.s32.totalorder %s14, 5
    %p210 = pnand %p208, %p209
    %p211 = pneg %p210
    // Predicated region
    $region41: #{cnn_lstm_forward.9} parent=5 // pred_check
      _
    $region42: #{cnn_lstm_forward.9} parent=5 // pred_check_branch
      %213 = sbr.rel (%p210) target = $region44
    $region43: #{cnn_lstm_forward.9} parent=5 // pred_region
      %s214 = ssub.s32 %s14, 1
      %p215 = scmp.lt.s32.totalorder %s19, 3
      %s216 = scalar_select %p215, %s19, 3
      %s217 = smul.addr %s216, 4
      %s218 = smul.addr %s217, 2
      %s219 = scalar_lea.vmem %s0, %s218
      %p220 = pneg %p40
      %p221 = pneg %p37
      %p222 = pneg %p61
      %p223 = pneg %p58
      %p224 = pneg %p82
      %p225 = pneg %p79
      %p226 = pneg %p103
      %p227 = pneg %p100
      %p228 = pneg %p124
      %p229 = pneg %p121
      %p230 = pneg %p145
      %p231 = pneg %p142
      %p232 = pneg %p166
      %p233 = pneg %p163
      %p234 = scmp.lt.s32.totalorder %s19, 3
      %s235 = scalar_select %p234, %s19, 3
      %s236 = smul.addr %s235, 4
      %s237 = smul.addr %s236, 2
      %s238 = scalar_lea.vmem %s0, %s237
      %p240 = scmp.eq.s32.totalorder %s19, 0
      // Predicated region
      $region45: #{cnn_lstm_forward.9} parent=43 // pred_check
        %p241 = pneg %p240
      $region46: #{cnn_lstm_forward.9} parent=43 // pred_check_branch
        %243 = sbr.rel (%p241) target = $region48
      $region47: #{cnn_lstm_forward.9} parent=43 // pred_region
        %244 = vst [vmem:[#allocation2] sm:$0x3] 0.0
        %245 = vst [vmem:[#allocation3] sm:$0x3] 0.0
      $region48: #{cnn_lstm_forward.9} parent=43 // pred_fallthru
        _
      %v246 = vld [vmem:[%s238] sm:$0xff]
      %v247 = vld [vmem:[#allocation2] sm:$0x3]
      %v248 = vpack.c.bf16 %v247, %v247
      %v249 = vld [vmem:[%s1] sm:$0xff]
      %v250 = vld [vmem:[%s1 + $0x8] sm:$0xff]
      %v251 = vld [vmem:[%s1 + $0x10] sm:$0xff]
      %v252 = vld [vmem:[%s1 + $0x18] sm:$0xff]
      %v253 = vld [vmem:[%s1 + $0x20] sm:$0xff]
      %v254 = vld [vmem:[%s1 + $0x28] sm:$0xff]
      %v255 = vld [vmem:[%s1 + $0x30] sm:$0xff]
      %v256 = vld [vmem:[%s1 + $0x38] sm:$0xff]
      %v257 = vld [vmem:[%s1 + $0x40] sm:$0xff]
      %v258 = vld [vmem:[%s1 + $0x48] sm:$0xff]
      %v259 = vld [vmem:[%s1 + $0x50] sm:$0xff]
      %v260 = vld [vmem:[%s1 + $0x58] sm:$0xff]
      %v261 = vld [vmem:[%s1 + $0x60] sm:$0xff]
      %v262 = vld [vmem:[%s1 + $0x68] sm:$0xff]
      %v263 = vld [vmem:[%s1 + $0x70] sm:$0xff]
      %v264 = vld [vmem:[%s1 + $0x78] sm:$0xff]
      %v265 = vld [vmem:[%s1 + $0x80] sm:$0xff]
      %v266 = vld [vmem:[%s1 + $0x88] sm:$0xff]
      %v267 = vld [vmem:[%s1 + $0x90] sm:$0xff]
      %v268 = vld [vmem:[%s1 + $0x98] sm:$0xff]
      %v269 = vld [vmem:[%s1 + $0xa0] sm:$0xff]
      %v270 = vld [vmem:[%s1 + $0xa8] sm:$0xff]
      %v271 = vld [vmem:[%s1 + $0xb0] sm:$0xff]
      %v272 = vld [vmem:[%s1 + $0xb8] sm:$0xff]
      %v273 = vld [vmem:[%s1 + $0xc0] sm:$0xff]
      %v274 = vld [vmem:[%s1 + $0xc8] sm:$0xff]
      %v275 = vld [vmem:[%s1 + $0xd0] sm:$0xff]
      %v276 = vld [vmem:[%s1 + $0xd8] sm:$0xff]
      %v277 = vld [vmem:[%s1 + $0xe0] sm:$0xff]
      %v278 = vld [vmem:[%s1 + $0xe8] sm:$0xff]
      %v279 = vld [vmem:[%s1 + $0xf0] sm:$0xff]
      %v280 = vld [vmem:[%s1 + $0xf8] sm:$0xff]
      %v313 = vunpack.c.l.b16 %v249
      %v314 = vunpack.c.h.b16 %v249
      %v315 = vunpack.c.l.b16 %v250
      %v316 = vunpack.c.h.b16 %v250
      %v317 = vunpack.c.l.b16 %v251
      %v318 = vunpack.c.h.b16 %v251
      %v319 = vunpack.c.l.b16 %v252
      %v320 = vunpack.c.h.b16 %v252
      %v321 = vunpack.c.l.b16 %v253
      %v322 = vunpack.c.h.b16 %v253
      %v323 = vunpack.c.l.b16 %v254
      %v324 = vunpack.c.h.b16 %v254
      %v325 = vunpack.c.l.b16 %v255
      %v326 = vunpack.c.h.b16 %v255
      %v327 = vunpack.c.l.b16 %v256
      %v328 = vunpack.c.h.b16 %v256
      %v329 = vunpack.c.l.b16 %v257
      %v330 = vunpack.c.h.b16 %v257
      %v331 = vunpack.c.l.b16 %v258
      %v332 = vunpack.c.h.b16 %v258
      %v333 = vunpack.c.l.b16 %v259
      %v334 = vunpack.c.h.b16 %v259
      %v335 = vunpack.c.l.b16 %v260
      %v336 = vunpack.c.h.b16 %v260
      %v337 = vunpack.c.l.b16 %v261
      %v338 = vunpack.c.h.b16 %v261
      %v339 = vunpack.c.l.b16 %v262
      %v340 = vunpack.c.h.b16 %v262
      %v341 = vunpack.c.l.b16 %v263
      %v342 = vunpack.c.h.b16 %v263
      %v343 = vunpack.c.l.b16 %v264
      %v344 = vunpack.c.h.b16 %v264
      %v345 = vunpack.c.l.b16 %v265
      %v346 = vunpack.c.h.b16 %v265
      %v347 = vunpack.c.l.b16 %v266
      %v348 = vunpack.c.h.b16 %v266
      %v349 = vunpack.c.l.b16 %v267
      %v350 = vunpack.c.h.b16 %v267
      %v351 = vunpack.c.l.b16 %v268
      %v352 = vunpack.c.h.b16 %v268
      %v353 = vunpack.c.l.b16 %v269
      %v354 = vunpack.c.h.b16 %v269
      %v355 = vunpack.c.l.b16 %v270
      %v356 = vunpack.c.h.b16 %v270
      %v357 = vunpack.c.l.b16 %v271
      %v358 = vunpack.c.h.b16 %v271
      %v359 = vunpack.c.l.b16 %v272
      %v360 = vunpack.c.h.b16 %v272
      %v361 = vunpack.c.l.b16 %v273
      %v362 = vunpack.c.h.b16 %v273
      %v363 = vunpack.c.l.b16 %v274
      %v364 = vunpack.c.h.b16 %v274
      %v365 = vunpack.c.l.b16 %v275
      %v366 = vunpack.c.h.b16 %v275
      %v367 = vunpack.c.l.b16 %v276
      %v368 = vunpack.c.h.b16 %v276
      %v369 = vunpack.c.l.b16 %v277
      %v370 = vunpack.c.h.b16 %v277
      %v371 = vunpack.c.l.b16 %v278
      %v372 = vunpack.c.h.b16 %v278
      %v373 = vunpack.c.l.b16 %v279
      %v374 = vunpack.c.h.b16 %v279
      %v375 = vunpack.c.l.b16 %v280
      %v376 = vunpack.c.h.b16 %v280
      %v377 = vpack.c.b16 %v317, %v313
      %v378 = vpack.c.b16 %v318, %v314
      %v379 = vpack.c.b16 %v319, %v315
      %v380 = vpack.c.b16 %v320, %v316
      %v381 = vpack.c.b16 %v325, %v321
      %v382 = vpack.c.b16 %v326, %v322
      %v383 = vpack.c.b16 %v327, %v323
      %v384 = vpack.c.b16 %v328, %v324
      %v385 = vpack.c.b16 %v333, %v329
      %v386 = vpack.c.b16 %v334, %v330
      %v387 = vpack.c.b16 %v335, %v331
      %v388 = vpack.c.b16 %v336, %v332
      %v389 = vpack.c.b16 %v341, %v337
      %v390 = vpack.c.b16 %v342, %v338
      %v391 = vpack.c.b16 %v343, %v339
      %v392 = vpack.c.b16 %v344, %v340
      %v393 = vpack.c.b16 %v349, %v345
      %v394 = vpack.c.b16 %v350, %v346
      %v395 = vpack.c.b16 %v351, %v347
      %v396 = vpack.c.b16 %v352, %v348
      %v397 = vpack.c.b16 %v357, %v353
      %v398 = vpack.c.b16 %v358, %v354
      %v399 = vpack.c.b16 %v359, %v355
      %v400 = vpack.c.b16 %v360, %v356
      %v401 = vpack.c.b16 %v365, %v361
      %v402 = vpack.c.b16 %v366, %v362
      %v403 = vpack.c.b16 %v367, %v363
      %v404 = vpack.c.b16 %v368, %v364
      %v405 = vpack.c.b16 %v373, %v369
      %v406 = vpack.c.b16 %v374, %v370
      %v407 = vpack.c.b16 %v375, %v371
      %v408 = vpack.c.b16 %v376, %v372
      %441 = vmatprep.subr.bf16.mxu0 %v378
      %442 = vmatpush1.bf16.msra.mxu0 %v377
      %443 = vmatprep.subr.bf16.mxu0 %v382
      %444 = vmatpush1.bf16.msra.mxu0 %v381
      %445 = vmatprep.subr.bf16.mxu0 %v386
      %446 = vmatpush1.bf16.msra.mxu0 %v385
      %447 = vmatprep.subr.bf16.mxu0 %v390
      %448 = vmatpush1.bf16.msra.mxu0 %v389
      %449 = vmatprep.subr.bf16.mxu0 %v394
      %450 = vmatpush1.bf16.msra.mxu0 %v393
      %451 = vmatprep.subr.bf16.mxu0 %v398
      %452 = vmatpush1.bf16.msra.mxu0 %v397
      %453 = vmatprep.subr.bf16.mxu0 %v402
      %454 = vmatpush1.bf16.msra.mxu0 %v401
      %455 = vmatprep.subr.bf16.mxu0 %v406
      %456 = vmatpush1.bf16.msra.mxu0 %v405
      %457 = vmatprep.subr.bf16.mxu0 0
      %458 = vmatpush1.bf16.msra.mxu0 0
      %459 = vmatprep.subr.bf16.mxu0 0
      %460 = vmatpush1.bf16.msra.mxu0 0
      %461 = vmatprep.subr.bf16.mxu0 0
      %462 = vmatpush1.bf16.msra.mxu0 0
      %463 = vmatprep.subr.bf16.mxu0 0
      %464 = vmatpush1.bf16.msra.mxu0 0
      %465 = vmatprep.subr.bf16.mxu0 0
      %466 = vmatpush1.bf16.msra.mxu0 0
      %467 = vmatprep.subr.bf16.mxu0 0
      %468 = vmatpush1.bf16.msra.mxu0 0
      %469 = vmatprep.subr.bf16.mxu0 0
      %470 = vmatpush1.bf16.msra.mxu0 0
      %471 = vmatprep.subr.bf16.mxu0 0
      %472 = vmatpush1.bf16.msra.mxu0 0
      %473 = vmatprep.mubr.bf16.mxu0 0
      %474 = vmatmul.mubr.bf16.gmra.mrb[0].mxu0 %v248
      %v475 = vpop.f32.mrb[0].mxu0
      %v476 = vadd.f32 0.0, %v475
      %v477 = vpop.f32.mrb[0].mxu0
      %v478 = vadd.f32 0.0, %v477
      %v479 = vpop.f32.mrb[0].mxu0
      %v480 = vpop.f32.mrb[0].mxu0
      %481 = vdwg.mxu0
      %482 = vmatprep.subr.bf16.mxu0 %v380
      %483 = vmatpush1.bf16.msra.mxu0 %v379
      %484 = vmatprep.subr.bf16.mxu0 %v384
      %485 = vmatpush1.bf16.msra.mxu0 %v383
      %486 = vmatprep.subr.bf16.mxu0 %v388
      %487 = vmatpush1.bf16.msra.mxu0 %v387
      %488 = vmatprep.subr.bf16.mxu0 %v392
      %489 = vmatpush1.bf16.msra.mxu0 %v391
      %490 = vmatprep.subr.bf16.mxu0 %v396
      %491 = vmatpush1.bf16.msra.mxu0 %v395
      %492 = vmatprep.subr.bf16.mxu0 %v400
      %493 = vmatpush1.bf16.msra.mxu0 %v399
      %494 = vmatprep.subr.bf16.mxu0 %v404
      %495 = vmatpush1.bf16.msra.mxu0 %v403
      %496 = vmatprep.subr.bf16.mxu0 %v408
      %497 = vmatpush1.bf16.msra.mxu0 %v407
      %498 = vmatprep.subr.bf16.mxu0 0
      %499 = vmatpush1.bf16.msra.mxu0 0
      %500 = vmatprep.subr.bf16.mxu0 0
      %501 = vmatpush1.bf16.msra.mxu0 0
      %502 = vmatprep.subr.bf16.mxu0 0
      %503 = vmatpush1.bf16.msra.mxu0 0
      %504 = vmatprep.subr.bf16.mxu0 0
      %505 = vmatpush1.bf16.msra.mxu0 0
      %506 = vmatprep.subr.bf16.mxu0 0
      %507 = vmatpush1.bf16.msra.mxu0 0
      %508 = vmatprep.subr.bf16.mxu0 0
      %509 = vmatpush1.bf16.msra.mxu0 0
      %510 = vmatprep.subr.bf16.mxu0 0
      %511 = vmatpush1.bf16.msra.mxu0 0
      %512 = vmatprep.subr.bf16.mxu0 0
      %513 = vmatpush1.bf16.msra.mxu0 0
      %514 = vmatprep.mubr.bf16.mxu0 0
      %515 = vmatmul.mubr.bf16.gmra.mrb[0].mxu0 %v248
      %v516 = vpop.f32.mrb[0].mxu0
      %v517 = vadd.f32 0.0, %v516
      %v518 = vpop.f32.mrb[0].mxu0
      %v519 = vadd.f32 0.0, %v518
      %v520 = vpop.f32.mrb[0].mxu0
      %v521 = vpop.f32.mrb[0].mxu0
      %522 = vdwg.mxu0
      %v527 = vcombine.low %v476, %v478
      %v528 = vcombine.low %v517, %v519
      %v530 = vunpack.c.l.s4 1983009808
      %v531 = vunpack.c.0.s8 %v530
      %v532 = vlaneseq
      %v533 = vshrl.u32 %v532, 7
      %v534 = vsub.s32 %v531, %v533
      %v535 = vrot.slane %v527, %v534
      %v537 = vunpack.c.l.s4 1983009808
      %v538 = vunpack.c.0.s8 %v537
      %v539 = vlaneseq
      %v540 = vshrl.u32 %v539, 7
      %v541 = vsub.s32 %v538, %v540
      %v542 = vrot.slane %v528, %v541
      %v543 = vcombine.low %v535, %v542
      %v545 = vadd.f32 %v246, %v543
      %v546 = vxor.u32 %v545, 2147483648
      %v547 = vmul.f32 %v546, 1.442695
      %v548 = vpow.pop %v547
      %v549 = vadd.f32 %v548, 1.0
      %v550 = vrcp.pop %v549
      %v551 = vmul.f32 1.0, %v550
      %v553 = vrot.slane %v545, 2
      %v555 = vxor.u32 %v553, 2147483648
      %v556 = vmul.f32 %v555, 1.442695
      %v557 = vpow.pop %v556
      %v558 = vadd.f32 %v557, 1.0
      %v559 = vrcp.pop %v558
      %v560 = vmul.f32 1.0, %v559
      %v561 = vrot.slane %v545, 4
      %v563 = vtanh.pop %v561
      %v564 = vrot.slane %v545, 6
      %v566 = vxor.u32 %v564, 2147483648
      %v567 = vmul.f32 %v566, 1.442695
      %v568 = vpow.pop %v567
      %v569 = vadd.f32 %v568, 1.0
      %v570 = vrcp.pop %v569
      %v571 = vmul.f32 1.0, %v570
      %v572 = vld [vmem:[#allocation3] sm:$0x3]
      %v573 = vmul.f32 %v560, %v572
      %v574 = vmul.f32 %v551, %v563
      %v575 = vadd.f32 %v573, %v574
      %v576 = vtanh.pop %v575
      %v577 = vmul.f32 %v571, %v576
      %578 = vst [vmem:[#allocation3] sm:$0x3] %v575
      %579 = vst [vmem:[#allocation2] sm:$0x3] %v577
      %p580 = scmp.eq.s32.totalorder %s19, 3
      // Predicated region
      $region49: #{cnn_lstm_forward.9} parent=43 // pred_check
        %p581 = pneg %p580
      $region50: #{cnn_lstm_forward.9} parent=43 // pred_check_branch
        %583 = sbr.rel (%p581) target = $region52
      $region51: #{cnn_lstm_forward.9} parent=43 // pred_region
        %v584 = vpack.c.bf16 %v577, %v577
        %v585 = vld [vmem:[%s2] sm:$0xf]
        %v586 = vld [vmem:[%s2 + $0x4] sm:$0xf]
        %v587 = vld [vmem:[%s2 + $0x8] sm:$0xf]
        %v588 = vld [vmem:[%s2 + $0xc] sm:$0xf]
        %v589 = vld [vmem:[%s2 + $0x10] sm:$0xf]
        %v590 = vld [vmem:[%s2 + $0x14] sm:$0xf]
        %v591 = vld [vmem:[%s2 + $0x18] sm:$0xf]
        %v592 = vld [vmem:[%s2 + $0x1c] sm:$0xf]
        %v593 = vld [vmem:[%s2 + $0x20] sm:$0xf]
        %v594 = vld [vmem:[%s2 + $0x24] sm:$0xf]
        %v595 = vld [vmem:[%s2 + $0x28] sm:$0xf]
        %v596 = vld [vmem:[%s2 + $0x2c] sm:$0xf]
        %v597 = vld [vmem:[%s2 + $0x30] sm:$0xf]
        %v598 = vld [vmem:[%s2 + $0x34] sm:$0xf]
        %v599 = vld [vmem:[%s2 + $0x38] sm:$0xf]
        %v600 = vld [vmem:[%s2 + $0x3c] sm:$0xf]
        %v601 = vld [vmem:[%s3] sm:$0x1]
        %v603 = vlaneseq
        %v604 = vshrl.u32 %v603, 7
        %v605 = vsub.s32 0, %v604
        %v606 = vrot.slane %v601, %v605
        %v624 = vunpack.c.l.b16 %v585
        %v625 = vunpack.c.l.b16 %v586
        %v626 = vunpack.c.l.b16 %v587
        %v627 = vunpack.c.l.b16 %v588
        %v628 = vunpack.c.l.b16 %v589
        %v629 = vunpack.c.l.b16 %v590
        %v630 = vunpack.c.l.b16 %v591
        %v631 = vunpack.c.l.b16 %v592
        %v632 = vunpack.c.l.b16 %v593
        %v633 = vunpack.c.l.b16 %v594
        %v634 = vunpack.c.l.b16 %v595
        %v635 = vunpack.c.l.b16 %v596
        %v636 = vunpack.c.l.b16 %v597
        %v637 = vunpack.c.l.b16 %v598
        %v638 = vunpack.c.l.b16 %v599
        %v639 = vunpack.c.l.b16 %v600
        %v640 = vpack.c.b16 %v625, %v624
        %v641 = vpack.c.b16 %v627, %v626
        %v642 = vpack.c.b16 %v629, %v628
        %v643 = vpack.c.b16 %v631, %v630
        %v644 = vpack.c.b16 %v633, %v632
        %v645 = vpack.c.b16 %v635, %v634
        %v646 = vpack.c.b16 %v637, %v636
        %v647 = vpack.c.b16 %v639, %v638
        %656 = vmatprep.subr.bf16.mxu0 0
        %657 = vmatpush1.bf16.msra.mxu0 %v640
        %658 = vmatprep.subr.bf16.mxu0 0
        %659 = vmatpush1.bf16.msra.mxu0 %v641
        %660 = vmatprep.subr.bf16.mxu0 0
        %661 = vmatpush1.bf16.msra.mxu0 %v642
        %662 = vmatprep.subr.bf16.mxu0 0
        %663 = vmatpush1.bf16.msra.mxu0 %v643
        %664 = vmatprep.subr.bf16.mxu0 0
        %665 = vmatpush1.bf16.msra.mxu0 %v644
        %666 = vmatprep.subr.bf16.mxu0 0
        %667 = vmatpush1.bf16.msra.mxu0 %v645
        %668 = vmatprep.subr.bf16.mxu0 0
        %669 = vmatpush1.bf16.msra.mxu0 %v646
        %670 = vmatprep.subr.bf16.mxu0 0
        %671 = vmatpush1.bf16.msra.mxu0 %v647
        %672 = vmatprep.subr.bf16.mxu0 0
        %673 = vmatpush1.bf16.msra.mxu0 0
        %674 = vmatprep.subr.bf16.mxu0 0
        %675 = vmatpush1.bf16.msra.mxu0 0
        %676 = vmatprep.subr.bf16.mxu0 0
        %677 = vmatpush1.bf16.msra.mxu0 0
        %678 = vmatprep.subr.bf16.mxu0 0
        %679 = vmatpush1.bf16.msra.mxu0 0
        %680 = vmatprep.subr.bf16.mxu0 0
        %681 = vmatpush1.bf16.msra.mxu0 0
        %682 = vmatprep.subr.bf16.mxu0 0
        %683 = vmatpush1.bf16.msra.mxu0 0
        %684 = vmatprep.subr.bf16.mxu0 0
        %685 = vmatpush1.bf16.msra.mxu0 0
        %686 = vmatprep.subr.bf16.mxu0 0
        %687 = vmatpush1.bf16.msra.mxu0 0
        %688 = vmatprep.mubr.bf16.mxu0 0
        %689 = vmatmul.mubr.bf16.gmra.mrb[0].mxu0 %v584
        %v690 = vpop.f32.mrb[0].mxu0
        %v691 = vadd.f32 %v606, %v690
        %v692 = vpop.f32.mrb[0].mxu0
        %v693 = vpop.f32.mrb[0].mxu0
        %v694 = vpop.f32.mrb[0].mxu0
        %695 = vdwg.mxu0
        %v696 = vmax.f32 %v691, 0.0
        %v697 = vld [vmem:[%s4] sm:$0x1]
        %v699 = vlaneseq
        %v700 = vshrl.u32 %v699, 7
        %v701 = vsub.s32 0, %v700
        %v702 = vrot.slane %v697, %v701
        %v704 = vmul.f32 %v696, %v702
        %vm705 = vcmask 517120
        %v706 = vsel %vm705, %v704, 0.0
        %707 = vadd.xlane.f32.xlu0 %v706
        %v708 = vpop.xlane.xlu0 %707
        %v709 = vld [vmem:[#allocation4] sm:$0x1]
        %v711 = vlaneseq
        %v712 = vshrl.u32 %v711, 7
        %v713 = vsub.s32 0, %v712
        %v714 = vrot.slane %v709, %v713
        %v716 = vadd.f32 %v708, %v714
        %vm717 = vcmask 1024
        %718 = vst.msk [vmem:[%s6] sm:$0x3] %vm717, %v716
      $region52: #{cnn_lstm_forward.9} parent=43 // pred_fallthru
        _
      // Predicated region
      $region53: #{cnn_lstm_forward.9} parent=43 // pred_check
        %p719 = pneg %p163
      $region54: #{cnn_lstm_forward.9} parent=43 // pred_check_branch
        %721 = sbr.rel (%p719) target = $region56
      $region55: #{cnn_lstm_forward.9} parent=43 // pred_region
        _
      $region56: #{cnn_lstm_forward.9} parent=43 // pred_fallthru
        _
      // Predicated region
      $region57: #{cnn_lstm_forward.9} parent=43 // pred_check
        %p722 = pneg %p163
      $region58: #{cnn_lstm_forward.9} parent=43 // pred_check_branch
        %724 = sbr.rel (%p722) target = $region60
      $region59: #{cnn_lstm_forward.9} parent=43 // pred_region
        _
      $region60: #{cnn_lstm_forward.9} parent=43 // pred_fallthru
        _
    $region44: #{cnn_lstm_forward.9} parent=5 // pred_fallthru
      _
    %p725 = scmp.le.s32.totalorder 2, %s14
    // Predicated region
    $region61: #{cnn_lstm_forward.9} parent=5 // pred_check
      %p726 = pneg %p725
    $region62: #{cnn_lstm_forward.9} parent=5 // pred_check_branch
      %728 = sbr.rel (%p726) target = $region64
    $region63: #{cnn_lstm_forward.9} parent=5 // pred_region
      %s729 = ssub.s32 %s14, 2
    $region64: #{cnn_lstm_forward.9} parent=5 // pred_fallthru
      _
  $region6: #{cnn_lstm_forward.9} parent=0 // loop_footer
    %s18 = sadd.s32 1, %s14
  $region7: #{cnn_lstm_forward.9} parent=0 // loop_footer_branch
    %13 = sbr.rel target = $region3
  $region8: #{cnn_lstm_forward.9} parent=0 // loop_exit
    _

</llo_original>
